<compile_context>
chip_gen: v6e
topology: v6e:2x2x1
jax: 0.10.0
libtpu: 0.0.40
codegen_flags: <defaults>
</compile_context>

<pallas_src>
import functools
import math

import jax
import jax.numpy as jnp
from jax.experimental import pallas as pl
from jax.experimental.pallas import tpu as pltpu


def _round_up(x, m):
    return ((x + m - 1) // m) * m


# ----------------------------- Pallas kernels ------------------------------

def _matmul_bias_relu_kernel(p_ref, w_ref, b_ref, o_ref):
    # p_ref: (tm, K) bf16 im2col patches; w_ref: (K, tn) bf16 with BN scale
    # folded in; b_ref: (1, tn) f32 folded bias; o_ref: (tm, tn) f32.
    acc = jnp.dot(p_ref[...], w_ref[...], preferred_element_type=jnp.float32)
    o_ref[...] = jnp.maximum(acc + b_ref[...], 0.0)       # f32 epilogue (v5e-safe)


def _maxpool_4x2_kernel(ee_ref, eo_ref, oe_ref, oo_ref, o_ref, *, oh, ow):
    # Each *_ref is one (row-parity, col-parity) phase of the input.  A 4x4
    # stride-2 window is the union of the 2x2 shifted windows of the 4 phases,
    # so only contiguous unit-stride slices are needed in-kernel.
    def win_max(v):
        return jnp.maximum(
            jnp.maximum(v[:, 0:oh, 0:ow, :], v[:, 0:oh, 1:ow + 1, :]),
            jnp.maximum(v[:, 1:oh + 1, 0:ow, :], v[:, 1:oh + 1, 1:ow + 1, :]))

    o_ref[...] = jnp.maximum(
        jnp.maximum(win_max(ee_ref[...]), win_max(eo_ref[...])),
        jnp.maximum(win_max(oe_ref[...]), win_max(oo_ref[...])))


# ------------------------------ layer wrappers ------------------------------

def conv_bn_relu(x, layer):
    """x: (N,H,W,Cin) f32.  layer: prepared dict (folded bf16 weights)."""
    N, H, W, Cin = x.shape
    KH, KW = layer["ksize"]
    sh, sw = layer["stride"]
    Cout = layer["cout"]
    OH = (H - KH) // sh + 1
    OW = (W - KW) // sw + 1

    # im2col (wrapper glue) in bf16 — ordering (kh, kw, cin) matches the
    # weight reshape done in prepare_params.
    # TODO(synk): im2col still duplicates input reads KH*KW-fold in HBM; an
    # in-kernel DMA formulation would remove it entirely.
    xb = x.astype(jnp.bfloat16)
    cols = []
    for i in range(KH):
        for j in range(KW):
            cols.append(xb[:, i:i + sh * (OH - 1) + 1:sh,
                           j:j + sw * (OW - 1) + 1:sw, :])   # (N, OH, OW, Cin)
    patches = jnp.stack(cols, axis=3).reshape(N * OH * OW, KH * KW * Cin)

    M = N * OH * OW
    K = KH * KW * Cin
    Cpad = layer["w"].shape[1]                               # multiple of 128

    # Tile M (sublane axis, multiple of 8) and Cout (lane axis, 128-wide).
    # K stays a single full-extent block (not a multiple of 128).
    tm = min(512, _round_up(M, 8))
    tn = 128
    M_pad = _round_up(M, tm)
    if M_pad != M:
        patches = jnp.pad(patches, ((0, M_pad - M), (0, 0)))

    out = pl.pallas_call(
        _matmul_bias_relu_kernel,
        out_shape=jax.ShapeDtypeStruct((M_pad, Cpad), jnp.float32),
        grid=(M_pad // tm, Cpad // tn),
        in_specs=[
            pl.BlockSpec((tm, K), lambda i, j: (i, 0)),      # patches tile
            pl.BlockSpec((K, tn), lambda i, j: (0, j)),      # weight column tile
            pl.BlockSpec((1, tn), lambda i, j: (0, j)),      # folded bias tile
        ],
        out_specs=pl.BlockSpec((tm, tn), lambda i, j: (i, j)),
        compiler_params=pltpu.CompilerParams(
            dimension_semantics=("parallel", "parallel")),   # megacore on v7x
    )(patches, layer["w"], layer["b"])

    return out[:M, :Cout].reshape(N, OH, OW, Cout)


def max_pool_4x2(x):
    """MaxPool2d(kernel_size=4, stride=2) on NHWC input, no window stacking."""
    N, H, W, C = x.shape
    OH = (H - 4) // 2 + 1
    OW = (W - 4) // 2 + 1

    # Cheap parity-phase views (combined size == input size; no duplication).
    ee = x[:, 0::2, 0::2, :]
    eo = x[:, 0::2, 1::2, :]
    oe = x[:, 1::2, 0::2, :]
    oo = x[:, 1::2, 1::2, :]

    tc = 128 if C % 128 == 0 else C

    def in_spec(a):
        n, hp, wp, _ = a.shape
        return pl.BlockSpec((n, hp, wp, tc), lambda c: (0, 0, 0, c))

    return pl.pallas_call(
        functools.partial(_maxpool_4x2_kernel, oh=OH, ow=OW),
        out_shape=jax.ShapeDtypeStruct((N, OH, OW, C), x.dtype),
        grid=(C // tc,),
        in_specs=[in_spec(ee), in_spec(eo), in_spec(oe), in_spec(oo)],
        out_specs=pl.BlockSpec((N, OH, OW, tc), lambda c: (0, 0, 0, c)),
        compiler_params=pltpu.CompilerParams(dimension_semantics=("parallel",)),
    )(ee, eo, oe, oo)


# ----------------------------- parameter setup ------------------------------

def _init_conv_bn(key, cout, cin, k):
    kw_, kb, kg, kbe, km, kv = jax.random.split(key, 6)
    fan_in = cin * k * k
    bound = 1.0 / math.sqrt(fan_in)
    w = jax.random.uniform(kw_, (cout, cin, k, k), jnp.float32, -bound, bound)
    b = jax.random.uniform(kb, (cout,), jnp.float32, -bound, bound)
    gamma = jax.random.uniform(kg, (cout,), jnp.float32, 0.5, 1.5)
    beta = 0.1 * jax.random.normal(kbe, (cout,), jnp.float32)
    rmean = 0.1 * jax.random.normal(km, (cout,), jnp.float32)
    rvar = jax.random.uniform(kv, (cout,), jnp.float32, 0.5, 1.5)
    return (w, b, gamma, beta, rmean, rvar)


def init_params(key):
    k1, k2, k3, k4 = jax.random.split(key, 4)
    return {
        "conv1": _init_conv_bn(k1, 64, 1, 5),
        "conv2": _init_conv_bn(k2, 128, 64, 5),
        "conv3": _init_conv_bn(k3, 256, 128, 3),
        "conv4": _init_conv_bn(k4, 64, 256, 3),
    }


def prepare_params(params, eps=1e-5):
    """One-time (hoisted) conv-BN folding, weight reshape, Cout padding, bf16 cast."""
    strides = {"conv1": (1, 2), "conv2": (1, 2), "conv3": (1, 2), "conv4": (1, 2)}
    prepped = {}
    for name, (w, b, gamma, beta, rmean, rvar) in params.items():
        Cout, Cin, KH, KW = w.shape
        scale = gamma / jnp.sqrt(rvar + eps)                        # (Cout,)
        # (Cout,Cin,KH,KW) -> (KH*KW*Cin, Cout) matching im2col (kh,kw,cin).
        w2d = jnp.transpose(w, (2, 3, 1, 0)).reshape(KH * KW * Cin, Cout)
        w_eff = w2d * scale[None, :]                                # fold BN scale
        bias_eff = (b - rmean) * scale + beta                       # fold bias + BN shift
        Cpad = _round_up(Cout, 128)                                 # lane-dense output
        if Cpad != Cout:
            w_eff = jnp.pad(w_eff, ((0, 0), (0, Cpad - Cout)))
            bias_eff = jnp.pad(bias_eff, (0, Cpad - Cout))
        prepped[name] = {
            "w": w_eff.astype(jnp.bfloat16),                        # MXU-native
            "b": bias_eff.reshape(1, Cpad).astype(jnp.float32),
            "ksize": (KH, KW),
            "stride": strides[name],
            "cout": Cout,
        }
    return prepped


# --------------------------------- forward ----------------------------------

def conv_module_forward(x_nchw, prepped):
    x = jnp.transpose(x_nchw, (0, 2, 3, 1))              # NCHW -> NHWC
    x = conv_bn_relu(x, prepped["conv1"])                # conv1 + bn + relu
    x = conv_bn_relu(x, prepped["conv2"])                # conv2 + bn + relu
    x = max_pool_4x2(x)                                  # pool1
    # dropout0 (p=0.4): identity in inference.
    # TODO(synk): training-mode dropout masking and BatchNorm batch-statistics
    # are not implemented; eval-mode (running stats / identity dropout) used.
    x = conv_bn_relu(x, prepped["conv3"])                # conv3 + bn + relu
    x = conv_bn_relu(x, prepped["conv4"])                # conv4 + bn + relu
    # note: self.pool2 is defined in __init__ but never used in forward().
    return jnp.transpose(x, (0, 3, 1, 2))                # NHWC -> NCHW


# ----------------------------------- main ------------------------------------

if __name__ == "__main__":
    key = jax.random.PRNGKey(0)
    kx, kp = jax.random.split(key)

    # (N=2, C=1, H=24, W=112): smallest-ish input that survives all 4 convs +
    # the max-pool; final output is (2, 64, 3, 2).
    x = jax.random.normal(kx, (2, 1, 24, 112), jnp.float32)
    params = init_params(kp)
    prepped = prepare_params(params)                     # hoisted out of hot path

    fwd = jax.jit(lambda xi: conv_module_forward(xi, prepped))
    out = jax.block_until_ready(fwd(x))

    assert out.shape == (2, 64, 3, 2), out.shape
    assert out.dtype == jnp.float32
    assert bool(jnp.all(jnp.isfinite(out)))
    print("KERNEL_OK")
</pallas_src>

<mosaic_0001>
module attributes {stable_mosaic.version = 11 : i64} {
  func.func @_matmul_bias_relu_kernel(%arg0: i32, %arg1: i32, %arg2: memref<512x25xbf16, #tpu.memory_space<vmem>>, %arg3: memref<25x128xbf16, #tpu.memory_space<vmem>>, %arg4: memref<1x128xf32, #tpu.memory_space<vmem>>, %arg5: memref<512x128xf32, #tpu.memory_space<vmem>>) attributes {dimension_semantics = [#tpu.dimension_semantics<parallel>, #tpu.dimension_semantics<parallel>], iteration_bounds = array<i64: 5, 1>, scalar_prefetch = 0 : i64, scratch_operands = 0 : i64, tpu.core_type = #tpu.core_type<tc>, window_params = [{transform_indices = @transform_0, window_bounds = array<i64: 512, 25>}, {transform_indices = @transform_1, window_bounds = array<i64: 25, 128>}, {transform_indices = @transform_2, window_bounds = array<i64: 1, 128>}, {transform_indices = @transform_3, window_bounds = array<i64: 512, 128>}]} {
    %c0 = arith.constant 0 : index
    %c0_0 = arith.constant 0 : index
    %0 = vector.load %arg2[%c0, %c0_0] : memref<512x25xbf16, #tpu.memory_space<vmem>>, vector<512x25xbf16>
    %c0_1 = arith.constant 0 : index
    %c0_2 = arith.constant 0 : index
    %1 = vector.load %arg3[%c0_1, %c0_2] : memref<25x128xbf16, #tpu.memory_space<vmem>>, vector<25x128xbf16>
    %cst = arith.constant dense<0.000000e+00> : vector<512x128xf32>
    %2 = tpu.matmul %0, %1, %cst {dimension_numbers = #tpu.dot_dimension_numbers<[1], [0], [0], [1], [0, 0, 1, 1], [], []>} : vector<512x25xbf16>, vector<25x128xbf16>, vector<512x128xf32> -> vector<512x128xf32>
    %c0_3 = arith.constant 0 : index
    %c0_4 = arith.constant 0 : index
    %3 = vector.load %arg4[%c0_3, %c0_4] : memref<1x128xf32, #tpu.memory_space<vmem>>, vector<1x128xf32>
    %4 = vector.broadcast %3 : vector<1x128xf32> to vector<512x128xf32>
    %5 = arith.addf %2, %4 : vector<512x128xf32>
    %cst_5 = arith.constant 0.000000e+00 : f32
    %6 = vector.broadcast %cst_5 : f32 to vector<512x128xf32>
    %7 = arith.maximumf %5, %6 : vector<512x128xf32>
    %c0_6 = arith.constant 0 : index
    %c0_7 = arith.constant 0 : index
    %8 = vector.load %arg5[%c0_6, %c0_7] : memref<512x128xf32, #tpu.memory_space<vmem>>, vector<512x128xf32>
    tpu.vector_store %arg5[%c0_6, %c0_7], %7 {strides = array<i32>} : memref<512x128xf32, #tpu.memory_space<vmem>>, vector<512x128xf32>,
    return
  }
  func.func @transform_0(%arg0: i32, %arg1: i32) -> (i32, i32) {
    %c0_i32 = arith.constant 0 : i32
    %c0_i32_0 = arith.constant 0 : i32
    return %arg0, %c0_i32 : i32, i32
  }
  func.func @transform_1(%arg0: i32, %arg1: i32) -> (i32, i32) {
    %c0_i32 = arith.constant 0 : i32
    %c0_i32_0 = arith.constant 0 : i32
    return %c0_i32, %arg1 : i32, i32
  }
  func.func @transform_2(%arg0: i32, %arg1: i32) -> (i32, i32) {
    %c0_i32 = arith.constant 0 : i32
    %c0_i32_0 = arith.constant 0 : i32
    return %c0_i32, %arg1 : i32, i32
  }
  func.func @transform_3(%arg0: i32, %arg1: i32) -> (i32, i32) {
    %c0_i32 = arith.constant 0 : i32
    return %arg0, %arg1 : i32, i32
  }
}

module attributes {stable_mosaic.version = 11 : i64} {
  func.func @_matmul_bias_relu_kernel(%arg0: i32, %arg1: i32, %arg2: memref<512x1600xbf16, #tpu.memory_space<vmem>>, %arg3: memref<1600x128xbf16, #tpu.memory_space<vmem>>, %arg4: memref<1x128xf32, #tpu.memory_space<vmem>>, %arg5: memref<512x128xf32, #tpu.memory_space<vmem>>) attributes {dimension_semantics = [#tpu.dimension_semantics<parallel>, #tpu.dimension_semantics<parallel>], iteration_bounds = array<i64: 2, 1>, scalar_prefetch = 0 : i64, scratch_operands = 0 : i64, tpu.core_type = #tpu.core_type<tc>, window_params = [{transform_indices = @transform_0, window_bounds = array<i64: 512, 1600>}, {transform_indices = @transform_1, window_bounds = array<i64: 1600, 128>}, {transform_indices = @transform_2, window_bounds = array<i64: 1, 128>}, {transform_indices = @transform_3, window_bounds = array<i64: 512, 128>}]} {
    %c0 = arith.constant 0 : index
    %c0_0 = arith.constant 0 : index
    %0 = vector.load %arg2[%c0, %c0_0] : memref<512x1600xbf16, #tpu.memory_space<vmem>>, vector<512x1600xbf16>
    %c0_1 = arith.constant 0 : index
    %c0_2 = arith.constant 0 : index
    %1 = vector.load %arg3[%c0_1, %c0_2] : memref<1600x128xbf16, #tpu.memory_space<vmem>>, vector<1600x128xbf16>
    %cst = arith.constant dense<0.000000e+00> : vector<512x128xf32>
    %2 = tpu.matmul %0, %1, %cst {dimension_numbers = #tpu.dot_dimension_numbers<[1], [0], [0], [1], [0, 0, 1, 1], [], []>} : vector<512x1600xbf16>, vector<1600x128xbf16>, vector<512x128xf32> -> vector<512x128xf32>
    %c0_3 = arith.constant 0 : index
    %c0_4 = arith.constant 0 : index
    %3 = vector.load %arg4[%c0_3, %c0_4] : memref<1x128xf32, #tpu.memory_space<vmem>>, vector<1x128xf32>
    %4 = vector.broadcast %3 : vector<1x128xf32> to vector<512x128xf32>
    %5 = arith.addf %2, %4 : vector<512x128xf32>
    %cst_5 = arith.constant 0.000000e+00 : f32
    %6 = vector.broadcast %cst_5 : f32 to vector<512x128xf32>
    %7 = arith.maximumf %5, %6 : vector<512x128xf32>
    %c0_6 = arith.constant 0 : index
    %c0_7 = arith.constant 0 : index
    %8 = vector.load %arg5[%c0_6, %c0_7] : memref<512x128xf32, #tpu.memory_space<vmem>>, vector<512x128xf32>
    tpu.vector_store %arg5[%c0_6, %c0_7], %7 {strides = array<i32>} : memref<512x128xf32, #tpu.memory_space<vmem>>, vector<512x128xf32>,
    return
  }
  func.func @transform_0(%arg0: i32, %arg1: i32) -> (i32, i32) {
    %c0_i32 = arith.constant 0 : i32
    %c0_i32_0 = arith.constant 0 : i32
    return %arg0, %c0_i32 : i32, i32
  }
  func.func @transform_1(%arg0: i32, %arg1: i32) -> (i32, i32) {
    %c0_i32 = arith.constant 0 : i32
    %c0_i32_0 = arith.constant 0 : i32
    return %c0_i32, %arg1 : i32, i32
  }
  func.func @transform_2(%arg0: i32, %arg1: i32) -> (i32, i32) {
    %c0_i32 = arith.constant 0 : i32
    %c0_i32_0 = arith.constant 0 : i32
    return %c0_i32, %arg1 : i32, i32
  }
  func.func @transform_3(%arg0: i32, %arg1: i32) -> (i32, i32) {
    %c0_i32 = arith.constant 0 : i32
    return %arg0, %arg1 : i32, i32
  }
}

module attributes {stable_mosaic.version = 11 : i64} {
  func.func @_maxpool_4x2_kernel(%arg0: i32, %arg1: memref<2x8x13x128xf32, #tpu.memory_space<vmem>>, %arg2: memref<2x8x12x128xf32, #tpu.memory_space<vmem>>, %arg3: memref<2x8x13x128xf32, #tpu.memory_space<vmem>>, %arg4: memref<2x8x12x128xf32, #tpu.memory_space<vmem>>, %arg5: memref<2x7x11x128xf32, #tpu.memory_space<vmem>>) attributes {dimension_semantics = [#tpu.dimension_semantics<parallel>], iteration_bounds = array<i64: 1>, scalar_prefetch = 0 : i64, scratch_operands = 0 : i64, tpu.core_type = #tpu.core_type<tc>, window_params = [{transform_indices = @transform_0, window_bounds = array<i64: 2, 8, 13, 128>}, {transform_indices = @transform_1, window_bounds = array<i64: 2, 8, 12, 128>}, {transform_indices = @transform_2, window_bounds = array<i64: 2, 8, 13, 128>}, {transform_indices = @transform_3, window_bounds = array<i64: 2, 8, 12, 128>}, {transform_indices = @transform_4, window_bounds = array<i64: 2, 7, 11, 128>}]} {
    %c0 = arith.constant 0 : index
    %c0_0 = arith.constant 0 : index
    %c0_1 = arith.constant 0 : index
    %c0_2 = arith.constant 0 : index
    %0 = vector.load %arg1[%c0, %c0_0, %c0_1, %c0_2] : memref<2x8x13x128xf32, #tpu.memory_space<vmem>>, vector<2x8x13x128xf32>
    %1 = vector.extract_strided_slice %0 {offsets = [0, 0, 0, 0], sizes = [2, 7, 11, 128], strides = [1, 1, 1, 1]} : vector<2x8x13x128xf32> to vector<2x7x11x128xf32>
    %2 = vector.extract_strided_slice %0 {offsets = [0, 0, 1, 0], sizes = [2, 7, 11, 128], strides = [1, 1, 1, 1]} : vector<2x8x13x128xf32> to vector<2x7x11x128xf32>
    %3 = arith.maximumf %1, %2 : vector<2x7x11x128xf32>
    %4 = vector.extract_strided_slice %0 {offsets = [0, 1, 0, 0], sizes = [2, 7, 11, 128], strides = [1, 1, 1, 1]} : vector<2x8x13x128xf32> to vector<2x7x11x128xf32>
    %5 = vector.extract_strided_slice %0 {offsets = [0, 1, 1, 0], sizes = [2, 7, 11, 128], strides = [1, 1, 1, 1]} : vector<2x8x13x128xf32> to vector<2x7x11x128xf32>
    %6 = arith.maximumf %4, %5 : vector<2x7x11x128xf32>
    %7 = arith.maximumf %3, %6 : vector<2x7x11x128xf32>
    %c0_3 = arith.constant 0 : index
    %c0_4 = arith.constant 0 : index
    %c0_5 = arith.constant 0 : index
    %c0_6 = arith.constant 0 : index
    %8 = vector.load %arg2[%c0_3, %c0_4, %c0_5, %c0_6] : memref<2x8x12x128xf32, #tpu.memory_space<vmem>>, vector<2x8x12x128xf32>
    %9 = vector.extract_strided_slice %8 {offsets = [0, 0, 0, 0], sizes = [2, 7, 11, 128], strides = [1, 1, 1, 1]} : vector<2x8x12x128xf32> to vector<2x7x11x128xf32>
    %10 = vector.extract_strided_slice %8 {offsets = [0, 0, 1, 0], sizes = [2, 7, 11, 128], strides = [1, 1, 1, 1]} : vector<2x8x12x128xf32> to vector<2x7x11x128xf32>
    %11 = arith.maximumf %9, %10 : vector<2x7x11x128xf32>
    %12 = vector.extract_strided_slice %8 {offsets = [0, 1, 0, 0], sizes = [2, 7, 11, 128], strides = [1, 1, 1, 1]} : vector<2x8x12x128xf32> to vector<2x7x11x128xf32>
    %13 = vector.extract_strided_slice %8 {offsets = [0, 1, 1, 0], sizes = [2, 7, 11, 128], strides = [1, 1, 1, 1]} : vector<2x8x12x128xf32> to vector<2x7x11x128xf32>
    %14 = arith.maximumf %12, %13 : vector<2x7x11x128xf32>
    %15 = arith.maximumf %11, %14 : vector<2x7x11x128xf32>
    %16 = arith.maximumf %7, %15 : vector<2x7x11x128xf32>
    %c0_7 = arith.constant 0 : index
    %c0_8 = arith.constant 0 : index
    %c0_9 = arith.constant 0 : index
    %c0_10 = arith.constant 0 : index
    %17 = vector.load %arg3[%c0_7, %c0_8, %c0_9, %c0_10] : memref<2x8x13x128xf32, #tpu.memory_space<vmem>>, vector<2x8x13x128xf32>
    %18 = vector.extract_strided_slice %17 {offsets = [0, 0, 0, 0], sizes = [2, 7, 11, 128], strides = [1, 1, 1, 1]} : vector<2x8x13x128xf32> to vector<2x7x11x128xf32>
    %19 = vector.extract_strided_slice %17 {offsets = [0, 0, 1, 0], sizes = [2, 7, 11, 128], strides = [1, 1, 1, 1]} : vector<2x8x13x128xf32> to vector<2x7x11x128xf32>
    %20 = arith.maximumf %18, %19 : vector<2x7x11x128xf32>
    %21 = vector.extract_strided_slice %17 {offsets = [0, 1, 0, 0], sizes = [2, 7, 11, 128], strides = [1, 1, 1, 1]} : vector<2x8x13x128xf32> to vector<2x7x11x128xf32>
    %22 = vector.extract_strided_slice %17 {offsets = [0, 1, 1, 0], sizes = [2, 7, 11, 128], strides = [1, 1, 1, 1]} : vector<2x8x13x128xf32> to vector<2x7x11x128xf32>
    %23 = arith.maximumf %21, %22 : vector<2x7x11x128xf32>
    %24 = arith.maximumf %20, %23 : vector<2x7x11x128xf32>
    %c0_11 = arith.constant 0 : index
    %c0_12 = arith.constant 0 : index
    %c0_13 = arith.constant 0 : index
    %c0_14 = arith.constant 0 : index
    %25 = vector.load %arg4[%c0_11, %c0_12, %c0_13, %c0_14] : memref<2x8x12x128xf32, #tpu.memory_space<vmem>>, vector<2x8x12x128xf32>
    %26 = vector.extract_strided_slice %25 {offsets = [0, 0, 0, 0], sizes = [2, 7, 11, 128], strides = [1, 1, 1, 1]} : vector<2x8x12x128xf32> to vector<2x7x11x128xf32>
    %27 = vector.extract_strided_slice %25 {offsets = [0, 0, 1, 0], sizes = [2, 7, 11, 128], strides = [1, 1, 1, 1]} : vector<2x8x12x128xf32> to vector<2x7x11x128xf32>
    %28 = arith.maximumf %26, %27 : vector<2x7x11x128xf32>
    %29 = vector.extract_strided_slice %25 {offsets = [0, 1, 0, 0], sizes = [2, 7, 11, 128], strides = [1, 1, 1, 1]} : vector<2x8x12x128xf32> to vector<2x7x11x128xf32>
    %30 = vector.extract_strided_slice %25 {offsets = [0, 1, 1, 0], sizes = [2, 7, 11, 128], strides = [1, 1, 1, 1]} : vector<2x8x12x128xf32> to vector<2x7x11x128xf32>
    %31 = arith.maximumf %29, %30 : vector<2x7x11x128xf32>
    %32 = arith.maximumf %28, %31 : vector<2x7x11x128xf32>
    %33 = arith.maximumf %24, %32 : vector<2x7x11x128xf32>
    %34 = arith.maximumf %16, %33 : vector<2x7x11x128xf32>
    %c0_15 = arith.constant 0 : index
    %c0_16 = arith.constant 0 : index
    %c0_17 = arith.constant 0 : index
    %c0_18 = arith.constant 0 : index
    %35 = vector.load %arg5[%c0_15, %c0_16, %c0_17, %c0_18] : memref<2x7x11x128xf32, #tpu.memory_space<vmem>>, vector<2x7x11x128xf32>
    tpu.vector_store %arg5[%c0_15, %c0_16, %c0_17, %c0_18], %34 {strides = array<i32>} : memref<2x7x11x128xf32, #tpu.memory_space<vmem>>, vector<2x7x11x128xf32>,
    return
  }
  func.func @transform_0(%arg0: i32) -> (i32, i32, i32, i32) {
    %c0_i32 = arith.constant 0 : i32
    %c0_i32_0 = arith.constant 0 : i32
    %c0_i32_1 = arith.constant 0 : i32
    %c0_i32_2 = arith.constant 0 : i32
    return %c0_i32, %c0_i32_0, %c0_i32_1, %arg0 : i32, i32, i32, i32
  }
  func.func @transform_1(%arg0: i32) -> (i32, i32, i32, i32) {
    %c0_i32 = arith.constant 0 : i32
    %c0_i32_0 = arith.constant 0 : i32
    %c0_i32_1 = arith.constant 0 : i32
    %c0_i32_2 = arith.constant 0 : i32
    return %c0_i32, %c0_i32_0, %c0_i32_1, %arg0 : i32, i32, i32, i32
  }
  func.func @transform_2(%arg0: i32) -> (i32, i32, i32, i32) {
    %c0_i32 = arith.constant 0 : i32
    %c0_i32_0 = arith.constant 0 : i32
    %c0_i32_1 = arith.constant 0 : i32
    %c0_i32_2 = arith.constant 0 : i32
    return %c0_i32, %c0_i32_0, %c0_i32_1, %arg0 : i32, i32, i32, i32
  }
  func.func @transform_3(%arg0: i32) -> (i32, i32, i32, i32) {
    %c0_i32 = arith.constant 0 : i32
    %c0_i32_0 = arith.constant 0 : i32
    %c0_i32_1 = arith.constant 0 : i32
    %c0_i32_2 = arith.constant 0 : i32
    return %c0_i32, %c0_i32_0, %c0_i32_1, %arg0 : i32, i32, i32, i32
  }
  func.func @transform_4(%arg0: i32) -> (i32, i32, i32, i32) {
    %c0_i32 = arith.constant 0 : i32
    %c0_i32_0 = arith.constant 0 : i32
    %c0_i32_1 = arith.constant 0 : i32
    %c0_i32_2 = arith.constant 0 : i32
    return %c0_i32, %c0_i32_0, %c0_i32_1, %arg0 : i32, i32, i32, i32
  }
}

module attributes {stable_mosaic.version = 11 : i64} {
  func.func @_matmul_bias_relu_kernel(%arg0: i32, %arg1: i32, %arg2: memref<56x1152xbf16, #tpu.memory_space<vmem>>, %arg3: memref<1152x128xbf16, #tpu.memory_space<vmem>>, %arg4: memref<1x128xf32, #tpu.memory_space<vmem>>, %arg5: memref<56x128xf32, #tpu.memory_space<vmem>>) attributes {dimension_semantics = [#tpu.dimension_semantics<parallel>, #tpu.dimension_semantics<parallel>], iteration_bounds = array<i64: 1, 2>, scalar_prefetch = 0 : i64, scratch_operands = 0 : i64, tpu.core_type = #tpu.core_type<tc>, window_params = [{transform_indices = @transform_0, window_bounds = array<i64: 56, 1152>}, {transform_indices = @transform_1, window_bounds = array<i64: 1152, 128>}, {transform_indices = @transform_2, window_bounds = array<i64: 1, 128>}, {transform_indices = @transform_3, window_bounds = array<i64: 56, 128>}]} {
    %c0 = arith.constant 0 : index
    %c0_0 = arith.constant 0 : index
    %0 = vector.load %arg2[%c0, %c0_0] : memref<56x1152xbf16, #tpu.memory_space<vmem>>, vector<56x1152xbf16>
    %c0_1 = arith.constant 0 : index
    %c0_2 = arith.constant 0 : index
    %1 = vector.load %arg3[%c0_1, %c0_2] : memref<1152x128xbf16, #tpu.memory_space<vmem>>, vector<1152x128xbf16>
    %cst = arith.constant dense<0.000000e+00> : vector<56x128xf32>
    %2 = tpu.matmul %0, %1, %cst {dimension_numbers = #tpu.dot_dimension_numbers<[1], [0], [0], [1], [0, 0, 1, 1], [], []>} : vector<56x1152xbf16>, vector<1152x128xbf16>, vector<56x128xf32> -> vector<56x128xf32>
    %c0_3 = arith.constant 0 : index
    %c0_4 = arith.constant 0 : index
    %3 = vector.load %arg4[%c0_3, %c0_4] : memref<1x128xf32, #tpu.memory_space<vmem>>, vector<1x128xf32>
    %4 = vector.broadcast %3 : vector<1x128xf32> to vector<56x128xf32>
    %5 = arith.addf %2, %4 : vector<56x128xf32>
    %cst_5 = arith.constant 0.000000e+00 : f32
    %6 = vector.broadcast %cst_5 : f32 to vector<56x128xf32>
    %7 = arith.maximumf %5, %6 : vector<56x128xf32>
    %c0_6 = arith.constant 0 : index
    %c0_7 = arith.constant 0 : index
    %8 = vector.load %arg5[%c0_6, %c0_7] : memref<56x128xf32, #tpu.memory_space<vmem>>, vector<56x128xf32>
    tpu.vector_store %arg5[%c0_6, %c0_7], %7 {strides = array<i32>} : memref<56x128xf32, #tpu.memory_space<vmem>>, vector<56x128xf32>,
    return
  }
  func.func @transform_0(%arg0: i32, %arg1: i32) -> (i32, i32) {
    %c0_i32 = arith.constant 0 : i32
    %c0_i32_0 = arith.constant 0 : i32
    return %arg0, %c0_i32 : i32, i32
  }
  func.func @transform_1(%arg0: i32, %arg1: i32) -> (i32, i32) {
    %c0_i32 = arith.constant 0 : i32
    %c0_i32_0 = arith.constant 0 : i32
    return %c0_i32, %arg1 : i32, i32
  }
  func.func @transform_2(%arg0: i32, %arg1: i32) -> (i32, i32) {
    %c0_i32 = arith.constant 0 : i32
    %c0_i32_0 = arith.constant 0 : i32
    return %c0_i32, %arg1 : i32, i32
  }
  func.func @transform_3(%arg0: i32, %arg1: i32) -> (i32, i32) {
    %c0_i32 = arith.constant 0 : i32
    return %arg0, %arg1 : i32, i32
  }
}

module attributes {stable_mosaic.version = 11 : i64} {
  func.func @_matmul_bias_relu_kernel(%arg0: i32, %arg1: i32, %arg2: memref<16x2304xbf16, #tpu.memory_space<vmem>>, %arg3: memref<2304x128xbf16, #tpu.memory_space<vmem>>, %arg4: memref<1x128xf32, #tpu.memory_space<vmem>>, %arg5: memref<16x128xf32, #tpu.memory_space<vmem>>) attributes {dimension_semantics = [#tpu.dimension_semantics<parallel>, #tpu.dimension_semantics<parallel>], iteration_bounds = array<i64: 1, 1>, scalar_prefetch = 0 : i64, scratch_operands = 0 : i64, tpu.core_type = #tpu.core_type<tc>, window_params = [{transform_indices = @transform_0, window_bounds = array<i64: 16, 2304>}, {transform_indices = @transform_1, window_bounds = array<i64: 2304, 128>}, {transform_indices = @transform_2, window_bounds = array<i64: 1, 128>}, {transform_indices = @transform_3, window_bounds = array<i64: 16, 128>}]} {
    %c0 = arith.constant 0 : index
    %c0_0 = arith.constant 0 : index
    %0 = vector.load %arg2[%c0, %c0_0] : memref<16x2304xbf16, #tpu.memory_space<vmem>>, vector<16x2304xbf16>
    %c0_1 = arith.constant 0 : index
    %c0_2 = arith.constant 0 : index
    %1 = vector.load %arg3[%c0_1, %c0_2] : memref<2304x128xbf16, #tpu.memory_space<vmem>>, vector<2304x128xbf16>
    %cst = arith.constant dense<0.000000e+00> : vector<16x128xf32>
    %2 = tpu.matmul %0, %1, %cst {dimension_numbers = #tpu.dot_dimension_numbers<[1], [0], [0], [1], [0, 0, 1, 1], [], []>} : vector<16x2304xbf16>, vector<2304x128xbf16>, vector<16x128xf32> -> vector<16x128xf32>
    %c0_3 = arith.constant 0 : index
    %c0_4 = arith.constant 0 : index
    %3 = vector.load %arg4[%c0_3, %c0_4] : memref<1x128xf32, #tpu.memory_space<vmem>>, vector<1x128xf32>
    %4 = vector.broadcast %3 : vector<1x128xf32> to vector<16x128xf32>
    %5 = arith.addf %2, %4 : vector<16x128xf32>
    %cst_5 = arith.constant 0.000000e+00 : f32
    %6 = vector.broadcast %cst_5 : f32 to vector<16x128xf32>
    %7 = arith.maximumf %5, %6 : vector<16x128xf32>
    %c0_6 = arith.constant 0 : index
    %c0_7 = arith.constant 0 : index
    %8 = vector.load %arg5[%c0_6, %c0_7] : memref<16x128xf32, #tpu.memory_space<vmem>>, vector<16x128xf32>
    tpu.vector_store %arg5[%c0_6, %c0_7], %7 {strides = array<i32>} : memref<16x128xf32, #tpu.memory_space<vmem>>, vector<16x128xf32>,
    return
  }
  func.func @transform_0(%arg0: i32, %arg1: i32) -> (i32, i32) {
    %c0_i32 = arith.constant 0 : i32
    %c0_i32_0 = arith.constant 0 : i32
    return %arg0, %c0_i32 : i32, i32
  }
  func.func @transform_1(%arg0: i32, %arg1: i32) -> (i32, i32) {
    %c0_i32 = arith.constant 0 : i32
    %c0_i32_0 = arith.constant 0 : i32
    return %c0_i32, %arg1 : i32, i32
  }
  func.func @transform_2(%arg0: i32, %arg1: i32) -> (i32, i32) {
    %c0_i32 = arith.constant 0 : i32
    %c0_i32_0 = arith.constant 0 : i32
    return %c0_i32, %arg1 : i32, i32
  }
  func.func @transform_3(%arg0: i32, %arg1: i32) -> (i32, i32) {
    %c0_i32 = arith.constant 0 : i32
    return %arg0, %arg1 : i32, i32
  }
}

</mosaic_0001>

<llo_original>
// kernel: _lambda_.5
$region0: #{_lambda_.5}
  #allocation0 [shape = 'u32[]', space=smem, size = 0x4, offset = 0x4, fixed_abs, tag = 'smem constant byte address 0x4 - core index']
  #allocation1 [shape = 'u32[144,128]{1,0:T(1,128)}', space=vmem, size = 0x12000, scoped, tag = 'internal scratch']
  %s0 = inlined_call_operand.vmem [shape: bf16[2560,25], index: 0, kind: input, shape index: {}]
  %s1 = inlined_call_operand.hbm [shape: bf16[25,128], index: 1, kind: input, shape index: {}]
  %s2 = inlined_call_operand.hbm [shape: f32[1,128], index: 2, kind: input, shape index: {}]
  %s3 = inlined_call_operand.vmem [shape: f32[2560,128], index: 3, kind: output, shape index: {}]
  %s4 = sld [smem:[#allocation0]]
  $region53: #{_lambda_.5} parent=0
    _
  %s6 = ssub.s32 1, %s4
  %s7 = scalar_select 0, %s6, %s4
  $region1: #{_lambda_.5} parent=0
    #allocation2 [shape = 'u8[8192]{0}', space=vmem, size = 0x2000, scoped, tag = 'input window, operand 1, single buffered']
    #allocation3 [shape = 's32[2]{0}', space=sflag, size = 0x8, scoped, tag = 'scoped memory for _lambda_.5']
    #allocation4 [shape = 'u8[512]{0}', space=vmem, size = 0x400, scoped, tag = 'input window, operand 2, single buffered']
    #allocation5 [shape = 's32[1]{0}', space=sflag, size = 0x4, scoped, tag = 'scoped memory for _lambda_.5']
    %8 = vsyncpa [#allocation3], 0
    %9 = vsyncpa [#allocation5], 0
    loop: start=0, step=1, limit=7
    $region2: #{_lambda_.5} parent=1 // loop_pre_header
      _
    $region3: #{_lambda_.5} parent=1 // loop_header
      %s11 = sphi 0, %s15
      %p12 = scmp.ge.s32.totalorder %s11, 7
      %s18 = sphi 0, %s30
      %s19 = sphi 0, %s26
      %s20 = sphi 0, %s18
      %s21 = sphi 0, %s19
      %s22 = sphi 0, %s20
      %s23 = sphi 0, %s21
      %s33 = sphi 0, %s35
      %s36 = sphi 0, %s33
      %s37 = sphi 0, %s36
      %s53 = sphi 0, %s37
      %s59 = sphi 0, %s61
      %s62 = sphi 0, %s59
      %s63 = sphi 0, %s62
      %s79 = sphi 0, %s63
      %s85 = sphi 0, %s87
      %s88 = sphi 0, %s85
      %s89 = sphi 0, %s88
      %s105 = sphi 0, %s89
      %s113 = sphi 0, %s115
      %s116 = sphi 0, %s113
      %s117 = sphi 0, %s116
      %s133 = sphi 0, %s117
    $region4: #{_lambda_.5} parent=1 // loop_header_branch
      %14 = sbr.rel (%p12) target = $region8
    $region5: #{_lambda_.5} parent=1 // loop_body
      %s16 = ssub.s32 %s11, 1
      %s17 = ssub.s32 %s11, 2
      %s24 = sadd.s32 1, %s19
      %p25 = scmp.ge.s32.totalorder %s24, 1
      %s26 = scalar_select %p25, 0, %s24
      %s27 = sadd.s32 1, %s18
      %s28 = scalar_select %p25, %s27, %s18
      %p29 = scmp.ge.s32.totalorder %s28, 5
      %s30 = scalar_select %p29, 0, %s28
      %s31 = ssub.s32 %s18, %s30
      %p32 = scmp.eq.s32.totalorder %s31, 0
      %s34 = sadd.s32 %s33, 1
      %s35 = scalar_select %p32, %s33, %s34
      %p38 = pneg %p32
      %p39 = scmp.eq.s32.totalorder %s11, 4
      %p40 = por %p38, %p39
      %p41 = scmp.ne.s32.totalorder %s33, %s36
      %p42 = scmp.eq.s32.totalorder %s11, 0
      %p43 = por %p41, %p42
      %p44 = scmp.ne.s32.totalorder %s33, %s36
      %p45 = scmp.eq.s32.totalorder %s16, 4
      %p46 = por %p44, %p45
      %p47 = scmp.ne.s32.totalorder %s36, %s37
      %p48 = scmp.eq.s32.totalorder %s16, 0
      %p49 = por %p47, %p48
      %p50 = scmp.ne.s32.totalorder %s36, %s37
      %p51 = scmp.eq.s32.totalorder %s17, 4
      %p52 = por %p50, %p51
      %p54 = scmp.ne.s32.totalorder %s37, %s53
      %p55 = scmp.eq.s32.totalorder %s17, 0
      %p56 = por %p54, %p55
      %s57 = ssub.s32 %s19, %s26
      %p58 = scmp.eq.s32.totalorder %s57, 0
      %s60 = sadd.s32 %s59, 1
      %s61 = scalar_select %p58, %s59, %s60
      %p64 = pneg %p58
      %p65 = scmp.eq.s32.totalorder %s11, 4
      %p66 = por %p64, %p65
      %p67 = scmp.ne.s32.totalorder %s59, %s62
      %p68 = scmp.eq.s32.totalorder %s11, 0
      %p69 = por %p67, %p68
      %p70 = scmp.ne.s32.totalorder %s59, %s62
      %p71 = scmp.eq.s32.totalorder %s16, 4
      %p72 = por %p70, %p71
      %p73 = scmp.ne.s32.totalorder %s62, %s63
      %p74 = scmp.eq.s32.totalorder %s16, 0
      %p75 = por %p73, %p74
      %p76 = scmp.ne.s32.totalorder %s62, %s63
      %p77 = scmp.eq.s32.totalorder %s17, 4
      %p78 = por %p76, %p77
      %p80 = scmp.ne.s32.totalorder %s63, %s79
      %p81 = scmp.eq.s32.totalorder %s17, 0
      %p82 = por %p80, %p81
      %s83 = ssub.s32 %s19, %s26
      %p84 = scmp.eq.s32.totalorder %s83, 0
      %s86 = sadd.s32 %s85, 1
      %s87 = scalar_select %p84, %s85, %s86
      %p90 = pneg %p84
      %p91 = scmp.eq.s32.totalorder %s11, 4
      %p92 = por %p90, %p91
      %p93 = scmp.ne.s32.totalorder %s85, %s88
      %p94 = scmp.eq.s32.totalorder %s11, 0
      %p95 = por %p93, %p94
      %p96 = scmp.ne.s32.totalorder %s85, %s88
      %p97 = scmp.eq.s32.totalorder %s16, 4
      %p98 = por %p96, %p97
      %p99 = scmp.ne.s32.totalorder %s88, %s89
      %p100 = scmp.eq.s32.totalorder %s16, 0
      %p101 = por %p99, %p100
      %p102 = scmp.ne.s32.totalorder %s88, %s89
      %p103 = scmp.eq.s32.totalorder %s17, 4
      %p104 = por %p102, %p103
      %p106 = scmp.ne.s32.totalorder %s89, %s105
      %p107 = scmp.eq.s32.totalorder %s17, 0
      %p108 = por %p106, %p107
      %s109 = ssub.s32 %s18, %s30
      %s110 = ssub.s32 %s19, %s26
      %s111 = sor.u32 %s109, %s110
      %p112 = scmp.eq.s32.totalorder %s111, 0
      %s114 = sadd.s32 %s113, 1
      %s115 = scalar_select %p112, %s113, %s114
      %p118 = pneg %p112
      %p119 = scmp.eq.s32.totalorder %s11, 4
      %p120 = por %p118, %p119
      %p121 = scmp.ne.s32.totalorder %s113, %s116
      %p122 = scmp.eq.s32.totalorder %s11, 0
      %p123 = por %p121, %p122
      %p124 = scmp.ne.s32.totalorder %s113, %s116
      %p125 = scmp.eq.s32.totalorder %s16, 4
      %p126 = por %p124, %p125
      %p127 = scmp.ne.s32.totalorder %s116, %s117
      %p128 = scmp.eq.s32.totalorder %s16, 0
      %p129 = por %p127, %p128
      %p130 = scmp.ne.s32.totalorder %s116, %s117
      %p131 = scmp.eq.s32.totalorder %s17, 4
      %p132 = por %p130, %p131
      %p134 = scmp.ne.s32.totalorder %s117, %s133
      %p135 = scmp.eq.s32.totalorder %s17, 0
      %p136 = por %p134, %p135
      %p137 = scmp.le.s32.totalorder 1, %s11
      %p138 = scmp.lt.s32.totalorder %s11, 6
      %p139 = pnand %p137, %p138
      %p140 = pneg %p139
      // Predicated region
      $region9: #{_lambda_.5} parent=5 // pred_check
        _
      $region10: #{_lambda_.5} parent=5 // pred_check_branch
        %142 = sbr.rel (%p139) target = $region12
      $region11: #{_lambda_.5} parent=5 // pred_region
        %s143 = ssub.s32 %s11, 1
        // Predicated region
        $region13: #{_lambda_.5} parent=11 // pred_check
          %p144 = pneg %p75
        $region14: #{_lambda_.5} parent=11 // pred_check_branch
          %146 = sbr.rel (%p144) target = $region16
        $region15: #{_lambda_.5} parent=11 // pred_region
          %s148 = ssub.s32 256, 256
          %149 = vsyncadd [#allocation3], %s148
          %s150 = smul.addr %s21, 64
          %s151 = scalar_lea.hbm %s1, %s150
          %s152 = sshll.u32 [#allocation2], 4
          %s153 = int_to_ptr.vmem [resolvable:$true] %s152
          %158 = dma.hbm_to_vmem [thread:$0]  %s151, 256, %s153, [#allocation3], 64, 64, 4
        $region16: #{_lambda_.5} parent=11 // pred_fallthru
          _
        // Predicated region
        $region17: #{_lambda_.5} parent=11 // pred_check
          %p159 = pneg %p101
        $region18: #{_lambda_.5} parent=11 // pred_check_branch
          %161 = sbr.rel (%p159) target = $region20
        $region19: #{_lambda_.5} parent=11 // pred_region
          %s163 = ssub.s32 16, 16
          %164 = vsyncadd [#allocation5], %s163
          %s165 = smul.addr %s21, 16
          %s166 = scalar_lea.hbm %s2, %s165
          %s168 = sshll.u32 [#allocation4], 4
          %s169 = int_to_ptr.vmem [resolvable:$true] %s168
          %171 = dma.hbm_to_vmem [thread:$0]  %s166, 16, %s169, [#allocation5]
        $region20: #{_lambda_.5} parent=11 // pred_fallthru
          _
      $region12: #{_lambda_.5} parent=5 // pred_fallthru
        _
      %p172 = scmp.lt.s32.totalorder %s11, 5
      // Predicated region
      $region21: #{_lambda_.5} parent=5 // pred_check
        %p173 = pneg %p172
      $region22: #{_lambda_.5} parent=5 // pred_check_branch
        %175 = sbr.rel (%p173) target = $region24
      $region23: #{_lambda_.5} parent=5 // pred_region
        // Predicated region
        $region25: #{_lambda_.5} parent=23 // pred_check
          %p176 = pneg %p43
        $region26: #{_lambda_.5} parent=23 // pred_check_branch
          %178 = sbr.rel (%p176) target = $region28
        $region27: #{_lambda_.5} parent=23 // pred_region
          %s179 = smul.u32 64, %s18
          %p180 = scmp.lt.s32.totalorder %s179, 319
          %s181 = scalar_select %p180, %s179, 319
          %s182 = smul.addr %s181, 4
          %s183 = scalar_lea.vmem %s0, %s182
          %s184 = smul.u32 64, %s18
        $region28: #{_lambda_.5} parent=23 // pred_fallthru
          _
      $region24: #{_lambda_.5} parent=5 // pred_fallthru
        _
      %p185 = scmp.le.s32.totalorder 1, %s11
      %p186 = scmp.lt.s32.totalorder %s11, 6
      %p187 = pnand %p185, %p186
      %p188 = pneg %p187
      // Predicated region
      $region29: #{_lambda_.5} parent=5 // pred_check
        _
      $region30: #{_lambda_.5} parent=5 // pred_check_branch
        %190 = sbr.rel (%p187) target = $region32
      $region31: #{_lambda_.5} parent=5 // pred_region
        %s191 = ssub.s32 %s11, 1
        // Predicated region
        $region33: #{_lambda_.5} parent=31 // pred_check
          %p192 = pneg %p75
        $region34: #{_lambda_.5} parent=31 // pred_check_branch
          %194 = sbr.rel (%p192) target = $region36
        $region35: #{_lambda_.5} parent=31 // pred_region
          %195 = dma.done [#allocation3], 256
        $region36: #{_lambda_.5} parent=31 // pred_fallthru
          _
        // Predicated region
        $region37: #{_lambda_.5} parent=31 // pred_check
          %p196 = pneg %p101
        $region38: #{_lambda_.5} parent=31 // pred_check_branch
          %198 = sbr.rel (%p196) target = $region40
        $region39: #{_lambda_.5} parent=31 // pred_region
          %199 = dma.done [#allocation5], 16
        $region40: #{_lambda_.5} parent=31 // pred_fallthru
          _
        %s200 = smul.u32 64, %s20
        %p201 = scmp.lt.s32.totalorder %s200, 319
        %s202 = scalar_select %p201, %s200, 319
        %s203 = smul.addr %s202, 4
        %s204 = scalar_lea.vmem %s0, %s203
        %p205 = pneg %p49
        %p206 = pneg %p46
        %p207 = pneg %p75
        %p208 = pneg %p72
        %p209 = pneg %p101
        %p210 = pneg %p98
        %p211 = pneg %p129
        %p212 = pneg %p126
        %s213 = smul.u32 64, %s20
        %p214 = scmp.lt.s32.totalorder %s213, 319
        %s215 = scalar_select %p214, %s213, 319
        %p216 = scmp.lt.s32.totalorder %s21, 0
        %s217 = scalar_select %p216, %s21, 0
        %s218 = sadd.s32 %s217, %s215
        %s219 = smul.addr %s218, 8
        %s220 = scalar_lea.vmem %s3, %s219
        %s221 = smul.u32 64, %s20
        %p222 = scmp.lt.s32.totalorder %s221, 319
        %s223 = scalar_select %p222, %s221, 319
        %s224 = smul.addr %s223, 4
        %s225 = scalar_lea.vmem %s0, %s224
        %s226 = smul.u32 64, %s20
        %s227 = smul.u32 64, %s20
        %p228 = scmp.lt.s32.totalorder %s227, 319
        %s229 = scalar_select %p228, %s227, 319
        %p230 = scmp.lt.s32.totalorder %s21, 0
        %s231 = scalar_select %p230, %s21, 0
        %s232 = sadd.s32 %s231, %s229
        %s233 = smul.addr %s232, 8
        %s234 = scalar_lea.vmem %s3, %s233
        %s235 = smul.u32 64, %s20
        %v237 = vld [vmem:[%s225] sm:$0xf]
        %v238 = vld [vmem:[%s225 + $0x4] sm:$0xf]
        %v239 = vld [vmem:[%s225 + $0x8] sm:$0xf]
        %v240 = vld [vmem:[%s225 + $0xc] sm:$0xf]
        %v241 = vld [vmem:[%s225 + $0x10] sm:$0xf]
        %v242 = vld [vmem:[%s225 + $0x14] sm:$0xf]
        %v243 = vld [vmem:[%s225 + $0x18] sm:$0xf]
        %v244 = vld [vmem:[%s225 + $0x1c] sm:$0xf]
        %v245 = vld [vmem:[%s225 + $0x20] sm:$0xf]
        %v246 = vld [vmem:[%s225 + $0x24] sm:$0xf]
        %v247 = vld [vmem:[%s225 + $0x28] sm:$0xf]
        %v248 = vld [vmem:[%s225 + $0x2c] sm:$0xf]
        %v249 = vld [vmem:[%s225 + $0x30] sm:$0xf]
        %v250 = vld [vmem:[%s225 + $0x34] sm:$0xf]
        %v251 = vld [vmem:[%s225 + $0x38] sm:$0xf]
        %v252 = vld [vmem:[%s225 + $0x3c] sm:$0xf]
        %v253 = vld [vmem:[%s225 + $0x40] sm:$0xf]
        %v254 = vld [vmem:[%s225 + $0x44] sm:$0xf]
        %v255 = vld [vmem:[%s225 + $0x48] sm:$0xf]
        %v256 = vld [vmem:[%s225 + $0x4c] sm:$0xf]
        %v257 = vld [vmem:[%s225 + $0x50] sm:$0xf]
        %v258 = vld [vmem:[%s225 + $0x54] sm:$0xf]
        %v259 = vld [vmem:[%s225 + $0x58] sm:$0xf]
        %v260 = vld [vmem:[%s225 + $0x5c] sm:$0xf]
        %v261 = vld [vmem:[%s225 + $0x60] sm:$0xf]
        %v262 = vld [vmem:[%s225 + $0x64] sm:$0xf]
        %v263 = vld [vmem:[%s225 + $0x68] sm:$0xf]
        %v264 = vld [vmem:[%s225 + $0x6c] sm:$0xf]
        %v265 = vld [vmem:[%s225 + $0x70] sm:$0xf]
        %v266 = vld [vmem:[%s225 + $0x74] sm:$0xf]
        %v267 = vld [vmem:[%s225 + $0x78] sm:$0xf]
        %v268 = vld [vmem:[%s225 + $0x7c] sm:$0xf]
        %v269 = vld [vmem:[%s225 + $0x80] sm:$0xf]
        %v270 = vld [vmem:[%s225 + $0x84] sm:$0xf]
        %v271 = vld [vmem:[%s225 + $0x88] sm:$0xf]
        %v272 = vld [vmem:[%s225 + $0x8c] sm:$0xf]
        %v273 = vld [vmem:[%s225 + $0x90] sm:$0xf]
        %v274 = vld [vmem:[%s225 + $0x94] sm:$0xf]
        %v275 = vld [vmem:[%s225 + $0x98] sm:$0xf]
        %v276 = vld [vmem:[%s225 + $0x9c] sm:$0xf]
        %v277 = vld [vmem:[%s225 + $0xa0] sm:$0xf]
        %v278 = vld [vmem:[%s225 + $0xa4] sm:$0xf]
        %v279 = vld [vmem:[%s225 + $0xa8] sm:$0xf]
        %v280 = vld [vmem:[%s225 + $0xac] sm:$0xf]
        %v281 = vld [vmem:[%s225 + $0xb0] sm:$0xf]
        %v282 = vld [vmem:[%s225 + $0xb4] sm:$0xf]
        %v283 = vld [vmem:[%s225 + $0xb8] sm:$0xf]
        %v284 = vld [vmem:[%s225 + $0xbc] sm:$0xf]
        %v285 = vld [vmem:[%s225 + $0xc0] sm:$0xf]
        %v286 = vld [vmem:[%s225 + $0xc4] sm:$0xf]
        %v287 = vld [vmem:[%s225 + $0xc8] sm:$0xf]
        %v288 = vld [vmem:[%s225 + $0xcc] sm:$0xf]
        %v289 = vld [vmem:[%s225 + $0xd0] sm:$0xf]
        %v290 = vld [vmem:[%s225 + $0xd4] sm:$0xf]
        %v291 = vld [vmem:[%s225 + $0xd8] sm:$0xf]
        %v292 = vld [vmem:[%s225 + $0xdc] sm:$0xf]
        %v293 = vld [vmem:[%s225 + $0xe0] sm:$0xf]
        %v294 = vld [vmem:[%s225 + $0xe4] sm:$0xf]
        %v295 = vld [vmem:[%s225 + $0xe8] sm:$0xf]
        %v296 = vld [vmem:[%s225 + $0xec] sm:$0xf]
        %v297 = vld [vmem:[%s225 + $0xf0] sm:$0xf]
        %v298 = vld [vmem:[%s225 + $0xf4] sm:$0xf]
        %v299 = vld [vmem:[%s225 + $0xf8] sm:$0xf]
        %v300 = vld [vmem:[%s225 + $0xfc] sm:$0xf]
        %v301 = vld [vmem:[#allocation2] sm:$0xf]
        %v302 = vld [vmem:[#allocation2 + $0x4] sm:$0xf]
        %v303 = vld [vmem:[#allocation2 + $0x8] sm:$0xf]
        %v304 = vld [vmem:[#allocation2 + $0xc] sm:$0x1]
        %v305 = vld [vmem:[#allocation4] sm:$0x1]
        %v307 = vlaneseq
        %v308 = vshrl.u32 %v307, 7
        %v309 = vsub.s32 0, %v308
        %v310 = vrot.slane %v305, %v309
        %v376 = vunpack.c.l.b16 %v237
        %v377 = vunpack.c.l.b16 %v238
        %v378 = vunpack.c.l.b16 %v239
        %v379 = vunpack.c.l.b16 %v240
        %v380 = vunpack.c.l.b16 %v241
        %v381 = vunpack.c.l.b16 %v242
        %v382 = vunpack.c.l.b16 %v243
        %v383 = vunpack.c.l.b16 %v244
        %v384 = vunpack.c.l.b16 %v245
        %v385 = vunpack.c.l.b16 %v246
        %v386 = vunpack.c.l.b16 %v247
        %v387 = vunpack.c.l.b16 %v248
        %v388 = vunpack.c.l.b16 %v249
        %v389 = vunpack.c.l.b16 %v250
        %v390 = vunpack.c.l.b16 %v251
        %v391 = vunpack.c.l.b16 %v252
        %v392 = vunpack.c.l.b16 %v253
        %v393 = vunpack.c.l.b16 %v254
        %v394 = vunpack.c.l.b16 %v255
        %v395 = vunpack.c.l.b16 %v256
        %v396 = vunpack.c.l.b16 %v257
        %v397 = vunpack.c.l.b16 %v258
        %v398 = vunpack.c.l.b16 %v259
        %v399 = vunpack.c.l.b16 %v260
        %v400 = vunpack.c.l.b16 %v261
        %v401 = vunpack.c.l.b16 %v262
        %v402 = vunpack.c.l.b16 %v263
        %v403 = vunpack.c.l.b16 %v264
        %v404 = vunpack.c.l.b16 %v265
        %v405 = vunpack.c.l.b16 %v266
        %v406 = vunpack.c.l.b16 %v267
        %v407 = vunpack.c.l.b16 %v268
        %v408 = vunpack.c.l.b16 %v269
        %v409 = vunpack.c.l.b16 %v270
        %v410 = vunpack.c.l.b16 %v271
        %v411 = vunpack.c.l.b16 %v272
        %v412 = vunpack.c.l.b16 %v273
        %v413 = vunpack.c.l.b16 %v274
        %v414 = vunpack.c.l.b16 %v275
        %v415 = vunpack.c.l.b16 %v276
        %v416 = vunpack.c.l.b16 %v277
        %v417 = vunpack.c.l.b16 %v278
        %v418 = vunpack.c.l.b16 %v279
        %v419 = vunpack.c.l.b16 %v280
        %v420 = vunpack.c.l.b16 %v281
        %v421 = vunpack.c.l.b16 %v282
        %v422 = vunpack.c.l.b16 %v283
        %v423 = vunpack.c.l.b16 %v284
        %v424 = vunpack.c.l.b16 %v285
        %v425 = vunpack.c.l.b16 %v286
        %v426 = vunpack.c.l.b16 %v287
        %v427 = vunpack.c.l.b16 %v288
        %v428 = vunpack.c.l.b16 %v289
        %v429 = vunpack.c.l.b16 %v290
        %v430 = vunpack.c.l.b16 %v291
        %v431 = vunpack.c.l.b16 %v292
        %v432 = vunpack.c.l.b16 %v293
        %v433 = vunpack.c.l.b16 %v294
        %v434 = vunpack.c.l.b16 %v295
        %v435 = vunpack.c.l.b16 %v296
        %v436 = vunpack.c.l.b16 %v297
        %v437 = vunpack.c.l.b16 %v298
        %v438 = vunpack.c.l.b16 %v299
        %v439 = vunpack.c.l.b16 %v300
        %v440 = vpack.c.b16 %v377, %v376
        %v441 = vpack.c.b16 %v379, %v378
        %v442 = vpack.c.b16 %v381, %v380
        %v443 = vpack.c.b16 %v383, %v382
        %v444 = vpack.c.b16 %v385, %v384
        %v445 = vpack.c.b16 %v387, %v386
        %v446 = vpack.c.b16 %v389, %v388
        %v447 = vpack.c.b16 %v391, %v390
        %v448 = vpack.c.b16 %v393, %v392
        %v449 = vpack.c.b16 %v395, %v394
        %v450 = vpack.c.b16 %v397, %v396
        %v451 = vpack.c.b16 %v399, %v398
        %v452 = vpack.c.b16 %v401, %v400
        %v453 = vpack.c.b16 %v403, %v402
        %v454 = vpack.c.b16 %v405, %v404
        %v455 = vpack.c.b16 %v407, %v406
        %v456 = vpack.c.b16 %v409, %v408
        %v457 = vpack.c.b16 %v411, %v410
        %v458 = vpack.c.b16 %v413, %v412
        %v459 = vpack.c.b16 %v415, %v414
        %v460 = vpack.c.b16 %v417, %v416
        %v461 = vpack.c.b16 %v419, %v418
        %v462 = vpack.c.b16 %v421, %v420
        %v463 = vpack.c.b16 %v423, %v422
        %v464 = vpack.c.b16 %v425, %v424
        %v465 = vpack.c.b16 %v427, %v426
        %v466 = vpack.c.b16 %v429, %v428
        %v467 = vpack.c.b16 %v431, %v430
        %v468 = vpack.c.b16 %v433, %v432
        %v469 = vpack.c.b16 %v435, %v434
        %v470 = vpack.c.b16 %v437, %v436
        %v471 = vpack.c.b16 %v439, %v438
        %v476 = vunpack.c.l.b16 %v301
        %v477 = vunpack.c.l.b16 %v302
        %v478 = vunpack.c.l.b16 %v303
        %v479 = vunpack.c.l.b16 %v304
        %v480 = vpack.c.b16 %v477, %v476
        %v481 = vpack.c.b16 %v479, %v478
        %vm483 = vcmask 203776
        %v485 = vsel %vm483, %v440, 0
        %v488 = vsel %vm483, %v441, 0
        %v491 = vsel %vm483, %v442, 0
        %v494 = vsel %vm483, %v443, 0
        %v497 = vsel %vm483, %v444, 0
        %v500 = vsel %vm483, %v445, 0
        %v503 = vsel %vm483, %v446, 0
        %v506 = vsel %vm483, %v447, 0
        %v509 = vsel %vm483, %v448, 0
        %v512 = vsel %vm483, %v449, 0
        %v515 = vsel %vm483, %v450, 0
        %v518 = vsel %vm483, %v451, 0
        %v521 = vsel %vm483, %v452, 0
        %v524 = vsel %vm483, %v453, 0
        %v527 = vsel %vm483, %v454, 0
        %v530 = vsel %vm483, %v455, 0
        %v533 = vsel %vm483, %v456, 0
        %v536 = vsel %vm483, %v457, 0
        %v539 = vsel %vm483, %v458, 0
        %v542 = vsel %vm483, %v459, 0
        %v545 = vsel %vm483, %v460, 0
        %v548 = vsel %vm483, %v461, 0
        %v551 = vsel %vm483, %v462, 0
        %v554 = vsel %vm483, %v463, 0
        %v557 = vsel %vm483, %v464, 0
        %v560 = vsel %vm483, %v465, 0
        %v563 = vsel %vm483, %v466, 0
        %v566 = vsel %vm483, %v467, 0
        %v569 = vsel %vm483, %v468, 0
        %v572 = vsel %vm483, %v469, 0
        %v575 = vsel %vm483, %v470, 0
        %v578 = vsel %vm483, %v471, 0
        %vm580 = vcmask 1043456
        %vm581 = vcmask 1044480
        %v582 = vsel %vm580, 4294967295, 65535
        %v583 = vsel %vm581, %v582, 0
        %v585 = vand.u32 %v481, %v583
        %587 = vmatprep.subr.bf16.mxu0 0
        %588 = vmatpush1.bf16.msra.mxu0 0
        %589 = vmatprep.subr.bf16.mxu0 0
        %590 = vmatpush1.bf16.msra.mxu0 0
        %591 = vmatprep.subr.bf16.mxu0 0
        %592 = vmatpush1.bf16.msra.mxu0 0
        %593 = vmatprep.subr.bf16.mxu0 0
        %594 = vmatpush1.bf16.msra.mxu0 0
        %595 = vmatprep.subr.bf16.mxu0 0
        %596 = vmatpush1.bf16.msra.mxu0 0
        %597 = vmatprep.subr.bf16.mxu0 0
        %598 = vmatpush1.bf16.msra.mxu0 0
        %599 = vmatprep.subr.bf16.mxu0 0
        %600 = vmatpush1.bf16.msra.mxu0 %v585
        %601 = vmatprep.subr.bf16.mxu0 0
        %602 = vmatpush1.bf16.msra.mxu0 %v480
        %603 = vmatprep.subr.bf16.mxu0 0
        %604 = vmatpush2.bf16.msra.mxu0 0
        %605 = vmatprep.subr.bf16.mxu0 0
        %606 = vmatpush2.bf16.msra.mxu0 0
        %607 = vmatprep.subr.bf16.mxu0 0
        %608 = vmatpush2.bf16.msra.mxu0 0
        %609 = vmatprep.subr.bf16.mxu0 0
        %610 = vmatpush2.bf16.msra.mxu0 0
        %611 = vmatprep.subr.bf16.mxu0 0
        %612 = vmatpush2.bf16.msra.mxu0 0
        %613 = vmatprep.subr.bf16.mxu0 0
        %614 = vmatpush2.bf16.msra.mxu0 0
        %615 = vmatprep.subr.bf16.mxu0 0
        %616 = vmatpush2.bf16.msra.mxu0 0
        %617 = vmatprep.subr.bf16.mxu0 0
        %618 = vmatpush2.bf16.msra.mxu0 0
        %619 = vmatprep.mubr.bf16.mxu0 0
        %620 = vmatmul.mubr.bf16.gmra.mxu0 %v485
        %v621 = vpop.f32.mrf.mxu0
        %v622 = vadd.f32 %v310, %v621
        %v623 = vpop.f32.mrf.mxu0
        %v624 = vpop.f32.mrf.mxu0
        %v625 = vadd.f32 %v310, %v624
        %v626 = vpop.f32.mrf.mxu0
        %627 = vmatprep.mubr.bf16.mxu0 0
        %628 = vmatmul.mubr.bf16.gmra.mxu0 %v488
        %v629 = vpop.f32.mrf.mxu0
        %v630 = vadd.f32 %v310, %v629
        %v631 = vpop.f32.mrf.mxu0
        %v632 = vpop.f32.mrf.mxu0
        %v633 = vadd.f32 %v310, %v632
        %v634 = vpop.f32.mrf.mxu0
        %635 = vmatprep.mubr.bf16.mxu0 0
        %636 = vmatmul.mubr.bf16.gmra.mxu0 %v491
        %v637 = vpop.f32.mrf.mxu0
        %v638 = vadd.f32 %v310, %v637
        %v639 = vpop.f32.mrf.mxu0
        %v640 = vpop.f32.mrf.mxu0
        %v641 = vadd.f32 %v310, %v640
        %v642 = vpop.f32.mrf.mxu0
        %643 = vmatprep.mubr.bf16.mxu0 0
        %644 = vmatmul.mubr.bf16.gmra.mxu0 %v494
        %v645 = vpop.f32.mrf.mxu0
        %v646 = vadd.f32 %v310, %v645
        %v647 = vpop.f32.mrf.mxu0
        %v648 = vpop.f32.mrf.mxu0
        %v649 = vadd.f32 %v310, %v648
        %v650 = vpop.f32.mrf.mxu0
        %651 = vmatprep.mubr.bf16.mxu0 0
        %652 = vmatmul.mubr.bf16.gmra.mxu0 %v497
        %v653 = vpop.f32.mrf.mxu0
        %v654 = vadd.f32 %v310, %v653
        %v655 = vpop.f32.mrf.mxu0
        %v656 = vpop.f32.mrf.mxu0
        %v657 = vadd.f32 %v310, %v656
        %v658 = vpop.f32.mrf.mxu0
        %659 = vmatprep.mubr.bf16.mxu0 0
        %660 = vmatmul.mubr.bf16.gmra.mxu0 %v500
        %v661 = vpop.f32.mrf.mxu0
        %v662 = vadd.f32 %v310, %v661
        %v663 = vpop.f32.mrf.mxu0
        %v664 = vpop.f32.mrf.mxu0
        %v665 = vadd.f32 %v310, %v664
        %v666 = vpop.f32.mrf.mxu0
        %667 = vmatprep.mubr.bf16.mxu0 0
        %668 = vmatmul.mubr.bf16.gmra.mxu0 %v503
        %v669 = vpop.f32.mrf.mxu0
        %v670 = vadd.f32 %v310, %v669
        %v671 = vpop.f32.mrf.mxu0
        %v672 = vpop.f32.mrf.mxu0
        %v673 = vadd.f32 %v310, %v672
        %v674 = vpop.f32.mrf.mxu0
        %675 = vmatprep.mubr.bf16.mxu0 0
        %676 = vmatmul.mubr.bf16.gmra.mxu0 %v506
        %v677 = vpop.f32.mrf.mxu0
        %v678 = vadd.f32 %v310, %v677
        %v679 = vpop.f32.mrf.mxu0
        %v680 = vpop.f32.mrf.mxu0
        %v681 = vadd.f32 %v310, %v680
        %v682 = vpop.f32.mrf.mxu0
        %683 = vmatprep.mubr.bf16.mxu0 0
        %684 = vmatmul.mubr.bf16.gmra.mxu0 %v509
        %v685 = vpop.f32.mrf.mxu0
        %v686 = vadd.f32 %v310, %v685
        %v687 = vpop.f32.mrf.mxu0
        %v688 = vpop.f32.mrf.mxu0
        %v689 = vadd.f32 %v310, %v688
        %v690 = vpop.f32.mrf.mxu0
        %691 = vmatprep.mubr.bf16.mxu0 0
        %692 = vmatmul.mubr.bf16.gmra.mxu0 %v512
        %v693 = vpop.f32.mrf.mxu0
        %v694 = vadd.f32 %v310, %v693
        %v695 = vpop.f32.mrf.mxu0
        %v696 = vpop.f32.mrf.mxu0
        %v697 = vadd.f32 %v310, %v696
        %v698 = vpop.f32.mrf.mxu0
        %699 = vmatprep.mubr.bf16.mxu0 0
        %700 = vmatmul.mubr.bf16.gmra.mxu0 %v515
        %v701 = vpop.f32.mrf.mxu0
        %v702 = vadd.f32 %v310, %v701
        %v703 = vpop.f32.mrf.mxu0
        %v704 = vpop.f32.mrf.mxu0
        %v705 = vadd.f32 %v310, %v704
        %v706 = vpop.f32.mrf.mxu0
        %707 = vmatprep.mubr.bf16.mxu0 0
        %708 = vmatmul.mubr.bf16.gmra.mxu0 %v518
        %v709 = vpop.f32.mrf.mxu0
        %v710 = vadd.f32 %v310, %v709
        %v711 = vpop.f32.mrf.mxu0
        %v712 = vpop.f32.mrf.mxu0
        %v713 = vadd.f32 %v310, %v712
        %v714 = vpop.f32.mrf.mxu0
        %715 = vmatprep.mubr.bf16.mxu0 0
        %716 = vmatmul.mubr.bf16.gmra.mxu0 %v521
        %v717 = vpop.f32.mrf.mxu0
        %v718 = vadd.f32 %v310, %v717
        %v719 = vpop.f32.mrf.mxu0
        %v720 = vpop.f32.mrf.mxu0
        %v721 = vadd.f32 %v310, %v720
        %v722 = vpop.f32.mrf.mxu0
        %723 = vmatprep.mubr.bf16.mxu0 0
        %724 = vmatmul.mubr.bf16.gmra.mxu0 %v524
        %v725 = vpop.f32.mrf.mxu0
        %v726 = vadd.f32 %v310, %v725
        %v727 = vpop.f32.mrf.mxu0
        %v728 = vpop.f32.mrf.mxu0
        %v729 = vadd.f32 %v310, %v728
        %v730 = vpop.f32.mrf.mxu0
        %731 = vmatprep.mubr.bf16.mxu0 0
        %732 = vmatmul.mubr.bf16.gmra.mxu0 %v527
        %v733 = vpop.f32.mrf.mxu0
        %v734 = vadd.f32 %v310, %v733
        %v735 = vpop.f32.mrf.mxu0
        %v736 = vpop.f32.mrf.mxu0
        %v737 = vadd.f32 %v310, %v736
        %v738 = vpop.f32.mrf.mxu0
        %739 = vmatprep.mubr.bf16.mxu0 0
        %740 = vmatmul.mubr.bf16.gmra.mxu0 %v530
        %v741 = vpop.f32.mrf.mxu0
        %v742 = vadd.f32 %v310, %v741
        %v743 = vpop.f32.mrf.mxu0
        %v744 = vpop.f32.mrf.mxu0
        %v745 = vadd.f32 %v310, %v744
        %v746 = vpop.f32.mrf.mxu0
        %747 = vmatprep.mubr.bf16.mxu0 0
        %748 = vmatmul.mubr.bf16.gmra.mxu0 %v533
        %v749 = vpop.f32.mrf.mxu0
        %v750 = vadd.f32 %v310, %v749
        %v751 = vpop.f32.mrf.mxu0
        %v752 = vpop.f32.mrf.mxu0
        %v753 = vadd.f32 %v310, %v752
        %v754 = vpop.f32.mrf.mxu0
        %755 = vmatprep.mubr.bf16.mxu0 0
        %756 = vmatmul.mubr.bf16.gmra.mxu0 %v536
        %v757 = vpop.f32.mrf.mxu0
        %v758 = vadd.f32 %v310, %v757
        %v759 = vpop.f32.mrf.mxu0
        %v760 = vpop.f32.mrf.mxu0
        %v761 = vadd.f32 %v310, %v760
        %v762 = vpop.f32.mrf.mxu0
        %763 = vmatprep.mubr.bf16.mxu0 0
        %764 = vmatmul.mubr.bf16.gmra.mxu0 %v539
        %v765 = vpop.f32.mrf.mxu0
        %v766 = vadd.f32 %v310, %v765
        %v767 = vpop.f32.mrf.mxu0
        %v768 = vpop.f32.mrf.mxu0
        %v769 = vadd.f32 %v310, %v768
        %v770 = vpop.f32.mrf.mxu0
        %771 = vmatprep.mubr.bf16.mxu0 0
        %772 = vmatmul.mubr.bf16.gmra.mxu0 %v542
        %v773 = vpop.f32.mrf.mxu0
        %v774 = vadd.f32 %v310, %v773
        %v775 = vpop.f32.mrf.mxu0
        %v776 = vpop.f32.mrf.mxu0
        %v777 = vadd.f32 %v310, %v776
        %v778 = vpop.f32.mrf.mxu0
        %779 = vmatprep.mubr.bf16.mxu0 0
        %780 = vmatmul.mubr.bf16.gmra.mxu0 %v545
        %v781 = vpop.f32.mrf.mxu0
        %v782 = vadd.f32 %v310, %v781
        %v783 = vpop.f32.mrf.mxu0
        %v784 = vpop.f32.mrf.mxu0
        %v785 = vadd.f32 %v310, %v784
        %v786 = vpop.f32.mrf.mxu0
        %787 = vmatprep.mubr.bf16.mxu0 0
        %788 = vmatmul.mubr.bf16.gmra.mxu0 %v548
        %v789 = vpop.f32.mrf.mxu0
        %v790 = vadd.f32 %v310, %v789
        %v791 = vpop.f32.mrf.mxu0
        %v792 = vpop.f32.mrf.mxu0
        %v793 = vadd.f32 %v310, %v792
        %v794 = vpop.f32.mrf.mxu0
        %795 = vmatprep.mubr.bf16.mxu0 0
        %796 = vmatmul.mubr.bf16.gmra.mxu0 %v551
        %v797 = vpop.f32.mrf.mxu0
        %v798 = vadd.f32 %v310, %v797
        %v799 = vpop.f32.mrf.mxu0
        %v800 = vpop.f32.mrf.mxu0
        %v801 = vadd.f32 %v310, %v800
        %v802 = vpop.f32.mrf.mxu0
        %803 = vmatprep.mubr.bf16.mxu0 0
        %804 = vmatmul.mubr.bf16.gmra.mxu0 %v554
        %v805 = vpop.f32.mrf.mxu0
        %v806 = vadd.f32 %v310, %v805
        %v807 = vpop.f32.mrf.mxu0
        %v808 = vpop.f32.mrf.mxu0
        %v809 = vadd.f32 %v310, %v808
        %v810 = vpop.f32.mrf.mxu0
        %811 = vmatprep.mubr.bf16.mxu0 0
        %812 = vmatmul.mubr.bf16.gmra.mxu0 %v557
        %v813 = vpop.f32.mrf.mxu0
        %v814 = vadd.f32 %v310, %v813
        %v815 = vpop.f32.mrf.mxu0
        %v816 = vpop.f32.mrf.mxu0
        %v817 = vadd.f32 %v310, %v816
        %v818 = vpop.f32.mrf.mxu0
        %819 = vmatprep.mubr.bf16.mxu0 0
        %820 = vmatmul.mubr.bf16.gmra.mxu0 %v560
        %v821 = vpop.f32.mrf.mxu0
        %v822 = vadd.f32 %v310, %v821
        %v823 = vpop.f32.mrf.mxu0
        %v824 = vpop.f32.mrf.mxu0
        %v825 = vadd.f32 %v310, %v824
        %v826 = vpop.f32.mrf.mxu0
        %827 = vmatprep.mubr.bf16.mxu0 0
        %828 = vmatmul.mubr.bf16.gmra.mxu0 %v563
        %v829 = vpop.f32.mrf.mxu0
        %v830 = vadd.f32 %v310, %v829
        %v831 = vpop.f32.mrf.mxu0
        %v832 = vpop.f32.mrf.mxu0
        %v833 = vadd.f32 %v310, %v832
        %v834 = vpop.f32.mrf.mxu0
        %835 = vmatprep.mubr.bf16.mxu0 0
        %836 = vmatmul.mubr.bf16.gmra.mxu0 %v566
        %v837 = vpop.f32.mrf.mxu0
        %v838 = vadd.f32 %v310, %v837
        %v839 = vpop.f32.mrf.mxu0
        %v840 = vpop.f32.mrf.mxu0
        %v841 = vadd.f32 %v310, %v840
        %v842 = vpop.f32.mrf.mxu0
        %843 = vmatprep.mubr.bf16.mxu0 0
        %844 = vmatmul.mubr.bf16.gmra.mxu0 %v569
        %v845 = vpop.f32.mrf.mxu0
        %v846 = vadd.f32 %v310, %v845
        %v847 = vpop.f32.mrf.mxu0
        %v848 = vpop.f32.mrf.mxu0
        %v849 = vadd.f32 %v310, %v848
        %v850 = vpop.f32.mrf.mxu0
        %851 = vmatprep.mubr.bf16.mxu0 0
        %852 = vmatmul.mubr.bf16.gmra.mxu0 %v572
        %v853 = vpop.f32.mrf.mxu0
        %v854 = vadd.f32 %v310, %v853
        %v855 = vpop.f32.mrf.mxu0
        %v856 = vpop.f32.mrf.mxu0
        %v857 = vadd.f32 %v310, %v856
        %v858 = vpop.f32.mrf.mxu0
        %859 = vmatprep.mubr.bf16.mxu0 0
        %860 = vmatmul.mubr.bf16.gmra.mxu0 %v575
        %v861 = vpop.f32.mrf.mxu0
        %v862 = vadd.f32 %v310, %v861
        %v863 = vpop.f32.mrf.mxu0
        %v864 = vpop.f32.mrf.mxu0
        %v865 = vadd.f32 %v310, %v864
        %v866 = vpop.f32.mrf.mxu0
        %867 = vmatprep.mubr.bf16.mxu0 0
        %868 = vmatmul.mubr.bf16.gmra.mxu0 %v578
        %v869 = vpop.f32.mrf.mxu0
        %v870 = vadd.f32 %v310, %v869
        %v871 = vpop.f32.mrf.mxu0
        %v872 = vpop.f32.mrf.mxu0
        %v873 = vadd.f32 %v310, %v872
        %v874 = vpop.f32.mrf.mxu0
        %875 = vdwg.mxu0
        %v876 = vmax.f32 %v622, 0.0
        %v877 = vmax.f32 %v625, 0.0
        %v878 = vmax.f32 %v630, 0.0
        %v879 = vmax.f32 %v633, 0.0
        %v880 = vmax.f32 %v638, 0.0
        %v881 = vmax.f32 %v641, 0.0
        %v882 = vmax.f32 %v646, 0.0
        %v883 = vmax.f32 %v649, 0.0
        %v884 = vmax.f32 %v654, 0.0
        %v885 = vmax.f32 %v657, 0.0
        %v886 = vmax.f32 %v662, 0.0
        %v887 = vmax.f32 %v665, 0.0
        %v888 = vmax.f32 %v670, 0.0
        %v889 = vmax.f32 %v673, 0.0
        %v890 = vmax.f32 %v678, 0.0
        %v891 = vmax.f32 %v681, 0.0
        %v892 = vmax.f32 %v686, 0.0
        %v893 = vmax.f32 %v689, 0.0
        %v894 = vmax.f32 %v694, 0.0
        %v895 = vmax.f32 %v697, 0.0
        %v896 = vmax.f32 %v702, 0.0
        %v897 = vmax.f32 %v705, 0.0
        %v898 = vmax.f32 %v710, 0.0
        %v899 = vmax.f32 %v713, 0.0
        %v900 = vmax.f32 %v718, 0.0
        %v901 = vmax.f32 %v721, 0.0
        %v902 = vmax.f32 %v726, 0.0
        %v903 = vmax.f32 %v729, 0.0
        %v904 = vmax.f32 %v734, 0.0
        %v905 = vmax.f32 %v737, 0.0
        %v906 = vmax.f32 %v742, 0.0
        %v907 = vmax.f32 %v745, 0.0
        %v908 = vmax.f32 %v750, 0.0
        %v909 = vmax.f32 %v753, 0.0
        %v910 = vmax.f32 %v758, 0.0
        %v911 = vmax.f32 %v761, 0.0
        %v912 = vmax.f32 %v766, 0.0
        %v913 = vmax.f32 %v769, 0.0
        %v914 = vmax.f32 %v774, 0.0
        %v915 = vmax.f32 %v777, 0.0
        %v916 = vmax.f32 %v782, 0.0
        %v917 = vmax.f32 %v785, 0.0
        %v918 = vmax.f32 %v790, 0.0
        %v919 = vmax.f32 %v793, 0.0
        %v920 = vmax.f32 %v798, 0.0
        %v921 = vmax.f32 %v801, 0.0
        %v922 = vmax.f32 %v806, 0.0
        %v923 = vmax.f32 %v809, 0.0
        %v924 = vmax.f32 %v814, 0.0
        %v925 = vmax.f32 %v817, 0.0
        %v926 = vmax.f32 %v822, 0.0
        %v927 = vmax.f32 %v825, 0.0
        %v928 = vmax.f32 %v830, 0.0
        %v929 = vmax.f32 %v833, 0.0
        %v930 = vmax.f32 %v838, 0.0
        %v931 = vmax.f32 %v841, 0.0
        %v932 = vmax.f32 %v846, 0.0
        %v933 = vmax.f32 %v849, 0.0
        %v934 = vmax.f32 %v854, 0.0
        %v935 = vmax.f32 %v857, 0.0
        %v936 = vmax.f32 %v862, 0.0
        %v937 = vmax.f32 %v865, 0.0
        %v938 = vmax.f32 %v870, 0.0
        %v939 = vmax.f32 %v873, 0.0
        %940 = vst [vmem:[%s234] sm:$0xff] %v876
        %941 = vst [vmem:[%s234 + $0x8] sm:$0xff] %v877
        %942 = vst [vmem:[%s234 + $0x10] sm:$0xff] %v878
        %943 = vst [vmem:[%s234 + $0x18] sm:$0xff] %v879
        %944 = vst [vmem:[%s234 + $0x20] sm:$0xff] %v880
        %945 = vst [vmem:[%s234 + $0x28] sm:$0xff] %v881
        %946 = vst [vmem:[%s234 + $0x30] sm:$0xff] %v882
        %947 = vst [vmem:[%s234 + $0x38] sm:$0xff] %v883
        %948 = vst [vmem:[%s234 + $0x40] sm:$0xff] %v884
        %949 = vst [vmem:[%s234 + $0x48] sm:$0xff] %v885
        %950 = vst [vmem:[%s234 + $0x50] sm:$0xff] %v886
        %951 = vst [vmem:[%s234 + $0x58] sm:$0xff] %v887
        %952 = vst [vmem:[%s234 + $0x60] sm:$0xff] %v888
        %953 = vst [vmem:[%s234 + $0x68] sm:$0xff] %v889
        %954 = vst [vmem:[%s234 + $0x70] sm:$0xff] %v890
        %955 = vst [vmem:[%s234 + $0x78] sm:$0xff] %v891
        %956 = vst [vmem:[%s234 + $0x80] sm:$0xff] %v892
        %957 = vst [vmem:[%s234 + $0x88] sm:$0xff] %v893
        %958 = vst [vmem:[%s234 + $0x90] sm:$0xff] %v894
        %959 = vst [vmem:[%s234 + $0x98] sm:$0xff] %v895
        %960 = vst [vmem:[%s234 + $0xa0] sm:$0xff] %v896
        %961 = vst [vmem:[%s234 + $0xa8] sm:$0xff] %v897
        %962 = vst [vmem:[%s234 + $0xb0] sm:$0xff] %v898
        %963 = vst [vmem:[%s234 + $0xb8] sm:$0xff] %v899
        %964 = vst [vmem:[%s234 + $0xc0] sm:$0xff] %v900
        %965 = vst [vmem:[%s234 + $0xc8] sm:$0xff] %v901
        %966 = vst [vmem:[%s234 + $0xd0] sm:$0xff] %v902
        %967 = vst [vmem:[%s234 + $0xd8] sm:$0xff] %v903
        %968 = vst [vmem:[%s234 + $0xe0] sm:$0xff] %v904
        %969 = vst [vmem:[%s234 + $0xe8] sm:$0xff] %v905
        %970 = vst [vmem:[%s234 + $0xf0] sm:$0xff] %v906
        %971 = vst [vmem:[%s234 + $0xf8] sm:$0xff] %v907
        %972 = vst [vmem:[%s234 + $0x100] sm:$0xff] %v908
        %973 = vst [vmem:[%s234 + $0x108] sm:$0xff] %v909
        %974 = vst [vmem:[%s234 + $0x110] sm:$0xff] %v910
        %975 = vst [vmem:[%s234 + $0x118] sm:$0xff] %v911
        %976 = vst [vmem:[%s234 + $0x120] sm:$0xff] %v912
        %977 = vst [vmem:[%s234 + $0x128] sm:$0xff] %v913
        %978 = vst [vmem:[%s234 + $0x130] sm:$0xff] %v914
        %979 = vst [vmem:[%s234 + $0x138] sm:$0xff] %v915
        %980 = vst [vmem:[%s234 + $0x140] sm:$0xff] %v916
        %981 = vst [vmem:[%s234 + $0x148] sm:$0xff] %v917
        %982 = vst [vmem:[%s234 + $0x150] sm:$0xff] %v918
        %983 = vst [vmem:[%s234 + $0x158] sm:$0xff] %v919
        %984 = vst [vmem:[%s234 + $0x160] sm:$0xff] %v920
        %985 = vst [vmem:[%s234 + $0x168] sm:$0xff] %v921
        %986 = vst [vmem:[%s234 + $0x170] sm:$0xff] %v922
        %987 = vst [vmem:[%s234 + $0x178] sm:$0xff] %v923
        %988 = vst [vmem:[%s234 + $0x180] sm:$0xff] %v924
        %989 = vst [vmem:[%s234 + $0x188] sm:$0xff] %v925
        %990 = vst [vmem:[%s234 + $0x190] sm:$0xff] %v926
        %991 = vst [vmem:[%s234 + $0x198] sm:$0xff] %v927
        %992 = vst [vmem:[%s234 + $0x1a0] sm:$0xff] %v928
        %993 = vst [vmem:[%s234 + $0x1a8] sm:$0xff] %v929
        %994 = vst [vmem:[%s234 + $0x1b0] sm:$0xff] %v930
        %995 = vst [vmem:[%s234 + $0x1b8] sm:$0xff] %v931
        %996 = vst [vmem:[%s234 + $0x1c0] sm:$0xff] %v932
        %997 = vst [vmem:[%s234 + $0x1c8] sm:$0xff] %v933
        %998 = vst [vmem:[%s234 + $0x1d0] sm:$0xff] %v934
        %999 = vst [vmem:[%s234 + $0x1d8] sm:$0xff] %v935
        %1000 = vst [vmem:[%s234 + $0x1e0] sm:$0xff] %v936
        %1001 = vst [vmem:[%s234 + $0x1e8] sm:$0xff] %v937
        %1002 = vst [vmem:[%s234 + $0x1f0] sm:$0xff] %v938
        %1003 = vst [vmem:[%s234 + $0x1f8] sm:$0xff] %v939
        %s1004 = smul.u32 64, %s20
        %p1005 = scmp.lt.s32.totalorder %s1004, 319
        %s1006 = scalar_select %p1005, %s1004, 319
        %p1007 = scmp.lt.s32.totalorder %s21, 0
        %s1008 = scalar_select %p1007, %s21, 0
        %s1009 = sadd.s32 %s1008, %s1006
        %s1010 = smul.addr %s1009, 8
        %s1011 = scalar_lea.vmem %s3, %s1010
        // Predicated region
        $region41: #{_lambda_.5} parent=31 // pred_check
          %p1012 = pneg %p126
        $region42: #{_lambda_.5} parent=31 // pred_check_branch
          %1014 = sbr.rel (%p1012) target = $region44
        $region43: #{_lambda_.5} parent=31 // pred_region
          %s1015 = smul.u32 64, %s20
        $region44: #{_lambda_.5} parent=31 // pred_fallthru
          _
      $region32: #{_lambda_.5} parent=5 // pred_fallthru
        _
      %p1016 = scmp.le.s32.totalorder 2, %s11
      // Predicated region
      $region45: #{_lambda_.5} parent=5 // pred_check
        %p1017 = pneg %p1016
      $region46: #{_lambda_.5} parent=5 // pred_check_branch
        %1019 = sbr.rel (%p1017) target = $region48
      $region47: #{_lambda_.5} parent=5 // pred_region
        %s1020 = ssub.s32 %s11, 2
        // Predicated region
        $region49: #{_lambda_.5} parent=47 // pred_check
          %p1021 = pneg %p132
        $region50: #{_lambda_.5} parent=47 // pred_check_branch
          %1023 = sbr.rel (%p1021) target = $region52
        $region51: #{_lambda_.5} parent=47 // pred_region
          %s1024 = smul.u32 64, %s22
          %p1025 = scmp.lt.s32.totalorder %s1024, 319
          %s1026 = scalar_select %p1025, %s1024, 319
          %p1027 = scmp.lt.s32.totalorder %s23, 0
          %s1028 = scalar_select %p1027, %s23, 0
          %s1029 = sadd.s32 %s1028, %s1026
          %s1030 = smul.addr %s1029, 8
          %s1031 = scalar_lea.vmem %s3, %s1030
        $region52: #{_lambda_.5} parent=47 // pred_fallthru
          _
      $region48: #{_lambda_.5} parent=5 // pred_fallthru
        _
    $region6: #{_lambda_.5} parent=1 // loop_footer
      %s15 = sadd.s32 1, %s11
    $region7: #{_lambda_.5} parent=1 // loop_footer_branch
      %10 = sbr.rel target = $region3
    $region8: #{_lambda_.5} parent=1 // loop_exit
      _
    %1032 = vsyncpa [#allocation3], 1
    %s1033 = scalar_lea.sflag [#allocation3], 1
    %1034 = vsyncpa %s1033, 1
    %1035 = vsyncpa [#allocation5], 1

// kernel: _lambda_.6
$region0: #{_lambda_.6}
  #allocation0 [shape = 'u32[]', space=smem, size = 0x4, offset = 0x4, fixed_abs, tag = 'smem constant byte address 0x4 - core index']
  #allocation1 [shape = 'u32[144,128]{1,0:T(1,128)}', space=vmem, size = 0x12000, scoped, tag = 'internal scratch']
  %s0 = inlined_call_operand.vmem [shape: bf16[1024,1600], index: 0, kind: input, shape index: {}]
  %s1 = inlined_call_operand.vmem [shape: bf16[1600,128], index: 1, kind: input, shape index: {}]
  %s2 = inlined_call_operand.vmem [shape: f32[1,128], index: 2, kind: input, shape index: {}]
  %s3 = inlined_call_operand.vmem [shape: f32[1024,128], index: 3, kind: output, shape index: {}]
  %s4 = sld [smem:[#allocation0]]
  $region45: #{_lambda_.6} parent=0
    _
  %s6 = ssub.s32 1, %s4
  %s7 = scalar_select 0, %s6, %s4
  loop: start=0, step=1, limit=4
  $region2: #{_lambda_.6} parent=0 // loop_pre_header
    _
  $region3: #{_lambda_.6} parent=0 // loop_header
    %s9 = sphi 0, %s13
    %p10 = scmp.ge.s32.totalorder %s9, 4
    %s16 = sphi 0, %s28
    %s17 = sphi 0, %s24
    %s18 = sphi 0, %s16
    %s19 = sphi 0, %s17
    %s20 = sphi 0, %s18
    %s21 = sphi 0, %s19
    %s31 = sphi 0, %s33
    %s34 = sphi 0, %s31
    %s35 = sphi 0, %s34
    %s51 = sphi 0, %s35
    %s57 = sphi 0, %s59
    %s60 = sphi 0, %s57
    %s61 = sphi 0, %s60
    %s77 = sphi 0, %s61
    %s83 = sphi 0, %s85
    %s86 = sphi 0, %s83
    %s87 = sphi 0, %s86
    %s103 = sphi 0, %s87
    %s111 = sphi 0, %s113
    %s114 = sphi 0, %s111
    %s115 = sphi 0, %s114
    %s131 = sphi 0, %s115
  $region4: #{_lambda_.6} parent=0 // loop_header_branch
    %12 = sbr.rel (%p10) target = $region8
  $region5: #{_lambda_.6} parent=0 // loop_body
    %s14 = ssub.s32 %s9, 1
    %s15 = ssub.s32 %s9, 2
    %s22 = sadd.s32 1, %s17
    %p23 = scmp.ge.s32.totalorder %s22, 1
    %s24 = scalar_select %p23, 0, %s22
    %s25 = sadd.s32 1, %s16
    %s26 = scalar_select %p23, %s25, %s16
    %p27 = scmp.ge.s32.totalorder %s26, 2
    %s28 = scalar_select %p27, 0, %s26
    %s29 = ssub.s32 %s16, %s28
    %p30 = scmp.eq.s32.totalorder %s29, 0
    %s32 = sadd.s32 %s31, 1
    %s33 = scalar_select %p30, %s31, %s32
    %p36 = pneg %p30
    %p37 = scmp.eq.s32.totalorder %s9, 1
    %p38 = por %p36, %p37
    %p39 = scmp.ne.s32.totalorder %s31, %s34
    %p40 = scmp.eq.s32.totalorder %s9, 0
    %p41 = por %p39, %p40
    %p42 = scmp.ne.s32.totalorder %s31, %s34
    %p43 = scmp.eq.s32.totalorder %s14, 1
    %p44 = por %p42, %p43
    %p45 = scmp.ne.s32.totalorder %s34, %s35
    %p46 = scmp.eq.s32.totalorder %s14, 0
    %p47 = por %p45, %p46
    %p48 = scmp.ne.s32.totalorder %s34, %s35
    %p49 = scmp.eq.s32.totalorder %s15, 1
    %p50 = por %p48, %p49
    %p52 = scmp.ne.s32.totalorder %s35, %s51
    %p53 = scmp.eq.s32.totalorder %s15, 0
    %p54 = por %p52, %p53
    %s55 = ssub.s32 %s17, %s24
    %p56 = scmp.eq.s32.totalorder %s55, 0
    %s58 = sadd.s32 %s57, 1
    %s59 = scalar_select %p56, %s57, %s58
    %p62 = pneg %p56
    %p63 = scmp.eq.s32.totalorder %s9, 1
    %p64 = por %p62, %p63
    %p65 = scmp.ne.s32.totalorder %s57, %s60
    %p66 = scmp.eq.s32.totalorder %s9, 0
    %p67 = por %p65, %p66
    %p68 = scmp.ne.s32.totalorder %s57, %s60
    %p69 = scmp.eq.s32.totalorder %s14, 1
    %p70 = por %p68, %p69
    %p71 = scmp.ne.s32.totalorder %s60, %s61
    %p72 = scmp.eq.s32.totalorder %s14, 0
    %p73 = por %p71, %p72
    %p74 = scmp.ne.s32.totalorder %s60, %s61
    %p75 = scmp.eq.s32.totalorder %s15, 1
    %p76 = por %p74, %p75
    %p78 = scmp.ne.s32.totalorder %s61, %s77
    %p79 = scmp.eq.s32.totalorder %s15, 0
    %p80 = por %p78, %p79
    %s81 = ssub.s32 %s17, %s24
    %p82 = scmp.eq.s32.totalorder %s81, 0
    %s84 = sadd.s32 %s83, 1
    %s85 = scalar_select %p82, %s83, %s84
    %p88 = pneg %p82
    %p89 = scmp.eq.s32.totalorder %s9, 1
    %p90 = por %p88, %p89
    %p91 = scmp.ne.s32.totalorder %s83, %s86
    %p92 = scmp.eq.s32.totalorder %s9, 0
    %p93 = por %p91, %p92
    %p94 = scmp.ne.s32.totalorder %s83, %s86
    %p95 = scmp.eq.s32.totalorder %s14, 1
    %p96 = por %p94, %p95
    %p97 = scmp.ne.s32.totalorder %s86, %s87
    %p98 = scmp.eq.s32.totalorder %s14, 0
    %p99 = por %p97, %p98
    %p100 = scmp.ne.s32.totalorder %s86, %s87
    %p101 = scmp.eq.s32.totalorder %s15, 1
    %p102 = por %p100, %p101
    %p104 = scmp.ne.s32.totalorder %s87, %s103
    %p105 = scmp.eq.s32.totalorder %s15, 0
    %p106 = por %p104, %p105
    %s107 = ssub.s32 %s16, %s28
    %s108 = ssub.s32 %s17, %s24
    %s109 = sor.u32 %s107, %s108
    %p110 = scmp.eq.s32.totalorder %s109, 0
    %s112 = sadd.s32 %s111, 1
    %s113 = scalar_select %p110, %s111, %s112
    %p116 = pneg %p110
    %p117 = scmp.eq.s32.totalorder %s9, 1
    %p118 = por %p116, %p117
    %p119 = scmp.ne.s32.totalorder %s111, %s114
    %p120 = scmp.eq.s32.totalorder %s9, 0
    %p121 = por %p119, %p120
    %p122 = scmp.ne.s32.totalorder %s111, %s114
    %p123 = scmp.eq.s32.totalorder %s14, 1
    %p124 = por %p122, %p123
    %p125 = scmp.ne.s32.totalorder %s114, %s115
    %p126 = scmp.eq.s32.totalorder %s14, 0
    %p127 = por %p125, %p126
    %p128 = scmp.ne.s32.totalorder %s114, %s115
    %p129 = scmp.eq.s32.totalorder %s15, 1
    %p130 = por %p128, %p129
    %p132 = scmp.ne.s32.totalorder %s115, %s131
    %p133 = scmp.eq.s32.totalorder %s15, 0
    %p134 = por %p132, %p133
    %p135 = scmp.le.s32.totalorder 1, %s9
    %p136 = scmp.lt.s32.totalorder %s9, 3
    %p137 = pnand %p135, %p136
    %p138 = pneg %p137
    // Predicated region
    $region9: #{_lambda_.6} parent=5 // pred_check
      _
    $region10: #{_lambda_.6} parent=5 // pred_check_branch
      %140 = sbr.rel (%p137) target = $region12
    $region11: #{_lambda_.6} parent=5 // pred_region
      %s141 = ssub.s32 %s9, 1
      // Predicated region
      $region13: #{_lambda_.6} parent=11 // pred_check
        %p142 = pneg %p73
      $region14: #{_lambda_.6} parent=11 // pred_check_branch
        %144 = sbr.rel (%p142) target = $region16
      $region15: #{_lambda_.6} parent=11 // pred_region
        %p145 = scmp.lt.s32.totalorder %s19, 0
        %s146 = scalar_select %p145, %s19, 0
        %s147 = smul.addr %s146, 4
        %s148 = scalar_lea.vmem %s1, %s147
      $region16: #{_lambda_.6} parent=11 // pred_fallthru
        _
      // Predicated region
      $region17: #{_lambda_.6} parent=11 // pred_check
        %p149 = pneg %p99
      $region18: #{_lambda_.6} parent=11 // pred_check_branch
        %151 = sbr.rel (%p149) target = $region20
      $region19: #{_lambda_.6} parent=11 // pred_region
        %p152 = scmp.lt.s32.totalorder %s19, 0
        %s153 = scalar_select %p152, %s19, 0
        %s154 = scalar_lea.vmem %s2, %s153
      $region20: #{_lambda_.6} parent=11 // pred_fallthru
        _
    $region12: #{_lambda_.6} parent=5 // pred_fallthru
      _
    %p155 = scmp.lt.s32.totalorder %s9, 2
    // Predicated region
    $region21: #{_lambda_.6} parent=5 // pred_check
      %p156 = pneg %p155
    $region22: #{_lambda_.6} parent=5 // pred_check_branch
      %158 = sbr.rel (%p156) target = $region24
    $region23: #{_lambda_.6} parent=5 // pred_region
      // Predicated region
      $region25: #{_lambda_.6} parent=23 // pred_check
        %p159 = pneg %p41
      $region26: #{_lambda_.6} parent=23 // pred_check_branch
        %161 = sbr.rel (%p159) target = $region28
      $region27: #{_lambda_.6} parent=23 // pred_region
        %s162 = smul.u32 64, %s16
        %p163 = scmp.lt.s32.totalorder %s162, 127
        %s164 = scalar_select %p163, %s162, 127
        %s165 = smul.addr %s164, 13
        %s166 = smul.addr %s165, 4
        %s167 = scalar_lea.vmem %s0, %s166
        %s168 = smul.u32 64, %s16
      $region28: #{_lambda_.6} parent=23 // pred_fallthru
        _
    $region24: #{_lambda_.6} parent=5 // pred_fallthru
      _
    %p169 = scmp.le.s32.totalorder 1, %s9
    %p170 = scmp.lt.s32.totalorder %s9, 3
    %p171 = pnand %p169, %p170
    %p172 = pneg %p171
    // Predicated region
    $region29: #{_lambda_.6} parent=5 // pred_check
      _
    $region30: #{_lambda_.6} parent=5 // pred_check_branch
      %174 = sbr.rel (%p171) target = $region32
    $region31: #{_lambda_.6} parent=5 // pred_region
      %s175 = ssub.s32 %s9, 1
      %s176 = smul.u32 64, %s18
      %p177 = scmp.lt.s32.totalorder %s176, 127
      %s178 = scalar_select %p177, %s176, 127
      %s179 = smul.addr %s178, 13
      %s180 = smul.addr %s179, 4
      %s181 = scalar_lea.vmem %s0, %s180
      %p182 = pneg %p47
      %p183 = pneg %p44
      %p184 = scmp.lt.s32.totalorder %s19, 0
      %s185 = scalar_select %p184, %s19, 0
      %s186 = smul.addr %s185, 4
      %s187 = scalar_lea.vmem %s1, %s186
      %p188 = pneg %p73
      %p189 = pneg %p70
      %p190 = scmp.lt.s32.totalorder %s19, 0
      %s191 = scalar_select %p190, %s19, 0
      %s192 = scalar_lea.vmem %s2, %s191
      %p193 = pneg %p99
      %p194 = pneg %p96
      %p195 = pneg %p127
      %p196 = pneg %p124
      %s197 = smul.u32 64, %s18
      %p198 = scmp.lt.s32.totalorder %s197, 127
      %s199 = scalar_select %p198, %s197, 127
      %p200 = scmp.lt.s32.totalorder %s19, 0
      %s201 = scalar_select %p200, %s19, 0
      %s202 = sadd.s32 %s201, %s199
      %s203 = smul.addr %s202, 8
      %s204 = scalar_lea.vmem %s3, %s203
      %s205 = smul.u32 64, %s18
      %p206 = scmp.lt.s32.totalorder %s205, 127
      %s207 = scalar_select %p206, %s205, 127
      %s208 = smul.addr %s207, 13
      %s209 = smul.addr %s208, 4
      %s210 = scalar_lea.vmem %s0, %s209
      %s211 = smul.u32 64, %s18
      %p212 = scmp.lt.s32.totalorder %s19, 0
      %s213 = scalar_select %p212, %s19, 0
      %s214 = smul.addr %s213, 4
      %s215 = scalar_lea.vmem %s1, %s214
      %p216 = scmp.lt.s32.totalorder %s19, 0
      %s217 = scalar_select %p216, %s19, 0
      %s218 = scalar_lea.vmem %s2, %s217
      %s219 = smul.u32 64, %s18
      %p220 = scmp.lt.s32.totalorder %s219, 127
      %s221 = scalar_select %p220, %s219, 127
      %p222 = scmp.lt.s32.totalorder %s19, 0
      %s223 = scalar_select %p222, %s19, 0
      %s224 = sadd.s32 %s223, %s221
      %s225 = smul.addr %s224, 8
      %s226 = scalar_lea.vmem %s3, %s225
      %s227 = smul.u32 64, %s18
      %v229 = vld [vmem:[%s210] sm:$0xff]
      %v230 = vld [vmem:[%s210 + $0x8] sm:$0xff]
      %v231 = vld [vmem:[%s210 + $0x10] sm:$0xff]
      %v232 = vld [vmem:[%s210 + $0x18] sm:$0xff]
      %v233 = vld [vmem:[%s210 + $0x20] sm:$0xff]
      %v234 = vld [vmem:[%s210 + $0x28] sm:$0xff]
      %v235 = vld [vmem:[%s210 + $0x30] sm:$0xf]
      %v236 = vld [vmem:[%s210 + $0x34] sm:$0xff]
      %v237 = vld [vmem:[%s210 + $0x3c] sm:$0xff]
      %v238 = vld [vmem:[%s210 + $0x44] sm:$0xff]
      %v239 = vld [vmem:[%s210 + $0x4c] sm:$0xff]
      %v240 = vld [vmem:[%s210 + $0x54] sm:$0xff]
      %v241 = vld [vmem:[%s210 + $0x5c] sm:$0xff]
      %v242 = vld [vmem:[%s210 + $0x64] sm:$0xf]
      %v243 = vld [vmem:[%s210 + $0x68] sm:$0xff]
      %v244 = vld [vmem:[%s210 + $0x70] sm:$0xff]
      %v245 = vld [vmem:[%s210 + $0x78] sm:$0xff]
      %v246 = vld [vmem:[%s210 + $0x80] sm:$0xff]
      %v247 = vld [vmem:[%s210 + $0x88] sm:$0xff]
      %v248 = vld [vmem:[%s210 + $0x90] sm:$0xff]
      %v249 = vld [vmem:[%s210 + $0x98] sm:$0xf]
      %v250 = vld [vmem:[%s210 + $0x9c] sm:$0xff]
      %v251 = vld [vmem:[%s210 + $0xa4] sm:$0xff]
      %v252 = vld [vmem:[%s210 + $0xac] sm:$0xff]
      %v253 = vld [vmem:[%s210 + $0xb4] sm:$0xff]
      %v254 = vld [vmem:[%s210 + $0xbc] sm:$0xff]
      %v255 = vld [vmem:[%s210 + $0xc4] sm:$0xff]
      %v256 = vld [vmem:[%s210 + $0xcc] sm:$0xf]
      %v257 = vld [vmem:[%s210 + $0xd0] sm:$0xff]
      %v258 = vld [vmem:[%s210 + $0xd8] sm:$0xff]
      %v259 = vld [vmem:[%s210 + $0xe0] sm:$0xff]
      %v260 = vld [vmem:[%s210 + $0xe8] sm:$0xff]
      %v261 = vld [vmem:[%s210 + $0xf0] sm:$0xff]
      %v262 = vld [vmem:[%s210 + $0xf8] sm:$0xff]
      %v263 = vld [vmem:[%s210 + $0x100] sm:$0xf]
      %v264 = vld [vmem:[%s210 + $0x104] sm:$0xff]
      %v265 = vld [vmem:[%s210 + $0x10c] sm:$0xff]
      %v266 = vld [vmem:[%s210 + $0x114] sm:$0xff]
      %v267 = vld [vmem:[%s210 + $0x11c] sm:$0xff]
      %v268 = vld [vmem:[%s210 + $0x124] sm:$0xff]
      %v269 = vld [vmem:[%s210 + $0x12c] sm:$0xff]
      %v270 = vld [vmem:[%s210 + $0x134] sm:$0xf]
      %v271 = vld [vmem:[%s210 + $0x138] sm:$0xff]
      %v272 = vld [vmem:[%s210 + $0x140] sm:$0xff]
      %v273 = vld [vmem:[%s210 + $0x148] sm:$0xff]
      %v274 = vld [vmem:[%s210 + $0x150] sm:$0xff]
      %v275 = vld [vmem:[%s210 + $0x158] sm:$0xff]
      %v276 = vld [vmem:[%s210 + $0x160] sm:$0xff]
      %v277 = vld [vmem:[%s210 + $0x168] sm:$0xf]
      %v278 = vld [vmem:[%s210 + $0x16c] sm:$0xff]
      %v279 = vld [vmem:[%s210 + $0x174] sm:$0xff]
      %v280 = vld [vmem:[%s210 + $0x17c] sm:$0xff]
      %v281 = vld [vmem:[%s210 + $0x184] sm:$0xff]
      %v282 = vld [vmem:[%s210 + $0x18c] sm:$0xff]
      %v283 = vld [vmem:[%s210 + $0x194] sm:$0xff]
      %v284 = vld [vmem:[%s210 + $0x19c] sm:$0xf]
      %v285 = vld [vmem:[%s210 + $0x1a0] sm:$0xff]
      %v286 = vld [vmem:[%s210 + $0x1a8] sm:$0xff]
      %v287 = vld [vmem:[%s210 + $0x1b0] sm:$0xff]
      %v288 = vld [vmem:[%s210 + $0x1b8] sm:$0xff]
      %v289 = vld [vmem:[%s210 + $0x1c0] sm:$0xff]
      %v290 = vld [vmem:[%s210 + $0x1c8] sm:$0xff]
      %v291 = vld [vmem:[%s210 + $0x1d0] sm:$0xf]
      %v292 = vld [vmem:[%s210 + $0x1d4] sm:$0xff]
      %v293 = vld [vmem:[%s210 + $0x1dc] sm:$0xff]
      %v294 = vld [vmem:[%s210 + $0x1e4] sm:$0xff]
      %v295 = vld [vmem:[%s210 + $0x1ec] sm:$0xff]
      %v296 = vld [vmem:[%s210 + $0x1f4] sm:$0xff]
      %v297 = vld [vmem:[%s210 + $0x1fc] sm:$0xff]
      %v298 = vld [vmem:[%s210 + $0x204] sm:$0xf]
      %v299 = vld [vmem:[%s210 + $0x208] sm:$0xff]
      %v300 = vld [vmem:[%s210 + $0x210] sm:$0xff]
      %v301 = vld [vmem:[%s210 + $0x218] sm:$0xff]
      %v302 = vld [vmem:[%s210 + $0x220] sm:$0xff]
      %v303 = vld [vmem:[%s210 + $0x228] sm:$0xff]
      %v304 = vld [vmem:[%s210 + $0x230] sm:$0xff]
      %v305 = vld [vmem:[%s210 + $0x238] sm:$0xf]
      %v306 = vld [vmem:[%s210 + $0x23c] sm:$0xff]
      %v307 = vld [vmem:[%s210 + $0x244] sm:$0xff]
      %v308 = vld [vmem:[%s210 + $0x24c] sm:$0xff]
      %v309 = vld [vmem:[%s210 + $0x254] sm:$0xff]
      %v310 = vld [vmem:[%s210 + $0x25c] sm:$0xff]
      %v311 = vld [vmem:[%s210 + $0x264] sm:$0xff]
      %v312 = vld [vmem:[%s210 + $0x26c] sm:$0xf]
      %v313 = vld [vmem:[%s210 + $0x270] sm:$0xff]
      %v314 = vld [vmem:[%s210 + $0x278] sm:$0xff]
      %v315 = vld [vmem:[%s210 + $0x280] sm:$0xff]
      %v316 = vld [vmem:[%s210 + $0x288] sm:$0xff]
      %v317 = vld [vmem:[%s210 + $0x290] sm:$0xff]
      %v318 = vld [vmem:[%s210 + $0x298] sm:$0xff]
      %v319 = vld [vmem:[%s210 + $0x2a0] sm:$0xf]
      %v320 = vld [vmem:[%s210 + $0x2a4] sm:$0xff]
      %v321 = vld [vmem:[%s210 + $0x2ac] sm:$0xff]
      %v322 = vld [vmem:[%s210 + $0x2b4] sm:$0xff]
      %v323 = vld [vmem:[%s210 + $0x2bc] sm:$0xff]
      %v324 = vld [vmem:[%s210 + $0x2c4] sm:$0xff]
      %v325 = vld [vmem:[%s210 + $0x2cc] sm:$0xff]
      %v326 = vld [vmem:[%s210 + $0x2d4] sm:$0xf]
      %v327 = vld [vmem:[%s210 + $0x2d8] sm:$0xff]
      %v328 = vld [vmem:[%s210 + $0x2e0] sm:$0xff]
      %v329 = vld [vmem:[%s210 + $0x2e8] sm:$0xff]
      %v330 = vld [vmem:[%s210 + $0x2f0] sm:$0xff]
      %v331 = vld [vmem:[%s210 + $0x2f8] sm:$0xff]
      %v332 = vld [vmem:[%s210 + $0x300] sm:$0xff]
      %v333 = vld [vmem:[%s210 + $0x308] sm:$0xf]
      %v334 = vld [vmem:[%s210 + $0x30c] sm:$0xff]
      %v335 = vld [vmem:[%s210 + $0x314] sm:$0xff]
      %v336 = vld [vmem:[%s210 + $0x31c] sm:$0xff]
      %v337 = vld [vmem:[%s210 + $0x324] sm:$0xff]
      %v338 = vld [vmem:[%s210 + $0x32c] sm:$0xff]
      %v339 = vld [vmem:[%s210 + $0x334] sm:$0xff]
      %v340 = vld [vmem:[%s210 + $0x33c] sm:$0xf]
      %v341 = vld [vmem:[%s210 + $0x340] sm:$0xff]
      %v342 = vld [vmem:[%s210 + $0x348] sm:$0xff]
      %v343 = vld [vmem:[%s210 + $0x350] sm:$0xff]
      %v344 = vld [vmem:[%s210 + $0x358] sm:$0xff]
      %v345 = vld [vmem:[%s210 + $0x360] sm:$0xff]
      %v346 = vld [vmem:[%s210 + $0x368] sm:$0xff]
      %v347 = vld [vmem:[%s210 + $0x370] sm:$0xf]
      %v348 = vld [vmem:[%s210 + $0x374] sm:$0xff]
      %v349 = vld [vmem:[%s210 + $0x37c] sm:$0xff]
      %v350 = vld [vmem:[%s210 + $0x384] sm:$0xff]
      %v351 = vld [vmem:[%s210 + $0x38c] sm:$0xff]
      %v352 = vld [vmem:[%s210 + $0x394] sm:$0xff]
      %v353 = vld [vmem:[%s210 + $0x39c] sm:$0xff]
      %v354 = vld [vmem:[%s210 + $0x3a4] sm:$0xf]
      %v355 = vld [vmem:[%s210 + $0x3a8] sm:$0xff]
      %v356 = vld [vmem:[%s210 + $0x3b0] sm:$0xff]
      %v357 = vld [vmem:[%s210 + $0x3b8] sm:$0xff]
      %v358 = vld [vmem:[%s210 + $0x3c0] sm:$0xff]
      %v359 = vld [vmem:[%s210 + $0x3c8] sm:$0xff]
      %v360 = vld [vmem:[%s210 + $0x3d0] sm:$0xff]
      %v361 = vld [vmem:[%s210 + $0x3d8] sm:$0xf]
      %v362 = vld [vmem:[%s210 + $0x3dc] sm:$0xff]
      %v363 = vld [vmem:[%s210 + $0x3e4] sm:$0xff]
      %v364 = vld [vmem:[%s210 + $0x3ec] sm:$0xff]
      %v365 = vld [vmem:[%s210 + $0x3f4] sm:$0xff]
      %v366 = vld [vmem:[%s210 + $0x3fc] sm:$0xff]
      %v367 = vld [vmem:[%s210 + $0x404] sm:$0xff]
      %v368 = vld [vmem:[%s210 + $0x40c] sm:$0xf]
      %v369 = vld [vmem:[%s210 + $0x410] sm:$0xff]
      %v370 = vld [vmem:[%s210 + $0x418] sm:$0xff]
      %v371 = vld [vmem:[%s210 + $0x420] sm:$0xff]
      %v372 = vld [vmem:[%s210 + $0x428] sm:$0xff]
      %v373 = vld [vmem:[%s210 + $0x430] sm:$0xff]
      %v374 = vld [vmem:[%s210 + $0x438] sm:$0xff]
      %v375 = vld [vmem:[%s210 + $0x440] sm:$0xf]
      %v376 = vld [vmem:[%s210 + $0x444] sm:$0xff]
      %v377 = vld [vmem:[%s210 + $0x44c] sm:$0xff]
      %v378 = vld [vmem:[%s210 + $0x454] sm:$0xff]
      %v379 = vld [vmem:[%s210 + $0x45c] sm:$0xff]
      %v380 = vld [vmem:[%s210 + $0x464] sm:$0xff]
      %v381 = vld [vmem:[%s210 + $0x46c] sm:$0xff]
      %v382 = vld [vmem:[%s210 + $0x474] sm:$0xf]
      %v383 = vld [vmem:[%s210 + $0x478] sm:$0xff]
      %v384 = vld [vmem:[%s210 + $0x480] sm:$0xff]
      %v385 = vld [vmem:[%s210 + $0x488] sm:$0xff]
      %v386 = vld [vmem:[%s210 + $0x490] sm:$0xff]
      %v387 = vld [vmem:[%s210 + $0x498] sm:$0xff]
      %v388 = vld [vmem:[%s210 + $0x4a0] sm:$0xff]
      %v389 = vld [vmem:[%s210 + $0x4a8] sm:$0xf]
      %v390 = vld [vmem:[%s210 + $0x4ac] sm:$0xff]
      %v391 = vld [vmem:[%s210 + $0x4b4] sm:$0xff]
      %v392 = vld [vmem:[%s210 + $0x4bc] sm:$0xff]
      %v393 = vld [vmem:[%s210 + $0x4c4] sm:$0xff]
      %v394 = vld [vmem:[%s210 + $0x4cc] sm:$0xff]
      %v395 = vld [vmem:[%s210 + $0x4d4] sm:$0xff]
      %v396 = vld [vmem:[%s210 + $0x4dc] sm:$0xf]
      %v397 = vld [vmem:[%s210 + $0x4e0] sm:$0xff]
      %v398 = vld [vmem:[%s210 + $0x4e8] sm:$0xff]
      %v399 = vld [vmem:[%s210 + $0x4f0] sm:$0xff]
      %v400 = vld [vmem:[%s210 + $0x4f8] sm:$0xff]
      %v401 = vld [vmem:[%s210 + $0x500] sm:$0xff]
      %v402 = vld [vmem:[%s210 + $0x508] sm:$0xff]
      %v403 = vld [vmem:[%s210 + $0x510] sm:$0xf]
      %v404 = vld [vmem:[%s210 + $0x514] sm:$0xff]
      %v405 = vld [vmem:[%s210 + $0x51c] sm:$0xff]
      %v406 = vld [vmem:[%s210 + $0x524] sm:$0xff]
      %v407 = vld [vmem:[%s210 + $0x52c] sm:$0xff]
      %v408 = vld [vmem:[%s210 + $0x534] sm:$0xff]
      %v409 = vld [vmem:[%s210 + $0x53c] sm:$0xff]
      %v410 = vld [vmem:[%s210 + $0x544] sm:$0xf]
      %v411 = vld [vmem:[%s210 + $0x548] sm:$0xff]
      %v412 = vld [vmem:[%s210 + $0x550] sm:$0xff]
      %v413 = vld [vmem:[%s210 + $0x558] sm:$0xff]
      %v414 = vld [vmem:[%s210 + $0x560] sm:$0xff]
      %v415 = vld [vmem:[%s210 + $0x568] sm:$0xff]
      %v416 = vld [vmem:[%s210 + $0x570] sm:$0xff]
      %v417 = vld [vmem:[%s210 + $0x578] sm:$0xf]
      %v418 = vld [vmem:[%s210 + $0x57c] sm:$0xff]
      %v419 = vld [vmem:[%s210 + $0x584] sm:$0xff]
      %v420 = vld [vmem:[%s210 + $0x58c] sm:$0xff]
      %v421 = vld [vmem:[%s210 + $0x594] sm:$0xff]
      %v422 = vld [vmem:[%s210 + $0x59c] sm:$0xff]
      %v423 = vld [vmem:[%s210 + $0x5a4] sm:$0xff]
      %v424 = vld [vmem:[%s210 + $0x5ac] sm:$0xf]
      %v425 = vld [vmem:[%s210 + $0x5b0] sm:$0xff]
      %v426 = vld [vmem:[%s210 + $0x5b8] sm:$0xff]
      %v427 = vld [vmem:[%s210 + $0x5c0] sm:$0xff]
      %v428 = vld [vmem:[%s210 + $0x5c8] sm:$0xff]
      %v429 = vld [vmem:[%s210 + $0x5d0] sm:$0xff]
      %v430 = vld [vmem:[%s210 + $0x5d8] sm:$0xff]
      %v431 = vld [vmem:[%s210 + $0x5e0] sm:$0xf]
      %v432 = vld [vmem:[%s210 + $0x5e4] sm:$0xff]
      %v433 = vld [vmem:[%s210 + $0x5ec] sm:$0xff]
      %v434 = vld [vmem:[%s210 + $0x5f4] sm:$0xff]
      %v435 = vld [vmem:[%s210 + $0x5fc] sm:$0xff]
      %v436 = vld [vmem:[%s210 + $0x604] sm:$0xff]
      %v437 = vld [vmem:[%s210 + $0x60c] sm:$0xff]
      %v438 = vld [vmem:[%s210 + $0x614] sm:$0xf]
      %v439 = vld [vmem:[%s210 + $0x618] sm:$0xff]
      %v440 = vld [vmem:[%s210 + $0x620] sm:$0xff]
      %v441 = vld [vmem:[%s210 + $0x628] sm:$0xff]
      %v442 = vld [vmem:[%s210 + $0x630] sm:$0xff]
      %v443 = vld [vmem:[%s210 + $0x638] sm:$0xff]
      %v444 = vld [vmem:[%s210 + $0x640] sm:$0xff]
      %v445 = vld [vmem:[%s210 + $0x648] sm:$0xf]
      %v446 = vld [vmem:[%s210 + $0x64c] sm:$0xff]
      %v447 = vld [vmem:[%s210 + $0x654] sm:$0xff]
      %v448 = vld [vmem:[%s210 + $0x65c] sm:$0xff]
      %v449 = vld [vmem:[%s210 + $0x664] sm:$0xff]
      %v450 = vld [vmem:[%s210 + $0x66c] sm:$0xff]
      %v451 = vld [vmem:[%s210 + $0x674] sm:$0xff]
      %v452 = vld [vmem:[%s210 + $0x67c] sm:$0xf]
      %v453 = vld [vmem:[%s210 + $0x680] sm:$0xff]
      %v454 = vld [vmem:[%s210 + $0x688] sm:$0xff]
      %v455 = vld [vmem:[%s210 + $0x690] sm:$0xff]
      %v456 = vld [vmem:[%s210 + $0x698] sm:$0xff]
      %v457 = vld [vmem:[%s210 + $0x6a0] sm:$0xff]
      %v458 = vld [vmem:[%s210 + $0x6a8] sm:$0xff]
      %v459 = vld [vmem:[%s210 + $0x6b0] sm:$0xf]
      %v460 = vld [vmem:[%s210 + $0x6b4] sm:$0xff]
      %v461 = vld [vmem:[%s210 + $0x6bc] sm:$0xff]
      %v462 = vld [vmem:[%s210 + $0x6c4] sm:$0xff]
      %v463 = vld [vmem:[%s210 + $0x6cc] sm:$0xff]
      %v464 = vld [vmem:[%s210 + $0x6d4] sm:$0xff]
      %v465 = vld [vmem:[%s210 + $0x6dc] sm:$0xff]
      %v466 = vld [vmem:[%s210 + $0x6e4] sm:$0xf]
      %v467 = vld [vmem:[%s210 + $0x6e8] sm:$0xff]
      %v468 = vld [vmem:[%s210 + $0x6f0] sm:$0xff]
      %v469 = vld [vmem:[%s210 + $0x6f8] sm:$0xff]
      %v470 = vld [vmem:[%s210 + $0x700] sm:$0xff]
      %v471 = vld [vmem:[%s210 + $0x708] sm:$0xff]
      %v472 = vld [vmem:[%s210 + $0x710] sm:$0xff]
      %v473 = vld [vmem:[%s210 + $0x718] sm:$0xf]
      %v474 = vld [vmem:[%s210 + $0x71c] sm:$0xff]
      %v475 = vld [vmem:[%s210 + $0x724] sm:$0xff]
      %v476 = vld [vmem:[%s210 + $0x72c] sm:$0xff]
      %v477 = vld [vmem:[%s210 + $0x734] sm:$0xff]
      %v478 = vld [vmem:[%s210 + $0x73c] sm:$0xff]
      %v479 = vld [vmem:[%s210 + $0x744] sm:$0xff]
      %v480 = vld [vmem:[%s210 + $0x74c] sm:$0xf]
      %v481 = vld [vmem:[%s210 + $0x750] sm:$0xff]
      %v482 = vld [vmem:[%s210 + $0x758] sm:$0xff]
      %v483 = vld [vmem:[%s210 + $0x760] sm:$0xff]
      %v484 = vld [vmem:[%s210 + $0x768] sm:$0xff]
      %v485 = vld [vmem:[%s210 + $0x770] sm:$0xff]
      %v486 = vld [vmem:[%s210 + $0x778] sm:$0xff]
      %v487 = vld [vmem:[%s210 + $0x780] sm:$0xf]
      %v488 = vld [vmem:[%s210 + $0x784] sm:$0xff]
      %v489 = vld [vmem:[%s210 + $0x78c] sm:$0xff]
      %v490 = vld [vmem:[%s210 + $0x794] sm:$0xff]
      %v491 = vld [vmem:[%s210 + $0x79c] sm:$0xff]
      %v492 = vld [vmem:[%s210 + $0x7a4] sm:$0xff]
      %v493 = vld [vmem:[%s210 + $0x7ac] sm:$0xff]
      %v494 = vld [vmem:[%s210 + $0x7b4] sm:$0xf]
      %v495 = vld [vmem:[%s210 + $0x7b8] sm:$0xff]
      %v496 = vld [vmem:[%s210 + $0x7c0] sm:$0xff]
      %v497 = vld [vmem:[%s210 + $0x7c8] sm:$0xff]
      %v498 = vld [vmem:[%s210 + $0x7d0] sm:$0xff]
      %v499 = vld [vmem:[%s210 + $0x7d8] sm:$0xff]
      %v500 = vld [vmem:[%s210 + $0x7e0] sm:$0xff]
      %v501 = vld [vmem:[%s210 + $0x7e8] sm:$0xf]
      %v502 = vld [vmem:[%s210 + $0x7ec] sm:$0xff]
      %v503 = vld [vmem:[%s210 + $0x7f4] sm:$0xff]
      %v504 = vld [vmem:[%s210 + $0x7fc] sm:$0xff]
      %v505 = vld [vmem:[%s210 + $0x804] sm:$0xff]
      %v506 = vld [vmem:[%s210 + $0x80c] sm:$0xff]
      %v507 = vld [vmem:[%s210 + $0x814] sm:$0xff]
      %v508 = vld [vmem:[%s210 + $0x81c] sm:$0xf]
      %v509 = vld [vmem:[%s210 + $0x820] sm:$0xff]
      %v510 = vld [vmem:[%s210 + $0x828] sm:$0xff]
      %v511 = vld [vmem:[%s210 + $0x830] sm:$0xff]
      %v512 = vld [vmem:[%s210 + $0x838] sm:$0xff]
      %v513 = vld [vmem:[%s210 + $0x840] sm:$0xff]
      %v514 = vld [vmem:[%s210 + $0x848] sm:$0xff]
      %v515 = vld [vmem:[%s210 + $0x850] sm:$0xf]
      %v516 = vld [vmem:[%s210 + $0x854] sm:$0xff]
      %v517 = vld [vmem:[%s210 + $0x85c] sm:$0xff]
      %v518 = vld [vmem:[%s210 + $0x864] sm:$0xff]
      %v519 = vld [vmem:[%s210 + $0x86c] sm:$0xff]
      %v520 = vld [vmem:[%s210 + $0x874] sm:$0xff]
      %v521 = vld [vmem:[%s210 + $0x87c] sm:$0xff]
      %v522 = vld [vmem:[%s210 + $0x884] sm:$0xf]
      %v523 = vld [vmem:[%s210 + $0x888] sm:$0xff]
      %v524 = vld [vmem:[%s210 + $0x890] sm:$0xff]
      %v525 = vld [vmem:[%s210 + $0x898] sm:$0xff]
      %v526 = vld [vmem:[%s210 + $0x8a0] sm:$0xff]
      %v527 = vld [vmem:[%s210 + $0x8a8] sm:$0xff]
      %v528 = vld [vmem:[%s210 + $0x8b0] sm:$0xff]
      %v529 = vld [vmem:[%s210 + $0x8b8] sm:$0xf]
      %v530 = vld [vmem:[%s210 + $0x8bc] sm:$0xff]
      %v531 = vld [vmem:[%s210 + $0x8c4] sm:$0xff]
      %v532 = vld [vmem:[%s210 + $0x8cc] sm:$0xff]
      %v533 = vld [vmem:[%s210 + $0x8d4] sm:$0xff]
      %v534 = vld [vmem:[%s210 + $0x8dc] sm:$0xff]
      %v535 = vld [vmem:[%s210 + $0x8e4] sm:$0xff]
      %v536 = vld [vmem:[%s210 + $0x8ec] sm:$0xf]
      %v537 = vld [vmem:[%s210 + $0x8f0] sm:$0xff]
      %v538 = vld [vmem:[%s210 + $0x8f8] sm:$0xff]
      %v539 = vld [vmem:[%s210 + $0x900] sm:$0xff]
      %v540 = vld [vmem:[%s210 + $0x908] sm:$0xff]
      %v541 = vld [vmem:[%s210 + $0x910] sm:$0xff]
      %v542 = vld [vmem:[%s210 + $0x918] sm:$0xff]
      %v543 = vld [vmem:[%s210 + $0x920] sm:$0xf]
      %v544 = vld [vmem:[%s210 + $0x924] sm:$0xff]
      %v545 = vld [vmem:[%s210 + $0x92c] sm:$0xff]
      %v546 = vld [vmem:[%s210 + $0x934] sm:$0xff]
      %v547 = vld [vmem:[%s210 + $0x93c] sm:$0xff]
      %v548 = vld [vmem:[%s210 + $0x944] sm:$0xff]
      %v549 = vld [vmem:[%s210 + $0x94c] sm:$0xff]
      %v550 = vld [vmem:[%s210 + $0x954] sm:$0xf]
      %v551 = vld [vmem:[%s210 + $0x958] sm:$0xff]
      %v552 = vld [vmem:[%s210 + $0x960] sm:$0xff]
      %v553 = vld [vmem:[%s210 + $0x968] sm:$0xff]
      %v554 = vld [vmem:[%s210 + $0x970] sm:$0xff]
      %v555 = vld [vmem:[%s210 + $0x978] sm:$0xff]
      %v556 = vld [vmem:[%s210 + $0x980] sm:$0xff]
      %v557 = vld [vmem:[%s210 + $0x988] sm:$0xf]
      %v558 = vld [vmem:[%s210 + $0x98c] sm:$0xff]
      %v559 = vld [vmem:[%s210 + $0x994] sm:$0xff]
      %v560 = vld [vmem:[%s210 + $0x99c] sm:$0xff]
      %v561 = vld [vmem:[%s210 + $0x9a4] sm:$0xff]
      %v562 = vld [vmem:[%s210 + $0x9ac] sm:$0xff]
      %v563 = vld [vmem:[%s210 + $0x9b4] sm:$0xff]
      %v564 = vld [vmem:[%s210 + $0x9bc] sm:$0xf]
      %v565 = vld [vmem:[%s210 + $0x9c0] sm:$0xff]
      %v566 = vld [vmem:[%s210 + $0x9c8] sm:$0xff]
      %v567 = vld [vmem:[%s210 + $0x9d0] sm:$0xff]
      %v568 = vld [vmem:[%s210 + $0x9d8] sm:$0xff]
      %v569 = vld [vmem:[%s210 + $0x9e0] sm:$0xff]
      %v570 = vld [vmem:[%s210 + $0x9e8] sm:$0xff]
      %v571 = vld [vmem:[%s210 + $0x9f0] sm:$0xf]
      %v572 = vld [vmem:[%s210 + $0x9f4] sm:$0xff]
      %v573 = vld [vmem:[%s210 + $0x9fc] sm:$0xff]
      %v574 = vld [vmem:[%s210 + $0xa04] sm:$0xff]
      %v575 = vld [vmem:[%s210 + $0xa0c] sm:$0xff]
      %v576 = vld [vmem:[%s210 + $0xa14] sm:$0xff]
      %v577 = vld [vmem:[%s210 + $0xa1c] sm:$0xff]
      %v578 = vld [vmem:[%s210 + $0xa24] sm:$0xf]
      %v579 = vld [vmem:[%s210 + $0xa28] sm:$0xff]
      %v580 = vld [vmem:[%s210 + $0xa30] sm:$0xff]
      %v581 = vld [vmem:[%s210 + $0xa38] sm:$0xff]
      %v582 = vld [vmem:[%s210 + $0xa40] sm:$0xff]
      %v583 = vld [vmem:[%s210 + $0xa48] sm:$0xff]
      %v584 = vld [vmem:[%s210 + $0xa50] sm:$0xff]
      %v585 = vld [vmem:[%s210 + $0xa58] sm:$0xf]
      %v586 = vld [vmem:[%s210 + $0xa5c] sm:$0xff]
      %v587 = vld [vmem:[%s210 + $0xa64] sm:$0xff]
      %v588 = vld [vmem:[%s210 + $0xa6c] sm:$0xff]
      %v589 = vld [vmem:[%s210 + $0xa74] sm:$0xff]
      %v590 = vld [vmem:[%s210 + $0xa7c] sm:$0xff]
      %v591 = vld [vmem:[%s210 + $0xa84] sm:$0xff]
      %v592 = vld [vmem:[%s210 + $0xa8c] sm:$0xf]
      %v593 = vld [vmem:[%s210 + $0xa90] sm:$0xff]
      %v594 = vld [vmem:[%s210 + $0xa98] sm:$0xff]
      %v595 = vld [vmem:[%s210 + $0xaa0] sm:$0xff]
      %v596 = vld [vmem:[%s210 + $0xaa8] sm:$0xff]
      %v597 = vld [vmem:[%s210 + $0xab0] sm:$0xff]
      %v598 = vld [vmem:[%s210 + $0xab8] sm:$0xff]
      %v599 = vld [vmem:[%s210 + $0xac0] sm:$0xf]
      %v600 = vld [vmem:[%s210 + $0xac4] sm:$0xff]
      %v601 = vld [vmem:[%s210 + $0xacc] sm:$0xff]
      %v602 = vld [vmem:[%s210 + $0xad4] sm:$0xff]
      %v603 = vld [vmem:[%s210 + $0xadc] sm:$0xff]
      %v604 = vld [vmem:[%s210 + $0xae4] sm:$0xff]
      %v605 = vld [vmem:[%s210 + $0xaec] sm:$0xff]
      %v606 = vld [vmem:[%s210 + $0xaf4] sm:$0xf]
      %v607 = vld [vmem:[%s210 + $0xaf8] sm:$0xff]
      %v608 = vld [vmem:[%s210 + $0xb00] sm:$0xff]
      %v609 = vld [vmem:[%s210 + $0xb08] sm:$0xff]
      %v610 = vld [vmem:[%s210 + $0xb10] sm:$0xff]
      %v611 = vld [vmem:[%s210 + $0xb18] sm:$0xff]
      %v612 = vld [vmem:[%s210 + $0xb20] sm:$0xff]
      %v613 = vld [vmem:[%s210 + $0xb28] sm:$0xf]
      %v614 = vld [vmem:[%s210 + $0xb2c] sm:$0xff]
      %v615 = vld [vmem:[%s210 + $0xb34] sm:$0xff]
      %v616 = vld [vmem:[%s210 + $0xb3c] sm:$0xff]
      %v617 = vld [vmem:[%s210 + $0xb44] sm:$0xff]
      %v618 = vld [vmem:[%s210 + $0xb4c] sm:$0xff]
      %v619 = vld [vmem:[%s210 + $0xb54] sm:$0xff]
      %v620 = vld [vmem:[%s210 + $0xb5c] sm:$0xf]
      %v621 = vld [vmem:[%s210 + $0xb60] sm:$0xff]
      %v622 = vld [vmem:[%s210 + $0xb68] sm:$0xff]
      %v623 = vld [vmem:[%s210 + $0xb70] sm:$0xff]
      %v624 = vld [vmem:[%s210 + $0xb78] sm:$0xff]
      %v625 = vld [vmem:[%s210 + $0xb80] sm:$0xff]
      %v626 = vld [vmem:[%s210 + $0xb88] sm:$0xff]
      %v627 = vld [vmem:[%s210 + $0xb90] sm:$0xf]
      %v628 = vld [vmem:[%s210 + $0xb94] sm:$0xff]
      %v629 = vld [vmem:[%s210 + $0xb9c] sm:$0xff]
      %v630 = vld [vmem:[%s210 + $0xba4] sm:$0xff]
      %v631 = vld [vmem:[%s210 + $0xbac] sm:$0xff]
      %v632 = vld [vmem:[%s210 + $0xbb4] sm:$0xff]
      %v633 = vld [vmem:[%s210 + $0xbbc] sm:$0xff]
      %v634 = vld [vmem:[%s210 + $0xbc4] sm:$0xf]
      %v635 = vld [vmem:[%s210 + $0xbc8] sm:$0xff]
      %v636 = vld [vmem:[%s210 + $0xbd0] sm:$0xff]
      %v637 = vld [vmem:[%s210 + $0xbd8] sm:$0xff]
      %v638 = vld [vmem:[%s210 + $0xbe0] sm:$0xff]
      %v639 = vld [vmem:[%s210 + $0xbe8] sm:$0xff]
      %v640 = vld [vmem:[%s210 + $0xbf0] sm:$0xff]
      %v641 = vld [vmem:[%s210 + $0xbf8] sm:$0xf]
      %v642 = vld [vmem:[%s210 + $0xbfc] sm:$0xff]
      %v643 = vld [vmem:[%s210 + $0xc04] sm:$0xff]
      %v644 = vld [vmem:[%s210 + $0xc0c] sm:$0xff]
      %v645 = vld [vmem:[%s210 + $0xc14] sm:$0xff]
      %v646 = vld [vmem:[%s210 + $0xc1c] sm:$0xff]
      %v647 = vld [vmem:[%s210 + $0xc24] sm:$0xff]
      %v648 = vld [vmem:[%s210 + $0xc2c] sm:$0xf]
      %v649 = vld [vmem:[%s210 + $0xc30] sm:$0xff]
      %v650 = vld [vmem:[%s210 + $0xc38] sm:$0xff]
      %v651 = vld [vmem:[%s210 + $0xc40] sm:$0xff]
      %v652 = vld [vmem:[%s210 + $0xc48] sm:$0xff]
      %v653 = vld [vmem:[%s210 + $0xc50] sm:$0xff]
      %v654 = vld [vmem:[%s210 + $0xc58] sm:$0xff]
      %v655 = vld [vmem:[%s210 + $0xc60] sm:$0xf]
      %v656 = vld [vmem:[%s210 + $0xc64] sm:$0xff]
      %v657 = vld [vmem:[%s210 + $0xc6c] sm:$0xff]
      %v658 = vld [vmem:[%s210 + $0xc74] sm:$0xff]
      %v659 = vld [vmem:[%s210 + $0xc7c] sm:$0xff]
      %v660 = vld [vmem:[%s210 + $0xc84] sm:$0xff]
      %v661 = vld [vmem:[%s210 + $0xc8c] sm:$0xff]
      %v662 = vld [vmem:[%s210 + $0xc94] sm:$0xf]
      %v663 = vld [vmem:[%s210 + $0xc98] sm:$0xff]
      %v664 = vld [vmem:[%s210 + $0xca0] sm:$0xff]
      %v665 = vld [vmem:[%s210 + $0xca8] sm:$0xff]
      %v666 = vld [vmem:[%s210 + $0xcb0] sm:$0xff]
      %v667 = vld [vmem:[%s210 + $0xcb8] sm:$0xff]
      %v668 = vld [vmem:[%s210 + $0xcc0] sm:$0xff]
      %v669 = vld [vmem:[%s210 + $0xcc8] sm:$0xf]
      %v670 = vld [vmem:[%s210 + $0xccc] sm:$0xff]
      %v671 = vld [vmem:[%s210 + $0xcd4] sm:$0xff]
      %v672 = vld [vmem:[%s210 + $0xcdc] sm:$0xff]
      %v673 = vld [vmem:[%s210 + $0xce4] sm:$0xff]
      %v674 = vld [vmem:[%s210 + $0xcec] sm:$0xff]
      %v675 = vld [vmem:[%s210 + $0xcf4] sm:$0xff]
      %v676 = vld [vmem:[%s210 + $0xcfc] sm:$0xf]
      %v677 = vld [vmem:[%s215] sm:$0xf]
      %v678 = vld [vmem:[%s215 + $0x4] sm:$0xf]
      %v679 = vld [vmem:[%s215 + $0x8] sm:$0xf]
      %v680 = vld [vmem:[%s215 + $0xc] sm:$0xf]
      %v681 = vld [vmem:[%s215 + $0x10] sm:$0xf]
      %v682 = vld [vmem:[%s215 + $0x14] sm:$0xf]
      %v683 = vld [vmem:[%s215 + $0x18] sm:$0xf]
      %v684 = vld [vmem:[%s215 + $0x1c] sm:$0xf]
      %v685 = vld [vmem:[%s215 + $0x20] sm:$0xf]
      %v686 = vld [vmem:[%s215 + $0x24] sm:$0xf]
      %v687 = vld [vmem:[%s215 + $0x28] sm:$0xf]
      %v688 = vld [vmem:[%s215 + $0x2c] sm:$0xf]
      %v689 = vld [vmem:[%s215 + $0x30] sm:$0xf]
      %v690 = vld [vmem:[%s215 + $0x34] sm:$0xf]
      %v691 = vld [vmem:[%s215 + $0x38] sm:$0xf]
      %v692 = vld [vmem:[%s215 + $0x3c] sm:$0xf]
      %v693 = vld [vmem:[%s215 + $0x40] sm:$0xf]
      %v694 = vld [vmem:[%s215 + $0x44] sm:$0xf]
      %v695 = vld [vmem:[%s215 + $0x48] sm:$0xf]
      %v696 = vld [vmem:[%s215 + $0x4c] sm:$0xf]
      %v697 = vld [vmem:[%s215 + $0x50] sm:$0xf]
      %v698 = vld [vmem:[%s215 + $0x54] sm:$0xf]
      %v699 = vld [vmem:[%s215 + $0x58] sm:$0xf]
      %v700 = vld [vmem:[%s215 + $0x5c] sm:$0xf]
      %v701 = vld [vmem:[%s215 + $0x60] sm:$0xf]
      %v702 = vld [vmem:[%s215 + $0x64] sm:$0xf]
      %v703 = vld [vmem:[%s215 + $0x68] sm:$0xf]
      %v704 = vld [vmem:[%s215 + $0x6c] sm:$0xf]
      %v705 = vld [vmem:[%s215 + $0x70] sm:$0xf]
      %v706 = vld [vmem:[%s215 + $0x74] sm:$0xf]
      %v707 = vld [vmem:[%s215 + $0x78] sm:$0xf]
      %v708 = vld [vmem:[%s215 + $0x7c] sm:$0xf]
      %v709 = vld [vmem:[%s215 + $0x80] sm:$0xf]
      %v710 = vld [vmem:[%s215 + $0x84] sm:$0xf]
      %v711 = vld [vmem:[%s215 + $0x88] sm:$0xf]
      %v712 = vld [vmem:[%s215 + $0x8c] sm:$0xf]
      %v713 = vld [vmem:[%s215 + $0x90] sm:$0xf]
      %v714 = vld [vmem:[%s215 + $0x94] sm:$0xf]
      %v715 = vld [vmem:[%s215 + $0x98] sm:$0xf]
      %v716 = vld [vmem:[%s215 + $0x9c] sm:$0xf]
      %v717 = vld [vmem:[%s215 + $0xa0] sm:$0xf]
      %v718 = vld [vmem:[%s215 + $0xa4] sm:$0xf]
      %v719 = vld [vmem:[%s215 + $0xa8] sm:$0xf]
      %v720 = vld [vmem:[%s215 + $0xac] sm:$0xf]
      %v721 = vld [vmem:[%s215 + $0xb0] sm:$0xf]
      %v722 = vld [vmem:[%s215 + $0xb4] sm:$0xf]
      %v723 = vld [vmem:[%s215 + $0xb8] sm:$0xf]
      %v724 = vld [vmem:[%s215 + $0xbc] sm:$0xf]
      %v725 = vld [vmem:[%s215 + $0xc0] sm:$0xf]
      %v726 = vld [vmem:[%s215 + $0xc4] sm:$0xf]
      %v727 = vld [vmem:[%s215 + $0xc8] sm:$0xf]
      %v728 = vld [vmem:[%s215 + $0xcc] sm:$0xf]
      %v729 = vld [vmem:[%s215 + $0xd0] sm:$0xf]
      %v730 = vld [vmem:[%s215 + $0xd4] sm:$0xf]
      %v731 = vld [vmem:[%s215 + $0xd8] sm:$0xf]
      %v732 = vld [vmem:[%s215 + $0xdc] sm:$0xf]
      %v733 = vld [vmem:[%s215 + $0xe0] sm:$0xf]
      %v734 = vld [vmem:[%s215 + $0xe4] sm:$0xf]
      %v735 = vld [vmem:[%s215 + $0xe8] sm:$0xf]
      %v736 = vld [vmem:[%s215 + $0xec] sm:$0xf]
      %v737 = vld [vmem:[%s215 + $0xf0] sm:$0xf]
      %v738 = vld [vmem:[%s215 + $0xf4] sm:$0xf]
      %v739 = vld [vmem:[%s215 + $0xf8] sm:$0xf]
      %v740 = vld [vmem:[%s215 + $0xfc] sm:$0xf]
      %v741 = vld [vmem:[%s215 + $0x100] sm:$0xf]
      %v742 = vld [vmem:[%s215 + $0x104] sm:$0xf]
      %v743 = vld [vmem:[%s215 + $0x108] sm:$0xf]
      %v744 = vld [vmem:[%s215 + $0x10c] sm:$0xf]
      %v745 = vld [vmem:[%s215 + $0x110] sm:$0xf]
      %v746 = vld [vmem:[%s215 + $0x114] sm:$0xf]
      %v747 = vld [vmem:[%s215 + $0x118] sm:$0xf]
      %v748 = vld [vmem:[%s215 + $0x11c] sm:$0xf]
      %v749 = vld [vmem:[%s215 + $0x120] sm:$0xf]
      %v750 = vld [vmem:[%s215 + $0x124] sm:$0xf]
      %v751 = vld [vmem:[%s215 + $0x128] sm:$0xf]
      %v752 = vld [vmem:[%s215 + $0x12c] sm:$0xf]
      %v753 = vld [vmem:[%s215 + $0x130] sm:$0xf]
      %v754 = vld [vmem:[%s215 + $0x134] sm:$0xf]
      %v755 = vld [vmem:[%s215 + $0x138] sm:$0xf]
      %v756 = vld [vmem:[%s215 + $0x13c] sm:$0xf]
      %v757 = vld [vmem:[%s215 + $0x140] sm:$0xf]
      %v758 = vld [vmem:[%s215 + $0x144] sm:$0xf]
      %v759 = vld [vmem:[%s215 + $0x148] sm:$0xf]
      %v760 = vld [vmem:[%s215 + $0x14c] sm:$0xf]
      %v761 = vld [vmem:[%s215 + $0x150] sm:$0xf]
      %v762 = vld [vmem:[%s215 + $0x154] sm:$0xf]
      %v763 = vld [vmem:[%s215 + $0x158] sm:$0xf]
      %v764 = vld [vmem:[%s215 + $0x15c] sm:$0xf]
      %v765 = vld [vmem:[%s215 + $0x160] sm:$0xf]
      %v766 = vld [vmem:[%s215 + $0x164] sm:$0xf]
      %v767 = vld [vmem:[%s215 + $0x168] sm:$0xf]
      %v768 = vld [vmem:[%s215 + $0x16c] sm:$0xf]
      %v769 = vld [vmem:[%s215 + $0x170] sm:$0xf]
      %v770 = vld [vmem:[%s215 + $0x174] sm:$0xf]
      %v771 = vld [vmem:[%s215 + $0x178] sm:$0xf]
      %v772 = vld [vmem:[%s215 + $0x17c] sm:$0xf]
      %v773 = vld [vmem:[%s215 + $0x180] sm:$0xf]
      %v774 = vld [vmem:[%s215 + $0x184] sm:$0xf]
      %v775 = vld [vmem:[%s215 + $0x188] sm:$0xf]
      %v776 = vld [vmem:[%s215 + $0x18c] sm:$0xf]
      %v777 = vld [vmem:[%s215 + $0x190] sm:$0xf]
      %v778 = vld [vmem:[%s215 + $0x194] sm:$0xf]
      %v779 = vld [vmem:[%s215 + $0x198] sm:$0xf]
      %v780 = vld [vmem:[%s215 + $0x19c] sm:$0xf]
      %v781 = vld [vmem:[%s215 + $0x1a0] sm:$0xf]
      %v782 = vld [vmem:[%s215 + $0x1a4] sm:$0xf]
      %v783 = vld [vmem:[%s215 + $0x1a8] sm:$0xf]
      %v784 = vld [vmem:[%s215 + $0x1ac] sm:$0xf]
      %v785 = vld [vmem:[%s215 + $0x1b0] sm:$0xf]
      %v786 = vld [vmem:[%s215 + $0x1b4] sm:$0xf]
      %v787 = vld [vmem:[%s215 + $0x1b8] sm:$0xf]
      %v788 = vld [vmem:[%s215 + $0x1bc] sm:$0xf]
      %v789 = vld [vmem:[%s215 + $0x1c0] sm:$0xf]
      %v790 = vld [vmem:[%s215 + $0x1c4] sm:$0xf]
      %v791 = vld [vmem:[%s215 + $0x1c8] sm:$0xf]
      %v792 = vld [vmem:[%s215 + $0x1cc] sm:$0xf]
      %v793 = vld [vmem:[%s215 + $0x1d0] sm:$0xf]
      %v794 = vld [vmem:[%s215 + $0x1d4] sm:$0xf]
      %v795 = vld [vmem:[%s215 + $0x1d8] sm:$0xf]
      %v796 = vld [vmem:[%s215 + $0x1dc] sm:$0xf]
      %v797 = vld [vmem:[%s215 + $0x1e0] sm:$0xf]
      %v798 = vld [vmem:[%s215 + $0x1e4] sm:$0xf]
      %v799 = vld [vmem:[%s215 + $0x1e8] sm:$0xf]
      %v800 = vld [vmem:[%s215 + $0x1ec] sm:$0xf]
      %v801 = vld [vmem:[%s215 + $0x1f0] sm:$0xf]
      %v802 = vld [vmem:[%s215 + $0x1f4] sm:$0xf]
      %v803 = vld [vmem:[%s215 + $0x1f8] sm:$0xf]
      %v804 = vld [vmem:[%s215 + $0x1fc] sm:$0xf]
      %v805 = vld [vmem:[%s215 + $0x200] sm:$0xf]
      %v806 = vld [vmem:[%s215 + $0x204] sm:$0xf]
      %v807 = vld [vmem:[%s215 + $0x208] sm:$0xf]
      %v808 = vld [vmem:[%s215 + $0x20c] sm:$0xf]
      %v809 = vld [vmem:[%s215 + $0x210] sm:$0xf]
      %v810 = vld [vmem:[%s215 + $0x214] sm:$0xf]
      %v811 = vld [vmem:[%s215 + $0x218] sm:$0xf]
      %v812 = vld [vmem:[%s215 + $0x21c] sm:$0xf]
      %v813 = vld [vmem:[%s215 + $0x220] sm:$0xf]
      %v814 = vld [vmem:[%s215 + $0x224] sm:$0xf]
      %v815 = vld [vmem:[%s215 + $0x228] sm:$0xf]
      %v816 = vld [vmem:[%s215 + $0x22c] sm:$0xf]
      %v817 = vld [vmem:[%s215 + $0x230] sm:$0xf]
      %v818 = vld [vmem:[%s215 + $0x234] sm:$0xf]
      %v819 = vld [vmem:[%s215 + $0x238] sm:$0xf]
      %v820 = vld [vmem:[%s215 + $0x23c] sm:$0xf]
      %v821 = vld [vmem:[%s215 + $0x240] sm:$0xf]
      %v822 = vld [vmem:[%s215 + $0x244] sm:$0xf]
      %v823 = vld [vmem:[%s215 + $0x248] sm:$0xf]
      %v824 = vld [vmem:[%s215 + $0x24c] sm:$0xf]
      %v825 = vld [vmem:[%s215 + $0x250] sm:$0xf]
      %v826 = vld [vmem:[%s215 + $0x254] sm:$0xf]
      %v827 = vld [vmem:[%s215 + $0x258] sm:$0xf]
      %v828 = vld [vmem:[%s215 + $0x25c] sm:$0xf]
      %v829 = vld [vmem:[%s215 + $0x260] sm:$0xf]
      %v830 = vld [vmem:[%s215 + $0x264] sm:$0xf]
      %v831 = vld [vmem:[%s215 + $0x268] sm:$0xf]
      %v832 = vld [vmem:[%s215 + $0x26c] sm:$0xf]
      %v833 = vld [vmem:[%s215 + $0x270] sm:$0xf]
      %v834 = vld [vmem:[%s215 + $0x274] sm:$0xf]
      %v835 = vld [vmem:[%s215 + $0x278] sm:$0xf]
      %v836 = vld [vmem:[%s215 + $0x27c] sm:$0xf]
      %v837 = vld [vmem:[%s215 + $0x280] sm:$0xf]
      %v838 = vld [vmem:[%s215 + $0x284] sm:$0xf]
      %v839 = vld [vmem:[%s215 + $0x288] sm:$0xf]
      %v840 = vld [vmem:[%s215 + $0x28c] sm:$0xf]
      %v841 = vld [vmem:[%s215 + $0x290] sm:$0xf]
      %v842 = vld [vmem:[%s215 + $0x294] sm:$0xf]
      %v843 = vld [vmem:[%s215 + $0x298] sm:$0xf]
      %v844 = vld [vmem:[%s215 + $0x29c] sm:$0xf]
      %v845 = vld [vmem:[%s215 + $0x2a0] sm:$0xf]
      %v846 = vld [vmem:[%s215 + $0x2a4] sm:$0xf]
      %v847 = vld [vmem:[%s215 + $0x2a8] sm:$0xf]
      %v848 = vld [vmem:[%s215 + $0x2ac] sm:$0xf]
      %v849 = vld [vmem:[%s215 + $0x2b0] sm:$0xf]
      %v850 = vld [vmem:[%s215 + $0x2b4] sm:$0xf]
      %v851 = vld [vmem:[%s215 + $0x2b8] sm:$0xf]
      %v852 = vld [vmem:[%s215 + $0x2bc] sm:$0xf]
      %v853 = vld [vmem:[%s215 + $0x2c0] sm:$0xf]
      %v854 = vld [vmem:[%s215 + $0x2c4] sm:$0xf]
      %v855 = vld [vmem:[%s215 + $0x2c8] sm:$0xf]
      %v856 = vld [vmem:[%s215 + $0x2cc] sm:$0xf]
      %v857 = vld [vmem:[%s215 + $0x2d0] sm:$0xf]
      %v858 = vld [vmem:[%s215 + $0x2d4] sm:$0xf]
      %v859 = vld [vmem:[%s215 + $0x2d8] sm:$0xf]
      %v860 = vld [vmem:[%s215 + $0x2dc] sm:$0xf]
      %v861 = vld [vmem:[%s215 + $0x2e0] sm:$0xf]
      %v862 = vld [vmem:[%s215 + $0x2e4] sm:$0xf]
      %v863 = vld [vmem:[%s215 + $0x2e8] sm:$0xf]
      %v864 = vld [vmem:[%s215 + $0x2ec] sm:$0xf]
      %v865 = vld [vmem:[%s215 + $0x2f0] sm:$0xf]
      %v866 = vld [vmem:[%s215 + $0x2f4] sm:$0xf]
      %v867 = vld [vmem:[%s215 + $0x2f8] sm:$0xf]
      %v868 = vld [vmem:[%s215 + $0x2fc] sm:$0xf]
      %v869 = vld [vmem:[%s215 + $0x300] sm:$0xf]
      %v870 = vld [vmem:[%s215 + $0x304] sm:$0xf]
      %v871 = vld [vmem:[%s215 + $0x308] sm:$0xf]
      %v872 = vld [vmem:[%s215 + $0x30c] sm:$0xf]
      %v873 = vld [vmem:[%s215 + $0x310] sm:$0xf]
      %v874 = vld [vmem:[%s215 + $0x314] sm:$0xf]
      %v875 = vld [vmem:[%s215 + $0x318] sm:$0xf]
      %v876 = vld [vmem:[%s215 + $0x31c] sm:$0xf]
      %v877 = vld [vmem:[%s218] sm:$0x1]
      %v879 = vlaneseq
      %v880 = vshrl.u32 %v879, 7
      %v881 = vsub.s32 0, %v880
      %v882 = vrot.slane %v877, %v881
      %v1332 = vunpack.c.l.b16 %v229
      %v1333 = vunpack.c.h.b16 %v229
      %v1334 = vunpack.c.l.b16 %v230
      %v1335 = vunpack.c.h.b16 %v230
      %v1336 = vunpack.c.l.b16 %v231
      %v1337 = vunpack.c.h.b16 %v231
      %v1338 = vunpack.c.l.b16 %v232
      %v1339 = vunpack.c.h.b16 %v232
      %v1340 = vunpack.c.l.b16 %v233
      %v1341 = vunpack.c.h.b16 %v233
      %v1342 = vunpack.c.l.b16 %v234
      %v1343 = vunpack.c.h.b16 %v234
      %v1344 = vunpack.c.l.b16 %v235
      %v1345 = vunpack.c.l.b16 %v236
      %v1346 = vunpack.c.h.b16 %v236
      %v1347 = vunpack.c.l.b16 %v237
      %v1348 = vunpack.c.h.b16 %v237
      %v1349 = vunpack.c.l.b16 %v238
      %v1350 = vunpack.c.h.b16 %v238
      %v1351 = vunpack.c.l.b16 %v239
      %v1352 = vunpack.c.h.b16 %v239
      %v1353 = vunpack.c.l.b16 %v240
      %v1354 = vunpack.c.h.b16 %v240
      %v1355 = vunpack.c.l.b16 %v241
      %v1356 = vunpack.c.h.b16 %v241
      %v1357 = vunpack.c.l.b16 %v242
      %v1358 = vunpack.c.l.b16 %v243
      %v1359 = vunpack.c.h.b16 %v243
      %v1360 = vunpack.c.l.b16 %v244
      %v1361 = vunpack.c.h.b16 %v244
      %v1362 = vunpack.c.l.b16 %v245
      %v1363 = vunpack.c.h.b16 %v245
      %v1364 = vunpack.c.l.b16 %v246
      %v1365 = vunpack.c.h.b16 %v246
      %v1366 = vunpack.c.l.b16 %v247
      %v1367 = vunpack.c.h.b16 %v247
      %v1368 = vunpack.c.l.b16 %v248
      %v1369 = vunpack.c.h.b16 %v248
      %v1370 = vunpack.c.l.b16 %v249
      %v1371 = vunpack.c.l.b16 %v250
      %v1372 = vunpack.c.h.b16 %v250
      %v1373 = vunpack.c.l.b16 %v251
      %v1374 = vunpack.c.h.b16 %v251
      %v1375 = vunpack.c.l.b16 %v252
      %v1376 = vunpack.c.h.b16 %v252
      %v1377 = vunpack.c.l.b16 %v253
      %v1378 = vunpack.c.h.b16 %v253
      %v1379 = vunpack.c.l.b16 %v254
      %v1380 = vunpack.c.h.b16 %v254
      %v1381 = vunpack.c.l.b16 %v255
      %v1382 = vunpack.c.h.b16 %v255
      %v1383 = vunpack.c.l.b16 %v256
      %v1384 = vunpack.c.l.b16 %v257
      %v1385 = vunpack.c.h.b16 %v257
      %v1386 = vunpack.c.l.b16 %v258
      %v1387 = vunpack.c.h.b16 %v258
      %v1388 = vunpack.c.l.b16 %v259
      %v1389 = vunpack.c.h.b16 %v259
      %v1390 = vunpack.c.l.b16 %v260
      %v1391 = vunpack.c.h.b16 %v260
      %v1392 = vunpack.c.l.b16 %v261
      %v1393 = vunpack.c.h.b16 %v261
      %v1394 = vunpack.c.l.b16 %v262
      %v1395 = vunpack.c.h.b16 %v262
      %v1396 = vunpack.c.l.b16 %v263
      %v1397 = vunpack.c.l.b16 %v264
      %v1398 = vunpack.c.h.b16 %v264
      %v1399 = vunpack.c.l.b16 %v265
      %v1400 = vunpack.c.h.b16 %v265
      %v1401 = vunpack.c.l.b16 %v266
      %v1402 = vunpack.c.h.b16 %v266
      %v1403 = vunpack.c.l.b16 %v267
      %v1404 = vunpack.c.h.b16 %v267
      %v1405 = vunpack.c.l.b16 %v268
      %v1406 = vunpack.c.h.b16 %v268
      %v1407 = vunpack.c.l.b16 %v269
      %v1408 = vunpack.c.h.b16 %v269
      %v1409 = vunpack.c.l.b16 %v270
      %v1410 = vunpack.c.l.b16 %v271
      %v1411 = vunpack.c.h.b16 %v271
      %v1412 = vunpack.c.l.b16 %v272
      %v1413 = vunpack.c.h.b16 %v272
      %v1414 = vunpack.c.l.b16 %v273
      %v1415 = vunpack.c.h.b16 %v273
      %v1416 = vunpack.c.l.b16 %v274
      %v1417 = vunpack.c.h.b16 %v274
      %v1418 = vunpack.c.l.b16 %v275
      %v1419 = vunpack.c.h.b16 %v275
      %v1420 = vunpack.c.l.b16 %v276
      %v1421 = vunpack.c.h.b16 %v276
      %v1422 = vunpack.c.l.b16 %v277
      %v1423 = vunpack.c.l.b16 %v278
      %v1424 = vunpack.c.h.b16 %v278
      %v1425 = vunpack.c.l.b16 %v279
      %v1426 = vunpack.c.h.b16 %v279
      %v1427 = vunpack.c.l.b16 %v280
      %v1428 = vunpack.c.h.b16 %v280
      %v1429 = vunpack.c.l.b16 %v281
      %v1430 = vunpack.c.h.b16 %v281
      %v1431 = vunpack.c.l.b16 %v282
      %v1432 = vunpack.c.h.b16 %v282
      %v1433 = vunpack.c.l.b16 %v283
      %v1434 = vunpack.c.h.b16 %v283
      %v1435 = vunpack.c.l.b16 %v284
      %v1436 = vunpack.c.l.b16 %v285
      %v1437 = vunpack.c.h.b16 %v285
      %v1438 = vunpack.c.l.b16 %v286
      %v1439 = vunpack.c.h.b16 %v286
      %v1440 = vunpack.c.l.b16 %v287
      %v1441 = vunpack.c.h.b16 %v287
      %v1442 = vunpack.c.l.b16 %v288
      %v1443 = vunpack.c.h.b16 %v288
      %v1444 = vunpack.c.l.b16 %v289
      %v1445 = vunpack.c.h.b16 %v289
      %v1446 = vunpack.c.l.b16 %v290
      %v1447 = vunpack.c.h.b16 %v290
      %v1448 = vunpack.c.l.b16 %v291
      %v1449 = vunpack.c.l.b16 %v292
      %v1450 = vunpack.c.h.b16 %v292
      %v1451 = vunpack.c.l.b16 %v293
      %v1452 = vunpack.c.h.b16 %v293
      %v1453 = vunpack.c.l.b16 %v294
      %v1454 = vunpack.c.h.b16 %v294
      %v1455 = vunpack.c.l.b16 %v295
      %v1456 = vunpack.c.h.b16 %v295
      %v1457 = vunpack.c.l.b16 %v296
      %v1458 = vunpack.c.h.b16 %v296
      %v1459 = vunpack.c.l.b16 %v297
      %v1460 = vunpack.c.h.b16 %v297
      %v1461 = vunpack.c.l.b16 %v298
      %v1462 = vunpack.c.l.b16 %v299
      %v1463 = vunpack.c.h.b16 %v299
      %v1464 = vunpack.c.l.b16 %v300
      %v1465 = vunpack.c.h.b16 %v300
      %v1466 = vunpack.c.l.b16 %v301
      %v1467 = vunpack.c.h.b16 %v301
      %v1468 = vunpack.c.l.b16 %v302
      %v1469 = vunpack.c.h.b16 %v302
      %v1470 = vunpack.c.l.b16 %v303
      %v1471 = vunpack.c.h.b16 %v303
      %v1472 = vunpack.c.l.b16 %v304
      %v1473 = vunpack.c.h.b16 %v304
      %v1474 = vunpack.c.l.b16 %v305
      %v1475 = vunpack.c.l.b16 %v306
      %v1476 = vunpack.c.h.b16 %v306
      %v1477 = vunpack.c.l.b16 %v307
      %v1478 = vunpack.c.h.b16 %v307
      %v1479 = vunpack.c.l.b16 %v308
      %v1480 = vunpack.c.h.b16 %v308
      %v1481 = vunpack.c.l.b16 %v309
      %v1482 = vunpack.c.h.b16 %v309
      %v1483 = vunpack.c.l.b16 %v310
      %v1484 = vunpack.c.h.b16 %v310
      %v1485 = vunpack.c.l.b16 %v311
      %v1486 = vunpack.c.h.b16 %v311
      %v1487 = vunpack.c.l.b16 %v312
      %v1488 = vunpack.c.l.b16 %v313
      %v1489 = vunpack.c.h.b16 %v313
      %v1490 = vunpack.c.l.b16 %v314
      %v1491 = vunpack.c.h.b16 %v314
      %v1492 = vunpack.c.l.b16 %v315
      %v1493 = vunpack.c.h.b16 %v315
      %v1494 = vunpack.c.l.b16 %v316
      %v1495 = vunpack.c.h.b16 %v316
      %v1496 = vunpack.c.l.b16 %v317
      %v1497 = vunpack.c.h.b16 %v317
      %v1498 = vunpack.c.l.b16 %v318
      %v1499 = vunpack.c.h.b16 %v318
      %v1500 = vunpack.c.l.b16 %v319
      %v1501 = vunpack.c.l.b16 %v320
      %v1502 = vunpack.c.h.b16 %v320
      %v1503 = vunpack.c.l.b16 %v321
      %v1504 = vunpack.c.h.b16 %v321
      %v1505 = vunpack.c.l.b16 %v322
      %v1506 = vunpack.c.h.b16 %v322
      %v1507 = vunpack.c.l.b16 %v323
      %v1508 = vunpack.c.h.b16 %v323
      %v1509 = vunpack.c.l.b16 %v324
      %v1510 = vunpack.c.h.b16 %v324
      %v1511 = vunpack.c.l.b16 %v325
      %v1512 = vunpack.c.h.b16 %v325
      %v1513 = vunpack.c.l.b16 %v326
      %v1514 = vunpack.c.l.b16 %v327
      %v1515 = vunpack.c.h.b16 %v327
      %v1516 = vunpack.c.l.b16 %v328
      %v1517 = vunpack.c.h.b16 %v328
      %v1518 = vunpack.c.l.b16 %v329
      %v1519 = vunpack.c.h.b16 %v329
      %v1520 = vunpack.c.l.b16 %v330
      %v1521 = vunpack.c.h.b16 %v330
      %v1522 = vunpack.c.l.b16 %v331
      %v1523 = vunpack.c.h.b16 %v331
      %v1524 = vunpack.c.l.b16 %v332
      %v1525 = vunpack.c.h.b16 %v332
      %v1526 = vunpack.c.l.b16 %v333
      %v1527 = vunpack.c.l.b16 %v334
      %v1528 = vunpack.c.h.b16 %v334
      %v1529 = vunpack.c.l.b16 %v335
      %v1530 = vunpack.c.h.b16 %v335
      %v1531 = vunpack.c.l.b16 %v336
      %v1532 = vunpack.c.h.b16 %v336
      %v1533 = vunpack.c.l.b16 %v337
      %v1534 = vunpack.c.h.b16 %v337
      %v1535 = vunpack.c.l.b16 %v338
      %v1536 = vunpack.c.h.b16 %v338
      %v1537 = vunpack.c.l.b16 %v339
      %v1538 = vunpack.c.h.b16 %v339
      %v1539 = vunpack.c.l.b16 %v340
      %v1540 = vunpack.c.l.b16 %v341
      %v1541 = vunpack.c.h.b16 %v341
      %v1542 = vunpack.c.l.b16 %v342
      %v1543 = vunpack.c.h.b16 %v342
      %v1544 = vunpack.c.l.b16 %v343
      %v1545 = vunpack.c.h.b16 %v343
      %v1546 = vunpack.c.l.b16 %v344
      %v1547 = vunpack.c.h.b16 %v344
      %v1548 = vunpack.c.l.b16 %v345
      %v1549 = vunpack.c.h.b16 %v345
      %v1550 = vunpack.c.l.b16 %v346
      %v1551 = vunpack.c.h.b16 %v346
      %v1552 = vunpack.c.l.b16 %v347
      %v1553 = vunpack.c.l.b16 %v348
      %v1554 = vunpack.c.h.b16 %v348
      %v1555 = vunpack.c.l.b16 %v349
      %v1556 = vunpack.c.h.b16 %v349
      %v1557 = vunpack.c.l.b16 %v350
      %v1558 = vunpack.c.h.b16 %v350
      %v1559 = vunpack.c.l.b16 %v351
      %v1560 = vunpack.c.h.b16 %v351
      %v1561 = vunpack.c.l.b16 %v352
      %v1562 = vunpack.c.h.b16 %v352
      %v1563 = vunpack.c.l.b16 %v353
      %v1564 = vunpack.c.h.b16 %v353
      %v1565 = vunpack.c.l.b16 %v354
      %v1566 = vunpack.c.l.b16 %v355
      %v1567 = vunpack.c.h.b16 %v355
      %v1568 = vunpack.c.l.b16 %v356
      %v1569 = vunpack.c.h.b16 %v356
      %v1570 = vunpack.c.l.b16 %v357
      %v1571 = vunpack.c.h.b16 %v357
      %v1572 = vunpack.c.l.b16 %v358
      %v1573 = vunpack.c.h.b16 %v358
      %v1574 = vunpack.c.l.b16 %v359
      %v1575 = vunpack.c.h.b16 %v359
      %v1576 = vunpack.c.l.b16 %v360
      %v1577 = vunpack.c.h.b16 %v360
      %v1578 = vunpack.c.l.b16 %v361
      %v1579 = vunpack.c.l.b16 %v362
      %v1580 = vunpack.c.h.b16 %v362
      %v1581 = vunpack.c.l.b16 %v363
      %v1582 = vunpack.c.h.b16 %v363
      %v1583 = vunpack.c.l.b16 %v364
      %v1584 = vunpack.c.h.b16 %v364
      %v1585 = vunpack.c.l.b16 %v365
      %v1586 = vunpack.c.h.b16 %v365
      %v1587 = vunpack.c.l.b16 %v366
      %v1588 = vunpack.c.h.b16 %v366
      %v1589 = vunpack.c.l.b16 %v367
      %v1590 = vunpack.c.h.b16 %v367
      %v1591 = vunpack.c.l.b16 %v368
      %v1592 = vunpack.c.l.b16 %v369
      %v1593 = vunpack.c.h.b16 %v369
      %v1594 = vunpack.c.l.b16 %v370
      %v1595 = vunpack.c.h.b16 %v370
      %v1596 = vunpack.c.l.b16 %v371
      %v1597 = vunpack.c.h.b16 %v371
      %v1598 = vunpack.c.l.b16 %v372
      %v1599 = vunpack.c.h.b16 %v372
      %v1600 = vunpack.c.l.b16 %v373
      %v1601 = vunpack.c.h.b16 %v373
      %v1602 = vunpack.c.l.b16 %v374
      %v1603 = vunpack.c.h.b16 %v374
      %v1604 = vunpack.c.l.b16 %v375
      %v1605 = vunpack.c.l.b16 %v376
      %v1606 = vunpack.c.h.b16 %v376
      %v1607 = vunpack.c.l.b16 %v377
      %v1608 = vunpack.c.h.b16 %v377
      %v1609 = vunpack.c.l.b16 %v378
      %v1610 = vunpack.c.h.b16 %v378
      %v1611 = vunpack.c.l.b16 %v379
      %v1612 = vunpack.c.h.b16 %v379
      %v1613 = vunpack.c.l.b16 %v380
      %v1614 = vunpack.c.h.b16 %v380
      %v1615 = vunpack.c.l.b16 %v381
      %v1616 = vunpack.c.h.b16 %v381
      %v1617 = vunpack.c.l.b16 %v382
      %v1618 = vunpack.c.l.b16 %v383
      %v1619 = vunpack.c.h.b16 %v383
      %v1620 = vunpack.c.l.b16 %v384
      %v1621 = vunpack.c.h.b16 %v384
      %v1622 = vunpack.c.l.b16 %v385
      %v1623 = vunpack.c.h.b16 %v385
      %v1624 = vunpack.c.l.b16 %v386
      %v1625 = vunpack.c.h.b16 %v386
      %v1626 = vunpack.c.l.b16 %v387
      %v1627 = vunpack.c.h.b16 %v387
      %v1628 = vunpack.c.l.b16 %v388
      %v1629 = vunpack.c.h.b16 %v388
      %v1630 = vunpack.c.l.b16 %v389
      %v1631 = vunpack.c.l.b16 %v390
      %v1632 = vunpack.c.h.b16 %v390
      %v1633 = vunpack.c.l.b16 %v391
      %v1634 = vunpack.c.h.b16 %v391
      %v1635 = vunpack.c.l.b16 %v392
      %v1636 = vunpack.c.h.b16 %v392
      %v1637 = vunpack.c.l.b16 %v393
      %v1638 = vunpack.c.h.b16 %v393
      %v1639 = vunpack.c.l.b16 %v394
      %v1640 = vunpack.c.h.b16 %v394
      %v1641 = vunpack.c.l.b16 %v395
      %v1642 = vunpack.c.h.b16 %v395
      %v1643 = vunpack.c.l.b16 %v396
      %v1644 = vunpack.c.l.b16 %v397
      %v1645 = vunpack.c.h.b16 %v397
      %v1646 = vunpack.c.l.b16 %v398
      %v1647 = vunpack.c.h.b16 %v398
      %v1648 = vunpack.c.l.b16 %v399
      %v1649 = vunpack.c.h.b16 %v399
      %v1650 = vunpack.c.l.b16 %v400
      %v1651 = vunpack.c.h.b16 %v400
      %v1652 = vunpack.c.l.b16 %v401
      %v1653 = vunpack.c.h.b16 %v401
      %v1654 = vunpack.c.l.b16 %v402
      %v1655 = vunpack.c.h.b16 %v402
      %v1656 = vunpack.c.l.b16 %v403
      %v1657 = vunpack.c.l.b16 %v404
      %v1658 = vunpack.c.h.b16 %v404
      %v1659 = vunpack.c.l.b16 %v405
      %v1660 = vunpack.c.h.b16 %v405
      %v1661 = vunpack.c.l.b16 %v406
      %v1662 = vunpack.c.h.b16 %v406
      %v1663 = vunpack.c.l.b16 %v407
      %v1664 = vunpack.c.h.b16 %v407
      %v1665 = vunpack.c.l.b16 %v408
      %v1666 = vunpack.c.h.b16 %v408
      %v1667 = vunpack.c.l.b16 %v409
      %v1668 = vunpack.c.h.b16 %v409
      %v1669 = vunpack.c.l.b16 %v410
      %v1670 = vunpack.c.l.b16 %v411
      %v1671 = vunpack.c.h.b16 %v411
      %v1672 = vunpack.c.l.b16 %v412
      %v1673 = vunpack.c.h.b16 %v412
      %v1674 = vunpack.c.l.b16 %v413
      %v1675 = vunpack.c.h.b16 %v413
      %v1676 = vunpack.c.l.b16 %v414
      %v1677 = vunpack.c.h.b16 %v414
      %v1678 = vunpack.c.l.b16 %v415
      %v1679 = vunpack.c.h.b16 %v415
      %v1680 = vunpack.c.l.b16 %v416
      %v1681 = vunpack.c.h.b16 %v416
      %v1682 = vunpack.c.l.b16 %v417
      %v1683 = vunpack.c.l.b16 %v418
      %v1684 = vunpack.c.h.b16 %v418
      %v1685 = vunpack.c.l.b16 %v419
      %v1686 = vunpack.c.h.b16 %v419
      %v1687 = vunpack.c.l.b16 %v420
      %v1688 = vunpack.c.h.b16 %v420
      %v1689 = vunpack.c.l.b16 %v421
      %v1690 = vunpack.c.h.b16 %v421
      %v1691 = vunpack.c.l.b16 %v422
      %v1692 = vunpack.c.h.b16 %v422
      %v1693 = vunpack.c.l.b16 %v423
      %v1694 = vunpack.c.h.b16 %v423
      %v1695 = vunpack.c.l.b16 %v424
      %v1696 = vunpack.c.l.b16 %v425
      %v1697 = vunpack.c.h.b16 %v425
      %v1698 = vunpack.c.l.b16 %v426
      %v1699 = vunpack.c.h.b16 %v426
      %v1700 = vunpack.c.l.b16 %v427
      %v1701 = vunpack.c.h.b16 %v427
      %v1702 = vunpack.c.l.b16 %v428
      %v1703 = vunpack.c.h.b16 %v428
      %v1704 = vunpack.c.l.b16 %v429
      %v1705 = vunpack.c.h.b16 %v429
      %v1706 = vunpack.c.l.b16 %v430
      %v1707 = vunpack.c.h.b16 %v430
      %v1708 = vunpack.c.l.b16 %v431
      %v1709 = vunpack.c.l.b16 %v432
      %v1710 = vunpack.c.h.b16 %v432
      %v1711 = vunpack.c.l.b16 %v433
      %v1712 = vunpack.c.h.b16 %v433
      %v1713 = vunpack.c.l.b16 %v434
      %v1714 = vunpack.c.h.b16 %v434
      %v1715 = vunpack.c.l.b16 %v435
      %v1716 = vunpack.c.h.b16 %v435
      %v1717 = vunpack.c.l.b16 %v436
      %v1718 = vunpack.c.h.b16 %v436
      %v1719 = vunpack.c.l.b16 %v437
      %v1720 = vunpack.c.h.b16 %v437
      %v1721 = vunpack.c.l.b16 %v438
      %v1722 = vunpack.c.l.b16 %v439
      %v1723 = vunpack.c.h.b16 %v439
      %v1724 = vunpack.c.l.b16 %v440
      %v1725 = vunpack.c.h.b16 %v440
      %v1726 = vunpack.c.l.b16 %v441
      %v1727 = vunpack.c.h.b16 %v441
      %v1728 = vunpack.c.l.b16 %v442
      %v1729 = vunpack.c.h.b16 %v442
      %v1730 = vunpack.c.l.b16 %v443
      %v1731 = vunpack.c.h.b16 %v443
      %v1732 = vunpack.c.l.b16 %v444
      %v1733 = vunpack.c.h.b16 %v444
      %v1734 = vunpack.c.l.b16 %v445
      %v1735 = vunpack.c.l.b16 %v446
      %v1736 = vunpack.c.h.b16 %v446
      %v1737 = vunpack.c.l.b16 %v447
      %v1738 = vunpack.c.h.b16 %v447
      %v1739 = vunpack.c.l.b16 %v448
      %v1740 = vunpack.c.h.b16 %v448
      %v1741 = vunpack.c.l.b16 %v449
      %v1742 = vunpack.c.h.b16 %v449
      %v1743 = vunpack.c.l.b16 %v450
      %v1744 = vunpack.c.h.b16 %v450
      %v1745 = vunpack.c.l.b16 %v451
      %v1746 = vunpack.c.h.b16 %v451
      %v1747 = vunpack.c.l.b16 %v452
      %v1748 = vunpack.c.l.b16 %v453
      %v1749 = vunpack.c.h.b16 %v453
      %v1750 = vunpack.c.l.b16 %v454
      %v1751 = vunpack.c.h.b16 %v454
      %v1752 = vunpack.c.l.b16 %v455
      %v1753 = vunpack.c.h.b16 %v455
      %v1754 = vunpack.c.l.b16 %v456
      %v1755 = vunpack.c.h.b16 %v456
      %v1756 = vunpack.c.l.b16 %v457
      %v1757 = vunpack.c.h.b16 %v457
      %v1758 = vunpack.c.l.b16 %v458
      %v1759 = vunpack.c.h.b16 %v458
      %v1760 = vunpack.c.l.b16 %v459
      %v1761 = vunpack.c.l.b16 %v460
      %v1762 = vunpack.c.h.b16 %v460
      %v1763 = vunpack.c.l.b16 %v461
      %v1764 = vunpack.c.h.b16 %v461
      %v1765 = vunpack.c.l.b16 %v462
      %v1766 = vunpack.c.h.b16 %v462
      %v1767 = vunpack.c.l.b16 %v463
      %v1768 = vunpack.c.h.b16 %v463
      %v1769 = vunpack.c.l.b16 %v464
      %v1770 = vunpack.c.h.b16 %v464
      %v1771 = vunpack.c.l.b16 %v465
      %v1772 = vunpack.c.h.b16 %v465
      %v1773 = vunpack.c.l.b16 %v466
      %v1774 = vunpack.c.l.b16 %v467
      %v1775 = vunpack.c.h.b16 %v467
      %v1776 = vunpack.c.l.b16 %v468
      %v1777 = vunpack.c.h.b16 %v468
      %v1778 = vunpack.c.l.b16 %v469
      %v1779 = vunpack.c.h.b16 %v469
      %v1780 = vunpack.c.l.b16 %v470
      %v1781 = vunpack.c.h.b16 %v470
      %v1782 = vunpack.c.l.b16 %v471
      %v1783 = vunpack.c.h.b16 %v471
      %v1784 = vunpack.c.l.b16 %v472
      %v1785 = vunpack.c.h.b16 %v472
      %v1786 = vunpack.c.l.b16 %v473
      %v1787 = vunpack.c.l.b16 %v474
      %v1788 = vunpack.c.h.b16 %v474
      %v1789 = vunpack.c.l.b16 %v475
      %v1790 = vunpack.c.h.b16 %v475
      %v1791 = vunpack.c.l.b16 %v476
      %v1792 = vunpack.c.h.b16 %v476
      %v1793 = vunpack.c.l.b16 %v477
      %v1794 = vunpack.c.h.b16 %v477
      %v1795 = vunpack.c.l.b16 %v478
      %v1796 = vunpack.c.h.b16 %v478
      %v1797 = vunpack.c.l.b16 %v479
      %v1798 = vunpack.c.h.b16 %v479
      %v1799 = vunpack.c.l.b16 %v480
      %v1800 = vunpack.c.l.b16 %v481
      %v1801 = vunpack.c.h.b16 %v481
      %v1802 = vunpack.c.l.b16 %v482
      %v1803 = vunpack.c.h.b16 %v482
      %v1804 = vunpack.c.l.b16 %v483
      %v1805 = vunpack.c.h.b16 %v483
      %v1806 = vunpack.c.l.b16 %v484
      %v1807 = vunpack.c.h.b16 %v484
      %v1808 = vunpack.c.l.b16 %v485
      %v1809 = vunpack.c.h.b16 %v485
      %v1810 = vunpack.c.l.b16 %v486
      %v1811 = vunpack.c.h.b16 %v486
      %v1812 = vunpack.c.l.b16 %v487
      %v1813 = vunpack.c.l.b16 %v488
      %v1814 = vunpack.c.h.b16 %v488
      %v1815 = vunpack.c.l.b16 %v489
      %v1816 = vunpack.c.h.b16 %v489
      %v1817 = vunpack.c.l.b16 %v490
      %v1818 = vunpack.c.h.b16 %v490
      %v1819 = vunpack.c.l.b16 %v491
      %v1820 = vunpack.c.h.b16 %v491
      %v1821 = vunpack.c.l.b16 %v492
      %v1822 = vunpack.c.h.b16 %v492
      %v1823 = vunpack.c.l.b16 %v493
      %v1824 = vunpack.c.h.b16 %v493
      %v1825 = vunpack.c.l.b16 %v494
      %v1826 = vunpack.c.l.b16 %v495
      %v1827 = vunpack.c.h.b16 %v495
      %v1828 = vunpack.c.l.b16 %v496
      %v1829 = vunpack.c.h.b16 %v496
      %v1830 = vunpack.c.l.b16 %v497
      %v1831 = vunpack.c.h.b16 %v497
      %v1832 = vunpack.c.l.b16 %v498
      %v1833 = vunpack.c.h.b16 %v498
      %v1834 = vunpack.c.l.b16 %v499
      %v1835 = vunpack.c.h.b16 %v499
      %v1836 = vunpack.c.l.b16 %v500
      %v1837 = vunpack.c.h.b16 %v500
      %v1838 = vunpack.c.l.b16 %v501
      %v1839 = vunpack.c.l.b16 %v502
      %v1840 = vunpack.c.h.b16 %v502
      %v1841 = vunpack.c.l.b16 %v503
      %v1842 = vunpack.c.h.b16 %v503
      %v1843 = vunpack.c.l.b16 %v504
      %v1844 = vunpack.c.h.b16 %v504
      %v1845 = vunpack.c.l.b16 %v505
      %v1846 = vunpack.c.h.b16 %v505
      %v1847 = vunpack.c.l.b16 %v506
      %v1848 = vunpack.c.h.b16 %v506
      %v1849 = vunpack.c.l.b16 %v507
      %v1850 = vunpack.c.h.b16 %v507
      %v1851 = vunpack.c.l.b16 %v508
      %v1852 = vunpack.c.l.b16 %v509
      %v1853 = vunpack.c.h.b16 %v509
      %v1854 = vunpack.c.l.b16 %v510
      %v1855 = vunpack.c.h.b16 %v510
      %v1856 = vunpack.c.l.b16 %v511
      %v1857 = vunpack.c.h.b16 %v511
      %v1858 = vunpack.c.l.b16 %v512
      %v1859 = vunpack.c.h.b16 %v512
      %v1860 = vunpack.c.l.b16 %v513
      %v1861 = vunpack.c.h.b16 %v513
      %v1862 = vunpack.c.l.b16 %v514
      %v1863 = vunpack.c.h.b16 %v514
      %v1864 = vunpack.c.l.b16 %v515
      %v1865 = vunpack.c.l.b16 %v516
      %v1866 = vunpack.c.h.b16 %v516
      %v1867 = vunpack.c.l.b16 %v517
      %v1868 = vunpack.c.h.b16 %v517
      %v1869 = vunpack.c.l.b16 %v518
      %v1870 = vunpack.c.h.b16 %v518
      %v1871 = vunpack.c.l.b16 %v519
      %v1872 = vunpack.c.h.b16 %v519
      %v1873 = vunpack.c.l.b16 %v520
      %v1874 = vunpack.c.h.b16 %v520
      %v1875 = vunpack.c.l.b16 %v521
      %v1876 = vunpack.c.h.b16 %v521
      %v1877 = vunpack.c.l.b16 %v522
      %v1878 = vunpack.c.l.b16 %v523
      %v1879 = vunpack.c.h.b16 %v523
      %v1880 = vunpack.c.l.b16 %v524
      %v1881 = vunpack.c.h.b16 %v524
      %v1882 = vunpack.c.l.b16 %v525
      %v1883 = vunpack.c.h.b16 %v525
      %v1884 = vunpack.c.l.b16 %v526
      %v1885 = vunpack.c.h.b16 %v526
      %v1886 = vunpack.c.l.b16 %v527
      %v1887 = vunpack.c.h.b16 %v527
      %v1888 = vunpack.c.l.b16 %v528
      %v1889 = vunpack.c.h.b16 %v528
      %v1890 = vunpack.c.l.b16 %v529
      %v1891 = vunpack.c.l.b16 %v530
      %v1892 = vunpack.c.h.b16 %v530
      %v1893 = vunpack.c.l.b16 %v531
      %v1894 = vunpack.c.h.b16 %v531
      %v1895 = vunpack.c.l.b16 %v532
      %v1896 = vunpack.c.h.b16 %v532
      %v1897 = vunpack.c.l.b16 %v533
      %v1898 = vunpack.c.h.b16 %v533
      %v1899 = vunpack.c.l.b16 %v534
      %v1900 = vunpack.c.h.b16 %v534
      %v1901 = vunpack.c.l.b16 %v535
      %v1902 = vunpack.c.h.b16 %v535
      %v1903 = vunpack.c.l.b16 %v536
      %v1904 = vunpack.c.l.b16 %v537
      %v1905 = vunpack.c.h.b16 %v537
      %v1906 = vunpack.c.l.b16 %v538
      %v1907 = vunpack.c.h.b16 %v538
      %v1908 = vunpack.c.l.b16 %v539
      %v1909 = vunpack.c.h.b16 %v539
      %v1910 = vunpack.c.l.b16 %v540
      %v1911 = vunpack.c.h.b16 %v540
      %v1912 = vunpack.c.l.b16 %v541
      %v1913 = vunpack.c.h.b16 %v541
      %v1914 = vunpack.c.l.b16 %v542
      %v1915 = vunpack.c.h.b16 %v542
      %v1916 = vunpack.c.l.b16 %v543
      %v1917 = vunpack.c.l.b16 %v544
      %v1918 = vunpack.c.h.b16 %v544
      %v1919 = vunpack.c.l.b16 %v545
      %v1920 = vunpack.c.h.b16 %v545
      %v1921 = vunpack.c.l.b16 %v546
      %v1922 = vunpack.c.h.b16 %v546
      %v1923 = vunpack.c.l.b16 %v547
      %v1924 = vunpack.c.h.b16 %v547
      %v1925 = vunpack.c.l.b16 %v548
      %v1926 = vunpack.c.h.b16 %v548
      %v1927 = vunpack.c.l.b16 %v549
      %v1928 = vunpack.c.h.b16 %v549
      %v1929 = vunpack.c.l.b16 %v550
      %v1930 = vunpack.c.l.b16 %v551
      %v1931 = vunpack.c.h.b16 %v551
      %v1932 = vunpack.c.l.b16 %v552
      %v1933 = vunpack.c.h.b16 %v552
      %v1934 = vunpack.c.l.b16 %v553
      %v1935 = vunpack.c.h.b16 %v553
      %v1936 = vunpack.c.l.b16 %v554
      %v1937 = vunpack.c.h.b16 %v554
      %v1938 = vunpack.c.l.b16 %v555
      %v1939 = vunpack.c.h.b16 %v555
      %v1940 = vunpack.c.l.b16 %v556
      %v1941 = vunpack.c.h.b16 %v556
      %v1942 = vunpack.c.l.b16 %v557
      %v1943 = vunpack.c.l.b16 %v558
      %v1944 = vunpack.c.h.b16 %v558
      %v1945 = vunpack.c.l.b16 %v559
      %v1946 = vunpack.c.h.b16 %v559
      %v1947 = vunpack.c.l.b16 %v560
      %v1948 = vunpack.c.h.b16 %v560
      %v1949 = vunpack.c.l.b16 %v561
      %v1950 = vunpack.c.h.b16 %v561
      %v1951 = vunpack.c.l.b16 %v562
      %v1952 = vunpack.c.h.b16 %v562
      %v1953 = vunpack.c.l.b16 %v563
      %v1954 = vunpack.c.h.b16 %v563
      %v1955 = vunpack.c.l.b16 %v564
      %v1956 = vunpack.c.l.b16 %v565
      %v1957 = vunpack.c.h.b16 %v565
      %v1958 = vunpack.c.l.b16 %v566
      %v1959 = vunpack.c.h.b16 %v566
      %v1960 = vunpack.c.l.b16 %v567
      %v1961 = vunpack.c.h.b16 %v567
      %v1962 = vunpack.c.l.b16 %v568
      %v1963 = vunpack.c.h.b16 %v568
      %v1964 = vunpack.c.l.b16 %v569
      %v1965 = vunpack.c.h.b16 %v569
      %v1966 = vunpack.c.l.b16 %v570
      %v1967 = vunpack.c.h.b16 %v570
      %v1968 = vunpack.c.l.b16 %v571
      %v1969 = vunpack.c.l.b16 %v572
      %v1970 = vunpack.c.h.b16 %v572
      %v1971 = vunpack.c.l.b16 %v573
      %v1972 = vunpack.c.h.b16 %v573
      %v1973 = vunpack.c.l.b16 %v574
      %v1974 = vunpack.c.h.b16 %v574
      %v1975 = vunpack.c.l.b16 %v575
      %v1976 = vunpack.c.h.b16 %v575
      %v1977 = vunpack.c.l.b16 %v576
      %v1978 = vunpack.c.h.b16 %v576
      %v1979 = vunpack.c.l.b16 %v577
      %v1980 = vunpack.c.h.b16 %v577
      %v1981 = vunpack.c.l.b16 %v578
      %v1982 = vunpack.c.l.b16 %v579
      %v1983 = vunpack.c.h.b16 %v579
      %v1984 = vunpack.c.l.b16 %v580
      %v1985 = vunpack.c.h.b16 %v580
      %v1986 = vunpack.c.l.b16 %v581
      %v1987 = vunpack.c.h.b16 %v581
      %v1988 = vunpack.c.l.b16 %v582
      %v1989 = vunpack.c.h.b16 %v582
      %v1990 = vunpack.c.l.b16 %v583
      %v1991 = vunpack.c.h.b16 %v583
      %v1992 = vunpack.c.l.b16 %v584
      %v1993 = vunpack.c.h.b16 %v584
      %v1994 = vunpack.c.l.b16 %v585
      %v1995 = vunpack.c.l.b16 %v586
      %v1996 = vunpack.c.h.b16 %v586
      %v1997 = vunpack.c.l.b16 %v587
      %v1998 = vunpack.c.h.b16 %v587
      %v1999 = vunpack.c.l.b16 %v588
      %v2000 = vunpack.c.h.b16 %v588
      %v2001 = vunpack.c.l.b16 %v589
      %v2002 = vunpack.c.h.b16 %v589
      %v2003 = vunpack.c.l.b16 %v590
      %v2004 = vunpack.c.h.b16 %v590
      %v2005 = vunpack.c.l.b16 %v591
      %v2006 = vunpack.c.h.b16 %v591
      %v2007 = vunpack.c.l.b16 %v592
      %v2008 = vunpack.c.l.b16 %v593
      %v2009 = vunpack.c.h.b16 %v593
      %v2010 = vunpack.c.l.b16 %v594
      %v2011 = vunpack.c.h.b16 %v594
      %v2012 = vunpack.c.l.b16 %v595
      %v2013 = vunpack.c.h.b16 %v595
      %v2014 = vunpack.c.l.b16 %v596
      %v2015 = vunpack.c.h.b16 %v596
      %v2016 = vunpack.c.l.b16 %v597
      %v2017 = vunpack.c.h.b16 %v597
      %v2018 = vunpack.c.l.b16 %v598
      %v2019 = vunpack.c.h.b16 %v598
      %v2020 = vunpack.c.l.b16 %v599
      %v2021 = vunpack.c.l.b16 %v600
      %v2022 = vunpack.c.h.b16 %v600
      %v2023 = vunpack.c.l.b16 %v601
      %v2024 = vunpack.c.h.b16 %v601
      %v2025 = vunpack.c.l.b16 %v602
      %v2026 = vunpack.c.h.b16 %v602
      %v2027 = vunpack.c.l.b16 %v603
      %v2028 = vunpack.c.h.b16 %v603
      %v2029 = vunpack.c.l.b16 %v604
      %v2030 = vunpack.c.h.b16 %v604
      %v2031 = vunpack.c.l.b16 %v605
      %v2032 = vunpack.c.h.b16 %v605
      %v2033 = vunpack.c.l.b16 %v606
      %v2034 = vunpack.c.l.b16 %v607
      %v2035 = vunpack.c.h.b16 %v607
      %v2036 = vunpack.c.l.b16 %v608
      %v2037 = vunpack.c.h.b16 %v608
      %v2038 = vunpack.c.l.b16 %v609
      %v2039 = vunpack.c.h.b16 %v609
      %v2040 = vunpack.c.l.b16 %v610
      %v2041 = vunpack.c.h.b16 %v610
      %v2042 = vunpack.c.l.b16 %v611
      %v2043 = vunpack.c.h.b16 %v611
      %v2044 = vunpack.c.l.b16 %v612
      %v2045 = vunpack.c.h.b16 %v612
      %v2046 = vunpack.c.l.b16 %v613
      %v2047 = vunpack.c.l.b16 %v614
      %v2048 = vunpack.c.h.b16 %v614
      %v2049 = vunpack.c.l.b16 %v615
      %v2050 = vunpack.c.h.b16 %v615
      %v2051 = vunpack.c.l.b16 %v616
      %v2052 = vunpack.c.h.b16 %v616
      %v2053 = vunpack.c.l.b16 %v617
      %v2054 = vunpack.c.h.b16 %v617
      %v2055 = vunpack.c.l.b16 %v618
      %v2056 = vunpack.c.h.b16 %v618
      %v2057 = vunpack.c.l.b16 %v619
      %v2058 = vunpack.c.h.b16 %v619
      %v2059 = vunpack.c.l.b16 %v620
      %v2060 = vunpack.c.l.b16 %v621
      %v2061 = vunpack.c.h.b16 %v621
      %v2062 = vunpack.c.l.b16 %v622
      %v2063 = vunpack.c.h.b16 %v622
      %v2064 = vunpack.c.l.b16 %v623
      %v2065 = vunpack.c.h.b16 %v623
      %v2066 = vunpack.c.l.b16 %v624
      %v2067 = vunpack.c.h.b16 %v624
      %v2068 = vunpack.c.l.b16 %v625
      %v2069 = vunpack.c.h.b16 %v625
      %v2070 = vunpack.c.l.b16 %v626
      %v2071 = vunpack.c.h.b16 %v626
      %v2072 = vunpack.c.l.b16 %v627
      %v2073 = vunpack.c.l.b16 %v628
      %v2074 = vunpack.c.h.b16 %v628
      %v2075 = vunpack.c.l.b16 %v629
      %v2076 = vunpack.c.h.b16 %v629
      %v2077 = vunpack.c.l.b16 %v630
      %v2078 = vunpack.c.h.b16 %v630
      %v2079 = vunpack.c.l.b16 %v631
      %v2080 = vunpack.c.h.b16 %v631
      %v2081 = vunpack.c.l.b16 %v632
      %v2082 = vunpack.c.h.b16 %v632
      %v2083 = vunpack.c.l.b16 %v633
      %v2084 = vunpack.c.h.b16 %v633
      %v2085 = vunpack.c.l.b16 %v634
      %v2086 = vunpack.c.l.b16 %v635
      %v2087 = vunpack.c.h.b16 %v635
      %v2088 = vunpack.c.l.b16 %v636
      %v2089 = vunpack.c.h.b16 %v636
      %v2090 = vunpack.c.l.b16 %v637
      %v2091 = vunpack.c.h.b16 %v637
      %v2092 = vunpack.c.l.b16 %v638
      %v2093 = vunpack.c.h.b16 %v638
      %v2094 = vunpack.c.l.b16 %v639
      %v2095 = vunpack.c.h.b16 %v639
      %v2096 = vunpack.c.l.b16 %v640
      %v2097 = vunpack.c.h.b16 %v640
      %v2098 = vunpack.c.l.b16 %v641
      %v2099 = vunpack.c.l.b16 %v642
      %v2100 = vunpack.c.h.b16 %v642
      %v2101 = vunpack.c.l.b16 %v643
      %v2102 = vunpack.c.h.b16 %v643
      %v2103 = vunpack.c.l.b16 %v644
      %v2104 = vunpack.c.h.b16 %v644
      %v2105 = vunpack.c.l.b16 %v645
      %v2106 = vunpack.c.h.b16 %v645
      %v2107 = vunpack.c.l.b16 %v646
      %v2108 = vunpack.c.h.b16 %v646
      %v2109 = vunpack.c.l.b16 %v647
      %v2110 = vunpack.c.h.b16 %v647
      %v2111 = vunpack.c.l.b16 %v648
      %v2112 = vunpack.c.l.b16 %v649
      %v2113 = vunpack.c.h.b16 %v649
      %v2114 = vunpack.c.l.b16 %v650
      %v2115 = vunpack.c.h.b16 %v650
      %v2116 = vunpack.c.l.b16 %v651
      %v2117 = vunpack.c.h.b16 %v651
      %v2118 = vunpack.c.l.b16 %v652
      %v2119 = vunpack.c.h.b16 %v652
      %v2120 = vunpack.c.l.b16 %v653
      %v2121 = vunpack.c.h.b16 %v653
      %v2122 = vunpack.c.l.b16 %v654
      %v2123 = vunpack.c.h.b16 %v654
      %v2124 = vunpack.c.l.b16 %v655
      %v2125 = vunpack.c.l.b16 %v656
      %v2126 = vunpack.c.h.b16 %v656
      %v2127 = vunpack.c.l.b16 %v657
      %v2128 = vunpack.c.h.b16 %v657
      %v2129 = vunpack.c.l.b16 %v658
      %v2130 = vunpack.c.h.b16 %v658
      %v2131 = vunpack.c.l.b16 %v659
      %v2132 = vunpack.c.h.b16 %v659
      %v2133 = vunpack.c.l.b16 %v660
      %v2134 = vunpack.c.h.b16 %v660
      %v2135 = vunpack.c.l.b16 %v661
      %v2136 = vunpack.c.h.b16 %v661
      %v2137 = vunpack.c.l.b16 %v662
      %v2138 = vunpack.c.l.b16 %v663
      %v2139 = vunpack.c.h.b16 %v663
      %v2140 = vunpack.c.l.b16 %v664
      %v2141 = vunpack.c.h.b16 %v664
      %v2142 = vunpack.c.l.b16 %v665
      %v2143 = vunpack.c.h.b16 %v665
      %v2144 = vunpack.c.l.b16 %v666
      %v2145 = vunpack.c.h.b16 %v666
      %v2146 = vunpack.c.l.b16 %v667
      %v2147 = vunpack.c.h.b16 %v667
      %v2148 = vunpack.c.l.b16 %v668
      %v2149 = vunpack.c.h.b16 %v668
      %v2150 = vunpack.c.l.b16 %v669
      %v2151 = vunpack.c.l.b16 %v670
      %v2152 = vunpack.c.h.b16 %v670
      %v2153 = vunpack.c.l.b16 %v671
      %v2154 = vunpack.c.h.b16 %v671
      %v2155 = vunpack.c.l.b16 %v672
      %v2156 = vunpack.c.h.b16 %v672
      %v2157 = vunpack.c.l.b16 %v673
      %v2158 = vunpack.c.h.b16 %v673
      %v2159 = vunpack.c.l.b16 %v674
      %v2160 = vunpack.c.h.b16 %v674
      %v2161 = vunpack.c.l.b16 %v675
      %v2162 = vunpack.c.h.b16 %v675
      %v2163 = vunpack.c.l.b16 %v676
      %v2164 = vpack.c.b16 %v1345, %v1332
      %v2165 = vpack.c.b16 %v1346, %v1333
      %v2166 = vpack.c.b16 %v1347, %v1334
      %v2167 = vpack.c.b16 %v1348, %v1335
      %v2168 = vpack.c.b16 %v1349, %v1336
      %v2169 = vpack.c.b16 %v1350, %v1337
      %v2170 = vpack.c.b16 %v1351, %v1338
      %v2171 = vpack.c.b16 %v1352, %v1339
      %v2172 = vpack.c.b16 %v1353, %v1340
      %v2173 = vpack.c.b16 %v1354, %v1341
      %v2174 = vpack.c.b16 %v1355, %v1342
      %v2175 = vpack.c.b16 %v1356, %v1343
      %v2176 = vpack.c.b16 %v1357, %v1344
      %v2177 = vpack.c.b16 %v1371, %v1358
      %v2178 = vpack.c.b16 %v1372, %v1359
      %v2179 = vpack.c.b16 %v1373, %v1360
      %v2180 = vpack.c.b16 %v1374, %v1361
      %v2181 = vpack.c.b16 %v1375, %v1362
      %v2182 = vpack.c.b16 %v1376, %v1363
      %v2183 = vpack.c.b16 %v1377, %v1364
      %v2184 = vpack.c.b16 %v1378, %v1365
      %v2185 = vpack.c.b16 %v1379, %v1366
      %v2186 = vpack.c.b16 %v1380, %v1367
      %v2187 = vpack.c.b16 %v1381, %v1368
      %v2188 = vpack.c.b16 %v1382, %v1369
      %v2189 = vpack.c.b16 %v1383, %v1370
      %v2190 = vpack.c.b16 %v1397, %v1384
      %v2191 = vpack.c.b16 %v1398, %v1385
      %v2192 = vpack.c.b16 %v1399, %v1386
      %v2193 = vpack.c.b16 %v1400, %v1387
      %v2194 = vpack.c.b16 %v1401, %v1388
      %v2195 = vpack.c.b16 %v1402, %v1389
      %v2196 = vpack.c.b16 %v1403, %v1390
      %v2197 = vpack.c.b16 %v1404, %v1391
      %v2198 = vpack.c.b16 %v1405, %v1392
      %v2199 = vpack.c.b16 %v1406, %v1393
      %v2200 = vpack.c.b16 %v1407, %v1394
      %v2201 = vpack.c.b16 %v1408, %v1395
      %v2202 = vpack.c.b16 %v1409, %v1396
      %v2203 = vpack.c.b16 %v1423, %v1410
      %v2204 = vpack.c.b16 %v1424, %v1411
      %v2205 = vpack.c.b16 %v1425, %v1412
      %v2206 = vpack.c.b16 %v1426, %v1413
      %v2207 = vpack.c.b16 %v1427, %v1414
      %v2208 = vpack.c.b16 %v1428, %v1415
      %v2209 = vpack.c.b16 %v1429, %v1416
      %v2210 = vpack.c.b16 %v1430, %v1417
      %v2211 = vpack.c.b16 %v1431, %v1418
      %v2212 = vpack.c.b16 %v1432, %v1419
      %v2213 = vpack.c.b16 %v1433, %v1420
      %v2214 = vpack.c.b16 %v1434, %v1421
      %v2215 = vpack.c.b16 %v1435, %v1422
      %v2216 = vpack.c.b16 %v1449, %v1436
      %v2217 = vpack.c.b16 %v1450, %v1437
      %v2218 = vpack.c.b16 %v1451, %v1438
      %v2219 = vpack.c.b16 %v1452, %v1439
      %v2220 = vpack.c.b16 %v1453, %v1440
      %v2221 = vpack.c.b16 %v1454, %v1441
      %v2222 = vpack.c.b16 %v1455, %v1442
      %v2223 = vpack.c.b16 %v1456, %v1443
      %v2224 = vpack.c.b16 %v1457, %v1444
      %v2225 = vpack.c.b16 %v1458, %v1445
      %v2226 = vpack.c.b16 %v1459, %v1446
      %v2227 = vpack.c.b16 %v1460, %v1447
      %v2228 = vpack.c.b16 %v1461, %v1448
      %v2229 = vpack.c.b16 %v1475, %v1462
      %v2230 = vpack.c.b16 %v1476, %v1463
      %v2231 = vpack.c.b16 %v1477, %v1464
      %v2232 = vpack.c.b16 %v1478, %v1465
      %v2233 = vpack.c.b16 %v1479, %v1466
      %v2234 = vpack.c.b16 %v1480, %v1467
      %v2235 = vpack.c.b16 %v1481, %v1468
      %v2236 = vpack.c.b16 %v1482, %v1469
      %v2237 = vpack.c.b16 %v1483, %v1470
      %v2238 = vpack.c.b16 %v1484, %v1471
      %v2239 = vpack.c.b16 %v1485, %v1472
      %v2240 = vpack.c.b16 %v1486, %v1473
      %v2241 = vpack.c.b16 %v1487, %v1474
      %v2242 = vpack.c.b16 %v1501, %v1488
      %v2243 = vpack.c.b16 %v1502, %v1489
      %v2244 = vpack.c.b16 %v1503, %v1490
      %v2245 = vpack.c.b16 %v1504, %v1491
      %v2246 = vpack.c.b16 %v1505, %v1492
      %v2247 = vpack.c.b16 %v1506, %v1493
      %v2248 = vpack.c.b16 %v1507, %v1494
      %v2249 = vpack.c.b16 %v1508, %v1495
      %v2250 = vpack.c.b16 %v1509, %v1496
      %v2251 = vpack.c.b16 %v1510, %v1497
      %v2252 = vpack.c.b16 %v1511, %v1498
      %v2253 = vpack.c.b16 %v1512, %v1499
      %v2254 = vpack.c.b16 %v1513, %v1500
      %v2255 = vpack.c.b16 %v1527, %v1514
      %v2256 = vpack.c.b16 %v1528, %v1515
      %v2257 = vpack.c.b16 %v1529, %v1516
      %v2258 = vpack.c.b16 %v1530, %v1517
      %v2259 = vpack.c.b16 %v1531, %v1518
      %v2260 = vpack.c.b16 %v1532, %v1519
      %v2261 = vpack.c.b16 %v1533, %v1520
      %v2262 = vpack.c.b16 %v1534, %v1521
      %v2263 = vpack.c.b16 %v1535, %v1522
      %v2264 = vpack.c.b16 %v1536, %v1523
      %v2265 = vpack.c.b16 %v1537, %v1524
      %v2266 = vpack.c.b16 %v1538, %v1525
      %v2267 = vpack.c.b16 %v1539, %v1526
      %v2268 = vpack.c.b16 %v1553, %v1540
      %v2269 = vpack.c.b16 %v1554, %v1541
      %v2270 = vpack.c.b16 %v1555, %v1542
      %v2271 = vpack.c.b16 %v1556, %v1543
      %v2272 = vpack.c.b16 %v1557, %v1544
      %v2273 = vpack.c.b16 %v1558, %v1545
      %v2274 = vpack.c.b16 %v1559, %v1546
      %v2275 = vpack.c.b16 %v1560, %v1547
      %v2276 = vpack.c.b16 %v1561, %v1548
      %v2277 = vpack.c.b16 %v1562, %v1549
      %v2278 = vpack.c.b16 %v1563, %v1550
      %v2279 = vpack.c.b16 %v1564, %v1551
      %v2280 = vpack.c.b16 %v1565, %v1552
      %v2281 = vpack.c.b16 %v1579, %v1566
      %v2282 = vpack.c.b16 %v1580, %v1567
      %v2283 = vpack.c.b16 %v1581, %v1568
      %v2284 = vpack.c.b16 %v1582, %v1569
      %v2285 = vpack.c.b16 %v1583, %v1570
      %v2286 = vpack.c.b16 %v1584, %v1571
      %v2287 = vpack.c.b16 %v1585, %v1572
      %v2288 = vpack.c.b16 %v1586, %v1573
      %v2289 = vpack.c.b16 %v1587, %v1574
      %v2290 = vpack.c.b16 %v1588, %v1575
      %v2291 = vpack.c.b16 %v1589, %v1576
      %v2292 = vpack.c.b16 %v1590, %v1577
      %v2293 = vpack.c.b16 %v1591, %v1578
      %v2294 = vpack.c.b16 %v1605, %v1592
      %v2295 = vpack.c.b16 %v1606, %v1593
      %v2296 = vpack.c.b16 %v1607, %v1594
      %v2297 = vpack.c.b16 %v1608, %v1595
      %v2298 = vpack.c.b16 %v1609, %v1596
      %v2299 = vpack.c.b16 %v1610, %v1597
      %v2300 = vpack.c.b16 %v1611, %v1598
      %v2301 = vpack.c.b16 %v1612, %v1599
      %v2302 = vpack.c.b16 %v1613, %v1600
      %v2303 = vpack.c.b16 %v1614, %v1601
      %v2304 = vpack.c.b16 %v1615, %v1602
      %v2305 = vpack.c.b16 %v1616, %v1603
      %v2306 = vpack.c.b16 %v1617, %v1604
      %v2307 = vpack.c.b16 %v1631, %v1618
      %v2308 = vpack.c.b16 %v1632, %v1619
      %v2309 = vpack.c.b16 %v1633, %v1620
      %v2310 = vpack.c.b16 %v1634, %v1621
      %v2311 = vpack.c.b16 %v1635, %v1622
      %v2312 = vpack.c.b16 %v1636, %v1623
      %v2313 = vpack.c.b16 %v1637, %v1624
      %v2314 = vpack.c.b16 %v1638, %v1625
      %v2315 = vpack.c.b16 %v1639, %v1626
      %v2316 = vpack.c.b16 %v1640, %v1627
      %v2317 = vpack.c.b16 %v1641, %v1628
      %v2318 = vpack.c.b16 %v1642, %v1629
      %v2319 = vpack.c.b16 %v1643, %v1630
      %v2320 = vpack.c.b16 %v1657, %v1644
      %v2321 = vpack.c.b16 %v1658, %v1645
      %v2322 = vpack.c.b16 %v1659, %v1646
      %v2323 = vpack.c.b16 %v1660, %v1647
      %v2324 = vpack.c.b16 %v1661, %v1648
      %v2325 = vpack.c.b16 %v1662, %v1649
      %v2326 = vpack.c.b16 %v1663, %v1650
      %v2327 = vpack.c.b16 %v1664, %v1651
      %v2328 = vpack.c.b16 %v1665, %v1652
      %v2329 = vpack.c.b16 %v1666, %v1653
      %v2330 = vpack.c.b16 %v1667, %v1654
      %v2331 = vpack.c.b16 %v1668, %v1655
      %v2332 = vpack.c.b16 %v1669, %v1656
      %v2333 = vpack.c.b16 %v1683, %v1670
      %v2334 = vpack.c.b16 %v1684, %v1671
      %v2335 = vpack.c.b16 %v1685, %v1672
      %v2336 = vpack.c.b16 %v1686, %v1673
      %v2337 = vpack.c.b16 %v1687, %v1674
      %v2338 = vpack.c.b16 %v1688, %v1675
      %v2339 = vpack.c.b16 %v1689, %v1676
      %v2340 = vpack.c.b16 %v1690, %v1677
      %v2341 = vpack.c.b16 %v1691, %v1678
      %v2342 = vpack.c.b16 %v1692, %v1679
      %v2343 = vpack.c.b16 %v1693, %v1680
      %v2344 = vpack.c.b16 %v1694, %v1681
      %v2345 = vpack.c.b16 %v1695, %v1682
      %v2346 = vpack.c.b16 %v1709, %v1696
      %v2347 = vpack.c.b16 %v1710, %v1697
      %v2348 = vpack.c.b16 %v1711, %v1698
      %v2349 = vpack.c.b16 %v1712, %v1699
      %v2350 = vpack.c.b16 %v1713, %v1700
      %v2351 = vpack.c.b16 %v1714, %v1701
      %v2352 = vpack.c.b16 %v1715, %v1702
      %v2353 = vpack.c.b16 %v1716, %v1703
      %v2354 = vpack.c.b16 %v1717, %v1704
      %v2355 = vpack.c.b16 %v1718, %v1705
      %v2356 = vpack.c.b16 %v1719, %v1706
      %v2357 = vpack.c.b16 %v1720, %v1707
      %v2358 = vpack.c.b16 %v1721, %v1708
      %v2359 = vpack.c.b16 %v1735, %v1722
      %v2360 = vpack.c.b16 %v1736, %v1723
      %v2361 = vpack.c.b16 %v1737, %v1724
      %v2362 = vpack.c.b16 %v1738, %v1725
      %v2363 = vpack.c.b16 %v1739, %v1726
      %v2364 = vpack.c.b16 %v1740, %v1727
      %v2365 = vpack.c.b16 %v1741, %v1728
      %v2366 = vpack.c.b16 %v1742, %v1729
      %v2367 = vpack.c.b16 %v1743, %v1730
      %v2368 = vpack.c.b16 %v1744, %v1731
      %v2369 = vpack.c.b16 %v1745, %v1732
      %v2370 = vpack.c.b16 %v1746, %v1733
      %v2371 = vpack.c.b16 %v1747, %v1734
      %v2372 = vpack.c.b16 %v1761, %v1748
      %v2373 = vpack.c.b16 %v1762, %v1749
      %v2374 = vpack.c.b16 %v1763, %v1750
      %v2375 = vpack.c.b16 %v1764, %v1751
      %v2376 = vpack.c.b16 %v1765, %v1752
      %v2377 = vpack.c.b16 %v1766, %v1753
      %v2378 = vpack.c.b16 %v1767, %v1754
      %v2379 = vpack.c.b16 %v1768, %v1755
      %v2380 = vpack.c.b16 %v1769, %v1756
      %v2381 = vpack.c.b16 %v1770, %v1757
      %v2382 = vpack.c.b16 %v1771, %v1758
      %v2383 = vpack.c.b16 %v1772, %v1759
      %v2384 = vpack.c.b16 %v1773, %v1760
      %v2385 = vpack.c.b16 %v1787, %v1774
      %v2386 = vpack.c.b16 %v1788, %v1775
      %v2387 = vpack.c.b16 %v1789, %v1776
      %v2388 = vpack.c.b16 %v1790, %v1777
      %v2389 = vpack.c.b16 %v1791, %v1778
      %v2390 = vpack.c.b16 %v1792, %v1779
      %v2391 = vpack.c.b16 %v1793, %v1780
      %v2392 = vpack.c.b16 %v1794, %v1781
      %v2393 = vpack.c.b16 %v1795, %v1782
      %v2394 = vpack.c.b16 %v1796, %v1783
      %v2395 = vpack.c.b16 %v1797, %v1784
      %v2396 = vpack.c.b16 %v1798, %v1785
      %v2397 = vpack.c.b16 %v1799, %v1786
      %v2398 = vpack.c.b16 %v1813, %v1800
      %v2399 = vpack.c.b16 %v1814, %v1801
      %v2400 = vpack.c.b16 %v1815, %v1802
      %v2401 = vpack.c.b16 %v1816, %v1803
      %v2402 = vpack.c.b16 %v1817, %v1804
      %v2403 = vpack.c.b16 %v1818, %v1805
      %v2404 = vpack.c.b16 %v1819, %v1806
      %v2405 = vpack.c.b16 %v1820, %v1807
      %v2406 = vpack.c.b16 %v1821, %v1808
      %v2407 = vpack.c.b16 %v1822, %v1809
      %v2408 = vpack.c.b16 %v1823, %v1810
      %v2409 = vpack.c.b16 %v1824, %v1811
      %v2410 = vpack.c.b16 %v1825, %v1812
      %v2411 = vpack.c.b16 %v1839, %v1826
      %v2412 = vpack.c.b16 %v1840, %v1827
      %v2413 = vpack.c.b16 %v1841, %v1828
      %v2414 = vpack.c.b16 %v1842, %v1829
      %v2415 = vpack.c.b16 %v1843, %v1830
      %v2416 = vpack.c.b16 %v1844, %v1831
      %v2417 = vpack.c.b16 %v1845, %v1832
      %v2418 = vpack.c.b16 %v1846, %v1833
      %v2419 = vpack.c.b16 %v1847, %v1834
      %v2420 = vpack.c.b16 %v1848, %v1835
      %v2421 = vpack.c.b16 %v1849, %v1836
      %v2422 = vpack.c.b16 %v1850, %v1837
      %v2423 = vpack.c.b16 %v1851, %v1838
      %v2424 = vpack.c.b16 %v1865, %v1852
      %v2425 = vpack.c.b16 %v1866, %v1853
      %v2426 = vpack.c.b16 %v1867, %v1854
      %v2427 = vpack.c.b16 %v1868, %v1855
      %v2428 = vpack.c.b16 %v1869, %v1856
      %v2429 = vpack.c.b16 %v1870, %v1857
      %v2430 = vpack.c.b16 %v1871, %v1858
      %v2431 = vpack.c.b16 %v1872, %v1859
      %v2432 = vpack.c.b16 %v1873, %v1860
      %v2433 = vpack.c.b16 %v1874, %v1861
      %v2434 = vpack.c.b16 %v1875, %v1862
      %v2435 = vpack.c.b16 %v1876, %v1863
      %v2436 = vpack.c.b16 %v1877, %v1864
      %v2437 = vpack.c.b16 %v1891, %v1878
      %v2438 = vpack.c.b16 %v1892, %v1879
      %v2439 = vpack.c.b16 %v1893, %v1880
      %v2440 = vpack.c.b16 %v1894, %v1881
      %v2441 = vpack.c.b16 %v1895, %v1882
      %v2442 = vpack.c.b16 %v1896, %v1883
      %v2443 = vpack.c.b16 %v1897, %v1884
      %v2444 = vpack.c.b16 %v1898, %v1885
      %v2445 = vpack.c.b16 %v1899, %v1886
      %v2446 = vpack.c.b16 %v1900, %v1887
      %v2447 = vpack.c.b16 %v1901, %v1888
      %v2448 = vpack.c.b16 %v1902, %v1889
      %v2449 = vpack.c.b16 %v1903, %v1890
      %v2450 = vpack.c.b16 %v1917, %v1904
      %v2451 = vpack.c.b16 %v1918, %v1905
      %v2452 = vpack.c.b16 %v1919, %v1906
      %v2453 = vpack.c.b16 %v1920, %v1907
      %v2454 = vpack.c.b16 %v1921, %v1908
      %v2455 = vpack.c.b16 %v1922, %v1909
      %v2456 = vpack.c.b16 %v1923, %v1910
      %v2457 = vpack.c.b16 %v1924, %v1911
      %v2458 = vpack.c.b16 %v1925, %v1912
      %v2459 = vpack.c.b16 %v1926, %v1913
      %v2460 = vpack.c.b16 %v1927, %v1914
      %v2461 = vpack.c.b16 %v1928, %v1915
      %v2462 = vpack.c.b16 %v1929, %v1916
      %v2463 = vpack.c.b16 %v1943, %v1930
      %v2464 = vpack.c.b16 %v1944, %v1931
      %v2465 = vpack.c.b16 %v1945, %v1932
      %v2466 = vpack.c.b16 %v1946, %v1933
      %v2467 = vpack.c.b16 %v1947, %v1934
      %v2468 = vpack.c.b16 %v1948, %v1935
      %v2469 = vpack.c.b16 %v1949, %v1936
      %v2470 = vpack.c.b16 %v1950, %v1937
      %v2471 = vpack.c.b16 %v1951, %v1938
      %v2472 = vpack.c.b16 %v1952, %v1939
      %v2473 = vpack.c.b16 %v1953, %v1940
      %v2474 = vpack.c.b16 %v1954, %v1941
      %v2475 = vpack.c.b16 %v1955, %v1942
      %v2476 = vpack.c.b16 %v1969, %v1956
      %v2477 = vpack.c.b16 %v1970, %v1957
      %v2478 = vpack.c.b16 %v1971, %v1958
      %v2479 = vpack.c.b16 %v1972, %v1959
      %v2480 = vpack.c.b16 %v1973, %v1960
      %v2481 = vpack.c.b16 %v1974, %v1961
      %v2482 = vpack.c.b16 %v1975, %v1962
      %v2483 = vpack.c.b16 %v1976, %v1963
      %v2484 = vpack.c.b16 %v1977, %v1964
      %v2485 = vpack.c.b16 %v1978, %v1965
      %v2486 = vpack.c.b16 %v1979, %v1966
      %v2487 = vpack.c.b16 %v1980, %v1967
      %v2488 = vpack.c.b16 %v1981, %v1968
      %v2489 = vpack.c.b16 %v1995, %v1982
      %v2490 = vpack.c.b16 %v1996, %v1983
      %v2491 = vpack.c.b16 %v1997, %v1984
      %v2492 = vpack.c.b16 %v1998, %v1985
      %v2493 = vpack.c.b16 %v1999, %v1986
      %v2494 = vpack.c.b16 %v2000, %v1987
      %v2495 = vpack.c.b16 %v2001, %v1988
      %v2496 = vpack.c.b16 %v2002, %v1989
      %v2497 = vpack.c.b16 %v2003, %v1990
      %v2498 = vpack.c.b16 %v2004, %v1991
      %v2499 = vpack.c.b16 %v2005, %v1992
      %v2500 = vpack.c.b16 %v2006, %v1993
      %v2501 = vpack.c.b16 %v2007, %v1994
      %v2502 = vpack.c.b16 %v2021, %v2008
      %v2503 = vpack.c.b16 %v2022, %v2009
      %v2504 = vpack.c.b16 %v2023, %v2010
      %v2505 = vpack.c.b16 %v2024, %v2011
      %v2506 = vpack.c.b16 %v2025, %v2012
      %v2507 = vpack.c.b16 %v2026, %v2013
      %v2508 = vpack.c.b16 %v2027, %v2014
      %v2509 = vpack.c.b16 %v2028, %v2015
      %v2510 = vpack.c.b16 %v2029, %v2016
      %v2511 = vpack.c.b16 %v2030, %v2017
      %v2512 = vpack.c.b16 %v2031, %v2018
      %v2513 = vpack.c.b16 %v2032, %v2019
      %v2514 = vpack.c.b16 %v2033, %v2020
      %v2515 = vpack.c.b16 %v2047, %v2034
      %v2516 = vpack.c.b16 %v2048, %v2035
      %v2517 = vpack.c.b16 %v2049, %v2036
      %v2518 = vpack.c.b16 %v2050, %v2037
      %v2519 = vpack.c.b16 %v2051, %v2038
      %v2520 = vpack.c.b16 %v2052, %v2039
      %v2521 = vpack.c.b16 %v2053, %v2040
      %v2522 = vpack.c.b16 %v2054, %v2041
      %v2523 = vpack.c.b16 %v2055, %v2042
      %v2524 = vpack.c.b16 %v2056, %v2043
      %v2525 = vpack.c.b16 %v2057, %v2044
      %v2526 = vpack.c.b16 %v2058, %v2045
      %v2527 = vpack.c.b16 %v2059, %v2046
      %v2528 = vpack.c.b16 %v2073, %v2060
      %v2529 = vpack.c.b16 %v2074, %v2061
      %v2530 = vpack.c.b16 %v2075, %v2062
      %v2531 = vpack.c.b16 %v2076, %v2063
      %v2532 = vpack.c.b16 %v2077, %v2064
      %v2533 = vpack.c.b16 %v2078, %v2065
      %v2534 = vpack.c.b16 %v2079, %v2066
      %v2535 = vpack.c.b16 %v2080, %v2067
      %v2536 = vpack.c.b16 %v2081, %v2068
      %v2537 = vpack.c.b16 %v2082, %v2069
      %v2538 = vpack.c.b16 %v2083, %v2070
      %v2539 = vpack.c.b16 %v2084, %v2071
      %v2540 = vpack.c.b16 %v2085, %v2072
      %v2541 = vpack.c.b16 %v2099, %v2086
      %v2542 = vpack.c.b16 %v2100, %v2087
      %v2543 = vpack.c.b16 %v2101, %v2088
      %v2544 = vpack.c.b16 %v2102, %v2089
      %v2545 = vpack.c.b16 %v2103, %v2090
      %v2546 = vpack.c.b16 %v2104, %v2091
      %v2547 = vpack.c.b16 %v2105, %v2092
      %v2548 = vpack.c.b16 %v2106, %v2093
      %v2549 = vpack.c.b16 %v2107, %v2094
      %v2550 = vpack.c.b16 %v2108, %v2095
      %v2551 = vpack.c.b16 %v2109, %v2096
      %v2552 = vpack.c.b16 %v2110, %v2097
      %v2553 = vpack.c.b16 %v2111, %v2098
      %v2554 = vpack.c.b16 %v2125, %v2112
      %v2555 = vpack.c.b16 %v2126, %v2113
      %v2556 = vpack.c.b16 %v2127, %v2114
      %v2557 = vpack.c.b16 %v2128, %v2115
      %v2558 = vpack.c.b16 %v2129, %v2116
      %v2559 = vpack.c.b16 %v2130, %v2117
      %v2560 = vpack.c.b16 %v2131, %v2118
      %v2561 = vpack.c.b16 %v2132, %v2119
      %v2562 = vpack.c.b16 %v2133, %v2120
      %v2563 = vpack.c.b16 %v2134, %v2121
      %v2564 = vpack.c.b16 %v2135, %v2122
      %v2565 = vpack.c.b16 %v2136, %v2123
      %v2566 = vpack.c.b16 %v2137, %v2124
      %v2567 = vpack.c.b16 %v2151, %v2138
      %v2568 = vpack.c.b16 %v2152, %v2139
      %v2569 = vpack.c.b16 %v2153, %v2140
      %v2570 = vpack.c.b16 %v2154, %v2141
      %v2571 = vpack.c.b16 %v2155, %v2142
      %v2572 = vpack.c.b16 %v2156, %v2143
      %v2573 = vpack.c.b16 %v2157, %v2144
      %v2574 = vpack.c.b16 %v2158, %v2145
      %v2575 = vpack.c.b16 %v2159, %v2146
      %v2576 = vpack.c.b16 %v2160, %v2147
      %v2577 = vpack.c.b16 %v2161, %v2148
      %v2578 = vpack.c.b16 %v2162, %v2149
      %v2579 = vpack.c.b16 %v2163, %v2150
      %v3164 = vunpack.c.l.b16 %v677
      %v3165 = vunpack.c.l.b16 %v678
      %v3166 = vunpack.c.l.b16 %v679
      %v3167 = vunpack.c.l.b16 %v680
      %v3168 = vunpack.c.l.b16 %v681
      %v3169 = vunpack.c.l.b16 %v682
      %v3170 = vunpack.c.l.b16 %v683
      %v3171 = vunpack.c.l.b16 %v684
      %v3172 = vunpack.c.l.b16 %v685
      %v3173 = vunpack.c.l.b16 %v686
      %v3174 = vunpack.c.l.b16 %v687
      %v3175 = vunpack.c.l.b16 %v688
      %v3176 = vunpack.c.l.b16 %v689
      %v3177 = vunpack.c.l.b16 %v690
      %v3178 = vunpack.c.l.b16 %v691
      %v3179 = vunpack.c.l.b16 %v692
      %v3180 = vunpack.c.l.b16 %v693
      %v3181 = vunpack.c.l.b16 %v694
      %v3182 = vunpack.c.l.b16 %v695
      %v3183 = vunpack.c.l.b16 %v696
      %v3184 = vunpack.c.l.b16 %v697
      %v3185 = vunpack.c.l.b16 %v698
      %v3186 = vunpack.c.l.b16 %v699
      %v3187 = vunpack.c.l.b16 %v700
      %v3188 = vunpack.c.l.b16 %v701
      %v3189 = vunpack.c.l.b16 %v702
      %v3190 = vunpack.c.l.b16 %v703
      %v3191 = vunpack.c.l.b16 %v704
      %v3192 = vunpack.c.l.b16 %v705
      %v3193 = vunpack.c.l.b16 %v706
      %v3194 = vunpack.c.l.b16 %v707
      %v3195 = vunpack.c.l.b16 %v708
      %v3196 = vunpack.c.l.b16 %v709
      %v3197 = vunpack.c.l.b16 %v710
      %v3198 = vunpack.c.l.b16 %v711
      %v3199 = vunpack.c.l.b16 %v712
      %v3200 = vunpack.c.l.b16 %v713
      %v3201 = vunpack.c.l.b16 %v714
      %v3202 = vunpack.c.l.b16 %v715
      %v3203 = vunpack.c.l.b16 %v716
      %v3204 = vunpack.c.l.b16 %v717
      %v3205 = vunpack.c.l.b16 %v718
      %v3206 = vunpack.c.l.b16 %v719
      %v3207 = vunpack.c.l.b16 %v720
      %v3208 = vunpack.c.l.b16 %v721
      %v3209 = vunpack.c.l.b16 %v722
      %v3210 = vunpack.c.l.b16 %v723
      %v3211 = vunpack.c.l.b16 %v724
      %v3212 = vunpack.c.l.b16 %v725
      %v3213 = vunpack.c.l.b16 %v726
      %v3214 = vunpack.c.l.b16 %v727
      %v3215 = vunpack.c.l.b16 %v728
      %v3216 = vunpack.c.l.b16 %v729
      %v3217 = vunpack.c.l.b16 %v730
      %v3218 = vunpack.c.l.b16 %v731
      %v3219 = vunpack.c.l.b16 %v732
      %v3220 = vunpack.c.l.b16 %v733
      %v3221 = vunpack.c.l.b16 %v734
      %v3222 = vunpack.c.l.b16 %v735
      %v3223 = vunpack.c.l.b16 %v736
      %v3224 = vunpack.c.l.b16 %v737
      %v3225 = vunpack.c.l.b16 %v738
      %v3226 = vunpack.c.l.b16 %v739
      %v3227 = vunpack.c.l.b16 %v740
      %v3228 = vunpack.c.l.b16 %v741
      %v3229 = vunpack.c.l.b16 %v742
      %v3230 = vunpack.c.l.b16 %v743
      %v3231 = vunpack.c.l.b16 %v744
      %v3232 = vunpack.c.l.b16 %v745
      %v3233 = vunpack.c.l.b16 %v746
      %v3234 = vunpack.c.l.b16 %v747
      %v3235 = vunpack.c.l.b16 %v748
      %v3236 = vunpack.c.l.b16 %v749
      %v3237 = vunpack.c.l.b16 %v750
      %v3238 = vunpack.c.l.b16 %v751
      %v3239 = vunpack.c.l.b16 %v752
      %v3240 = vunpack.c.l.b16 %v753
      %v3241 = vunpack.c.l.b16 %v754
      %v3242 = vunpack.c.l.b16 %v755
      %v3243 = vunpack.c.l.b16 %v756
      %v3244 = vunpack.c.l.b16 %v757
      %v3245 = vunpack.c.l.b16 %v758
      %v3246 = vunpack.c.l.b16 %v759
      %v3247 = vunpack.c.l.b16 %v760
      %v3248 = vunpack.c.l.b16 %v761
      %v3249 = vunpack.c.l.b16 %v762
      %v3250 = vunpack.c.l.b16 %v763
      %v3251 = vunpack.c.l.b16 %v764
      %v3252 = vunpack.c.l.b16 %v765
      %v3253 = vunpack.c.l.b16 %v766
      %v3254 = vunpack.c.l.b16 %v767
      %v3255 = vunpack.c.l.b16 %v768
      %v3256 = vunpack.c.l.b16 %v769
      %v3257 = vunpack.c.l.b16 %v770
      %v3258 = vunpack.c.l.b16 %v771
      %v3259 = vunpack.c.l.b16 %v772
      %v3260 = vunpack.c.l.b16 %v773
      %v3261 = vunpack.c.l.b16 %v774
      %v3262 = vunpack.c.l.b16 %v775
      %v3263 = vunpack.c.l.b16 %v776
      %v3264 = vunpack.c.l.b16 %v777
      %v3265 = vunpack.c.l.b16 %v778
      %v3266 = vunpack.c.l.b16 %v779
      %v3267 = vunpack.c.l.b16 %v780
      %v3268 = vunpack.c.l.b16 %v781
      %v3269 = vunpack.c.l.b16 %v782
      %v3270 = vunpack.c.l.b16 %v783
      %v3271 = vunpack.c.l.b16 %v784
      %v3272 = vunpack.c.l.b16 %v785
      %v3273 = vunpack.c.l.b16 %v786
      %v3274 = vunpack.c.l.b16 %v787
      %v3275 = vunpack.c.l.b16 %v788
      %v3276 = vunpack.c.l.b16 %v789
      %v3277 = vunpack.c.l.b16 %v790
      %v3278 = vunpack.c.l.b16 %v791
      %v3279 = vunpack.c.l.b16 %v792
      %v3280 = vunpack.c.l.b16 %v793
      %v3281 = vunpack.c.l.b16 %v794
      %v3282 = vunpack.c.l.b16 %v795
      %v3283 = vunpack.c.l.b16 %v796
      %v3284 = vunpack.c.l.b16 %v797
      %v3285 = vunpack.c.l.b16 %v798
      %v3286 = vunpack.c.l.b16 %v799
      %v3287 = vunpack.c.l.b16 %v800
      %v3288 = vunpack.c.l.b16 %v801
      %v3289 = vunpack.c.l.b16 %v802
      %v3290 = vunpack.c.l.b16 %v803
      %v3291 = vunpack.c.l.b16 %v804
      %v3292 = vunpack.c.l.b16 %v805
      %v3293 = vunpack.c.l.b16 %v806
      %v3294 = vunpack.c.l.b16 %v807
      %v3295 = vunpack.c.l.b16 %v808
      %v3296 = vunpack.c.l.b16 %v809
      %v3297 = vunpack.c.l.b16 %v810
      %v3298 = vunpack.c.l.b16 %v811
      %v3299 = vunpack.c.l.b16 %v812
      %v3300 = vunpack.c.l.b16 %v813
      %v3301 = vunpack.c.l.b16 %v814
      %v3302 = vunpack.c.l.b16 %v815
      %v3303 = vunpack.c.l.b16 %v816
      %v3304 = vunpack.c.l.b16 %v817
      %v3305 = vunpack.c.l.b16 %v818
      %v3306 = vunpack.c.l.b16 %v819
      %v3307 = vunpack.c.l.b16 %v820
      %v3308 = vunpack.c.l.b16 %v821
      %v3309 = vunpack.c.l.b16 %v822
      %v3310 = vunpack.c.l.b16 %v823
      %v3311 = vunpack.c.l.b16 %v824
      %v3312 = vunpack.c.l.b16 %v825
      %v3313 = vunpack.c.l.b16 %v826
      %v3314 = vunpack.c.l.b16 %v827
      %v3315 = vunpack.c.l.b16 %v828
      %v3316 = vunpack.c.l.b16 %v829
      %v3317 = vunpack.c.l.b16 %v830
      %v3318 = vunpack.c.l.b16 %v831
      %v3319 = vunpack.c.l.b16 %v832
      %v3320 = vunpack.c.l.b16 %v833
      %v3321 = vunpack.c.l.b16 %v834
      %v3322 = vunpack.c.l.b16 %v835
      %v3323 = vunpack.c.l.b16 %v836
      %v3324 = vunpack.c.l.b16 %v837
      %v3325 = vunpack.c.l.b16 %v838
      %v3326 = vunpack.c.l.b16 %v839
      %v3327 = vunpack.c.l.b16 %v840
      %v3328 = vunpack.c.l.b16 %v841
      %v3329 = vunpack.c.l.b16 %v842
      %v3330 = vunpack.c.l.b16 %v843
      %v3331 = vunpack.c.l.b16 %v844
      %v3332 = vunpack.c.l.b16 %v845
      %v3333 = vunpack.c.l.b16 %v846
      %v3334 = vunpack.c.l.b16 %v847
      %v3335 = vunpack.c.l.b16 %v848
      %v3336 = vunpack.c.l.b16 %v849
      %v3337 = vunpack.c.l.b16 %v850
      %v3338 = vunpack.c.l.b16 %v851
      %v3339 = vunpack.c.l.b16 %v852
      %v3340 = vunpack.c.l.b16 %v853
      %v3341 = vunpack.c.l.b16 %v854
      %v3342 = vunpack.c.l.b16 %v855
      %v3343 = vunpack.c.l.b16 %v856
      %v3344 = vunpack.c.l.b16 %v857
      %v3345 = vunpack.c.l.b16 %v858
      %v3346 = vunpack.c.l.b16 %v859
      %v3347 = vunpack.c.l.b16 %v860
      %v3348 = vunpack.c.l.b16 %v861
      %v3349 = vunpack.c.l.b16 %v862
      %v3350 = vunpack.c.l.b16 %v863
      %v3351 = vunpack.c.l.b16 %v864
      %v3352 = vunpack.c.l.b16 %v865
      %v3353 = vunpack.c.l.b16 %v866
      %v3354 = vunpack.c.l.b16 %v867
      %v3355 = vunpack.c.l.b16 %v868
      %v3356 = vunpack.c.l.b16 %v869
      %v3357 = vunpack.c.l.b16 %v870
      %v3358 = vunpack.c.l.b16 %v871
      %v3359 = vunpack.c.l.b16 %v872
      %v3360 = vunpack.c.l.b16 %v873
      %v3361 = vunpack.c.l.b16 %v874
      %v3362 = vunpack.c.l.b16 %v875
      %v3363 = vunpack.c.l.b16 %v876
      %v3364 = vpack.c.b16 %v3165, %v3164
      %v3365 = vpack.c.b16 %v3167, %v3166
      %v3366 = vpack.c.b16 %v3169, %v3168
      %v3367 = vpack.c.b16 %v3171, %v3170
      %v3368 = vpack.c.b16 %v3173, %v3172
      %v3369 = vpack.c.b16 %v3175, %v3174
      %v3370 = vpack.c.b16 %v3177, %v3176
      %v3371 = vpack.c.b16 %v3179, %v3178
      %v3372 = vpack.c.b16 %v3181, %v3180
      %v3373 = vpack.c.b16 %v3183, %v3182
      %v3374 = vpack.c.b16 %v3185, %v3184
      %v3375 = vpack.c.b16 %v3187, %v3186
      %v3376 = vpack.c.b16 %v3189, %v3188
      %v3377 = vpack.c.b16 %v3191, %v3190
      %v3378 = vpack.c.b16 %v3193, %v3192
      %v3379 = vpack.c.b16 %v3195, %v3194
      %v3380 = vpack.c.b16 %v3197, %v3196
      %v3381 = vpack.c.b16 %v3199, %v3198
      %v3382 = vpack.c.b16 %v3201, %v3200
      %v3383 = vpack.c.b16 %v3203, %v3202
      %v3384 = vpack.c.b16 %v3205, %v3204
      %v3385 = vpack.c.b16 %v3207, %v3206
      %v3386 = vpack.c.b16 %v3209, %v3208
      %v3387 = vpack.c.b16 %v3211, %v3210
      %v3388 = vpack.c.b16 %v3213, %v3212
      %v3389 = vpack.c.b16 %v3215, %v3214
      %v3390 = vpack.c.b16 %v3217, %v3216
      %v3391 = vpack.c.b16 %v3219, %v3218
      %v3392 = vpack.c.b16 %v3221, %v3220
      %v3393 = vpack.c.b16 %v3223, %v3222
      %v3394 = vpack.c.b16 %v3225, %v3224
      %v3395 = vpack.c.b16 %v3227, %v3226
      %v3396 = vpack.c.b16 %v3229, %v3228
      %v3397 = vpack.c.b16 %v3231, %v3230
      %v3398 = vpack.c.b16 %v3233, %v3232
      %v3399 = vpack.c.b16 %v3235, %v3234
      %v3400 = vpack.c.b16 %v3237, %v3236
      %v3401 = vpack.c.b16 %v3239, %v3238
      %v3402 = vpack.c.b16 %v3241, %v3240
      %v3403 = vpack.c.b16 %v3243, %v3242
      %v3404 = vpack.c.b16 %v3245, %v3244
      %v3405 = vpack.c.b16 %v3247, %v3246
      %v3406 = vpack.c.b16 %v3249, %v3248
      %v3407 = vpack.c.b16 %v3251, %v3250
      %v3408 = vpack.c.b16 %v3253, %v3252
      %v3409 = vpack.c.b16 %v3255, %v3254
      %v3410 = vpack.c.b16 %v3257, %v3256
      %v3411 = vpack.c.b16 %v3259, %v3258
      %v3412 = vpack.c.b16 %v3261, %v3260
      %v3413 = vpack.c.b16 %v3263, %v3262
      %v3414 = vpack.c.b16 %v3265, %v3264
      %v3415 = vpack.c.b16 %v3267, %v3266
      %v3416 = vpack.c.b16 %v3269, %v3268
      %v3417 = vpack.c.b16 %v3271, %v3270
      %v3418 = vpack.c.b16 %v3273, %v3272
      %v3419 = vpack.c.b16 %v3275, %v3274
      %v3420 = vpack.c.b16 %v3277, %v3276
      %v3421 = vpack.c.b16 %v3279, %v3278
      %v3422 = vpack.c.b16 %v3281, %v3280
      %v3423 = vpack.c.b16 %v3283, %v3282
      %v3424 = vpack.c.b16 %v3285, %v3284
      %v3425 = vpack.c.b16 %v3287, %v3286
      %v3426 = vpack.c.b16 %v3289, %v3288
      %v3427 = vpack.c.b16 %v3291, %v3290
      %v3428 = vpack.c.b16 %v3293, %v3292
      %v3429 = vpack.c.b16 %v3295, %v3294
      %v3430 = vpack.c.b16 %v3297, %v3296
      %v3431 = vpack.c.b16 %v3299, %v3298
      %v3432 = vpack.c.b16 %v3301, %v3300
      %v3433 = vpack.c.b16 %v3303, %v3302
      %v3434 = vpack.c.b16 %v3305, %v3304
      %v3435 = vpack.c.b16 %v3307, %v3306
      %v3436 = vpack.c.b16 %v3309, %v3308
      %v3437 = vpack.c.b16 %v3311, %v3310
      %v3438 = vpack.c.b16 %v3313, %v3312
      %v3439 = vpack.c.b16 %v3315, %v3314
      %v3440 = vpack.c.b16 %v3317, %v3316
      %v3441 = vpack.c.b16 %v3319, %v3318
      %v3442 = vpack.c.b16 %v3321, %v3320
      %v3443 = vpack.c.b16 %v3323, %v3322
      %v3444 = vpack.c.b16 %v3325, %v3324
      %v3445 = vpack.c.b16 %v3327, %v3326
      %v3446 = vpack.c.b16 %v3329, %v3328
      %v3447 = vpack.c.b16 %v3331, %v3330
      %v3448 = vpack.c.b16 %v3333, %v3332
      %v3449 = vpack.c.b16 %v3335, %v3334
      %v3450 = vpack.c.b16 %v3337, %v3336
      %v3451 = vpack.c.b16 %v3339, %v3338
      %v3452 = vpack.c.b16 %v3341, %v3340
      %v3453 = vpack.c.b16 %v3343, %v3342
      %v3454 = vpack.c.b16 %v3345, %v3344
      %v3455 = vpack.c.b16 %v3347, %v3346
      %v3456 = vpack.c.b16 %v3349, %v3348
      %v3457 = vpack.c.b16 %v3351, %v3350
      %v3458 = vpack.c.b16 %v3353, %v3352
      %v3459 = vpack.c.b16 %v3355, %v3354
      %v3460 = vpack.c.b16 %v3357, %v3356
      %v3461 = vpack.c.b16 %v3359, %v3358
      %v3462 = vpack.c.b16 %v3361, %v3360
      %v3463 = vpack.c.b16 %v3363, %v3362
      %vm3564 = vcmask 523264
      %v3566 = vsel %vm3564, %v2176, 0
      %v3569 = vsel %vm3564, %v2189, 0
      %v3572 = vsel %vm3564, %v2202, 0
      %v3575 = vsel %vm3564, %v2215, 0
      %v3578 = vsel %vm3564, %v2228, 0
      %v3581 = vsel %vm3564, %v2241, 0
      %v3584 = vsel %vm3564, %v2254, 0
      %v3587 = vsel %vm3564, %v2267, 0
      %v3590 = vsel %vm3564, %v2280, 0
      %v3593 = vsel %vm3564, %v2293, 0
      %v3596 = vsel %vm3564, %v2306, 0
      %v3599 = vsel %vm3564, %v2319, 0
      %v3602 = vsel %vm3564, %v2332, 0
      %v3605 = vsel %vm3564, %v2345, 0
      %v3608 = vsel %vm3564, %v2358, 0
      %v3611 = vsel %vm3564, %v2371, 0
      %v3614 = vsel %vm3564, %v2384, 0
      %v3617 = vsel %vm3564, %v2397, 0
      %v3620 = vsel %vm3564, %v2410, 0
      %v3623 = vsel %vm3564, %v2423, 0
      %v3626 = vsel %vm3564, %v2436, 0
      %v3629 = vsel %vm3564, %v2449, 0
      %v3632 = vsel %vm3564, %v2462, 0
      %v3635 = vsel %vm3564, %v2475, 0
      %v3638 = vsel %vm3564, %v2488, 0
      %v3641 = vsel %vm3564, %v2501, 0
      %v3644 = vsel %vm3564, %v2514, 0
      %v3647 = vsel %vm3564, %v2527, 0
      %v3650 = vsel %vm3564, %v2540, 0
      %v3653 = vsel %vm3564, %v2553, 0
      %v3656 = vsel %vm3564, %v2566, 0
      %v3659 = vsel %vm3564, %v2579, 0
      %3661 = vmatprep.subr.bf16.mxu0 0
      %3662 = vmatpush1.bf16.msra.mxu0 %v3371
      %3663 = vmatprep.subr.bf16.mxu0 0
      %3664 = vmatpush1.bf16.msra.mxu0 %v3370
      %3665 = vmatprep.subr.bf16.mxu0 0
      %3666 = vmatpush1.bf16.msra.mxu0 %v3369
      %3667 = vmatprep.subr.bf16.mxu0 0
      %3668 = vmatpush1.bf16.msra.mxu0 %v3368
      %3669 = vmatprep.subr.bf16.mxu0 0
      %3670 = vmatpush1.bf16.msra.mxu0 %v3367
      %3671 = vmatprep.subr.bf16.mxu0 0
      %3672 = vmatpush1.bf16.msra.mxu0 %v3366
      %3673 = vmatprep.subr.bf16.mxu0 0
      %3674 = vmatpush1.bf16.msra.mxu0 %v3365
      %3675 = vmatprep.subr.bf16.mxu0 0
      %3676 = vmatpush1.bf16.msra.mxu0 %v3364
      %3677 = vmatprep.subr.bf16.mxu0 0
      %3678 = vmatpush2.bf16.msra.mxu0 %v3379
      %3679 = vmatprep.subr.bf16.mxu0 0
      %3680 = vmatpush2.bf16.msra.mxu0 %v3378
      %3681 = vmatprep.subr.bf16.mxu0 0
      %3682 = vmatpush2.bf16.msra.mxu0 %v3377
      %3683 = vmatprep.subr.bf16.mxu0 0
      %3684 = vmatpush2.bf16.msra.mxu0 %v3376
      %3685 = vmatprep.subr.bf16.mxu0 0
      %3686 = vmatpush2.bf16.msra.mxu0 %v3375
      %3687 = vmatprep.subr.bf16.mxu0 0
      %3688 = vmatpush2.bf16.msra.mxu0 %v3374
      %3689 = vmatprep.subr.bf16.mxu0 0
      %3690 = vmatpush2.bf16.msra.mxu0 %v3373
      %3691 = vmatprep.subr.bf16.mxu0 0
      %3692 = vmatpush2.bf16.msra.mxu0 %v3372
      %3693 = vmatprep.mubr.bf16.mxu0 %v2165
      %3694 = vmatmul.mubr.bf16.gmra.mxu0 %v2164
      %v3695 = vpop.f32.mrf.mxu0
      %v3696 = vadd.f32 %v882, %v3695
      %v3697 = vpop.f32.mrf.mxu0
      %v3698 = vpop.f32.mrf.mxu0
      %v3699 = vadd.f32 %v882, %v3698
      %v3700 = vpop.f32.mrf.mxu0
      %3701 = vmatprep.mubr.bf16.mxu0 %v2178
      %3702 = vmatmul.mubr.bf16.gmra.mxu0 %v2177
      %v3703 = vpop.f32.mrf.mxu0
      %v3704 = vadd.f32 %v882, %v3703
      %v3705 = vpop.f32.mrf.mxu0
      %v3706 = vpop.f32.mrf.mxu0
      %v3707 = vadd.f32 %v882, %v3706
      %v3708 = vpop.f32.mrf.mxu0
      %3709 = vmatprep.mubr.bf16.mxu0 %v2191
      %3710 = vmatmul.mubr.bf16.gmra.mxu0 %v2190
      %v3711 = vpop.f32.mrf.mxu0
      %v3712 = vadd.f32 %v882, %v3711
      %v3713 = vpop.f32.mrf.mxu0
      %v3714 = vpop.f32.mrf.mxu0
      %v3715 = vadd.f32 %v882, %v3714
      %v3716 = vpop.f32.mrf.mxu0
      %3717 = vmatprep.mubr.bf16.mxu0 %v2204
      %3718 = vmatmul.mubr.bf16.gmra.mxu0 %v2203
      %v3719 = vpop.f32.mrf.mxu0
      %v3720 = vadd.f32 %v882, %v3719
      %v3721 = vpop.f32.mrf.mxu0
      %v3722 = vpop.f32.mrf.mxu0
      %v3723 = vadd.f32 %v882, %v3722
      %v3724 = vpop.f32.mrf.mxu0
      %3725 = vmatprep.mubr.bf16.mxu0 %v2217
      %3726 = vmatmul.mubr.bf16.gmra.mxu0 %v2216
      %v3727 = vpop.f32.mrf.mxu0
      %v3728 = vadd.f32 %v882, %v3727
      %v3729 = vpop.f32.mrf.mxu0
      %v3730 = vpop.f32.mrf.mxu0
      %v3731 = vadd.f32 %v882, %v3730
      %v3732 = vpop.f32.mrf.mxu0
      %3733 = vmatprep.mubr.bf16.mxu0 %v2230
      %3734 = vmatmul.mubr.bf16.gmra.mxu0 %v2229
      %v3735 = vpop.f32.mrf.mxu0
      %v3736 = vadd.f32 %v882, %v3735
      %v3737 = vpop.f32.mrf.mxu0
      %v3738 = vpop.f32.mrf.mxu0
      %v3739 = vadd.f32 %v882, %v3738
      %v3740 = vpop.f32.mrf.mxu0
      %3741 = vmatprep.mubr.bf16.mxu0 %v2243
      %3742 = vmatmul.mubr.bf16.gmra.mxu0 %v2242
      %v3743 = vpop.f32.mrf.mxu0
      %v3744 = vadd.f32 %v882, %v3743
      %v3745 = vpop.f32.mrf.mxu0
      %v3746 = vpop.f32.mrf.mxu0
      %v3747 = vadd.f32 %v882, %v3746
      %v3748 = vpop.f32.mrf.mxu0
      %3749 = vmatprep.mubr.bf16.mxu0 %v2256
      %3750 = vmatmul.mubr.bf16.gmra.mxu0 %v2255
      %v3751 = vpop.f32.mrf.mxu0
      %v3752 = vadd.f32 %v882, %v3751
      %v3753 = vpop.f32.mrf.mxu0
      %v3754 = vpop.f32.mrf.mxu0
      %v3755 = vadd.f32 %v882, %v3754
      %v3756 = vpop.f32.mrf.mxu0
      %3757 = vmatprep.mubr.bf16.mxu0 %v2269
      %3758 = vmatmul.mubr.bf16.gmra.mxu0 %v2268
      %v3759 = vpop.f32.mrf.mxu0
      %v3760 = vadd.f32 %v882, %v3759
      %v3761 = vpop.f32.mrf.mxu0
      %v3762 = vpop.f32.mrf.mxu0
      %v3763 = vadd.f32 %v882, %v3762
      %v3764 = vpop.f32.mrf.mxu0
      %3765 = vmatprep.mubr.bf16.mxu0 %v2282
      %3766 = vmatmul.mubr.bf16.gmra.mxu0 %v2281
      %v3767 = vpop.f32.mrf.mxu0
      %v3768 = vadd.f32 %v882, %v3767
      %v3769 = vpop.f32.mrf.mxu0
      %v3770 = vpop.f32.mrf.mxu0
      %v3771 = vadd.f32 %v882, %v3770
      %v3772 = vpop.f32.mrf.mxu0
      %3773 = vmatprep.mubr.bf16.mxu0 %v2295
      %3774 = vmatmul.mubr.bf16.gmra.mxu0 %v2294
      %v3775 = vpop.f32.mrf.mxu0
      %v3776 = vadd.f32 %v882, %v3775
      %v3777 = vpop.f32.mrf.mxu0
      %v3778 = vpop.f32.mrf.mxu0
      %v3779 = vadd.f32 %v882, %v3778
      %v3780 = vpop.f32.mrf.mxu0
      %3781 = vmatprep.mubr.bf16.mxu0 %v2308
      %3782 = vmatmul.mubr.bf16.gmra.mxu0 %v2307
      %v3783 = vpop.f32.mrf.mxu0
      %v3784 = vadd.f32 %v882, %v3783
      %v3785 = vpop.f32.mrf.mxu0
      %v3786 = vpop.f32.mrf.mxu0
      %v3787 = vadd.f32 %v882, %v3786
      %v3788 = vpop.f32.mrf.mxu0
      %3789 = vmatprep.mubr.bf16.mxu0 %v2321
      %3790 = vmatmul.mubr.bf16.gmra.mxu0 %v2320
      %v3791 = vpop.f32.mrf.mxu0
      %v3792 = vadd.f32 %v882, %v3791
      %v3793 = vpop.f32.mrf.mxu0
      %v3794 = vpop.f32.mrf.mxu0
      %v3795 = vadd.f32 %v882, %v3794
      %v3796 = vpop.f32.mrf.mxu0
      %3797 = vmatprep.mubr.bf16.mxu0 %v2334
      %3798 = vmatmul.mubr.bf16.gmra.mxu0 %v2333
      %v3799 = vpop.f32.mrf.mxu0
      %v3800 = vadd.f32 %v882, %v3799
      %v3801 = vpop.f32.mrf.mxu0
      %v3802 = vpop.f32.mrf.mxu0
      %v3803 = vadd.f32 %v882, %v3802
      %v3804 = vpop.f32.mrf.mxu0
      %3805 = vmatprep.mubr.bf16.mxu0 %v2347
      %3806 = vmatmul.mubr.bf16.gmra.mxu0 %v2346
      %v3807 = vpop.f32.mrf.mxu0
      %v3808 = vadd.f32 %v882, %v3807
      %v3809 = vpop.f32.mrf.mxu0
      %v3810 = vpop.f32.mrf.mxu0
      %v3811 = vadd.f32 %v882, %v3810
      %v3812 = vpop.f32.mrf.mxu0
      %3813 = vmatprep.mubr.bf16.mxu0 %v2360
      %3814 = vmatmul.mubr.bf16.gmra.mxu0 %v2359
      %v3815 = vpop.f32.mrf.mxu0
      %v3816 = vadd.f32 %v882, %v3815
      %v3817 = vpop.f32.mrf.mxu0
      %v3818 = vpop.f32.mrf.mxu0
      %v3819 = vadd.f32 %v882, %v3818
      %v3820 = vpop.f32.mrf.mxu0
      %3821 = vmatprep.mubr.bf16.mxu0 %v2373
      %3822 = vmatmul.mubr.bf16.gmra.mxu0 %v2372
      %v3823 = vpop.f32.mrf.mxu0
      %v3824 = vadd.f32 %v882, %v3823
      %v3825 = vpop.f32.mrf.mxu0
      %v3826 = vpop.f32.mrf.mxu0
      %v3827 = vadd.f32 %v882, %v3826
      %v3828 = vpop.f32.mrf.mxu0
      %3829 = vmatprep.mubr.bf16.mxu0 %v2386
      %3830 = vmatmul.mubr.bf16.gmra.mxu0 %v2385
      %v3831 = vpop.f32.mrf.mxu0
      %v3832 = vadd.f32 %v882, %v3831
      %v3833 = vpop.f32.mrf.mxu0
      %v3834 = vpop.f32.mrf.mxu0
      %v3835 = vadd.f32 %v882, %v3834
      %v3836 = vpop.f32.mrf.mxu0
      %3837 = vmatprep.mubr.bf16.mxu0 %v2399
      %3838 = vmatmul.mubr.bf16.gmra.mxu0 %v2398
      %v3839 = vpop.f32.mrf.mxu0
      %v3840 = vadd.f32 %v882, %v3839
      %v3841 = vpop.f32.mrf.mxu0
      %v3842 = vpop.f32.mrf.mxu0
      %v3843 = vadd.f32 %v882, %v3842
      %v3844 = vpop.f32.mrf.mxu0
      %3845 = vmatprep.mubr.bf16.mxu0 %v2412
      %3846 = vmatmul.mubr.bf16.gmra.mxu0 %v2411
      %v3847 = vpop.f32.mrf.mxu0
      %v3848 = vadd.f32 %v882, %v3847
      %v3849 = vpop.f32.mrf.mxu0
      %v3850 = vpop.f32.mrf.mxu0
      %v3851 = vadd.f32 %v882, %v3850
      %v3852 = vpop.f32.mrf.mxu0
      %3853 = vmatprep.mubr.bf16.mxu0 %v2425
      %3854 = vmatmul.mubr.bf16.gmra.mxu0 %v2424
      %v3855 = vpop.f32.mrf.mxu0
      %v3856 = vadd.f32 %v882, %v3855
      %v3857 = vpop.f32.mrf.mxu0
      %v3858 = vpop.f32.mrf.mxu0
      %v3859 = vadd.f32 %v882, %v3858
      %v3860 = vpop.f32.mrf.mxu0
      %3861 = vmatprep.mubr.bf16.mxu0 %v2438
      %3862 = vmatmul.mubr.bf16.gmra.mxu0 %v2437
      %v3863 = vpop.f32.mrf.mxu0
      %v3864 = vadd.f32 %v882, %v3863
      %v3865 = vpop.f32.mrf.mxu0
      %v3866 = vpop.f32.mrf.mxu0
      %v3867 = vadd.f32 %v882, %v3866
      %v3868 = vpop.f32.mrf.mxu0
      %3869 = vmatprep.mubr.bf16.mxu0 %v2451
      %3870 = vmatmul.mubr.bf16.gmra.mxu0 %v2450
      %v3871 = vpop.f32.mrf.mxu0
      %v3872 = vadd.f32 %v882, %v3871
      %v3873 = vpop.f32.mrf.mxu0
      %v3874 = vpop.f32.mrf.mxu0
      %v3875 = vadd.f32 %v882, %v3874
      %v3876 = vpop.f32.mrf.mxu0
      %3877 = vmatprep.mubr.bf16.mxu0 %v2464
      %3878 = vmatmul.mubr.bf16.gmra.mxu0 %v2463
      %v3879 = vpop.f32.mrf.mxu0
      %v3880 = vadd.f32 %v882, %v3879
      %v3881 = vpop.f32.mrf.mxu0
      %v3882 = vpop.f32.mrf.mxu0
      %v3883 = vadd.f32 %v882, %v3882
      %v3884 = vpop.f32.mrf.mxu0
      %3885 = vmatprep.mubr.bf16.mxu0 %v2477
      %3886 = vmatmul.mubr.bf16.gmra.mxu0 %v2476
      %v3887 = vpop.f32.mrf.mxu0
      %v3888 = vadd.f32 %v882, %v3887
      %v3889 = vpop.f32.mrf.mxu0
      %v3890 = vpop.f32.mrf.mxu0
      %v3891 = vadd.f32 %v882, %v3890
      %v3892 = vpop.f32.mrf.mxu0
      %3893 = vmatprep.mubr.bf16.mxu0 %v2490
      %3894 = vmatmul.mubr.bf16.gmra.mxu0 %v2489
      %v3895 = vpop.f32.mrf.mxu0
      %v3896 = vadd.f32 %v882, %v3895
      %v3897 = vpop.f32.mrf.mxu0
      %v3898 = vpop.f32.mrf.mxu0
      %v3899 = vadd.f32 %v882, %v3898
      %v3900 = vpop.f32.mrf.mxu0
      %3901 = vmatprep.mubr.bf16.mxu0 %v2503
      %3902 = vmatmul.mubr.bf16.gmra.mxu0 %v2502
      %v3903 = vpop.f32.mrf.mxu0
      %v3904 = vadd.f32 %v882, %v3903
      %v3905 = vpop.f32.mrf.mxu0
      %v3906 = vpop.f32.mrf.mxu0
      %v3907 = vadd.f32 %v882, %v3906
      %v3908 = vpop.f32.mrf.mxu0
      %3909 = vmatprep.mubr.bf16.mxu0 %v2516
      %3910 = vmatmul.mubr.bf16.gmra.mxu0 %v2515
      %v3911 = vpop.f32.mrf.mxu0
      %v3912 = vadd.f32 %v882, %v3911
      %v3913 = vpop.f32.mrf.mxu0
      %v3914 = vpop.f32.mrf.mxu0
      %v3915 = vadd.f32 %v882, %v3914
      %v3916 = vpop.f32.mrf.mxu0
      %3917 = vmatprep.mubr.bf16.mxu0 %v2529
      %3918 = vmatmul.mubr.bf16.gmra.mxu0 %v2528
      %v3919 = vpop.f32.mrf.mxu0
      %v3920 = vadd.f32 %v882, %v3919
      %v3921 = vpop.f32.mrf.mxu0
      %v3922 = vpop.f32.mrf.mxu0
      %v3923 = vadd.f32 %v882, %v3922
      %v3924 = vpop.f32.mrf.mxu0
      %3925 = vmatprep.mubr.bf16.mxu0 %v2542
      %3926 = vmatmul.mubr.bf16.gmra.mxu0 %v2541
      %v3927 = vpop.f32.mrf.mxu0
      %v3928 = vadd.f32 %v882, %v3927
      %v3929 = vpop.f32.mrf.mxu0
      %v3930 = vpop.f32.mrf.mxu0
      %v3931 = vadd.f32 %v882, %v3930
      %v3932 = vpop.f32.mrf.mxu0
      %3933 = vmatprep.mubr.bf16.mxu0 %v2555
      %3934 = vmatmul.mubr.bf16.gmra.mxu0 %v2554
      %v3935 = vpop.f32.mrf.mxu0
      %v3936 = vadd.f32 %v882, %v3935
      %v3937 = vpop.f32.mrf.mxu0
      %v3938 = vpop.f32.mrf.mxu0
      %v3939 = vadd.f32 %v882, %v3938
      %v3940 = vpop.f32.mrf.mxu0
      %3941 = vmatprep.mubr.bf16.mxu0 %v2568
      %3942 = vmatmul.mubr.bf16.gmra.mxu0 %v2567
      %v3943 = vpop.f32.mrf.mxu0
      %v3944 = vadd.f32 %v882, %v3943
      %v3945 = vpop.f32.mrf.mxu0
      %v3946 = vpop.f32.mrf.mxu0
      %v3947 = vadd.f32 %v882, %v3946
      %v3948 = vpop.f32.mrf.mxu0
      %3949 = vdwg.mxu0
      %3950 = vmatprep.subr.bf16.mxu0 0
      %3951 = vmatpush1.bf16.msra.mxu0 %v3387
      %3952 = vmatprep.subr.bf16.mxu0 0
      %3953 = vmatpush1.bf16.msra.mxu0 %v3386
      %3954 = vmatprep.subr.bf16.mxu0 0
      %3955 = vmatpush1.bf16.msra.mxu0 %v3385
      %3956 = vmatprep.subr.bf16.mxu0 0
      %3957 = vmatpush1.bf16.msra.mxu0 %v3384
      %3958 = vmatprep.subr.bf16.mxu0 0
      %3959 = vmatpush1.bf16.msra.mxu0 %v3383
      %3960 = vmatprep.subr.bf16.mxu0 0
      %3961 = vmatpush1.bf16.msra.mxu0 %v3382
      %3962 = vmatprep.subr.bf16.mxu0 0
      %3963 = vmatpush1.bf16.msra.mxu0 %v3381
      %3964 = vmatprep.subr.bf16.mxu0 0
      %3965 = vmatpush1.bf16.msra.mxu0 %v3380
      %3966 = vmatprep.subr.bf16.mxu0 0
      %3967 = vmatpush2.bf16.msra.mxu0 %v3395
      %3968 = vmatprep.subr.bf16.mxu0 0
      %3969 = vmatpush2.bf16.msra.mxu0 %v3394
      %3970 = vmatprep.subr.bf16.mxu0 0
      %3971 = vmatpush2.bf16.msra.mxu0 %v3393
      %3972 = vmatprep.subr.bf16.mxu0 0
      %3973 = vmatpush2.bf16.msra.mxu0 %v3392
      %3974 = vmatprep.subr.bf16.mxu0 0
      %3975 = vmatpush2.bf16.msra.mxu0 %v3391
      %3976 = vmatprep.subr.bf16.mxu0 0
      %3977 = vmatpush2.bf16.msra.mxu0 %v3390
      %3978 = vmatprep.subr.bf16.mxu0 0
      %3979 = vmatpush2.bf16.msra.mxu0 %v3389
      %3980 = vmatprep.subr.bf16.mxu0 0
      %3981 = vmatpush2.bf16.msra.mxu0 %v3388
      %3982 = vmatprep.mubr.bf16.mxu0 %v2167
      %3983 = vmatmul.mubr.bf16.gmra.mxu0 %v2166
      %v3984 = vpop.f32.mrf.mxu0
      %v3985 = vadd.f32 %v3696, %v3984
      %v3986 = vpop.f32.mrf.mxu0
      %v3987 = vpop.f32.mrf.mxu0
      %v3988 = vadd.f32 %v3699, %v3987
      %v3989 = vpop.f32.mrf.mxu0
      %3990 = vmatprep.mubr.bf16.mxu0 %v2180
      %3991 = vmatmul.mubr.bf16.gmra.mxu0 %v2179
      %v3992 = vpop.f32.mrf.mxu0
      %v3993 = vadd.f32 %v3704, %v3992
      %v3994 = vpop.f32.mrf.mxu0
      %v3995 = vpop.f32.mrf.mxu0
      %v3996 = vadd.f32 %v3707, %v3995
      %v3997 = vpop.f32.mrf.mxu0
      %3998 = vmatprep.mubr.bf16.mxu0 %v2193
      %3999 = vmatmul.mubr.bf16.gmra.mxu0 %v2192
      %v4000 = vpop.f32.mrf.mxu0
      %v4001 = vadd.f32 %v3712, %v4000
      %v4002 = vpop.f32.mrf.mxu0
      %v4003 = vpop.f32.mrf.mxu0
      %v4004 = vadd.f32 %v3715, %v4003
      %v4005 = vpop.f32.mrf.mxu0
      %4006 = vmatprep.mubr.bf16.mxu0 %v2206
      %4007 = vmatmul.mubr.bf16.gmra.mxu0 %v2205
      %v4008 = vpop.f32.mrf.mxu0
      %v4009 = vadd.f32 %v3720, %v4008
      %v4010 = vpop.f32.mrf.mxu0
      %v4011 = vpop.f32.mrf.mxu0
      %v4012 = vadd.f32 %v3723, %v4011
      %v4013 = vpop.f32.mrf.mxu0
      %4014 = vmatprep.mubr.bf16.mxu0 %v2219
      %4015 = vmatmul.mubr.bf16.gmra.mxu0 %v2218
      %v4016 = vpop.f32.mrf.mxu0
      %v4017 = vadd.f32 %v3728, %v4016
      %v4018 = vpop.f32.mrf.mxu0
      %v4019 = vpop.f32.mrf.mxu0
      %v4020 = vadd.f32 %v3731, %v4019
      %v4021 = vpop.f32.mrf.mxu0
      %4022 = vmatprep.mubr.bf16.mxu0 %v2232
      %4023 = vmatmul.mubr.bf16.gmra.mxu0 %v2231
      %v4024 = vpop.f32.mrf.mxu0
      %v4025 = vadd.f32 %v3736, %v4024
      %v4026 = vpop.f32.mrf.mxu0
      %v4027 = vpop.f32.mrf.mxu0
      %v4028 = vadd.f32 %v3739, %v4027
      %v4029 = vpop.f32.mrf.mxu0
      %4030 = vmatprep.mubr.bf16.mxu0 %v2245
      %4031 = vmatmul.mubr.bf16.gmra.mxu0 %v2244
      %v4032 = vpop.f32.mrf.mxu0
      %v4033 = vadd.f32 %v3744, %v4032
      %v4034 = vpop.f32.mrf.mxu0
      %v4035 = vpop.f32.mrf.mxu0
      %v4036 = vadd.f32 %v3747, %v4035
      %v4037 = vpop.f32.mrf.mxu0
      %4038 = vmatprep.mubr.bf16.mxu0 %v2258
      %4039 = vmatmul.mubr.bf16.gmra.mxu0 %v2257
      %v4040 = vpop.f32.mrf.mxu0
      %v4041 = vadd.f32 %v3752, %v4040
      %v4042 = vpop.f32.mrf.mxu0
      %v4043 = vpop.f32.mrf.mxu0
      %v4044 = vadd.f32 %v3755, %v4043
      %v4045 = vpop.f32.mrf.mxu0
      %4046 = vmatprep.mubr.bf16.mxu0 %v2271
      %4047 = vmatmul.mubr.bf16.gmra.mxu0 %v2270
      %v4048 = vpop.f32.mrf.mxu0
      %v4049 = vadd.f32 %v3760, %v4048
      %v4050 = vpop.f32.mrf.mxu0
      %v4051 = vpop.f32.mrf.mxu0
      %v4052 = vadd.f32 %v3763, %v4051
      %v4053 = vpop.f32.mrf.mxu0
      %4054 = vmatprep.mubr.bf16.mxu0 %v2284
      %4055 = vmatmul.mubr.bf16.gmra.mxu0 %v2283
      %v4056 = vpop.f32.mrf.mxu0
      %v4057 = vadd.f32 %v3768, %v4056
      %v4058 = vpop.f32.mrf.mxu0
      %v4059 = vpop.f32.mrf.mxu0
      %v4060 = vadd.f32 %v3771, %v4059
      %v4061 = vpop.f32.mrf.mxu0
      %4062 = vmatprep.mubr.bf16.mxu0 %v2297
      %4063 = vmatmul.mubr.bf16.gmra.mxu0 %v2296
      %v4064 = vpop.f32.mrf.mxu0
      %v4065 = vadd.f32 %v3776, %v4064
      %v4066 = vpop.f32.mrf.mxu0
      %v4067 = vpop.f32.mrf.mxu0
      %v4068 = vadd.f32 %v3779, %v4067
      %v4069 = vpop.f32.mrf.mxu0
      %4070 = vmatprep.mubr.bf16.mxu0 %v2310
      %4071 = vmatmul.mubr.bf16.gmra.mxu0 %v2309
      %v4072 = vpop.f32.mrf.mxu0
      %v4073 = vadd.f32 %v3784, %v4072
      %v4074 = vpop.f32.mrf.mxu0
      %v4075 = vpop.f32.mrf.mxu0
      %v4076 = vadd.f32 %v3787, %v4075
      %v4077 = vpop.f32.mrf.mxu0
      %4078 = vmatprep.mubr.bf16.mxu0 %v2323
      %4079 = vmatmul.mubr.bf16.gmra.mxu0 %v2322
      %v4080 = vpop.f32.mrf.mxu0
      %v4081 = vadd.f32 %v3792, %v4080
      %v4082 = vpop.f32.mrf.mxu0
      %v4083 = vpop.f32.mrf.mxu0
      %v4084 = vadd.f32 %v3795, %v4083
      %v4085 = vpop.f32.mrf.mxu0
      %4086 = vmatprep.mubr.bf16.mxu0 %v2336
      %4087 = vmatmul.mubr.bf16.gmra.mxu0 %v2335
      %v4088 = vpop.f32.mrf.mxu0
      %v4089 = vadd.f32 %v3800, %v4088
      %v4090 = vpop.f32.mrf.mxu0
      %v4091 = vpop.f32.mrf.mxu0
      %v4092 = vadd.f32 %v3803, %v4091
      %v4093 = vpop.f32.mrf.mxu0
      %4094 = vmatprep.mubr.bf16.mxu0 %v2349
      %4095 = vmatmul.mubr.bf16.gmra.mxu0 %v2348
      %v4096 = vpop.f32.mrf.mxu0
      %v4097 = vadd.f32 %v3808, %v4096
      %v4098 = vpop.f32.mrf.mxu0
      %v4099 = vpop.f32.mrf.mxu0
      %v4100 = vadd.f32 %v3811, %v4099
      %v4101 = vpop.f32.mrf.mxu0
      %4102 = vmatprep.mubr.bf16.mxu0 %v2362
      %4103 = vmatmul.mubr.bf16.gmra.mxu0 %v2361
      %v4104 = vpop.f32.mrf.mxu0
      %v4105 = vadd.f32 %v3816, %v4104
      %v4106 = vpop.f32.mrf.mxu0
      %v4107 = vpop.f32.mrf.mxu0
      %v4108 = vadd.f32 %v3819, %v4107
      %v4109 = vpop.f32.mrf.mxu0
      %4110 = vmatprep.mubr.bf16.mxu0 %v2375
      %4111 = vmatmul.mubr.bf16.gmra.mxu0 %v2374
      %v4112 = vpop.f32.mrf.mxu0
      %v4113 = vadd.f32 %v3824, %v4112
      %v4114 = vpop.f32.mrf.mxu0
      %v4115 = vpop.f32.mrf.mxu0
      %v4116 = vadd.f32 %v3827, %v4115
      %v4117 = vpop.f32.mrf.mxu0
      %4118 = vmatprep.mubr.bf16.mxu0 %v2388
      %4119 = vmatmul.mubr.bf16.gmra.mxu0 %v2387
      %v4120 = vpop.f32.mrf.mxu0
      %v4121 = vadd.f32 %v3832, %v4120
      %v4122 = vpop.f32.mrf.mxu0
      %v4123 = vpop.f32.mrf.mxu0
      %v4124 = vadd.f32 %v3835, %v4123
      %v4125 = vpop.f32.mrf.mxu0
      %4126 = vmatprep.mubr.bf16.mxu0 %v2401
      %4127 = vmatmul.mubr.bf16.gmra.mxu0 %v2400
      %v4128 = vpop.f32.mrf.mxu0
      %v4129 = vadd.f32 %v3840, %v4128
      %v4130 = vpop.f32.mrf.mxu0
      %v4131 = vpop.f32.mrf.mxu0
      %v4132 = vadd.f32 %v3843, %v4131
      %v4133 = vpop.f32.mrf.mxu0
      %4134 = vmatprep.mubr.bf16.mxu0 %v2414
      %4135 = vmatmul.mubr.bf16.gmra.mxu0 %v2413
      %v4136 = vpop.f32.mrf.mxu0
      %v4137 = vadd.f32 %v3848, %v4136
      %v4138 = vpop.f32.mrf.mxu0
      %v4139 = vpop.f32.mrf.mxu0
      %v4140 = vadd.f32 %v3851, %v4139
      %v4141 = vpop.f32.mrf.mxu0
      %4142 = vmatprep.mubr.bf16.mxu0 %v2427
      %4143 = vmatmul.mubr.bf16.gmra.mxu0 %v2426
      %v4144 = vpop.f32.mrf.mxu0
      %v4145 = vadd.f32 %v3856, %v4144
      %v4146 = vpop.f32.mrf.mxu0
      %v4147 = vpop.f32.mrf.mxu0
      %v4148 = vadd.f32 %v3859, %v4147
      %v4149 = vpop.f32.mrf.mxu0
      %4150 = vmatprep.mubr.bf16.mxu0 %v2440
      %4151 = vmatmul.mubr.bf16.gmra.mxu0 %v2439
      %v4152 = vpop.f32.mrf.mxu0
      %v4153 = vadd.f32 %v3864, %v4152
      %v4154 = vpop.f32.mrf.mxu0
      %v4155 = vpop.f32.mrf.mxu0
      %v4156 = vadd.f32 %v3867, %v4155
      %v4157 = vpop.f32.mrf.mxu0
      %4158 = vmatprep.mubr.bf16.mxu0 %v2453
      %4159 = vmatmul.mubr.bf16.gmra.mxu0 %v2452
      %v4160 = vpop.f32.mrf.mxu0
      %v4161 = vadd.f32 %v3872, %v4160
      %v4162 = vpop.f32.mrf.mxu0
      %v4163 = vpop.f32.mrf.mxu0
      %v4164 = vadd.f32 %v3875, %v4163
      %v4165 = vpop.f32.mrf.mxu0
      %4166 = vmatprep.mubr.bf16.mxu0 %v2466
      %4167 = vmatmul.mubr.bf16.gmra.mxu0 %v2465
      %v4168 = vpop.f32.mrf.mxu0
      %v4169 = vadd.f32 %v3880, %v4168
      %v4170 = vpop.f32.mrf.mxu0
      %v4171 = vpop.f32.mrf.mxu0
      %v4172 = vadd.f32 %v3883, %v4171
      %v4173 = vpop.f32.mrf.mxu0
      %4174 = vmatprep.mubr.bf16.mxu0 %v2479
      %4175 = vmatmul.mubr.bf16.gmra.mxu0 %v2478
      %v4176 = vpop.f32.mrf.mxu0
      %v4177 = vadd.f32 %v3888, %v4176
      %v4178 = vpop.f32.mrf.mxu0
      %v4179 = vpop.f32.mrf.mxu0
      %v4180 = vadd.f32 %v3891, %v4179
      %v4181 = vpop.f32.mrf.mxu0
      %4182 = vmatprep.mubr.bf16.mxu0 %v2492
      %4183 = vmatmul.mubr.bf16.gmra.mxu0 %v2491
      %v4184 = vpop.f32.mrf.mxu0
      %v4185 = vadd.f32 %v3896, %v4184
      %v4186 = vpop.f32.mrf.mxu0
      %v4187 = vpop.f32.mrf.mxu0
      %v4188 = vadd.f32 %v3899, %v4187
      %v4189 = vpop.f32.mrf.mxu0
      %4190 = vmatprep.mubr.bf16.mxu0 %v2505
      %4191 = vmatmul.mubr.bf16.gmra.mxu0 %v2504
      %v4192 = vpop.f32.mrf.mxu0
      %v4193 = vadd.f32 %v3904, %v4192
      %v4194 = vpop.f32.mrf.mxu0
      %v4195 = vpop.f32.mrf.mxu0
      %v4196 = vadd.f32 %v3907, %v4195
      %v4197 = vpop.f32.mrf.mxu0
      %4198 = vmatprep.mubr.bf16.mxu0 %v2518
      %4199 = vmatmul.mubr.bf16.gmra.mxu0 %v2517
      %v4200 = vpop.f32.mrf.mxu0
      %v4201 = vadd.f32 %v3912, %v4200
      %v4202 = vpop.f32.mrf.mxu0
      %v4203 = vpop.f32.mrf.mxu0
      %v4204 = vadd.f32 %v3915, %v4203
      %v4205 = vpop.f32.mrf.mxu0
      %4206 = vmatprep.mubr.bf16.mxu0 %v2531
      %4207 = vmatmul.mubr.bf16.gmra.mxu0 %v2530
      %v4208 = vpop.f32.mrf.mxu0
      %v4209 = vadd.f32 %v3920, %v4208
      %v4210 = vpop.f32.mrf.mxu0
      %v4211 = vpop.f32.mrf.mxu0
      %v4212 = vadd.f32 %v3923, %v4211
      %v4213 = vpop.f32.mrf.mxu0
      %4214 = vmatprep.mubr.bf16.mxu0 %v2544
      %4215 = vmatmul.mubr.bf16.gmra.mxu0 %v2543
      %v4216 = vpop.f32.mrf.mxu0
      %v4217 = vadd.f32 %v3928, %v4216
      %v4218 = vpop.f32.mrf.mxu0
      %v4219 = vpop.f32.mrf.mxu0
      %v4220 = vadd.f32 %v3931, %v4219
      %v4221 = vpop.f32.mrf.mxu0
      %4222 = vmatprep.mubr.bf16.mxu0 %v2557
      %4223 = vmatmul.mubr.bf16.gmra.mxu0 %v2556
      %v4224 = vpop.f32.mrf.mxu0
      %v4225 = vadd.f32 %v3936, %v4224
      %v4226 = vpop.f32.mrf.mxu0
      %v4227 = vpop.f32.mrf.mxu0
      %v4228 = vadd.f32 %v3939, %v4227
      %v4229 = vpop.f32.mrf.mxu0
      %4230 = vmatprep.mubr.bf16.mxu0 %v2570
      %4231 = vmatmul.mubr.bf16.gmra.mxu0 %v2569
      %v4232 = vpop.f32.mrf.mxu0
      %v4233 = vadd.f32 %v3944, %v4232
      %v4234 = vpop.f32.mrf.mxu0
      %v4235 = vpop.f32.mrf.mxu0
      %v4236 = vadd.f32 %v3947, %v4235
      %v4237 = vpop.f32.mrf.mxu0
      %4238 = vdwg.mxu0
      %4239 = vmatprep.subr.bf16.mxu0 0
      %4240 = vmatpush1.bf16.msra.mxu0 %v3403
      %4241 = vmatprep.subr.bf16.mxu0 0
      %4242 = vmatpush1.bf16.msra.mxu0 %v3402
      %4243 = vmatprep.subr.bf16.mxu0 0
      %4244 = vmatpush1.bf16.msra.mxu0 %v3401
      %4245 = vmatprep.subr.bf16.mxu0 0
      %4246 = vmatpush1.bf16.msra.mxu0 %v3400
      %4247 = vmatprep.subr.bf16.mxu0 0
      %4248 = vmatpush1.bf16.msra.mxu0 %v3399
      %4249 = vmatprep.subr.bf16.mxu0 0
      %4250 = vmatpush1.bf16.msra.mxu0 %v3398
      %4251 = vmatprep.subr.bf16.mxu0 0
      %4252 = vmatpush1.bf16.msra.mxu0 %v3397
      %4253 = vmatprep.subr.bf16.mxu0 0
      %4254 = vmatpush1.bf16.msra.mxu0 %v3396
      %4255 = vmatprep.subr.bf16.mxu0 0
      %4256 = vmatpush2.bf16.msra.mxu0 %v3411
      %4257 = vmatprep.subr.bf16.mxu0 0
      %4258 = vmatpush2.bf16.msra.mxu0 %v3410
      %4259 = vmatprep.subr.bf16.mxu0 0
      %4260 = vmatpush2.bf16.msra.mxu0 %v3409
      %4261 = vmatprep.subr.bf16.mxu0 0
      %4262 = vmatpush2.bf16.msra.mxu0 %v3408
      %4263 = vmatprep.subr.bf16.mxu0 0
      %4264 = vmatpush2.bf16.msra.mxu0 %v3407
      %4265 = vmatprep.subr.bf16.mxu0 0
      %4266 = vmatpush2.bf16.msra.mxu0 %v3406
      %4267 = vmatprep.subr.bf16.mxu0 0
      %4268 = vmatpush2.bf16.msra.mxu0 %v3405
      %4269 = vmatprep.subr.bf16.mxu0 0
      %4270 = vmatpush2.bf16.msra.mxu0 %v3404
      %4271 = vmatprep.mubr.bf16.mxu0 %v2169
      %4272 = vmatmul.mubr.bf16.gmra.mxu0 %v2168
      %v4273 = vpop.f32.mrf.mxu0
      %v4274 = vadd.f32 %v3985, %v4273
      %v4275 = vpop.f32.mrf.mxu0
      %v4276 = vpop.f32.mrf.mxu0
      %v4277 = vadd.f32 %v3988, %v4276
      %v4278 = vpop.f32.mrf.mxu0
      %4279 = vmatprep.mubr.bf16.mxu0 %v2182
      %4280 = vmatmul.mubr.bf16.gmra.mxu0 %v2181
      %v4281 = vpop.f32.mrf.mxu0
      %v4282 = vadd.f32 %v3993, %v4281
      %v4283 = vpop.f32.mrf.mxu0
      %v4284 = vpop.f32.mrf.mxu0
      %v4285 = vadd.f32 %v3996, %v4284
      %v4286 = vpop.f32.mrf.mxu0
      %4287 = vmatprep.mubr.bf16.mxu0 %v2195
      %4288 = vmatmul.mubr.bf16.gmra.mxu0 %v2194
      %v4289 = vpop.f32.mrf.mxu0
      %v4290 = vadd.f32 %v4001, %v4289
      %v4291 = vpop.f32.mrf.mxu0
      %v4292 = vpop.f32.mrf.mxu0
      %v4293 = vadd.f32 %v4004, %v4292
      %v4294 = vpop.f32.mrf.mxu0
      %4295 = vmatprep.mubr.bf16.mxu0 %v2208
      %4296 = vmatmul.mubr.bf16.gmra.mxu0 %v2207
      %v4297 = vpop.f32.mrf.mxu0
      %v4298 = vadd.f32 %v4009, %v4297
      %v4299 = vpop.f32.mrf.mxu0
      %v4300 = vpop.f32.mrf.mxu0
      %v4301 = vadd.f32 %v4012, %v4300
      %v4302 = vpop.f32.mrf.mxu0
      %4303 = vmatprep.mubr.bf16.mxu0 %v2221
      %4304 = vmatmul.mubr.bf16.gmra.mxu0 %v2220
      %v4305 = vpop.f32.mrf.mxu0
      %v4306 = vadd.f32 %v4017, %v4305
      %v4307 = vpop.f32.mrf.mxu0
      %v4308 = vpop.f32.mrf.mxu0
      %v4309 = vadd.f32 %v4020, %v4308
      %v4310 = vpop.f32.mrf.mxu0
      %4311 = vmatprep.mubr.bf16.mxu0 %v2234
      %4312 = vmatmul.mubr.bf16.gmra.mxu0 %v2233
      %v4313 = vpop.f32.mrf.mxu0
      %v4314 = vadd.f32 %v4025, %v4313
      %v4315 = vpop.f32.mrf.mxu0
      %v4316 = vpop.f32.mrf.mxu0
      %v4317 = vadd.f32 %v4028, %v4316
      %v4318 = vpop.f32.mrf.mxu0
      %4319 = vmatprep.mubr.bf16.mxu0 %v2247
      %4320 = vmatmul.mubr.bf16.gmra.mxu0 %v2246
      %v4321 = vpop.f32.mrf.mxu0
      %v4322 = vadd.f32 %v4033, %v4321
      %v4323 = vpop.f32.mrf.mxu0
      %v4324 = vpop.f32.mrf.mxu0
      %v4325 = vadd.f32 %v4036, %v4324
      %v4326 = vpop.f32.mrf.mxu0
      %4327 = vmatprep.mubr.bf16.mxu0 %v2260
      %4328 = vmatmul.mubr.bf16.gmra.mxu0 %v2259
      %v4329 = vpop.f32.mrf.mxu0
      %v4330 = vadd.f32 %v4041, %v4329
      %v4331 = vpop.f32.mrf.mxu0
      %v4332 = vpop.f32.mrf.mxu0
      %v4333 = vadd.f32 %v4044, %v4332
      %v4334 = vpop.f32.mrf.mxu0
      %4335 = vmatprep.mubr.bf16.mxu0 %v2273
      %4336 = vmatmul.mubr.bf16.gmra.mxu0 %v2272
      %v4337 = vpop.f32.mrf.mxu0
      %v4338 = vadd.f32 %v4049, %v4337
      %v4339 = vpop.f32.mrf.mxu0
      %v4340 = vpop.f32.mrf.mxu0
      %v4341 = vadd.f32 %v4052, %v4340
      %v4342 = vpop.f32.mrf.mxu0
      %4343 = vmatprep.mubr.bf16.mxu0 %v2286
      %4344 = vmatmul.mubr.bf16.gmra.mxu0 %v2285
      %v4345 = vpop.f32.mrf.mxu0
      %v4346 = vadd.f32 %v4057, %v4345
      %v4347 = vpop.f32.mrf.mxu0
      %v4348 = vpop.f32.mrf.mxu0
      %v4349 = vadd.f32 %v4060, %v4348
      %v4350 = vpop.f32.mrf.mxu0
      %4351 = vmatprep.mubr.bf16.mxu0 %v2299
      %4352 = vmatmul.mubr.bf16.gmra.mxu0 %v2298
      %v4353 = vpop.f32.mrf.mxu0
      %v4354 = vadd.f32 %v4065, %v4353
      %v4355 = vpop.f32.mrf.mxu0
      %v4356 = vpop.f32.mrf.mxu0
      %v4357 = vadd.f32 %v4068, %v4356
      %v4358 = vpop.f32.mrf.mxu0
      %4359 = vmatprep.mubr.bf16.mxu0 %v2312
      %4360 = vmatmul.mubr.bf16.gmra.mxu0 %v2311
      %v4361 = vpop.f32.mrf.mxu0
      %v4362 = vadd.f32 %v4073, %v4361
      %v4363 = vpop.f32.mrf.mxu0
      %v4364 = vpop.f32.mrf.mxu0
      %v4365 = vadd.f32 %v4076, %v4364
      %v4366 = vpop.f32.mrf.mxu0
      %4367 = vmatprep.mubr.bf16.mxu0 %v2325
      %4368 = vmatmul.mubr.bf16.gmra.mxu0 %v2324
      %v4369 = vpop.f32.mrf.mxu0
      %v4370 = vadd.f32 %v4081, %v4369
      %v4371 = vpop.f32.mrf.mxu0
      %v4372 = vpop.f32.mrf.mxu0
      %v4373 = vadd.f32 %v4084, %v4372
      %v4374 = vpop.f32.mrf.mxu0
      %4375 = vmatprep.mubr.bf16.mxu0 %v2338
      %4376 = vmatmul.mubr.bf16.gmra.mxu0 %v2337
      %v4377 = vpop.f32.mrf.mxu0
      %v4378 = vadd.f32 %v4089, %v4377
      %v4379 = vpop.f32.mrf.mxu0
      %v4380 = vpop.f32.mrf.mxu0
      %v4381 = vadd.f32 %v4092, %v4380
      %v4382 = vpop.f32.mrf.mxu0
      %4383 = vmatprep.mubr.bf16.mxu0 %v2351
      %4384 = vmatmul.mubr.bf16.gmra.mxu0 %v2350
      %v4385 = vpop.f32.mrf.mxu0
      %v4386 = vadd.f32 %v4097, %v4385
      %v4387 = vpop.f32.mrf.mxu0
      %v4388 = vpop.f32.mrf.mxu0
      %v4389 = vadd.f32 %v4100, %v4388
      %v4390 = vpop.f32.mrf.mxu0
      %4391 = vmatprep.mubr.bf16.mxu0 %v2364
      %4392 = vmatmul.mubr.bf16.gmra.mxu0 %v2363
      %v4393 = vpop.f32.mrf.mxu0
      %v4394 = vadd.f32 %v4105, %v4393
      %v4395 = vpop.f32.mrf.mxu0
      %v4396 = vpop.f32.mrf.mxu0
      %v4397 = vadd.f32 %v4108, %v4396
      %v4398 = vpop.f32.mrf.mxu0
      %4399 = vmatprep.mubr.bf16.mxu0 %v2377
      %4400 = vmatmul.mubr.bf16.gmra.mxu0 %v2376
      %v4401 = vpop.f32.mrf.mxu0
      %v4402 = vadd.f32 %v4113, %v4401
      %v4403 = vpop.f32.mrf.mxu0
      %v4404 = vpop.f32.mrf.mxu0
      %v4405 = vadd.f32 %v4116, %v4404
      %v4406 = vpop.f32.mrf.mxu0
      %4407 = vmatprep.mubr.bf16.mxu0 %v2390
      %4408 = vmatmul.mubr.bf16.gmra.mxu0 %v2389
      %v4409 = vpop.f32.mrf.mxu0
      %v4410 = vadd.f32 %v4121, %v4409
      %v4411 = vpop.f32.mrf.mxu0
      %v4412 = vpop.f32.mrf.mxu0
      %v4413 = vadd.f32 %v4124, %v4412
      %v4414 = vpop.f32.mrf.mxu0
      %4415 = vmatprep.mubr.bf16.mxu0 %v2403
      %4416 = vmatmul.mubr.bf16.gmra.mxu0 %v2402
      %v4417 = vpop.f32.mrf.mxu0
      %v4418 = vadd.f32 %v4129, %v4417
      %v4419 = vpop.f32.mrf.mxu0
      %v4420 = vpop.f32.mrf.mxu0
      %v4421 = vadd.f32 %v4132, %v4420
      %v4422 = vpop.f32.mrf.mxu0
      %4423 = vmatprep.mubr.bf16.mxu0 %v2416
      %4424 = vmatmul.mubr.bf16.gmra.mxu0 %v2415
      %v4425 = vpop.f32.mrf.mxu0
      %v4426 = vadd.f32 %v4137, %v4425
      %v4427 = vpop.f32.mrf.mxu0
      %v4428 = vpop.f32.mrf.mxu0
      %v4429 = vadd.f32 %v4140, %v4428
      %v4430 = vpop.f32.mrf.mxu0
      %4431 = vmatprep.mubr.bf16.mxu0 %v2429
      %4432 = vmatmul.mubr.bf16.gmra.mxu0 %v2428
      %v4433 = vpop.f32.mrf.mxu0
      %v4434 = vadd.f32 %v4145, %v4433
      %v4435 = vpop.f32.mrf.mxu0
      %v4436 = vpop.f32.mrf.mxu0
      %v4437 = vadd.f32 %v4148, %v4436
      %v4438 = vpop.f32.mrf.mxu0
      %4439 = vmatprep.mubr.bf16.mxu0 %v2442
      %4440 = vmatmul.mubr.bf16.gmra.mxu0 %v2441
      %v4441 = vpop.f32.mrf.mxu0
      %v4442 = vadd.f32 %v4153, %v4441
      %v4443 = vpop.f32.mrf.mxu0
      %v4444 = vpop.f32.mrf.mxu0
      %v4445 = vadd.f32 %v4156, %v4444
      %v4446 = vpop.f32.mrf.mxu0
      %4447 = vmatprep.mubr.bf16.mxu0 %v2455
      %4448 = vmatmul.mubr.bf16.gmra.mxu0 %v2454
      %v4449 = vpop.f32.mrf.mxu0
      %v4450 = vadd.f32 %v4161, %v4449
      %v4451 = vpop.f32.mrf.mxu0
      %v4452 = vpop.f32.mrf.mxu0
      %v4453 = vadd.f32 %v4164, %v4452
      %v4454 = vpop.f32.mrf.mxu0
      %4455 = vmatprep.mubr.bf16.mxu0 %v2468
      %4456 = vmatmul.mubr.bf16.gmra.mxu0 %v2467
      %v4457 = vpop.f32.mrf.mxu0
      %v4458 = vadd.f32 %v4169, %v4457
      %v4459 = vpop.f32.mrf.mxu0
      %v4460 = vpop.f32.mrf.mxu0
      %v4461 = vadd.f32 %v4172, %v4460
      %v4462 = vpop.f32.mrf.mxu0
      %4463 = vmatprep.mubr.bf16.mxu0 %v2481
      %4464 = vmatmul.mubr.bf16.gmra.mxu0 %v2480
      %v4465 = vpop.f32.mrf.mxu0
      %v4466 = vadd.f32 %v4177, %v4465
      %v4467 = vpop.f32.mrf.mxu0
      %v4468 = vpop.f32.mrf.mxu0
      %v4469 = vadd.f32 %v4180, %v4468
      %v4470 = vpop.f32.mrf.mxu0
      %4471 = vmatprep.mubr.bf16.mxu0 %v2494
      %4472 = vmatmul.mubr.bf16.gmra.mxu0 %v2493
      %v4473 = vpop.f32.mrf.mxu0
      %v4474 = vadd.f32 %v4185, %v4473
      %v4475 = vpop.f32.mrf.mxu0
      %v4476 = vpop.f32.mrf.mxu0
      %v4477 = vadd.f32 %v4188, %v4476
      %v4478 = vpop.f32.mrf.mxu0
      %4479 = vmatprep.mubr.bf16.mxu0 %v2507
      %4480 = vmatmul.mubr.bf16.gmra.mxu0 %v2506
      %v4481 = vpop.f32.mrf.mxu0
      %v4482 = vadd.f32 %v4193, %v4481
      %v4483 = vpop.f32.mrf.mxu0
      %v4484 = vpop.f32.mrf.mxu0
      %v4485 = vadd.f32 %v4196, %v4484
      %v4486 = vpop.f32.mrf.mxu0
      %4487 = vmatprep.mubr.bf16.mxu0 %v2520
      %4488 = vmatmul.mubr.bf16.gmra.mxu0 %v2519
      %v4489 = vpop.f32.mrf.mxu0
      %v4490 = vadd.f32 %v4201, %v4489
      %v4491 = vpop.f32.mrf.mxu0
      %v4492 = vpop.f32.mrf.mxu0
      %v4493 = vadd.f32 %v4204, %v4492
      %v4494 = vpop.f32.mrf.mxu0
      %4495 = vmatprep.mubr.bf16.mxu0 %v2533
      %4496 = vmatmul.mubr.bf16.gmra.mxu0 %v2532
      %v4497 = vpop.f32.mrf.mxu0
      %v4498 = vadd.f32 %v4209, %v4497
      %v4499 = vpop.f32.mrf.mxu0
      %v4500 = vpop.f32.mrf.mxu0
      %v4501 = vadd.f32 %v4212, %v4500
      %v4502 = vpop.f32.mrf.mxu0
      %4503 = vmatprep.mubr.bf16.mxu0 %v2546
      %4504 = vmatmul.mubr.bf16.gmra.mxu0 %v2545
      %v4505 = vpop.f32.mrf.mxu0
      %v4506 = vadd.f32 %v4217, %v4505
      %v4507 = vpop.f32.mrf.mxu0
      %v4508 = vpop.f32.mrf.mxu0
      %v4509 = vadd.f32 %v4220, %v4508
      %v4510 = vpop.f32.mrf.mxu0
      %4511 = vmatprep.mubr.bf16.mxu0 %v2559
      %4512 = vmatmul.mubr.bf16.gmra.mxu0 %v2558
      %v4513 = vpop.f32.mrf.mxu0
      %v4514 = vadd.f32 %v4225, %v4513
      %v4515 = vpop.f32.mrf.mxu0
      %v4516 = vpop.f32.mrf.mxu0
      %v4517 = vadd.f32 %v4228, %v4516
      %v4518 = vpop.f32.mrf.mxu0
      %4519 = vmatprep.mubr.bf16.mxu0 %v2572
      %4520 = vmatmul.mubr.bf16.gmra.mxu0 %v2571
      %v4521 = vpop.f32.mrf.mxu0
      %v4522 = vadd.f32 %v4233, %v4521
      %v4523 = vpop.f32.mrf.mxu0
      %v4524 = vpop.f32.mrf.mxu0
      %v4525 = vadd.f32 %v4236, %v4524
      %v4526 = vpop.f32.mrf.mxu0
      %4527 = vdwg.mxu0
      %4528 = vmatprep.subr.bf16.mxu0 0
      %4529 = vmatpush1.bf16.msra.mxu0 %v3419
      %4530 = vmatprep.subr.bf16.mxu0 0
      %4531 = vmatpush1.bf16.msra.mxu0 %v3418
      %4532 = vmatprep.subr.bf16.mxu0 0
      %4533 = vmatpush1.bf16.msra.mxu0 %v3417
      %4534 = vmatprep.subr.bf16.mxu0 0
      %4535 = vmatpush1.bf16.msra.mxu0 %v3416
      %4536 = vmatprep.subr.bf16.mxu0 0
      %4537 = vmatpush1.bf16.msra.mxu0 %v3415
      %4538 = vmatprep.subr.bf16.mxu0 0
      %4539 = vmatpush1.bf16.msra.mxu0 %v3414
      %4540 = vmatprep.subr.bf16.mxu0 0
      %4541 = vmatpush1.bf16.msra.mxu0 %v3413
      %4542 = vmatprep.subr.bf16.mxu0 0
      %4543 = vmatpush1.bf16.msra.mxu0 %v3412
      %4544 = vmatprep.subr.bf16.mxu0 0
      %4545 = vmatpush2.bf16.msra.mxu0 %v3427
      %4546 = vmatprep.subr.bf16.mxu0 0
      %4547 = vmatpush2.bf16.msra.mxu0 %v3426
      %4548 = vmatprep.subr.bf16.mxu0 0
      %4549 = vmatpush2.bf16.msra.mxu0 %v3425
      %4550 = vmatprep.subr.bf16.mxu0 0
      %4551 = vmatpush2.bf16.msra.mxu0 %v3424
      %4552 = vmatprep.subr.bf16.mxu0 0
      %4553 = vmatpush2.bf16.msra.mxu0 %v3423
      %4554 = vmatprep.subr.bf16.mxu0 0
      %4555 = vmatpush2.bf16.msra.mxu0 %v3422
      %4556 = vmatprep.subr.bf16.mxu0 0
      %4557 = vmatpush2.bf16.msra.mxu0 %v3421
      %4558 = vmatprep.subr.bf16.mxu0 0
      %4559 = vmatpush2.bf16.msra.mxu0 %v3420
      %4560 = vmatprep.mubr.bf16.mxu0 %v2171
      %4561 = vmatmul.mubr.bf16.gmra.mxu0 %v2170
      %v4562 = vpop.f32.mrf.mxu0
      %v4563 = vadd.f32 %v4274, %v4562
      %v4564 = vpop.f32.mrf.mxu0
      %v4565 = vpop.f32.mrf.mxu0
      %v4566 = vadd.f32 %v4277, %v4565
      %v4567 = vpop.f32.mrf.mxu0
      %4568 = vmatprep.mubr.bf16.mxu0 %v2184
      %4569 = vmatmul.mubr.bf16.gmra.mxu0 %v2183
      %v4570 = vpop.f32.mrf.mxu0
      %v4571 = vadd.f32 %v4282, %v4570
      %v4572 = vpop.f32.mrf.mxu0
      %v4573 = vpop.f32.mrf.mxu0
      %v4574 = vadd.f32 %v4285, %v4573
      %v4575 = vpop.f32.mrf.mxu0
      %4576 = vmatprep.mubr.bf16.mxu0 %v2197
      %4577 = vmatmul.mubr.bf16.gmra.mxu0 %v2196
      %v4578 = vpop.f32.mrf.mxu0
      %v4579 = vadd.f32 %v4290, %v4578
      %v4580 = vpop.f32.mrf.mxu0
      %v4581 = vpop.f32.mrf.mxu0
      %v4582 = vadd.f32 %v4293, %v4581
      %v4583 = vpop.f32.mrf.mxu0
      %4584 = vmatprep.mubr.bf16.mxu0 %v2210
      %4585 = vmatmul.mubr.bf16.gmra.mxu0 %v2209
      %v4586 = vpop.f32.mrf.mxu0
      %v4587 = vadd.f32 %v4298, %v4586
      %v4588 = vpop.f32.mrf.mxu0
      %v4589 = vpop.f32.mrf.mxu0
      %v4590 = vadd.f32 %v4301, %v4589
      %v4591 = vpop.f32.mrf.mxu0
      %4592 = vmatprep.mubr.bf16.mxu0 %v2223
      %4593 = vmatmul.mubr.bf16.gmra.mxu0 %v2222
      %v4594 = vpop.f32.mrf.mxu0
      %v4595 = vadd.f32 %v4306, %v4594
      %v4596 = vpop.f32.mrf.mxu0
      %v4597 = vpop.f32.mrf.mxu0
      %v4598 = vadd.f32 %v4309, %v4597
      %v4599 = vpop.f32.mrf.mxu0
      %4600 = vmatprep.mubr.bf16.mxu0 %v2236
      %4601 = vmatmul.mubr.bf16.gmra.mxu0 %v2235
      %v4602 = vpop.f32.mrf.mxu0
      %v4603 = vadd.f32 %v4314, %v4602
      %v4604 = vpop.f32.mrf.mxu0
      %v4605 = vpop.f32.mrf.mxu0
      %v4606 = vadd.f32 %v4317, %v4605
      %v4607 = vpop.f32.mrf.mxu0
      %4608 = vmatprep.mubr.bf16.mxu0 %v2249
      %4609 = vmatmul.mubr.bf16.gmra.mxu0 %v2248
      %v4610 = vpop.f32.mrf.mxu0
      %v4611 = vadd.f32 %v4322, %v4610
      %v4612 = vpop.f32.mrf.mxu0
      %v4613 = vpop.f32.mrf.mxu0
      %v4614 = vadd.f32 %v4325, %v4613
      %v4615 = vpop.f32.mrf.mxu0
      %4616 = vmatprep.mubr.bf16.mxu0 %v2262
      %4617 = vmatmul.mubr.bf16.gmra.mxu0 %v2261
      %v4618 = vpop.f32.mrf.mxu0
      %v4619 = vadd.f32 %v4330, %v4618
      %v4620 = vpop.f32.mrf.mxu0
      %v4621 = vpop.f32.mrf.mxu0
      %v4622 = vadd.f32 %v4333, %v4621
      %v4623 = vpop.f32.mrf.mxu0
      %4624 = vmatprep.mubr.bf16.mxu0 %v2275
      %4625 = vmatmul.mubr.bf16.gmra.mxu0 %v2274
      %v4626 = vpop.f32.mrf.mxu0
      %v4627 = vadd.f32 %v4338, %v4626
      %v4628 = vpop.f32.mrf.mxu0
      %v4629 = vpop.f32.mrf.mxu0
      %v4630 = vadd.f32 %v4341, %v4629
      %v4631 = vpop.f32.mrf.mxu0
      %4632 = vmatprep.mubr.bf16.mxu0 %v2288
      %4633 = vmatmul.mubr.bf16.gmra.mxu0 %v2287
      %v4634 = vpop.f32.mrf.mxu0
      %v4635 = vadd.f32 %v4346, %v4634
      %v4636 = vpop.f32.mrf.mxu0
      %v4637 = vpop.f32.mrf.mxu0
      %v4638 = vadd.f32 %v4349, %v4637
      %v4639 = vpop.f32.mrf.mxu0
      %4640 = vmatprep.mubr.bf16.mxu0 %v2301
      %4641 = vmatmul.mubr.bf16.gmra.mxu0 %v2300
      %v4642 = vpop.f32.mrf.mxu0
      %v4643 = vadd.f32 %v4354, %v4642
      %v4644 = vpop.f32.mrf.mxu0
      %v4645 = vpop.f32.mrf.mxu0
      %v4646 = vadd.f32 %v4357, %v4645
      %v4647 = vpop.f32.mrf.mxu0
      %4648 = vmatprep.mubr.bf16.mxu0 %v2314
      %4649 = vmatmul.mubr.bf16.gmra.mxu0 %v2313
      %v4650 = vpop.f32.mrf.mxu0
      %v4651 = vadd.f32 %v4362, %v4650
      %v4652 = vpop.f32.mrf.mxu0
      %v4653 = vpop.f32.mrf.mxu0
      %v4654 = vadd.f32 %v4365, %v4653
      %v4655 = vpop.f32.mrf.mxu0
      %4656 = vmatprep.mubr.bf16.mxu0 %v2327
      %4657 = vmatmul.mubr.bf16.gmra.mxu0 %v2326
      %v4658 = vpop.f32.mrf.mxu0
      %v4659 = vadd.f32 %v4370, %v4658
      %v4660 = vpop.f32.mrf.mxu0
      %v4661 = vpop.f32.mrf.mxu0
      %v4662 = vadd.f32 %v4373, %v4661
      %v4663 = vpop.f32.mrf.mxu0
      %4664 = vmatprep.mubr.bf16.mxu0 %v2340
      %4665 = vmatmul.mubr.bf16.gmra.mxu0 %v2339
      %v4666 = vpop.f32.mrf.mxu0
      %v4667 = vadd.f32 %v4378, %v4666
      %v4668 = vpop.f32.mrf.mxu0
      %v4669 = vpop.f32.mrf.mxu0
      %v4670 = vadd.f32 %v4381, %v4669
      %v4671 = vpop.f32.mrf.mxu0
      %4672 = vmatprep.mubr.bf16.mxu0 %v2353
      %4673 = vmatmul.mubr.bf16.gmra.mxu0 %v2352
      %v4674 = vpop.f32.mrf.mxu0
      %v4675 = vadd.f32 %v4386, %v4674
      %v4676 = vpop.f32.mrf.mxu0
      %v4677 = vpop.f32.mrf.mxu0
      %v4678 = vadd.f32 %v4389, %v4677
      %v4679 = vpop.f32.mrf.mxu0
      %4680 = vmatprep.mubr.bf16.mxu0 %v2366
      %4681 = vmatmul.mubr.bf16.gmra.mxu0 %v2365
      %v4682 = vpop.f32.mrf.mxu0
      %v4683 = vadd.f32 %v4394, %v4682
      %v4684 = vpop.f32.mrf.mxu0
      %v4685 = vpop.f32.mrf.mxu0
      %v4686 = vadd.f32 %v4397, %v4685
      %v4687 = vpop.f32.mrf.mxu0
      %4688 = vmatprep.mubr.bf16.mxu0 %v2379
      %4689 = vmatmul.mubr.bf16.gmra.mxu0 %v2378
      %v4690 = vpop.f32.mrf.mxu0
      %v4691 = vadd.f32 %v4402, %v4690
      %v4692 = vpop.f32.mrf.mxu0
      %v4693 = vpop.f32.mrf.mxu0
      %v4694 = vadd.f32 %v4405, %v4693
      %v4695 = vpop.f32.mrf.mxu0
      %4696 = vmatprep.mubr.bf16.mxu0 %v2392
      %4697 = vmatmul.mubr.bf16.gmra.mxu0 %v2391
      %v4698 = vpop.f32.mrf.mxu0
      %v4699 = vadd.f32 %v4410, %v4698
      %v4700 = vpop.f32.mrf.mxu0
      %v4701 = vpop.f32.mrf.mxu0
      %v4702 = vadd.f32 %v4413, %v4701
      %v4703 = vpop.f32.mrf.mxu0
      %4704 = vmatprep.mubr.bf16.mxu0 %v2405
      %4705 = vmatmul.mubr.bf16.gmra.mxu0 %v2404
      %v4706 = vpop.f32.mrf.mxu0
      %v4707 = vadd.f32 %v4418, %v4706
      %v4708 = vpop.f32.mrf.mxu0
      %v4709 = vpop.f32.mrf.mxu0
      %v4710 = vadd.f32 %v4421, %v4709
      %v4711 = vpop.f32.mrf.mxu0
      %4712 = vmatprep.mubr.bf16.mxu0 %v2418
      %4713 = vmatmul.mubr.bf16.gmra.mxu0 %v2417
      %v4714 = vpop.f32.mrf.mxu0
      %v4715 = vadd.f32 %v4426, %v4714
      %v4716 = vpop.f32.mrf.mxu0
      %v4717 = vpop.f32.mrf.mxu0
      %v4718 = vadd.f32 %v4429, %v4717
      %v4719 = vpop.f32.mrf.mxu0
      %4720 = vmatprep.mubr.bf16.mxu0 %v2431
      %4721 = vmatmul.mubr.bf16.gmra.mxu0 %v2430
      %v4722 = vpop.f32.mrf.mxu0
      %v4723 = vadd.f32 %v4434, %v4722
      %v4724 = vpop.f32.mrf.mxu0
      %v4725 = vpop.f32.mrf.mxu0
      %v4726 = vadd.f32 %v4437, %v4725
      %v4727 = vpop.f32.mrf.mxu0
      %4728 = vmatprep.mubr.bf16.mxu0 %v2444
      %4729 = vmatmul.mubr.bf16.gmra.mxu0 %v2443
      %v4730 = vpop.f32.mrf.mxu0
      %v4731 = vadd.f32 %v4442, %v4730
      %v4732 = vpop.f32.mrf.mxu0
      %v4733 = vpop.f32.mrf.mxu0
      %v4734 = vadd.f32 %v4445, %v4733
      %v4735 = vpop.f32.mrf.mxu0
      %4736 = vmatprep.mubr.bf16.mxu0 %v2457
      %4737 = vmatmul.mubr.bf16.gmra.mxu0 %v2456
      %v4738 = vpop.f32.mrf.mxu0
      %v4739 = vadd.f32 %v4450, %v4738
      %v4740 = vpop.f32.mrf.mxu0
      %v4741 = vpop.f32.mrf.mxu0
      %v4742 = vadd.f32 %v4453, %v4741
      %v4743 = vpop.f32.mrf.mxu0
      %4744 = vmatprep.mubr.bf16.mxu0 %v2470
      %4745 = vmatmul.mubr.bf16.gmra.mxu0 %v2469
      %v4746 = vpop.f32.mrf.mxu0
      %v4747 = vadd.f32 %v4458, %v4746
      %v4748 = vpop.f32.mrf.mxu0
      %v4749 = vpop.f32.mrf.mxu0
      %v4750 = vadd.f32 %v4461, %v4749
      %v4751 = vpop.f32.mrf.mxu0
      %4752 = vmatprep.mubr.bf16.mxu0 %v2483
      %4753 = vmatmul.mubr.bf16.gmra.mxu0 %v2482
      %v4754 = vpop.f32.mrf.mxu0
      %v4755 = vadd.f32 %v4466, %v4754
      %v4756 = vpop.f32.mrf.mxu0
      %v4757 = vpop.f32.mrf.mxu0
      %v4758 = vadd.f32 %v4469, %v4757
      %v4759 = vpop.f32.mrf.mxu0
      %4760 = vmatprep.mubr.bf16.mxu0 %v2496
      %4761 = vmatmul.mubr.bf16.gmra.mxu0 %v2495
      %v4762 = vpop.f32.mrf.mxu0
      %v4763 = vadd.f32 %v4474, %v4762
      %v4764 = vpop.f32.mrf.mxu0
      %v4765 = vpop.f32.mrf.mxu0
      %v4766 = vadd.f32 %v4477, %v4765
      %v4767 = vpop.f32.mrf.mxu0
      %4768 = vmatprep.mubr.bf16.mxu0 %v2509
      %4769 = vmatmul.mubr.bf16.gmra.mxu0 %v2508
      %v4770 = vpop.f32.mrf.mxu0
      %v4771 = vadd.f32 %v4482, %v4770
      %v4772 = vpop.f32.mrf.mxu0
      %v4773 = vpop.f32.mrf.mxu0
      %v4774 = vadd.f32 %v4485, %v4773
      %v4775 = vpop.f32.mrf.mxu0
      %4776 = vmatprep.mubr.bf16.mxu0 %v2522
      %4777 = vmatmul.mubr.bf16.gmra.mxu0 %v2521
      %v4778 = vpop.f32.mrf.mxu0
      %v4779 = vadd.f32 %v4490, %v4778
      %v4780 = vpop.f32.mrf.mxu0
      %v4781 = vpop.f32.mrf.mxu0
      %v4782 = vadd.f32 %v4493, %v4781
      %v4783 = vpop.f32.mrf.mxu0
      %4784 = vmatprep.mubr.bf16.mxu0 %v2535
      %4785 = vmatmul.mubr.bf16.gmra.mxu0 %v2534
      %v4786 = vpop.f32.mrf.mxu0
      %v4787 = vadd.f32 %v4498, %v4786
      %v4788 = vpop.f32.mrf.mxu0
      %v4789 = vpop.f32.mrf.mxu0
      %v4790 = vadd.f32 %v4501, %v4789
      %v4791 = vpop.f32.mrf.mxu0
      %4792 = vmatprep.mubr.bf16.mxu0 %v2548
      %4793 = vmatmul.mubr.bf16.gmra.mxu0 %v2547
      %v4794 = vpop.f32.mrf.mxu0
      %v4795 = vadd.f32 %v4506, %v4794
      %v4796 = vpop.f32.mrf.mxu0
      %v4797 = vpop.f32.mrf.mxu0
      %v4798 = vadd.f32 %v4509, %v4797
      %v4799 = vpop.f32.mrf.mxu0
      %4800 = vmatprep.mubr.bf16.mxu0 %v2561
      %4801 = vmatmul.mubr.bf16.gmra.mxu0 %v2560
      %v4802 = vpop.f32.mrf.mxu0
      %v4803 = vadd.f32 %v4514, %v4802
      %v4804 = vpop.f32.mrf.mxu0
      %v4805 = vpop.f32.mrf.mxu0
      %v4806 = vadd.f32 %v4517, %v4805
      %v4807 = vpop.f32.mrf.mxu0
      %4808 = vmatprep.mubr.bf16.mxu0 %v2574
      %4809 = vmatmul.mubr.bf16.gmra.mxu0 %v2573
      %v4810 = vpop.f32.mrf.mxu0
      %v4811 = vadd.f32 %v4522, %v4810
      %v4812 = vpop.f32.mrf.mxu0
      %v4813 = vpop.f32.mrf.mxu0
      %v4814 = vadd.f32 %v4525, %v4813
      %v4815 = vpop.f32.mrf.mxu0
      %4816 = vdwg.mxu0
      %4817 = vmatprep.subr.bf16.mxu0 0
      %4818 = vmatpush1.bf16.msra.mxu0 %v3435
      %4819 = vmatprep.subr.bf16.mxu0 0
      %4820 = vmatpush1.bf16.msra.mxu0 %v3434
      %4821 = vmatprep.subr.bf16.mxu0 0
      %4822 = vmatpush1.bf16.msra.mxu0 %v3433
      %4823 = vmatprep.subr.bf16.mxu0 0
      %4824 = vmatpush1.bf16.msra.mxu0 %v3432
      %4825 = vmatprep.subr.bf16.mxu0 0
      %4826 = vmatpush1.bf16.msra.mxu0 %v3431
      %4827 = vmatprep.subr.bf16.mxu0 0
      %4828 = vmatpush1.bf16.msra.mxu0 %v3430
      %4829 = vmatprep.subr.bf16.mxu0 0
      %4830 = vmatpush1.bf16.msra.mxu0 %v3429
      %4831 = vmatprep.subr.bf16.mxu0 0
      %4832 = vmatpush1.bf16.msra.mxu0 %v3428
      %4833 = vmatprep.subr.bf16.mxu0 0
      %4834 = vmatpush2.bf16.msra.mxu0 %v3443
      %4835 = vmatprep.subr.bf16.mxu0 0
      %4836 = vmatpush2.bf16.msra.mxu0 %v3442
      %4837 = vmatprep.subr.bf16.mxu0 0
      %4838 = vmatpush2.bf16.msra.mxu0 %v3441
      %4839 = vmatprep.subr.bf16.mxu0 0
      %4840 = vmatpush2.bf16.msra.mxu0 %v3440
      %4841 = vmatprep.subr.bf16.mxu0 0
      %4842 = vmatpush2.bf16.msra.mxu0 %v3439
      %4843 = vmatprep.subr.bf16.mxu0 0
      %4844 = vmatpush2.bf16.msra.mxu0 %v3438
      %4845 = vmatprep.subr.bf16.mxu0 0
      %4846 = vmatpush2.bf16.msra.mxu0 %v3437
      %4847 = vmatprep.subr.bf16.mxu0 0
      %4848 = vmatpush2.bf16.msra.mxu0 %v3436
      %4849 = vmatprep.mubr.bf16.mxu0 %v2173
      %4850 = vmatmul.mubr.bf16.gmra.mxu0 %v2172
      %v4851 = vpop.f32.mrf.mxu0
      %v4852 = vadd.f32 %v4563, %v4851
      %v4853 = vpop.f32.mrf.mxu0
      %v4854 = vpop.f32.mrf.mxu0
      %v4855 = vadd.f32 %v4566, %v4854
      %v4856 = vpop.f32.mrf.mxu0
      %4857 = vmatprep.mubr.bf16.mxu0 %v2186
      %4858 = vmatmul.mubr.bf16.gmra.mxu0 %v2185
      %v4859 = vpop.f32.mrf.mxu0
      %v4860 = vadd.f32 %v4571, %v4859
      %v4861 = vpop.f32.mrf.mxu0
      %v4862 = vpop.f32.mrf.mxu0
      %v4863 = vadd.f32 %v4574, %v4862
      %v4864 = vpop.f32.mrf.mxu0
      %4865 = vmatprep.mubr.bf16.mxu0 %v2199
      %4866 = vmatmul.mubr.bf16.gmra.mxu0 %v2198
      %v4867 = vpop.f32.mrf.mxu0
      %v4868 = vadd.f32 %v4579, %v4867
      %v4869 = vpop.f32.mrf.mxu0
      %v4870 = vpop.f32.mrf.mxu0
      %v4871 = vadd.f32 %v4582, %v4870
      %v4872 = vpop.f32.mrf.mxu0
      %4873 = vmatprep.mubr.bf16.mxu0 %v2212
      %4874 = vmatmul.mubr.bf16.gmra.mxu0 %v2211
      %v4875 = vpop.f32.mrf.mxu0
      %v4876 = vadd.f32 %v4587, %v4875
      %v4877 = vpop.f32.mrf.mxu0
      %v4878 = vpop.f32.mrf.mxu0
      %v4879 = vadd.f32 %v4590, %v4878
      %v4880 = vpop.f32.mrf.mxu0
      %4881 = vmatprep.mubr.bf16.mxu0 %v2225
      %4882 = vmatmul.mubr.bf16.gmra.mxu0 %v2224
      %v4883 = vpop.f32.mrf.mxu0
      %v4884 = vadd.f32 %v4595, %v4883
      %v4885 = vpop.f32.mrf.mxu0
      %v4886 = vpop.f32.mrf.mxu0
      %v4887 = vadd.f32 %v4598, %v4886
      %v4888 = vpop.f32.mrf.mxu0
      %4889 = vmatprep.mubr.bf16.mxu0 %v2238
      %4890 = vmatmul.mubr.bf16.gmra.mxu0 %v2237
      %v4891 = vpop.f32.mrf.mxu0
      %v4892 = vadd.f32 %v4603, %v4891
      %v4893 = vpop.f32.mrf.mxu0
      %v4894 = vpop.f32.mrf.mxu0
      %v4895 = vadd.f32 %v4606, %v4894
      %v4896 = vpop.f32.mrf.mxu0
      %4897 = vmatprep.mubr.bf16.mxu0 %v2251
      %4898 = vmatmul.mubr.bf16.gmra.mxu0 %v2250
      %v4899 = vpop.f32.mrf.mxu0
      %v4900 = vadd.f32 %v4611, %v4899
      %v4901 = vpop.f32.mrf.mxu0
      %v4902 = vpop.f32.mrf.mxu0
      %v4903 = vadd.f32 %v4614, %v4902
      %v4904 = vpop.f32.mrf.mxu0
      %4905 = vmatprep.mubr.bf16.mxu0 %v2264
      %4906 = vmatmul.mubr.bf16.gmra.mxu0 %v2263
      %v4907 = vpop.f32.mrf.mxu0
      %v4908 = vadd.f32 %v4619, %v4907
      %v4909 = vpop.f32.mrf.mxu0
      %v4910 = vpop.f32.mrf.mxu0
      %v4911 = vadd.f32 %v4622, %v4910
      %v4912 = vpop.f32.mrf.mxu0
      %4913 = vmatprep.mubr.bf16.mxu0 %v2277
      %4914 = vmatmul.mubr.bf16.gmra.mxu0 %v2276
      %v4915 = vpop.f32.mrf.mxu0
      %v4916 = vadd.f32 %v4627, %v4915
      %v4917 = vpop.f32.mrf.mxu0
      %v4918 = vpop.f32.mrf.mxu0
      %v4919 = vadd.f32 %v4630, %v4918
      %v4920 = vpop.f32.mrf.mxu0
      %4921 = vmatprep.mubr.bf16.mxu0 %v2290
      %4922 = vmatmul.mubr.bf16.gmra.mxu0 %v2289
      %v4923 = vpop.f32.mrf.mxu0
      %v4924 = vadd.f32 %v4635, %v4923
      %v4925 = vpop.f32.mrf.mxu0
      %v4926 = vpop.f32.mrf.mxu0
      %v4927 = vadd.f32 %v4638, %v4926
      %v4928 = vpop.f32.mrf.mxu0
      %4929 = vmatprep.mubr.bf16.mxu0 %v2303
      %4930 = vmatmul.mubr.bf16.gmra.mxu0 %v2302
      %v4931 = vpop.f32.mrf.mxu0
      %v4932 = vadd.f32 %v4643, %v4931
      %v4933 = vpop.f32.mrf.mxu0
      %v4934 = vpop.f32.mrf.mxu0
      %v4935 = vadd.f32 %v4646, %v4934
      %v4936 = vpop.f32.mrf.mxu0
      %4937 = vmatprep.mubr.bf16.mxu0 %v2316
      %4938 = vmatmul.mubr.bf16.gmra.mxu0 %v2315
      %v4939 = vpop.f32.mrf.mxu0
      %v4940 = vadd.f32 %v4651, %v4939
      %v4941 = vpop.f32.mrf.mxu0
      %v4942 = vpop.f32.mrf.mxu0
      %v4943 = vadd.f32 %v4654, %v4942
      %v4944 = vpop.f32.mrf.mxu0
      %4945 = vmatprep.mubr.bf16.mxu0 %v2329
      %4946 = vmatmul.mubr.bf16.gmra.mxu0 %v2328
      %v4947 = vpop.f32.mrf.mxu0
      %v4948 = vadd.f32 %v4659, %v4947
      %v4949 = vpop.f32.mrf.mxu0
      %v4950 = vpop.f32.mrf.mxu0
      %v4951 = vadd.f32 %v4662, %v4950
      %v4952 = vpop.f32.mrf.mxu0
      %4953 = vmatprep.mubr.bf16.mxu0 %v2342
      %4954 = vmatmul.mubr.bf16.gmra.mxu0 %v2341
      %v4955 = vpop.f32.mrf.mxu0
      %v4956 = vadd.f32 %v4667, %v4955
      %v4957 = vpop.f32.mrf.mxu0
      %v4958 = vpop.f32.mrf.mxu0
      %v4959 = vadd.f32 %v4670, %v4958
      %v4960 = vpop.f32.mrf.mxu0
      %4961 = vmatprep.mubr.bf16.mxu0 %v2355
      %4962 = vmatmul.mubr.bf16.gmra.mxu0 %v2354
      %v4963 = vpop.f32.mrf.mxu0
      %v4964 = vadd.f32 %v4675, %v4963
      %v4965 = vpop.f32.mrf.mxu0
      %v4966 = vpop.f32.mrf.mxu0
      %v4967 = vadd.f32 %v4678, %v4966
      %v4968 = vpop.f32.mrf.mxu0
      %4969 = vmatprep.mubr.bf16.mxu0 %v2368
      %4970 = vmatmul.mubr.bf16.gmra.mxu0 %v2367
      %v4971 = vpop.f32.mrf.mxu0
      %v4972 = vadd.f32 %v4683, %v4971
      %v4973 = vpop.f32.mrf.mxu0
      %v4974 = vpop.f32.mrf.mxu0
      %v4975 = vadd.f32 %v4686, %v4974
      %v4976 = vpop.f32.mrf.mxu0
      %4977 = vmatprep.mubr.bf16.mxu0 %v2381
      %4978 = vmatmul.mubr.bf16.gmra.mxu0 %v2380
      %v4979 = vpop.f32.mrf.mxu0
      %v4980 = vadd.f32 %v4691, %v4979
      %v4981 = vpop.f32.mrf.mxu0
      %v4982 = vpop.f32.mrf.mxu0
      %v4983 = vadd.f32 %v4694, %v4982
      %v4984 = vpop.f32.mrf.mxu0
      %4985 = vmatprep.mubr.bf16.mxu0 %v2394
      %4986 = vmatmul.mubr.bf16.gmra.mxu0 %v2393
      %v4987 = vpop.f32.mrf.mxu0
      %v4988 = vadd.f32 %v4699, %v4987
      %v4989 = vpop.f32.mrf.mxu0
      %v4990 = vpop.f32.mrf.mxu0
      %v4991 = vadd.f32 %v4702, %v4990
      %v4992 = vpop.f32.mrf.mxu0
      %4993 = vmatprep.mubr.bf16.mxu0 %v2407
      %4994 = vmatmul.mubr.bf16.gmra.mxu0 %v2406
      %v4995 = vpop.f32.mrf.mxu0
      %v4996 = vadd.f32 %v4707, %v4995
      %v4997 = vpop.f32.mrf.mxu0
      %v4998 = vpop.f32.mrf.mxu0
      %v4999 = vadd.f32 %v4710, %v4998
      %v5000 = vpop.f32.mrf.mxu0
      %5001 = vmatprep.mubr.bf16.mxu0 %v2420
      %5002 = vmatmul.mubr.bf16.gmra.mxu0 %v2419
      %v5003 = vpop.f32.mrf.mxu0
      %v5004 = vadd.f32 %v4715, %v5003
      %v5005 = vpop.f32.mrf.mxu0
      %v5006 = vpop.f32.mrf.mxu0
      %v5007 = vadd.f32 %v4718, %v5006
      %v5008 = vpop.f32.mrf.mxu0
      %5009 = vmatprep.mubr.bf16.mxu0 %v2433
      %5010 = vmatmul.mubr.bf16.gmra.mxu0 %v2432
      %v5011 = vpop.f32.mrf.mxu0
      %v5012 = vadd.f32 %v4723, %v5011
      %v5013 = vpop.f32.mrf.mxu0
      %v5014 = vpop.f32.mrf.mxu0
      %v5015 = vadd.f32 %v4726, %v5014
      %v5016 = vpop.f32.mrf.mxu0
      %5017 = vmatprep.mubr.bf16.mxu0 %v2446
      %5018 = vmatmul.mubr.bf16.gmra.mxu0 %v2445
      %v5019 = vpop.f32.mrf.mxu0
      %v5020 = vadd.f32 %v4731, %v5019
      %v5021 = vpop.f32.mrf.mxu0
      %v5022 = vpop.f32.mrf.mxu0
      %v5023 = vadd.f32 %v4734, %v5022
      %v5024 = vpop.f32.mrf.mxu0
      %5025 = vmatprep.mubr.bf16.mxu0 %v2459
      %5026 = vmatmul.mubr.bf16.gmra.mxu0 %v2458
      %v5027 = vpop.f32.mrf.mxu0
      %v5028 = vadd.f32 %v4739, %v5027
      %v5029 = vpop.f32.mrf.mxu0
      %v5030 = vpop.f32.mrf.mxu0
      %v5031 = vadd.f32 %v4742, %v5030
      %v5032 = vpop.f32.mrf.mxu0
      %5033 = vmatprep.mubr.bf16.mxu0 %v2472
      %5034 = vmatmul.mubr.bf16.gmra.mxu0 %v2471
      %v5035 = vpop.f32.mrf.mxu0
      %v5036 = vadd.f32 %v4747, %v5035
      %v5037 = vpop.f32.mrf.mxu0
      %v5038 = vpop.f32.mrf.mxu0
      %v5039 = vadd.f32 %v4750, %v5038
      %v5040 = vpop.f32.mrf.mxu0
      %5041 = vmatprep.mubr.bf16.mxu0 %v2485
      %5042 = vmatmul.mubr.bf16.gmra.mxu0 %v2484
      %v5043 = vpop.f32.mrf.mxu0
      %v5044 = vadd.f32 %v4755, %v5043
      %v5045 = vpop.f32.mrf.mxu0
      %v5046 = vpop.f32.mrf.mxu0
      %v5047 = vadd.f32 %v4758, %v5046
      %v5048 = vpop.f32.mrf.mxu0
      %5049 = vmatprep.mubr.bf16.mxu0 %v2498
      %5050 = vmatmul.mubr.bf16.gmra.mxu0 %v2497
      %v5051 = vpop.f32.mrf.mxu0
      %v5052 = vadd.f32 %v4763, %v5051
      %v5053 = vpop.f32.mrf.mxu0
      %v5054 = vpop.f32.mrf.mxu0
      %v5055 = vadd.f32 %v4766, %v5054
      %v5056 = vpop.f32.mrf.mxu0
      %5057 = vmatprep.mubr.bf16.mxu0 %v2511
      %5058 = vmatmul.mubr.bf16.gmra.mxu0 %v2510
      %v5059 = vpop.f32.mrf.mxu0
      %v5060 = vadd.f32 %v4771, %v5059
      %v5061 = vpop.f32.mrf.mxu0
      %v5062 = vpop.f32.mrf.mxu0
      %v5063 = vadd.f32 %v4774, %v5062
      %v5064 = vpop.f32.mrf.mxu0
      %5065 = vmatprep.mubr.bf16.mxu0 %v2524
      %5066 = vmatmul.mubr.bf16.gmra.mxu0 %v2523
      %v5067 = vpop.f32.mrf.mxu0
      %v5068 = vadd.f32 %v4779, %v5067
      %v5069 = vpop.f32.mrf.mxu0
      %v5070 = vpop.f32.mrf.mxu0
      %v5071 = vadd.f32 %v4782, %v5070
      %v5072 = vpop.f32.mrf.mxu0
      %5073 = vmatprep.mubr.bf16.mxu0 %v2537
      %5074 = vmatmul.mubr.bf16.gmra.mxu0 %v2536
      %v5075 = vpop.f32.mrf.mxu0
      %v5076 = vadd.f32 %v4787, %v5075
      %v5077 = vpop.f32.mrf.mxu0
      %v5078 = vpop.f32.mrf.mxu0
      %v5079 = vadd.f32 %v4790, %v5078
      %v5080 = vpop.f32.mrf.mxu0
      %5081 = vmatprep.mubr.bf16.mxu0 %v2550
      %5082 = vmatmul.mubr.bf16.gmra.mxu0 %v2549
      %v5083 = vpop.f32.mrf.mxu0
      %v5084 = vadd.f32 %v4795, %v5083
      %v5085 = vpop.f32.mrf.mxu0
      %v5086 = vpop.f32.mrf.mxu0
      %v5087 = vadd.f32 %v4798, %v5086
      %v5088 = vpop.f32.mrf.mxu0
      %5089 = vmatprep.mubr.bf16.mxu0 %v2563
      %5090 = vmatmul.mubr.bf16.gmra.mxu0 %v2562
      %v5091 = vpop.f32.mrf.mxu0
      %v5092 = vadd.f32 %v4803, %v5091
      %v5093 = vpop.f32.mrf.mxu0
      %v5094 = vpop.f32.mrf.mxu0
      %v5095 = vadd.f32 %v4806, %v5094
      %v5096 = vpop.f32.mrf.mxu0
      %5097 = vmatprep.mubr.bf16.mxu0 %v2576
      %5098 = vmatmul.mubr.bf16.gmra.mxu0 %v2575
      %v5099 = vpop.f32.mrf.mxu0
      %v5100 = vadd.f32 %v4811, %v5099
      %v5101 = vpop.f32.mrf.mxu0
      %v5102 = vpop.f32.mrf.mxu0
      %v5103 = vadd.f32 %v4814, %v5102
      %v5104 = vpop.f32.mrf.mxu0
      %5105 = vdwg.mxu0
      %5106 = vmatprep.subr.bf16.mxu0 0
      %5107 = vmatpush1.bf16.msra.mxu0 %v3451
      %5108 = vmatprep.subr.bf16.mxu0 0
      %5109 = vmatpush1.bf16.msra.mxu0 %v3450
      %5110 = vmatprep.subr.bf16.mxu0 0
      %5111 = vmatpush1.bf16.msra.mxu0 %v3449
      %5112 = vmatprep.subr.bf16.mxu0 0
      %5113 = vmatpush1.bf16.msra.mxu0 %v3448
      %5114 = vmatprep.subr.bf16.mxu0 0
      %5115 = vmatpush1.bf16.msra.mxu0 %v3447
      %5116 = vmatprep.subr.bf16.mxu0 0
      %5117 = vmatpush1.bf16.msra.mxu0 %v3446
      %5118 = vmatprep.subr.bf16.mxu0 0
      %5119 = vmatpush1.bf16.msra.mxu0 %v3445
      %5120 = vmatprep.subr.bf16.mxu0 0
      %5121 = vmatpush1.bf16.msra.mxu0 %v3444
      %5122 = vmatprep.subr.bf16.mxu0 0
      %5123 = vmatpush2.bf16.msra.mxu0 %v3459
      %5124 = vmatprep.subr.bf16.mxu0 0
      %5125 = vmatpush2.bf16.msra.mxu0 %v3458
      %5126 = vmatprep.subr.bf16.mxu0 0
      %5127 = vmatpush2.bf16.msra.mxu0 %v3457
      %5128 = vmatprep.subr.bf16.mxu0 0
      %5129 = vmatpush2.bf16.msra.mxu0 %v3456
      %5130 = vmatprep.subr.bf16.mxu0 0
      %5131 = vmatpush2.bf16.msra.mxu0 %v3455
      %5132 = vmatprep.subr.bf16.mxu0 0
      %5133 = vmatpush2.bf16.msra.mxu0 %v3454
      %5134 = vmatprep.subr.bf16.mxu0 0
      %5135 = vmatpush2.bf16.msra.mxu0 %v3453
      %5136 = vmatprep.subr.bf16.mxu0 0
      %5137 = vmatpush2.bf16.msra.mxu0 %v3452
      %5138 = vmatprep.mubr.bf16.mxu0 %v2175
      %5139 = vmatmul.mubr.bf16.gmra.mxu0 %v2174
      %v5140 = vpop.f32.mrf.mxu0
      %v5141 = vadd.f32 %v4852, %v5140
      %v5142 = vpop.f32.mrf.mxu0
      %v5143 = vpop.f32.mrf.mxu0
      %v5144 = vadd.f32 %v4855, %v5143
      %v5145 = vpop.f32.mrf.mxu0
      %5146 = vmatprep.mubr.bf16.mxu0 %v2188
      %5147 = vmatmul.mubr.bf16.gmra.mxu0 %v2187
      %v5148 = vpop.f32.mrf.mxu0
      %v5149 = vadd.f32 %v4860, %v5148
      %v5150 = vpop.f32.mrf.mxu0
      %v5151 = vpop.f32.mrf.mxu0
      %v5152 = vadd.f32 %v4863, %v5151
      %v5153 = vpop.f32.mrf.mxu0
      %5154 = vmatprep.mubr.bf16.mxu0 %v2201
      %5155 = vmatmul.mubr.bf16.gmra.mxu0 %v2200
      %v5156 = vpop.f32.mrf.mxu0
      %v5157 = vadd.f32 %v4868, %v5156
      %v5158 = vpop.f32.mrf.mxu0
      %v5159 = vpop.f32.mrf.mxu0
      %v5160 = vadd.f32 %v4871, %v5159
      %v5161 = vpop.f32.mrf.mxu0
      %5162 = vmatprep.mubr.bf16.mxu0 %v2214
      %5163 = vmatmul.mubr.bf16.gmra.mxu0 %v2213
      %v5164 = vpop.f32.mrf.mxu0
      %v5165 = vadd.f32 %v4876, %v5164
      %v5166 = vpop.f32.mrf.mxu0
      %v5167 = vpop.f32.mrf.mxu0
      %v5168 = vadd.f32 %v4879, %v5167
      %v5169 = vpop.f32.mrf.mxu0
      %5170 = vmatprep.mubr.bf16.mxu0 %v2227
      %5171 = vmatmul.mubr.bf16.gmra.mxu0 %v2226
      %v5172 = vpop.f32.mrf.mxu0
      %v5173 = vadd.f32 %v4884, %v5172
      %v5174 = vpop.f32.mrf.mxu0
      %v5175 = vpop.f32.mrf.mxu0
      %v5176 = vadd.f32 %v4887, %v5175
      %v5177 = vpop.f32.mrf.mxu0
      %5178 = vmatprep.mubr.bf16.mxu0 %v2240
      %5179 = vmatmul.mubr.bf16.gmra.mxu0 %v2239
      %v5180 = vpop.f32.mrf.mxu0
      %v5181 = vadd.f32 %v4892, %v5180
      %v5182 = vpop.f32.mrf.mxu0
      %v5183 = vpop.f32.mrf.mxu0
      %v5184 = vadd.f32 %v4895, %v5183
      %v5185 = vpop.f32.mrf.mxu0
      %5186 = vmatprep.mubr.bf16.mxu0 %v2253
      %5187 = vmatmul.mubr.bf16.gmra.mxu0 %v2252
      %v5188 = vpop.f32.mrf.mxu0
      %v5189 = vadd.f32 %v4900, %v5188
      %v5190 = vpop.f32.mrf.mxu0
      %v5191 = vpop.f32.mrf.mxu0
      %v5192 = vadd.f32 %v4903, %v5191
      %v5193 = vpop.f32.mrf.mxu0
      %5194 = vmatprep.mubr.bf16.mxu0 %v2266
      %5195 = vmatmul.mubr.bf16.gmra.mxu0 %v2265
      %v5196 = vpop.f32.mrf.mxu0
      %v5197 = vadd.f32 %v4908, %v5196
      %v5198 = vpop.f32.mrf.mxu0
      %v5199 = vpop.f32.mrf.mxu0
      %v5200 = vadd.f32 %v4911, %v5199
      %v5201 = vpop.f32.mrf.mxu0
      %5202 = vmatprep.mubr.bf16.mxu0 %v2279
      %5203 = vmatmul.mubr.bf16.gmra.mxu0 %v2278
      %v5204 = vpop.f32.mrf.mxu0
      %v5205 = vadd.f32 %v4916, %v5204
      %v5206 = vpop.f32.mrf.mxu0
      %v5207 = vpop.f32.mrf.mxu0
      %v5208 = vadd.f32 %v4919, %v5207
      %v5209 = vpop.f32.mrf.mxu0
      %5210 = vmatprep.mubr.bf16.mxu0 %v2292
      %5211 = vmatmul.mubr.bf16.gmra.mxu0 %v2291
      %v5212 = vpop.f32.mrf.mxu0
      %v5213 = vadd.f32 %v4924, %v5212
      %v5214 = vpop.f32.mrf.mxu0
      %v5215 = vpop.f32.mrf.mxu0
      %v5216 = vadd.f32 %v4927, %v5215
      %v5217 = vpop.f32.mrf.mxu0
      %5218 = vmatprep.mubr.bf16.mxu0 %v2305
      %5219 = vmatmul.mubr.bf16.gmra.mxu0 %v2304
      %v5220 = vpop.f32.mrf.mxu0
      %v5221 = vadd.f32 %v4932, %v5220
      %v5222 = vpop.f32.mrf.mxu0
      %v5223 = vpop.f32.mrf.mxu0
      %v5224 = vadd.f32 %v4935, %v5223
      %v5225 = vpop.f32.mrf.mxu0
      %5226 = vmatprep.mubr.bf16.mxu0 %v2318
      %5227 = vmatmul.mubr.bf16.gmra.mxu0 %v2317
      %v5228 = vpop.f32.mrf.mxu0
      %v5229 = vadd.f32 %v4940, %v5228
      %v5230 = vpop.f32.mrf.mxu0
      %v5231 = vpop.f32.mrf.mxu0
      %v5232 = vadd.f32 %v4943, %v5231
      %v5233 = vpop.f32.mrf.mxu0
      %5234 = vmatprep.mubr.bf16.mxu0 %v2331
      %5235 = vmatmul.mubr.bf16.gmra.mxu0 %v2330
      %v5236 = vpop.f32.mrf.mxu0
      %v5237 = vadd.f32 %v4948, %v5236
      %v5238 = vpop.f32.mrf.mxu0
      %v5239 = vpop.f32.mrf.mxu0
      %v5240 = vadd.f32 %v4951, %v5239
      %v5241 = vpop.f32.mrf.mxu0
      %5242 = vmatprep.mubr.bf16.mxu0 %v2344
      %5243 = vmatmul.mubr.bf16.gmra.mxu0 %v2343
      %v5244 = vpop.f32.mrf.mxu0
      %v5245 = vadd.f32 %v4956, %v5244
      %v5246 = vpop.f32.mrf.mxu0
      %v5247 = vpop.f32.mrf.mxu0
      %v5248 = vadd.f32 %v4959, %v5247
      %v5249 = vpop.f32.mrf.mxu0
      %5250 = vmatprep.mubr.bf16.mxu0 %v2357
      %5251 = vmatmul.mubr.bf16.gmra.mxu0 %v2356
      %v5252 = vpop.f32.mrf.mxu0
      %v5253 = vadd.f32 %v4964, %v5252
      %v5254 = vpop.f32.mrf.mxu0
      %v5255 = vpop.f32.mrf.mxu0
      %v5256 = vadd.f32 %v4967, %v5255
      %v5257 = vpop.f32.mrf.mxu0
      %5258 = vmatprep.mubr.bf16.mxu0 %v2370
      %5259 = vmatmul.mubr.bf16.gmra.mxu0 %v2369
      %v5260 = vpop.f32.mrf.mxu0
      %v5261 = vadd.f32 %v4972, %v5260
      %v5262 = vpop.f32.mrf.mxu0
      %v5263 = vpop.f32.mrf.mxu0
      %v5264 = vadd.f32 %v4975, %v5263
      %v5265 = vpop.f32.mrf.mxu0
      %5266 = vmatprep.mubr.bf16.mxu0 %v2383
      %5267 = vmatmul.mubr.bf16.gmra.mxu0 %v2382
      %v5268 = vpop.f32.mrf.mxu0
      %v5269 = vadd.f32 %v4980, %v5268
      %v5270 = vpop.f32.mrf.mxu0
      %v5271 = vpop.f32.mrf.mxu0
      %v5272 = vadd.f32 %v4983, %v5271
      %v5273 = vpop.f32.mrf.mxu0
      %5274 = vmatprep.mubr.bf16.mxu0 %v2396
      %5275 = vmatmul.mubr.bf16.gmra.mxu0 %v2395
      %v5276 = vpop.f32.mrf.mxu0
      %v5277 = vadd.f32 %v4988, %v5276
      %v5278 = vpop.f32.mrf.mxu0
      %v5279 = vpop.f32.mrf.mxu0
      %v5280 = vadd.f32 %v4991, %v5279
      %v5281 = vpop.f32.mrf.mxu0
      %5282 = vmatprep.mubr.bf16.mxu0 %v2409
      %5283 = vmatmul.mubr.bf16.gmra.mxu0 %v2408
      %v5284 = vpop.f32.mrf.mxu0
      %v5285 = vadd.f32 %v4996, %v5284
      %v5286 = vpop.f32.mrf.mxu0
      %v5287 = vpop.f32.mrf.mxu0
      %v5288 = vadd.f32 %v4999, %v5287
      %v5289 = vpop.f32.mrf.mxu0
      %5290 = vmatprep.mubr.bf16.mxu0 %v2422
      %5291 = vmatmul.mubr.bf16.gmra.mxu0 %v2421
      %v5292 = vpop.f32.mrf.mxu0
      %v5293 = vadd.f32 %v5004, %v5292
      %v5294 = vpop.f32.mrf.mxu0
      %v5295 = vpop.f32.mrf.mxu0
      %v5296 = vadd.f32 %v5007, %v5295
      %v5297 = vpop.f32.mrf.mxu0
      %5298 = vmatprep.mubr.bf16.mxu0 %v2435
      %5299 = vmatmul.mubr.bf16.gmra.mxu0 %v2434
      %v5300 = vpop.f32.mrf.mxu0
      %v5301 = vadd.f32 %v5012, %v5300
      %v5302 = vpop.f32.mrf.mxu0
      %v5303 = vpop.f32.mrf.mxu0
      %v5304 = vadd.f32 %v5015, %v5303
      %v5305 = vpop.f32.mrf.mxu0
      %5306 = vmatprep.mubr.bf16.mxu0 %v2448
      %5307 = vmatmul.mubr.bf16.gmra.mxu0 %v2447
      %v5308 = vpop.f32.mrf.mxu0
      %v5309 = vadd.f32 %v5020, %v5308
      %v5310 = vpop.f32.mrf.mxu0
      %v5311 = vpop.f32.mrf.mxu0
      %v5312 = vadd.f32 %v5023, %v5311
      %v5313 = vpop.f32.mrf.mxu0
      %5314 = vmatprep.mubr.bf16.mxu0 %v2461
      %5315 = vmatmul.mubr.bf16.gmra.mxu0 %v2460
      %v5316 = vpop.f32.mrf.mxu0
      %v5317 = vadd.f32 %v5028, %v5316
      %v5318 = vpop.f32.mrf.mxu0
      %v5319 = vpop.f32.mrf.mxu0
      %v5320 = vadd.f32 %v5031, %v5319
      %v5321 = vpop.f32.mrf.mxu0
      %5322 = vmatprep.mubr.bf16.mxu0 %v2474
      %5323 = vmatmul.mubr.bf16.gmra.mxu0 %v2473
      %v5324 = vpop.f32.mrf.mxu0
      %v5325 = vadd.f32 %v5036, %v5324
      %v5326 = vpop.f32.mrf.mxu0
      %v5327 = vpop.f32.mrf.mxu0
      %v5328 = vadd.f32 %v5039, %v5327
      %v5329 = vpop.f32.mrf.mxu0
      %5330 = vmatprep.mubr.bf16.mxu0 %v2487
      %5331 = vmatmul.mubr.bf16.gmra.mxu0 %v2486
      %v5332 = vpop.f32.mrf.mxu0
      %v5333 = vadd.f32 %v5044, %v5332
      %v5334 = vpop.f32.mrf.mxu0
      %v5335 = vpop.f32.mrf.mxu0
      %v5336 = vadd.f32 %v5047, %v5335
      %v5337 = vpop.f32.mrf.mxu0
      %5338 = vmatprep.mubr.bf16.mxu0 %v2500
      %5339 = vmatmul.mubr.bf16.gmra.mxu0 %v2499
      %v5340 = vpop.f32.mrf.mxu0
      %v5341 = vadd.f32 %v5052, %v5340
      %v5342 = vpop.f32.mrf.mxu0
      %v5343 = vpop.f32.mrf.mxu0
      %v5344 = vadd.f32 %v5055, %v5343
      %v5345 = vpop.f32.mrf.mxu0
      %5346 = vmatprep.mubr.bf16.mxu0 %v2513
      %5347 = vmatmul.mubr.bf16.gmra.mxu0 %v2512
      %v5348 = vpop.f32.mrf.mxu0
      %v5349 = vadd.f32 %v5060, %v5348
      %v5350 = vpop.f32.mrf.mxu0
      %v5351 = vpop.f32.mrf.mxu0
      %v5352 = vadd.f32 %v5063, %v5351
      %v5353 = vpop.f32.mrf.mxu0
      %5354 = vmatprep.mubr.bf16.mxu0 %v2526
      %5355 = vmatmul.mubr.bf16.gmra.mxu0 %v2525
      %v5356 = vpop.f32.mrf.mxu0
      %v5357 = vadd.f32 %v5068, %v5356
      %v5358 = vpop.f32.mrf.mxu0
      %v5359 = vpop.f32.mrf.mxu0
      %v5360 = vadd.f32 %v5071, %v5359
      %v5361 = vpop.f32.mrf.mxu0
      %5362 = vmatprep.mubr.bf16.mxu0 %v2539
      %5363 = vmatmul.mubr.bf16.gmra.mxu0 %v2538
      %v5364 = vpop.f32.mrf.mxu0
      %v5365 = vadd.f32 %v5076, %v5364
      %v5366 = vpop.f32.mrf.mxu0
      %v5367 = vpop.f32.mrf.mxu0
      %v5368 = vadd.f32 %v5079, %v5367
      %v5369 = vpop.f32.mrf.mxu0
      %5370 = vmatprep.mubr.bf16.mxu0 %v2552
      %5371 = vmatmul.mubr.bf16.gmra.mxu0 %v2551
      %v5372 = vpop.f32.mrf.mxu0
      %v5373 = vadd.f32 %v5084, %v5372
      %v5374 = vpop.f32.mrf.mxu0
      %v5375 = vpop.f32.mrf.mxu0
      %v5376 = vadd.f32 %v5087, %v5375
      %v5377 = vpop.f32.mrf.mxu0
      %5378 = vmatprep.mubr.bf16.mxu0 %v2565
      %5379 = vmatmul.mubr.bf16.gmra.mxu0 %v2564
      %v5380 = vpop.f32.mrf.mxu0
      %v5381 = vadd.f32 %v5092, %v5380
      %v5382 = vpop.f32.mrf.mxu0
      %v5383 = vpop.f32.mrf.mxu0
      %v5384 = vadd.f32 %v5095, %v5383
      %v5385 = vpop.f32.mrf.mxu0
      %5386 = vmatprep.mubr.bf16.mxu0 %v2578
      %5387 = vmatmul.mubr.bf16.gmra.mxu0 %v2577
      %v5388 = vpop.f32.mrf.mxu0
      %v5389 = vadd.f32 %v5100, %v5388
      %v5390 = vpop.f32.mrf.mxu0
      %v5391 = vpop.f32.mrf.mxu0
      %v5392 = vadd.f32 %v5103, %v5391
      %v5393 = vpop.f32.mrf.mxu0
      %5394 = vdwg.mxu0
      %5395 = vmatprep.subr.bf16.mxu0 0
      %5396 = vmatpush1.bf16.msra.mxu0 0
      %5397 = vmatprep.subr.bf16.mxu0 0
      %5398 = vmatpush1.bf16.msra.mxu0 0
      %5399 = vmatprep.subr.bf16.mxu0 0
      %5400 = vmatpush1.bf16.msra.mxu0 0
      %5401 = vmatprep.subr.bf16.mxu0 0
      %5402 = vmatpush1.bf16.msra.mxu0 0
      %5403 = vmatprep.subr.bf16.mxu0 0
      %5404 = vmatpush1.bf16.msra.mxu0 %v3463
      %5405 = vmatprep.subr.bf16.mxu0 0
      %5406 = vmatpush1.bf16.msra.mxu0 %v3462
      %5407 = vmatprep.subr.bf16.mxu0 0
      %5408 = vmatpush1.bf16.msra.mxu0 %v3461
      %5409 = vmatprep.subr.bf16.mxu0 0
      %5410 = vmatpush1.bf16.msra.mxu0 %v3460
      %5411 = vmatprep.subr.bf16.mxu0 0
      %5412 = vmatpush2.bf16.msra.mxu0 0
      %5413 = vmatprep.subr.bf16.mxu0 0
      %5414 = vmatpush2.bf16.msra.mxu0 0
      %5415 = vmatprep.subr.bf16.mxu0 0
      %5416 = vmatpush2.bf16.msra.mxu0 0
      %5417 = vmatprep.subr.bf16.mxu0 0
      %5418 = vmatpush2.bf16.msra.mxu0 0
      %5419 = vmatprep.subr.bf16.mxu0 0
      %5420 = vmatpush2.bf16.msra.mxu0 0
      %5421 = vmatprep.subr.bf16.mxu0 0
      %5422 = vmatpush2.bf16.msra.mxu0 0
      %5423 = vmatprep.subr.bf16.mxu0 0
      %5424 = vmatpush2.bf16.msra.mxu0 0
      %5425 = vmatprep.subr.bf16.mxu0 0
      %5426 = vmatpush2.bf16.msra.mxu0 0
      %5427 = vmatprep.mubr.bf16.mxu0 0
      %5428 = vmatmul.mubr.bf16.gmra.mxu0 %v3566
      %v5429 = vpop.f32.mrf.mxu0
      %v5430 = vadd.f32 %v5141, %v5429
      %v5431 = vpop.f32.mrf.mxu0
      %v5432 = vpop.f32.mrf.mxu0
      %v5433 = vadd.f32 %v5144, %v5432
      %v5434 = vpop.f32.mrf.mxu0
      %5435 = vmatprep.mubr.bf16.mxu0 0
      %5436 = vmatmul.mubr.bf16.gmra.mxu0 %v3569
      %v5437 = vpop.f32.mrf.mxu0
      %v5438 = vadd.f32 %v5149, %v5437
      %v5439 = vpop.f32.mrf.mxu0
      %v5440 = vpop.f32.mrf.mxu0
      %v5441 = vadd.f32 %v5152, %v5440
      %v5442 = vpop.f32.mrf.mxu0
      %5443 = vmatprep.mubr.bf16.mxu0 0
      %5444 = vmatmul.mubr.bf16.gmra.mxu0 %v3572
      %v5445 = vpop.f32.mrf.mxu0
      %v5446 = vadd.f32 %v5157, %v5445
      %v5447 = vpop.f32.mrf.mxu0
      %v5448 = vpop.f32.mrf.mxu0
      %v5449 = vadd.f32 %v5160, %v5448
      %v5450 = vpop.f32.mrf.mxu0
      %5451 = vmatprep.mubr.bf16.mxu0 0
      %5452 = vmatmul.mubr.bf16.gmra.mxu0 %v3575
      %v5453 = vpop.f32.mrf.mxu0
      %v5454 = vadd.f32 %v5165, %v5453
      %v5455 = vpop.f32.mrf.mxu0
      %v5456 = vpop.f32.mrf.mxu0
      %v5457 = vadd.f32 %v5168, %v5456
      %v5458 = vpop.f32.mrf.mxu0
      %5459 = vmatprep.mubr.bf16.mxu0 0
      %5460 = vmatmul.mubr.bf16.gmra.mxu0 %v3578
      %v5461 = vpop.f32.mrf.mxu0
      %v5462 = vadd.f32 %v5173, %v5461
      %v5463 = vpop.f32.mrf.mxu0
      %v5464 = vpop.f32.mrf.mxu0
      %v5465 = vadd.f32 %v5176, %v5464
      %v5466 = vpop.f32.mrf.mxu0
      %5467 = vmatprep.mubr.bf16.mxu0 0
      %5468 = vmatmul.mubr.bf16.gmra.mxu0 %v3581
      %v5469 = vpop.f32.mrf.mxu0
      %v5470 = vadd.f32 %v5181, %v5469
      %v5471 = vpop.f32.mrf.mxu0
      %v5472 = vpop.f32.mrf.mxu0
      %v5473 = vadd.f32 %v5184, %v5472
      %v5474 = vpop.f32.mrf.mxu0
      %5475 = vmatprep.mubr.bf16.mxu0 0
      %5476 = vmatmul.mubr.bf16.gmra.mxu0 %v3584
      %v5477 = vpop.f32.mrf.mxu0
      %v5478 = vadd.f32 %v5189, %v5477
      %v5479 = vpop.f32.mrf.mxu0
      %v5480 = vpop.f32.mrf.mxu0
      %v5481 = vadd.f32 %v5192, %v5480
      %v5482 = vpop.f32.mrf.mxu0
      %5483 = vmatprep.mubr.bf16.mxu0 0
      %5484 = vmatmul.mubr.bf16.gmra.mxu0 %v3587
      %v5485 = vpop.f32.mrf.mxu0
      %v5486 = vadd.f32 %v5197, %v5485
      %v5487 = vpop.f32.mrf.mxu0
      %v5488 = vpop.f32.mrf.mxu0
      %v5489 = vadd.f32 %v5200, %v5488
      %v5490 = vpop.f32.mrf.mxu0
      %5491 = vmatprep.mubr.bf16.mxu0 0
      %5492 = vmatmul.mubr.bf16.gmra.mxu0 %v3590
      %v5493 = vpop.f32.mrf.mxu0
      %v5494 = vadd.f32 %v5205, %v5493
      %v5495 = vpop.f32.mrf.mxu0
      %v5496 = vpop.f32.mrf.mxu0
      %v5497 = vadd.f32 %v5208, %v5496
      %v5498 = vpop.f32.mrf.mxu0
      %5499 = vmatprep.mubr.bf16.mxu0 0
      %5500 = vmatmul.mubr.bf16.gmra.mxu0 %v3593
      %v5501 = vpop.f32.mrf.mxu0
      %v5502 = vadd.f32 %v5213, %v5501
      %v5503 = vpop.f32.mrf.mxu0
      %v5504 = vpop.f32.mrf.mxu0
      %v5505 = vadd.f32 %v5216, %v5504
      %v5506 = vpop.f32.mrf.mxu0
      %5507 = vmatprep.mubr.bf16.mxu0 0
      %5508 = vmatmul.mubr.bf16.gmra.mxu0 %v3596
      %v5509 = vpop.f32.mrf.mxu0
      %v5510 = vadd.f32 %v5221, %v5509
      %v5511 = vpop.f32.mrf.mxu0
      %v5512 = vpop.f32.mrf.mxu0
      %v5513 = vadd.f32 %v5224, %v5512
      %v5514 = vpop.f32.mrf.mxu0
      %5515 = vmatprep.mubr.bf16.mxu0 0
      %5516 = vmatmul.mubr.bf16.gmra.mxu0 %v3599
      %v5517 = vpop.f32.mrf.mxu0
      %v5518 = vadd.f32 %v5229, %v5517
      %v5519 = vpop.f32.mrf.mxu0
      %v5520 = vpop.f32.mrf.mxu0
      %v5521 = vadd.f32 %v5232, %v5520
      %v5522 = vpop.f32.mrf.mxu0
      %5523 = vmatprep.mubr.bf16.mxu0 0
      %5524 = vmatmul.mubr.bf16.gmra.mxu0 %v3602
      %v5525 = vpop.f32.mrf.mxu0
      %v5526 = vadd.f32 %v5237, %v5525
      %v5527 = vpop.f32.mrf.mxu0
      %v5528 = vpop.f32.mrf.mxu0
      %v5529 = vadd.f32 %v5240, %v5528
      %v5530 = vpop.f32.mrf.mxu0
      %5531 = vmatprep.mubr.bf16.mxu0 0
      %5532 = vmatmul.mubr.bf16.gmra.mxu0 %v3605
      %v5533 = vpop.f32.mrf.mxu0
      %v5534 = vadd.f32 %v5245, %v5533
      %v5535 = vpop.f32.mrf.mxu0
      %v5536 = vpop.f32.mrf.mxu0
      %v5537 = vadd.f32 %v5248, %v5536
      %v5538 = vpop.f32.mrf.mxu0
      %5539 = vmatprep.mubr.bf16.mxu0 0
      %5540 = vmatmul.mubr.bf16.gmra.mxu0 %v3608
      %v5541 = vpop.f32.mrf.mxu0
      %v5542 = vadd.f32 %v5253, %v5541
      %v5543 = vpop.f32.mrf.mxu0
      %v5544 = vpop.f32.mrf.mxu0
      %v5545 = vadd.f32 %v5256, %v5544
      %v5546 = vpop.f32.mrf.mxu0
      %5547 = vmatprep.mubr.bf16.mxu0 0
      %5548 = vmatmul.mubr.bf16.gmra.mxu0 %v3611
      %v5549 = vpop.f32.mrf.mxu0
      %v5550 = vadd.f32 %v5261, %v5549
      %v5551 = vpop.f32.mrf.mxu0
      %v5552 = vpop.f32.mrf.mxu0
      %v5553 = vadd.f32 %v5264, %v5552
      %v5554 = vpop.f32.mrf.mxu0
      %5555 = vmatprep.mubr.bf16.mxu0 0
      %5556 = vmatmul.mubr.bf16.gmra.mxu0 %v3614
      %v5557 = vpop.f32.mrf.mxu0
      %v5558 = vadd.f32 %v5269, %v5557
      %v5559 = vpop.f32.mrf.mxu0
      %v5560 = vpop.f32.mrf.mxu0
      %v5561 = vadd.f32 %v5272, %v5560
      %v5562 = vpop.f32.mrf.mxu0
      %5563 = vmatprep.mubr.bf16.mxu0 0
      %5564 = vmatmul.mubr.bf16.gmra.mxu0 %v3617
      %v5565 = vpop.f32.mrf.mxu0
      %v5566 = vadd.f32 %v5277, %v5565
      %v5567 = vpop.f32.mrf.mxu0
      %v5568 = vpop.f32.mrf.mxu0
      %v5569 = vadd.f32 %v5280, %v5568
      %v5570 = vpop.f32.mrf.mxu0
      %5571 = vmatprep.mubr.bf16.mxu0 0
      %5572 = vmatmul.mubr.bf16.gmra.mxu0 %v3620
      %v5573 = vpop.f32.mrf.mxu0
      %v5574 = vadd.f32 %v5285, %v5573
      %v5575 = vpop.f32.mrf.mxu0
      %v5576 = vpop.f32.mrf.mxu0
      %v5577 = vadd.f32 %v5288, %v5576
      %v5578 = vpop.f32.mrf.mxu0
      %5579 = vmatprep.mubr.bf16.mxu0 0
      %5580 = vmatmul.mubr.bf16.gmra.mxu0 %v3623
      %v5581 = vpop.f32.mrf.mxu0
      %v5582 = vadd.f32 %v5293, %v5581
      %v5583 = vpop.f32.mrf.mxu0
      %v5584 = vpop.f32.mrf.mxu0
      %v5585 = vadd.f32 %v5296, %v5584
      %v5586 = vpop.f32.mrf.mxu0
      %5587 = vmatprep.mubr.bf16.mxu0 0
      %5588 = vmatmul.mubr.bf16.gmra.mxu0 %v3626
      %v5589 = vpop.f32.mrf.mxu0
      %v5590 = vadd.f32 %v5301, %v5589
      %v5591 = vpop.f32.mrf.mxu0
      %v5592 = vpop.f32.mrf.mxu0
      %v5593 = vadd.f32 %v5304, %v5592
      %v5594 = vpop.f32.mrf.mxu0
      %5595 = vmatprep.mubr.bf16.mxu0 0
      %5596 = vmatmul.mubr.bf16.gmra.mxu0 %v3629
      %v5597 = vpop.f32.mrf.mxu0
      %v5598 = vadd.f32 %v5309, %v5597
      %v5599 = vpop.f32.mrf.mxu0
      %v5600 = vpop.f32.mrf.mxu0
      %v5601 = vadd.f32 %v5312, %v5600
      %v5602 = vpop.f32.mrf.mxu0
      %5603 = vmatprep.mubr.bf16.mxu0 0
      %5604 = vmatmul.mubr.bf16.gmra.mxu0 %v3632
      %v5605 = vpop.f32.mrf.mxu0
      %v5606 = vadd.f32 %v5317, %v5605
      %v5607 = vpop.f32.mrf.mxu0
      %v5608 = vpop.f32.mrf.mxu0
      %v5609 = vadd.f32 %v5320, %v5608
      %v5610 = vpop.f32.mrf.mxu0
      %5611 = vmatprep.mubr.bf16.mxu0 0
      %5612 = vmatmul.mubr.bf16.gmra.mxu0 %v3635
      %v5613 = vpop.f32.mrf.mxu0
      %v5614 = vadd.f32 %v5325, %v5613
      %v5615 = vpop.f32.mrf.mxu0
      %v5616 = vpop.f32.mrf.mxu0
      %v5617 = vadd.f32 %v5328, %v5616
      %v5618 = vpop.f32.mrf.mxu0
      %5619 = vmatprep.mubr.bf16.mxu0 0
      %5620 = vmatmul.mubr.bf16.gmra.mxu0 %v3638
      %v5621 = vpop.f32.mrf.mxu0
      %v5622 = vadd.f32 %v5333, %v5621
      %v5623 = vpop.f32.mrf.mxu0
      %v5624 = vpop.f32.mrf.mxu0
      %v5625 = vadd.f32 %v5336, %v5624
      %v5626 = vpop.f32.mrf.mxu0
      %5627 = vmatprep.mubr.bf16.mxu0 0
      %5628 = vmatmul.mubr.bf16.gmra.mxu0 %v3641
      %v5629 = vpop.f32.mrf.mxu0
      %v5630 = vadd.f32 %v5341, %v5629
      %v5631 = vpop.f32.mrf.mxu0
      %v5632 = vpop.f32.mrf.mxu0
      %v5633 = vadd.f32 %v5344, %v5632
      %v5634 = vpop.f32.mrf.mxu0
      %5635 = vmatprep.mubr.bf16.mxu0 0
      %5636 = vmatmul.mubr.bf16.gmra.mxu0 %v3644
      %v5637 = vpop.f32.mrf.mxu0
      %v5638 = vadd.f32 %v5349, %v5637
      %v5639 = vpop.f32.mrf.mxu0
      %v5640 = vpop.f32.mrf.mxu0
      %v5641 = vadd.f32 %v5352, %v5640
      %v5642 = vpop.f32.mrf.mxu0
      %5643 = vmatprep.mubr.bf16.mxu0 0
      %5644 = vmatmul.mubr.bf16.gmra.mxu0 %v3647
      %v5645 = vpop.f32.mrf.mxu0
      %v5646 = vadd.f32 %v5357, %v5645
      %v5647 = vpop.f32.mrf.mxu0
      %v5648 = vpop.f32.mrf.mxu0
      %v5649 = vadd.f32 %v5360, %v5648
      %v5650 = vpop.f32.mrf.mxu0
      %5651 = vmatprep.mubr.bf16.mxu0 0
      %5652 = vmatmul.mubr.bf16.gmra.mxu0 %v3650
      %v5653 = vpop.f32.mrf.mxu0
      %v5654 = vadd.f32 %v5365, %v5653
      %v5655 = vpop.f32.mrf.mxu0
      %v5656 = vpop.f32.mrf.mxu0
      %v5657 = vadd.f32 %v5368, %v5656
      %v5658 = vpop.f32.mrf.mxu0
      %5659 = vmatprep.mubr.bf16.mxu0 0
      %5660 = vmatmul.mubr.bf16.gmra.mxu0 %v3653
      %v5661 = vpop.f32.mrf.mxu0
      %v5662 = vadd.f32 %v5373, %v5661
      %v5663 = vpop.f32.mrf.mxu0
      %v5664 = vpop.f32.mrf.mxu0
      %v5665 = vadd.f32 %v5376, %v5664
      %v5666 = vpop.f32.mrf.mxu0
      %5667 = vmatprep.mubr.bf16.mxu0 0
      %5668 = vmatmul.mubr.bf16.gmra.mxu0 %v3656
      %v5669 = vpop.f32.mrf.mxu0
      %v5670 = vadd.f32 %v5381, %v5669
      %v5671 = vpop.f32.mrf.mxu0
      %v5672 = vpop.f32.mrf.mxu0
      %v5673 = vadd.f32 %v5384, %v5672
      %v5674 = vpop.f32.mrf.mxu0
      %5675 = vmatprep.mubr.bf16.mxu0 0
      %5676 = vmatmul.mubr.bf16.gmra.mxu0 %v3659
      %v5677 = vpop.f32.mrf.mxu0
      %v5678 = vadd.f32 %v5389, %v5677
      %v5679 = vpop.f32.mrf.mxu0
      %v5680 = vpop.f32.mrf.mxu0
      %v5681 = vadd.f32 %v5392, %v5680
      %v5682 = vpop.f32.mrf.mxu0
      %5683 = vdwg.mxu0
      %v5684 = vmax.f32 %v5430, 0.0
      %v5685 = vmax.f32 %v5433, 0.0
      %v5686 = vmax.f32 %v5438, 0.0
      %v5687 = vmax.f32 %v5441, 0.0
      %v5688 = vmax.f32 %v5446, 0.0
      %v5689 = vmax.f32 %v5449, 0.0
      %v5690 = vmax.f32 %v5454, 0.0
      %v5691 = vmax.f32 %v5457, 0.0
      %v5692 = vmax.f32 %v5462, 0.0
      %v5693 = vmax.f32 %v5465, 0.0
      %v5694 = vmax.f32 %v5470, 0.0
      %v5695 = vmax.f32 %v5473, 0.0
      %v5696 = vmax.f32 %v5478, 0.0
      %v5697 = vmax.f32 %v5481, 0.0
      %v5698 = vmax.f32 %v5486, 0.0
      %v5699 = vmax.f32 %v5489, 0.0
      %v5700 = vmax.f32 %v5494, 0.0
      %v5701 = vmax.f32 %v5497, 0.0
      %v5702 = vmax.f32 %v5502, 0.0
      %v5703 = vmax.f32 %v5505, 0.0
      %v5704 = vmax.f32 %v5510, 0.0
      %v5705 = vmax.f32 %v5513, 0.0
      %v5706 = vmax.f32 %v5518, 0.0
      %v5707 = vmax.f32 %v5521, 0.0
      %v5708 = vmax.f32 %v5526, 0.0
      %v5709 = vmax.f32 %v5529, 0.0
      %v5710 = vmax.f32 %v5534, 0.0
      %v5711 = vmax.f32 %v5537, 0.0
      %v5712 = vmax.f32 %v5542, 0.0
      %v5713 = vmax.f32 %v5545, 0.0
      %v5714 = vmax.f32 %v5550, 0.0
      %v5715 = vmax.f32 %v5553, 0.0
      %v5716 = vmax.f32 %v5558, 0.0
      %v5717 = vmax.f32 %v5561, 0.0
      %v5718 = vmax.f32 %v5566, 0.0
      %v5719 = vmax.f32 %v5569, 0.0
      %v5720 = vmax.f32 %v5574, 0.0
      %v5721 = vmax.f32 %v5577, 0.0
      %v5722 = vmax.f32 %v5582, 0.0
      %v5723 = vmax.f32 %v5585, 0.0
      %v5724 = vmax.f32 %v5590, 0.0
      %v5725 = vmax.f32 %v5593, 0.0
      %v5726 = vmax.f32 %v5598, 0.0
      %v5727 = vmax.f32 %v5601, 0.0
      %v5728 = vmax.f32 %v5606, 0.0
      %v5729 = vmax.f32 %v5609, 0.0
      %v5730 = vmax.f32 %v5614, 0.0
      %v5731 = vmax.f32 %v5617, 0.0
      %v5732 = vmax.f32 %v5622, 0.0
      %v5733 = vmax.f32 %v5625, 0.0
      %v5734 = vmax.f32 %v5630, 0.0
      %v5735 = vmax.f32 %v5633, 0.0
      %v5736 = vmax.f32 %v5638, 0.0
      %v5737 = vmax.f32 %v5641, 0.0
      %v5738 = vmax.f32 %v5646, 0.0
      %v5739 = vmax.f32 %v5649, 0.0
      %v5740 = vmax.f32 %v5654, 0.0
      %v5741 = vmax.f32 %v5657, 0.0
      %v5742 = vmax.f32 %v5662, 0.0
      %v5743 = vmax.f32 %v5665, 0.0
      %v5744 = vmax.f32 %v5670, 0.0
      %v5745 = vmax.f32 %v5673, 0.0
      %v5746 = vmax.f32 %v5678, 0.0
      %v5747 = vmax.f32 %v5681, 0.0
      %5748 = vst [vmem:[%s226] sm:$0xff] %v5684
      %5749 = vst [vmem:[%s226 + $0x8] sm:$0xff] %v5685
      %5750 = vst [vmem:[%s226 + $0x10] sm:$0xff] %v5686
      %5751 = vst [vmem:[%s226 + $0x18] sm:$0xff] %v5687
      %5752 = vst [vmem:[%s226 + $0x20] sm:$0xff] %v5688
      %5753 = vst [vmem:[%s226 + $0x28] sm:$0xff] %v5689
      %5754 = vst [vmem:[%s226 + $0x30] sm:$0xff] %v5690
      %5755 = vst [vmem:[%s226 + $0x38] sm:$0xff] %v5691
      %5756 = vst [vmem:[%s226 + $0x40] sm:$0xff] %v5692
      %5757 = vst [vmem:[%s226 + $0x48] sm:$0xff] %v5693
      %5758 = vst [vmem:[%s226 + $0x50] sm:$0xff] %v5694
      %5759 = vst [vmem:[%s226 + $0x58] sm:$0xff] %v5695
      %5760 = vst [vmem:[%s226 + $0x60] sm:$0xff] %v5696
      %5761 = vst [vmem:[%s226 + $0x68] sm:$0xff] %v5697
      %5762 = vst [vmem:[%s226 + $0x70] sm:$0xff] %v5698
      %5763 = vst [vmem:[%s226 + $0x78] sm:$0xff] %v5699
      %5764 = vst [vmem:[%s226 + $0x80] sm:$0xff] %v5700
      %5765 = vst [vmem:[%s226 + $0x88] sm:$0xff] %v5701
      %5766 = vst [vmem:[%s226 + $0x90] sm:$0xff] %v5702
      %5767 = vst [vmem:[%s226 + $0x98] sm:$0xff] %v5703
      %5768 = vst [vmem:[%s226 + $0xa0] sm:$0xff] %v5704
      %5769 = vst [vmem:[%s226 + $0xa8] sm:$0xff] %v5705
      %5770 = vst [vmem:[%s226 + $0xb0] sm:$0xff] %v5706
      %5771 = vst [vmem:[%s226 + $0xb8] sm:$0xff] %v5707
      %5772 = vst [vmem:[%s226 + $0xc0] sm:$0xff] %v5708
      %5773 = vst [vmem:[%s226 + $0xc8] sm:$0xff] %v5709
      %5774 = vst [vmem:[%s226 + $0xd0] sm:$0xff] %v5710
      %5775 = vst [vmem:[%s226 + $0xd8] sm:$0xff] %v5711
      %5776 = vst [vmem:[%s226 + $0xe0] sm:$0xff] %v5712
      %5777 = vst [vmem:[%s226 + $0xe8] sm:$0xff] %v5713
      %5778 = vst [vmem:[%s226 + $0xf0] sm:$0xff] %v5714
      %5779 = vst [vmem:[%s226 + $0xf8] sm:$0xff] %v5715
      %5780 = vst [vmem:[%s226 + $0x100] sm:$0xff] %v5716
      %5781 = vst [vmem:[%s226 + $0x108] sm:$0xff] %v5717
      %5782 = vst [vmem:[%s226 + $0x110] sm:$0xff] %v5718
      %5783 = vst [vmem:[%s226 + $0x118] sm:$0xff] %v5719
      %5784 = vst [vmem:[%s226 + $0x120] sm:$0xff] %v5720
      %5785 = vst [vmem:[%s226 + $0x128] sm:$0xff] %v5721
      %5786 = vst [vmem:[%s226 + $0x130] sm:$0xff] %v5722
      %5787 = vst [vmem:[%s226 + $0x138] sm:$0xff] %v5723
      %5788 = vst [vmem:[%s226 + $0x140] sm:$0xff] %v5724
      %5789 = vst [vmem:[%s226 + $0x148] sm:$0xff] %v5725
      %5790 = vst [vmem:[%s226 + $0x150] sm:$0xff] %v5726
      %5791 = vst [vmem:[%s226 + $0x158] sm:$0xff] %v5727
      %5792 = vst [vmem:[%s226 + $0x160] sm:$0xff] %v5728
      %5793 = vst [vmem:[%s226 + $0x168] sm:$0xff] %v5729
      %5794 = vst [vmem:[%s226 + $0x170] sm:$0xff] %v5730
      %5795 = vst [vmem:[%s226 + $0x178] sm:$0xff] %v5731
      %5796 = vst [vmem:[%s226 + $0x180] sm:$0xff] %v5732
      %5797 = vst [vmem:[%s226 + $0x188] sm:$0xff] %v5733
      %5798 = vst [vmem:[%s226 + $0x190] sm:$0xff] %v5734
      %5799 = vst [vmem:[%s226 + $0x198] sm:$0xff] %v5735
      %5800 = vst [vmem:[%s226 + $0x1a0] sm:$0xff] %v5736
      %5801 = vst [vmem:[%s226 + $0x1a8] sm:$0xff] %v5737
      %5802 = vst [vmem:[%s226 + $0x1b0] sm:$0xff] %v5738
      %5803 = vst [vmem:[%s226 + $0x1b8] sm:$0xff] %v5739
      %5804 = vst [vmem:[%s226 + $0x1c0] sm:$0xff] %v5740
      %5805 = vst [vmem:[%s226 + $0x1c8] sm:$0xff] %v5741
      %5806 = vst [vmem:[%s226 + $0x1d0] sm:$0xff] %v5742
      %5807 = vst [vmem:[%s226 + $0x1d8] sm:$0xff] %v5743
      %5808 = vst [vmem:[%s226 + $0x1e0] sm:$0xff] %v5744
      %5809 = vst [vmem:[%s226 + $0x1e8] sm:$0xff] %v5745
      %5810 = vst [vmem:[%s226 + $0x1f0] sm:$0xff] %v5746
      %5811 = vst [vmem:[%s226 + $0x1f8] sm:$0xff] %v5747
      %s5812 = smul.u32 64, %s18
      %p5813 = scmp.lt.s32.totalorder %s5812, 127
      %s5814 = scalar_select %p5813, %s5812, 127
      %p5815 = scmp.lt.s32.totalorder %s19, 0
      %s5816 = scalar_select %p5815, %s19, 0
      %s5817 = sadd.s32 %s5816, %s5814
      %s5818 = smul.addr %s5817, 8
      %s5819 = scalar_lea.vmem %s3, %s5818
      // Predicated region
      $region33: #{_lambda_.6} parent=31 // pred_check
        %p5820 = pneg %p124
      $region34: #{_lambda_.6} parent=31 // pred_check_branch
        %5822 = sbr.rel (%p5820) target = $region36
      $region35: #{_lambda_.6} parent=31 // pred_region
        %s5823 = smul.u32 64, %s18
      $region36: #{_lambda_.6} parent=31 // pred_fallthru
        _
    $region32: #{_lambda_.6} parent=5 // pred_fallthru
      _
    %p5824 = scmp.le.s32.totalorder 2, %s9
    // Predicated region
    $region37: #{_lambda_.6} parent=5 // pred_check
      %p5825 = pneg %p5824
    $region38: #{_lambda_.6} parent=5 // pred_check_branch
      %5827 = sbr.rel (%p5825) target = $region40
    $region39: #{_lambda_.6} parent=5 // pred_region
      %s5828 = ssub.s32 %s9, 2
      // Predicated region
      $region41: #{_lambda_.6} parent=39 // pred_check
        %p5829 = pneg %p130
      $region42: #{_lambda_.6} parent=39 // pred_check_branch
        %5831 = sbr.rel (%p5829) target = $region44
      $region43: #{_lambda_.6} parent=39 // pred_region
        %s5832 = smul.u32 64, %s20
        %p5833 = scmp.lt.s32.totalorder %s5832, 127
        %s5834 = scalar_select %p5833, %s5832, 127
        %p5835 = scmp.lt.s32.totalorder %s21, 0
        %s5836 = scalar_select %p5835, %s21, 0
        %s5837 = sadd.s32 %s5836, %s5834
        %s5838 = smul.addr %s5837, 8
        %s5839 = scalar_lea.vmem %s3, %s5838
      $region44: #{_lambda_.6} parent=39 // pred_fallthru
        _
    $region40: #{_lambda_.6} parent=5 // pred_fallthru
      _
  $region6: #{_lambda_.6} parent=0 // loop_footer
    %s13 = sadd.s32 1, %s9
  $region7: #{_lambda_.6} parent=0 // loop_footer_branch
    %8 = sbr.rel target = $region3
  $region8: #{_lambda_.6} parent=0 // loop_exit
    _

// kernel: _lambda_.7
$region0: #{_lambda_.7}
  #allocation0 [shape = 'u32[]', space=smem, size = 0x4, offset = 0x4, fixed_abs, tag = 'smem constant byte address 0x4 - core index']
  #allocation1 [shape = 'u32[144,128]{1,0:T(1,128)}', space=vmem, size = 0x12000, scoped, tag = 'internal scratch']
  %s0 = inlined_call_operand.vmem [shape: f32[2,8,13,128], index: 0, kind: input, shape index: {}]
  %s1 = inlined_call_operand.vmem [shape: f32[2,8,12,128], index: 1, kind: input, shape index: {}]
  %s2 = inlined_call_operand.vmem [shape: f32[2,8,13,128], index: 2, kind: input, shape index: {}]
  %s3 = inlined_call_operand.vmem [shape: f32[2,8,12,128], index: 3, kind: input, shape index: {}]
  %s4 = inlined_call_operand.vmem [shape: f32[2,7,11,128], index: 4, kind: output, shape index: {}]
  %s5 = sld [smem:[#allocation0]]
  $region26: #{_lambda_.7} parent=0
    _
  %s7 = ssub.s32 1, %s5
  %s8 = scalar_select 0, %s7, %s5
  // Predicated region
  $region2: #{_lambda_.7} parent=0 // pred_check
    _
  $region3: #{_lambda_.7} parent=0 // pred_check_branch
    %10 = sbr.rel (0) target = $region5
  $region4: #{_lambda_.7} parent=0 // pred_region
    _
  $region5: #{_lambda_.7} parent=0 // pred_fallthru
    _
  // Predicated region
  $region6: #{_lambda_.7} parent=0 // pred_check
    _
  $region7: #{_lambda_.7} parent=0 // pred_check_branch
    %12 = sbr.rel (0) target = $region9
  $region8: #{_lambda_.7} parent=0 // pred_region
    _
  $region9: #{_lambda_.7} parent=0 // pred_fallthru
    _
  // Predicated region
  $region10: #{_lambda_.7} parent=0 // pred_check
    _
  $region11: #{_lambda_.7} parent=0 // pred_check_branch
    %14 = sbr.rel (0) target = $region13
  $region12: #{_lambda_.7} parent=0 // pred_region
    _
  $region13: #{_lambda_.7} parent=0 // pred_fallthru
    _
  // Predicated region
  $region14: #{_lambda_.7} parent=0 // pred_check
    _
  $region15: #{_lambda_.7} parent=0 // pred_check_branch
    %16 = sbr.rel (0) target = $region17
  $region16: #{_lambda_.7} parent=0 // pred_region
    _
  $region17: #{_lambda_.7} parent=0 // pred_fallthru
    _
  %v17 = vld [vmem:[%s0] sm:$0xff]
  %v18 = vld [vmem:[%s0 + $0x8] sm:$0x1f]
  %v19 = vld [vmem:[%s0 + $0x10] sm:$0xff]
  %v20 = vld [vmem:[%s0 + $0x18] sm:$0x1f]
  %v21 = vld [vmem:[%s0 + $0x20] sm:$0xff]
  %v22 = vld [vmem:[%s0 + $0x28] sm:$0x1f]
  %v23 = vld [vmem:[%s0 + $0x30] sm:$0xff]
  %v24 = vld [vmem:[%s0 + $0x38] sm:$0x1f]
  %v25 = vld [vmem:[%s0 + $0x40] sm:$0xff]
  %v26 = vld [vmem:[%s0 + $0x48] sm:$0x1f]
  %v27 = vld [vmem:[%s0 + $0x50] sm:$0xff]
  %v28 = vld [vmem:[%s0 + $0x58] sm:$0x1f]
  %v29 = vld [vmem:[%s0 + $0x60] sm:$0xff]
  %v30 = vld [vmem:[%s0 + $0x68] sm:$0x1f]
  %v31 = vld [vmem:[%s0 + $0x70] sm:$0xff]
  %v32 = vld [vmem:[%s0 + $0x78] sm:$0x1f]
  %v33 = vld [vmem:[%s0 + $0x80] sm:$0xff]
  %v34 = vld [vmem:[%s0 + $0x88] sm:$0x1f]
  %v35 = vld [vmem:[%s0 + $0x90] sm:$0xff]
  %v36 = vld [vmem:[%s0 + $0x98] sm:$0x1f]
  %v37 = vld [vmem:[%s0 + $0xa0] sm:$0xff]
  %v38 = vld [vmem:[%s0 + $0xa8] sm:$0x1f]
  %v39 = vld [vmem:[%s0 + $0xb0] sm:$0xff]
  %v40 = vld [vmem:[%s0 + $0xb8] sm:$0x1f]
  %v41 = vld [vmem:[%s0 + $0xc0] sm:$0xff]
  %v42 = vld [vmem:[%s0 + $0xc8] sm:$0x1f]
  %v43 = vld [vmem:[%s0 + $0xd0] sm:$0xff]
  %v44 = vld [vmem:[%s0 + $0xd8] sm:$0x1f]
  %v45 = vld [vmem:[%s0 + $0xe0] sm:$0xff]
  %v46 = vld [vmem:[%s0 + $0xe8] sm:$0x1f]
  %v47 = vld [vmem:[%s0 + $0xf0] sm:$0xff]
  %v48 = vld [vmem:[%s0 + $0xf8] sm:$0x1f]
  %vm77 = vcmask 1046528
  %v78 = vrot.slane %v17, 1
  %v79 = vrot.slane %v18, 1
  %v80 = vsel %vm77, %v78, %v79
  %v81 = vrot.slane %v19, 1
  %v82 = vrot.slane %v20, 1
  %v83 = vsel %vm77, %v81, %v82
  %v84 = vrot.slane %v21, 1
  %v85 = vrot.slane %v22, 1
  %v86 = vsel %vm77, %v84, %v85
  %v87 = vrot.slane %v23, 1
  %v88 = vrot.slane %v24, 1
  %v89 = vsel %vm77, %v87, %v88
  %v90 = vrot.slane %v25, 1
  %v91 = vrot.slane %v26, 1
  %v92 = vsel %vm77, %v90, %v91
  %v93 = vrot.slane %v27, 1
  %v94 = vrot.slane %v28, 1
  %v95 = vsel %vm77, %v93, %v94
  %v96 = vrot.slane %v29, 1
  %v97 = vrot.slane %v30, 1
  %v98 = vsel %vm77, %v96, %v97
  %v99 = vrot.slane %v33, 1
  %v100 = vrot.slane %v34, 1
  %v101 = vsel %vm77, %v99, %v100
  %v102 = vrot.slane %v35, 1
  %v103 = vrot.slane %v36, 1
  %v104 = vsel %vm77, %v102, %v103
  %v105 = vrot.slane %v37, 1
  %v106 = vrot.slane %v38, 1
  %v107 = vsel %vm77, %v105, %v106
  %v108 = vrot.slane %v39, 1
  %v109 = vrot.slane %v40, 1
  %v110 = vsel %vm77, %v108, %v109
  %v111 = vrot.slane %v41, 1
  %v112 = vrot.slane %v42, 1
  %v113 = vsel %vm77, %v111, %v112
  %v114 = vrot.slane %v43, 1
  %v115 = vrot.slane %v44, 1
  %v116 = vsel %vm77, %v114, %v115
  %v117 = vrot.slane %v45, 1
  %v118 = vrot.slane %v46, 1
  %v119 = vsel %vm77, %v117, %v118
  %v148 = vmax.f32 %v17, %v80
  %v149 = vmax.f32 %v18, %v79
  %v150 = vmax.f32 %v19, %v83
  %v151 = vmax.f32 %v20, %v82
  %v152 = vmax.f32 %v21, %v86
  %v153 = vmax.f32 %v22, %v85
  %v154 = vmax.f32 %v23, %v89
  %v155 = vmax.f32 %v24, %v88
  %v156 = vmax.f32 %v25, %v92
  %v157 = vmax.f32 %v26, %v91
  %v158 = vmax.f32 %v27, %v95
  %v159 = vmax.f32 %v28, %v94
  %v160 = vmax.f32 %v29, %v98
  %v161 = vmax.f32 %v30, %v97
  %v162 = vmax.f32 %v33, %v101
  %v163 = vmax.f32 %v34, %v100
  %v164 = vmax.f32 %v35, %v104
  %v165 = vmax.f32 %v36, %v103
  %v166 = vmax.f32 %v37, %v107
  %v167 = vmax.f32 %v38, %v106
  %v168 = vmax.f32 %v39, %v110
  %v169 = vmax.f32 %v40, %v109
  %v170 = vmax.f32 %v41, %v113
  %v171 = vmax.f32 %v42, %v112
  %v172 = vmax.f32 %v43, %v116
  %v173 = vmax.f32 %v44, %v115
  %v174 = vmax.f32 %v45, %v119
  %v175 = vmax.f32 %v46, %v118
  %v180 = vrot.slane %v31, 1
  %v181 = vrot.slane %v32, 1
  %v182 = vsel %vm77, %v180, %v181
  %v183 = vrot.slane %v47, 1
  %v184 = vrot.slane %v48, 1
  %v185 = vsel %vm77, %v183, %v184
  %v190 = vmax.f32 %v31, %v182
  %v191 = vmax.f32 %v32, %v181
  %v192 = vmax.f32 %v47, %v185
  %v193 = vmax.f32 %v48, %v184
  %v194 = vmax.f32 %v148, %v150
  %v195 = vmax.f32 %v149, %v151
  %v196 = vmax.f32 %v150, %v152
  %v197 = vmax.f32 %v151, %v153
  %v198 = vmax.f32 %v152, %v154
  %v199 = vmax.f32 %v153, %v155
  %v200 = vmax.f32 %v154, %v156
  %v201 = vmax.f32 %v155, %v157
  %v202 = vmax.f32 %v156, %v158
  %v203 = vmax.f32 %v157, %v159
  %v204 = vmax.f32 %v158, %v160
  %v205 = vmax.f32 %v159, %v161
  %v206 = vmax.f32 %v160, %v190
  %v207 = vmax.f32 %v161, %v191
  %v208 = vmax.f32 %v162, %v164
  %v209 = vmax.f32 %v163, %v165
  %v210 = vmax.f32 %v164, %v166
  %v211 = vmax.f32 %v165, %v167
  %v212 = vmax.f32 %v166, %v168
  %v213 = vmax.f32 %v167, %v169
  %v214 = vmax.f32 %v168, %v170
  %v215 = vmax.f32 %v169, %v171
  %v216 = vmax.f32 %v170, %v172
  %v217 = vmax.f32 %v171, %v173
  %v218 = vmax.f32 %v172, %v174
  %v219 = vmax.f32 %v173, %v175
  %v220 = vmax.f32 %v174, %v192
  %v221 = vmax.f32 %v175, %v193
  %v222 = vld [vmem:[%s1] sm:$0xff]
  %v223 = vld [vmem:[%s1 + $0x8] sm:$0xf]
  %v224 = vld [vmem:[%s1 + $0x10] sm:$0xff]
  %v225 = vld [vmem:[%s1 + $0x18] sm:$0xf]
  %v226 = vld [vmem:[%s1 + $0x20] sm:$0xff]
  %v227 = vld [vmem:[%s1 + $0x28] sm:$0xf]
  %v228 = vld [vmem:[%s1 + $0x30] sm:$0xff]
  %v229 = vld [vmem:[%s1 + $0x38] sm:$0xf]
  %v230 = vld [vmem:[%s1 + $0x40] sm:$0xff]
  %v231 = vld [vmem:[%s1 + $0x48] sm:$0xf]
  %v232 = vld [vmem:[%s1 + $0x50] sm:$0xff]
  %v233 = vld [vmem:[%s1 + $0x58] sm:$0xf]
  %v234 = vld [vmem:[%s1 + $0x60] sm:$0xff]
  %v235 = vld [vmem:[%s1 + $0x68] sm:$0xf]
  %v236 = vld [vmem:[%s1 + $0x70] sm:$0xff]
  %v237 = vld [vmem:[%s1 + $0x78] sm:$0xf]
  %v238 = vld [vmem:[%s1 + $0x80] sm:$0xff]
  %v239 = vld [vmem:[%s1 + $0x88] sm:$0xf]
  %v240 = vld [vmem:[%s1 + $0x90] sm:$0xff]
  %v241 = vld [vmem:[%s1 + $0x98] sm:$0xf]
  %v242 = vld [vmem:[%s1 + $0xa0] sm:$0xff]
  %v243 = vld [vmem:[%s1 + $0xa8] sm:$0xf]
  %v244 = vld [vmem:[%s1 + $0xb0] sm:$0xff]
  %v245 = vld [vmem:[%s1 + $0xb8] sm:$0xf]
  %v246 = vld [vmem:[%s1 + $0xc0] sm:$0xff]
  %v247 = vld [vmem:[%s1 + $0xc8] sm:$0xf]
  %v248 = vld [vmem:[%s1 + $0xd0] sm:$0xff]
  %v249 = vld [vmem:[%s1 + $0xd8] sm:$0xf]
  %v250 = vld [vmem:[%s1 + $0xe0] sm:$0xff]
  %v251 = vld [vmem:[%s1 + $0xe8] sm:$0xf]
  %v252 = vld [vmem:[%s1 + $0xf0] sm:$0xff]
  %v253 = vld [vmem:[%s1 + $0xf8] sm:$0xf]
  %v282 = vrot.slane %v222, 1
  %v283 = vrot.slane %v223, 1
  %v284 = vsel %vm77, %v282, %v283
  %v285 = vrot.slane %v224, 1
  %v286 = vrot.slane %v225, 1
  %v287 = vsel %vm77, %v285, %v286
  %v288 = vrot.slane %v226, 1
  %v289 = vrot.slane %v227, 1
  %v290 = vsel %vm77, %v288, %v289
  %v291 = vrot.slane %v228, 1
  %v292 = vrot.slane %v229, 1
  %v293 = vsel %vm77, %v291, %v292
  %v294 = vrot.slane %v230, 1
  %v295 = vrot.slane %v231, 1
  %v296 = vsel %vm77, %v294, %v295
  %v297 = vrot.slane %v232, 1
  %v298 = vrot.slane %v233, 1
  %v299 = vsel %vm77, %v297, %v298
  %v300 = vrot.slane %v234, 1
  %v301 = vrot.slane %v235, 1
  %v302 = vsel %vm77, %v300, %v301
  %v303 = vrot.slane %v238, 1
  %v304 = vrot.slane %v239, 1
  %v305 = vsel %vm77, %v303, %v304
  %v306 = vrot.slane %v240, 1
  %v307 = vrot.slane %v241, 1
  %v308 = vsel %vm77, %v306, %v307
  %v309 = vrot.slane %v242, 1
  %v310 = vrot.slane %v243, 1
  %v311 = vsel %vm77, %v309, %v310
  %v312 = vrot.slane %v244, 1
  %v313 = vrot.slane %v245, 1
  %v314 = vsel %vm77, %v312, %v313
  %v315 = vrot.slane %v246, 1
  %v316 = vrot.slane %v247, 1
  %v317 = vsel %vm77, %v315, %v316
  %v318 = vrot.slane %v248, 1
  %v319 = vrot.slane %v249, 1
  %v320 = vsel %vm77, %v318, %v319
  %v321 = vrot.slane %v250, 1
  %v322 = vrot.slane %v251, 1
  %v323 = vsel %vm77, %v321, %v322
  %v352 = vmax.f32 %v222, %v284
  %v353 = vmax.f32 %v223, %v283
  %v354 = vmax.f32 %v224, %v287
  %v355 = vmax.f32 %v225, %v286
  %v356 = vmax.f32 %v226, %v290
  %v357 = vmax.f32 %v227, %v289
  %v358 = vmax.f32 %v228, %v293
  %v359 = vmax.f32 %v229, %v292
  %v360 = vmax.f32 %v230, %v296
  %v361 = vmax.f32 %v231, %v295
  %v362 = vmax.f32 %v232, %v299
  %v363 = vmax.f32 %v233, %v298
  %v364 = vmax.f32 %v234, %v302
  %v365 = vmax.f32 %v235, %v301
  %v366 = vmax.f32 %v238, %v305
  %v367 = vmax.f32 %v239, %v304
  %v368 = vmax.f32 %v240, %v308
  %v369 = vmax.f32 %v241, %v307
  %v370 = vmax.f32 %v242, %v311
  %v371 = vmax.f32 %v243, %v310
  %v372 = vmax.f32 %v244, %v314
  %v373 = vmax.f32 %v245, %v313
  %v374 = vmax.f32 %v246, %v317
  %v375 = vmax.f32 %v247, %v316
  %v376 = vmax.f32 %v248, %v320
  %v377 = vmax.f32 %v249, %v319
  %v378 = vmax.f32 %v250, %v323
  %v379 = vmax.f32 %v251, %v322
  %v384 = vrot.slane %v236, 1
  %v385 = vrot.slane %v237, 1
  %v386 = vsel %vm77, %v384, %v385
  %v387 = vrot.slane %v252, 1
  %v388 = vrot.slane %v253, 1
  %v389 = vsel %vm77, %v387, %v388
  %v394 = vmax.f32 %v236, %v386
  %v395 = vmax.f32 %v237, %v385
  %v396 = vmax.f32 %v252, %v389
  %v397 = vmax.f32 %v253, %v388
  %v398 = vmax.f32 %v352, %v354
  %v399 = vmax.f32 %v353, %v355
  %v400 = vmax.f32 %v354, %v356
  %v401 = vmax.f32 %v355, %v357
  %v402 = vmax.f32 %v356, %v358
  %v403 = vmax.f32 %v357, %v359
  %v404 = vmax.f32 %v358, %v360
  %v405 = vmax.f32 %v359, %v361
  %v406 = vmax.f32 %v360, %v362
  %v407 = vmax.f32 %v361, %v363
  %v408 = vmax.f32 %v362, %v364
  %v409 = vmax.f32 %v363, %v365
  %v410 = vmax.f32 %v364, %v394
  %v411 = vmax.f32 %v365, %v395
  %v412 = vmax.f32 %v366, %v368
  %v413 = vmax.f32 %v367, %v369
  %v414 = vmax.f32 %v368, %v370
  %v415 = vmax.f32 %v369, %v371
  %v416 = vmax.f32 %v370, %v372
  %v417 = vmax.f32 %v371, %v373
  %v418 = vmax.f32 %v372, %v374
  %v419 = vmax.f32 %v373, %v375
  %v420 = vmax.f32 %v374, %v376
  %v421 = vmax.f32 %v375, %v377
  %v422 = vmax.f32 %v376, %v378
  %v423 = vmax.f32 %v377, %v379
  %v424 = vmax.f32 %v378, %v396
  %v425 = vmax.f32 %v379, %v397
  %v426 = vmax.f32 %v194, %v398
  %v427 = vmax.f32 %v195, %v399
  %v428 = vmax.f32 %v196, %v400
  %v429 = vmax.f32 %v197, %v401
  %v430 = vmax.f32 %v198, %v402
  %v431 = vmax.f32 %v199, %v403
  %v432 = vmax.f32 %v200, %v404
  %v433 = vmax.f32 %v201, %v405
  %v434 = vmax.f32 %v202, %v406
  %v435 = vmax.f32 %v203, %v407
  %v436 = vmax.f32 %v204, %v408
  %v437 = vmax.f32 %v205, %v409
  %v438 = vmax.f32 %v206, %v410
  %v439 = vmax.f32 %v207, %v411
  %v440 = vmax.f32 %v208, %v412
  %v441 = vmax.f32 %v209, %v413
  %v442 = vmax.f32 %v210, %v414
  %v443 = vmax.f32 %v211, %v415
  %v444 = vmax.f32 %v212, %v416
  %v445 = vmax.f32 %v213, %v417
  %v446 = vmax.f32 %v214, %v418
  %v447 = vmax.f32 %v215, %v419
  %v448 = vmax.f32 %v216, %v420
  %v449 = vmax.f32 %v217, %v421
  %v450 = vmax.f32 %v218, %v422
  %v451 = vmax.f32 %v219, %v423
  %v452 = vmax.f32 %v220, %v424
  %v453 = vmax.f32 %v221, %v425
  %v454 = vld [vmem:[%s2] sm:$0xff]
  %v455 = vld [vmem:[%s2 + $0x8] sm:$0x1f]
  %v456 = vld [vmem:[%s2 + $0x10] sm:$0xff]
  %v457 = vld [vmem:[%s2 + $0x18] sm:$0x1f]
  %v458 = vld [vmem:[%s2 + $0x20] sm:$0xff]
  %v459 = vld [vmem:[%s2 + $0x28] sm:$0x1f]
  %v460 = vld [vmem:[%s2 + $0x30] sm:$0xff]
  %v461 = vld [vmem:[%s2 + $0x38] sm:$0x1f]
  %v462 = vld [vmem:[%s2 + $0x40] sm:$0xff]
  %v463 = vld [vmem:[%s2 + $0x48] sm:$0x1f]
  %v464 = vld [vmem:[%s2 + $0x50] sm:$0xff]
  %v465 = vld [vmem:[%s2 + $0x58] sm:$0x1f]
  %v466 = vld [vmem:[%s2 + $0x60] sm:$0xff]
  %v467 = vld [vmem:[%s2 + $0x68] sm:$0x1f]
  %v468 = vld [vmem:[%s2 + $0x70] sm:$0xff]
  %v469 = vld [vmem:[%s2 + $0x78] sm:$0x1f]
  %v470 = vld [vmem:[%s2 + $0x80] sm:$0xff]
  %v471 = vld [vmem:[%s2 + $0x88] sm:$0x1f]
  %v472 = vld [vmem:[%s2 + $0x90] sm:$0xff]
  %v473 = vld [vmem:[%s2 + $0x98] sm:$0x1f]
  %v474 = vld [vmem:[%s2 + $0xa0] sm:$0xff]
  %v475 = vld [vmem:[%s2 + $0xa8] sm:$0x1f]
  %v476 = vld [vmem:[%s2 + $0xb0] sm:$0xff]
  %v477 = vld [vmem:[%s2 + $0xb8] sm:$0x1f]
  %v478 = vld [vmem:[%s2 + $0xc0] sm:$0xff]
  %v479 = vld [vmem:[%s2 + $0xc8] sm:$0x1f]
  %v480 = vld [vmem:[%s2 + $0xd0] sm:$0xff]
  %v481 = vld [vmem:[%s2 + $0xd8] sm:$0x1f]
  %v482 = vld [vmem:[%s2 + $0xe0] sm:$0xff]
  %v483 = vld [vmem:[%s2 + $0xe8] sm:$0x1f]
  %v484 = vld [vmem:[%s2 + $0xf0] sm:$0xff]
  %v485 = vld [vmem:[%s2 + $0xf8] sm:$0x1f]
  %v514 = vrot.slane %v454, 1
  %v515 = vrot.slane %v455, 1
  %v516 = vsel %vm77, %v514, %v515
  %v517 = vrot.slane %v456, 1
  %v518 = vrot.slane %v457, 1
  %v519 = vsel %vm77, %v517, %v518
  %v520 = vrot.slane %v458, 1
  %v521 = vrot.slane %v459, 1
  %v522 = vsel %vm77, %v520, %v521
  %v523 = vrot.slane %v460, 1
  %v524 = vrot.slane %v461, 1
  %v525 = vsel %vm77, %v523, %v524
  %v526 = vrot.slane %v462, 1
  %v527 = vrot.slane %v463, 1
  %v528 = vsel %vm77, %v526, %v527
  %v529 = vrot.slane %v464, 1
  %v530 = vrot.slane %v465, 1
  %v531 = vsel %vm77, %v529, %v530
  %v532 = vrot.slane %v466, 1
  %v533 = vrot.slane %v467, 1
  %v534 = vsel %vm77, %v532, %v533
  %v535 = vrot.slane %v470, 1
  %v536 = vrot.slane %v471, 1
  %v537 = vsel %vm77, %v535, %v536
  %v538 = vrot.slane %v472, 1
  %v539 = vrot.slane %v473, 1
  %v540 = vsel %vm77, %v538, %v539
  %v541 = vrot.slane %v474, 1
  %v542 = vrot.slane %v475, 1
  %v543 = vsel %vm77, %v541, %v542
  %v544 = vrot.slane %v476, 1
  %v545 = vrot.slane %v477, 1
  %v546 = vsel %vm77, %v544, %v545
  %v547 = vrot.slane %v478, 1
  %v548 = vrot.slane %v479, 1
  %v549 = vsel %vm77, %v547, %v548
  %v550 = vrot.slane %v480, 1
  %v551 = vrot.slane %v481, 1
  %v552 = vsel %vm77, %v550, %v551
  %v553 = vrot.slane %v482, 1
  %v554 = vrot.slane %v483, 1
  %v555 = vsel %vm77, %v553, %v554
  %v584 = vmax.f32 %v454, %v516
  %v585 = vmax.f32 %v455, %v515
  %v586 = vmax.f32 %v456, %v519
  %v587 = vmax.f32 %v457, %v518
  %v588 = vmax.f32 %v458, %v522
  %v589 = vmax.f32 %v459, %v521
  %v590 = vmax.f32 %v460, %v525
  %v591 = vmax.f32 %v461, %v524
  %v592 = vmax.f32 %v462, %v528
  %v593 = vmax.f32 %v463, %v527
  %v594 = vmax.f32 %v464, %v531
  %v595 = vmax.f32 %v465, %v530
  %v596 = vmax.f32 %v466, %v534
  %v597 = vmax.f32 %v467, %v533
  %v598 = vmax.f32 %v470, %v537
  %v599 = vmax.f32 %v471, %v536
  %v600 = vmax.f32 %v472, %v540
  %v601 = vmax.f32 %v473, %v539
  %v602 = vmax.f32 %v474, %v543
  %v603 = vmax.f32 %v475, %v542
  %v604 = vmax.f32 %v476, %v546
  %v605 = vmax.f32 %v477, %v545
  %v606 = vmax.f32 %v478, %v549
  %v607 = vmax.f32 %v479, %v548
  %v608 = vmax.f32 %v480, %v552
  %v609 = vmax.f32 %v481, %v551
  %v610 = vmax.f32 %v482, %v555
  %v611 = vmax.f32 %v483, %v554
  %v616 = vrot.slane %v468, 1
  %v617 = vrot.slane %v469, 1
  %v618 = vsel %vm77, %v616, %v617
  %v619 = vrot.slane %v484, 1
  %v620 = vrot.slane %v485, 1
  %v621 = vsel %vm77, %v619, %v620
  %v626 = vmax.f32 %v468, %v618
  %v627 = vmax.f32 %v469, %v617
  %v628 = vmax.f32 %v484, %v621
  %v629 = vmax.f32 %v485, %v620
  %v630 = vmax.f32 %v584, %v586
  %v631 = vmax.f32 %v585, %v587
  %v632 = vmax.f32 %v586, %v588
  %v633 = vmax.f32 %v587, %v589
  %v634 = vmax.f32 %v588, %v590
  %v635 = vmax.f32 %v589, %v591
  %v636 = vmax.f32 %v590, %v592
  %v637 = vmax.f32 %v591, %v593
  %v638 = vmax.f32 %v592, %v594
  %v639 = vmax.f32 %v593, %v595
  %v640 = vmax.f32 %v594, %v596
  %v641 = vmax.f32 %v595, %v597
  %v642 = vmax.f32 %v596, %v626
  %v643 = vmax.f32 %v597, %v627
  %v644 = vmax.f32 %v598, %v600
  %v645 = vmax.f32 %v599, %v601
  %v646 = vmax.f32 %v600, %v602
  %v647 = vmax.f32 %v601, %v603
  %v648 = vmax.f32 %v602, %v604
  %v649 = vmax.f32 %v603, %v605
  %v650 = vmax.f32 %v604, %v606
  %v651 = vmax.f32 %v605, %v607
  %v652 = vmax.f32 %v606, %v608
  %v653 = vmax.f32 %v607, %v609
  %v654 = vmax.f32 %v608, %v610
  %v655 = vmax.f32 %v609, %v611
  %v656 = vmax.f32 %v610, %v628
  %v657 = vmax.f32 %v611, %v629
  %v658 = vld [vmem:[%s3] sm:$0xff]
  %v659 = vld [vmem:[%s3 + $0x8] sm:$0xf]
  %v660 = vld [vmem:[%s3 + $0x10] sm:$0xff]
  %v661 = vld [vmem:[%s3 + $0x18] sm:$0xf]
  %v662 = vld [vmem:[%s3 + $0x20] sm:$0xff]
  %v663 = vld [vmem:[%s3 + $0x28] sm:$0xf]
  %v664 = vld [vmem:[%s3 + $0x30] sm:$0xff]
  %v665 = vld [vmem:[%s3 + $0x38] sm:$0xf]
  %v666 = vld [vmem:[%s3 + $0x40] sm:$0xff]
  %v667 = vld [vmem:[%s3 + $0x48] sm:$0xf]
  %v668 = vld [vmem:[%s3 + $0x50] sm:$0xff]
  %v669 = vld [vmem:[%s3 + $0x58] sm:$0xf]
  %v670 = vld [vmem:[%s3 + $0x60] sm:$0xff]
  %v671 = vld [vmem:[%s3 + $0x68] sm:$0xf]
  %v672 = vld [vmem:[%s3 + $0x70] sm:$0xff]
  %v673 = vld [vmem:[%s3 + $0x78] sm:$0xf]
  %v674 = vld [vmem:[%s3 + $0x80] sm:$0xff]
  %v675 = vld [vmem:[%s3 + $0x88] sm:$0xf]
  %v676 = vld [vmem:[%s3 + $0x90] sm:$0xff]
  %v677 = vld [vmem:[%s3 + $0x98] sm:$0xf]
  %v678 = vld [vmem:[%s3 + $0xa0] sm:$0xff]
  %v679 = vld [vmem:[%s3 + $0xa8] sm:$0xf]
  %v680 = vld [vmem:[%s3 + $0xb0] sm:$0xff]
  %v681 = vld [vmem:[%s3 + $0xb8] sm:$0xf]
  %v682 = vld [vmem:[%s3 + $0xc0] sm:$0xff]
  %v683 = vld [vmem:[%s3 + $0xc8] sm:$0xf]
  %v684 = vld [vmem:[%s3 + $0xd0] sm:$0xff]
  %v685 = vld [vmem:[%s3 + $0xd8] sm:$0xf]
  %v686 = vld [vmem:[%s3 + $0xe0] sm:$0xff]
  %v687 = vld [vmem:[%s3 + $0xe8] sm:$0xf]
  %v688 = vld [vmem:[%s3 + $0xf0] sm:$0xff]
  %v689 = vld [vmem:[%s3 + $0xf8] sm:$0xf]
  %v718 = vrot.slane %v658, 1
  %v719 = vrot.slane %v659, 1
  %v720 = vsel %vm77, %v718, %v719
  %v721 = vrot.slane %v660, 1
  %v722 = vrot.slane %v661, 1
  %v723 = vsel %vm77, %v721, %v722
  %v724 = vrot.slane %v662, 1
  %v725 = vrot.slane %v663, 1
  %v726 = vsel %vm77, %v724, %v725
  %v727 = vrot.slane %v664, 1
  %v728 = vrot.slane %v665, 1
  %v729 = vsel %vm77, %v727, %v728
  %v730 = vrot.slane %v666, 1
  %v731 = vrot.slane %v667, 1
  %v732 = vsel %vm77, %v730, %v731
  %v733 = vrot.slane %v668, 1
  %v734 = vrot.slane %v669, 1
  %v735 = vsel %vm77, %v733, %v734
  %v736 = vrot.slane %v670, 1
  %v737 = vrot.slane %v671, 1
  %v738 = vsel %vm77, %v736, %v737
  %v739 = vrot.slane %v674, 1
  %v740 = vrot.slane %v675, 1
  %v741 = vsel %vm77, %v739, %v740
  %v742 = vrot.slane %v676, 1
  %v743 = vrot.slane %v677, 1
  %v744 = vsel %vm77, %v742, %v743
  %v745 = vrot.slane %v678, 1
  %v746 = vrot.slane %v679, 1
  %v747 = vsel %vm77, %v745, %v746
  %v748 = vrot.slane %v680, 1
  %v749 = vrot.slane %v681, 1
  %v750 = vsel %vm77, %v748, %v749
  %v751 = vrot.slane %v682, 1
  %v752 = vrot.slane %v683, 1
  %v753 = vsel %vm77, %v751, %v752
  %v754 = vrot.slane %v684, 1
  %v755 = vrot.slane %v685, 1
  %v756 = vsel %vm77, %v754, %v755
  %v757 = vrot.slane %v686, 1
  %v758 = vrot.slane %v687, 1
  %v759 = vsel %vm77, %v757, %v758
  %v788 = vmax.f32 %v658, %v720
  %v789 = vmax.f32 %v659, %v719
  %v790 = vmax.f32 %v660, %v723
  %v791 = vmax.f32 %v661, %v722
  %v792 = vmax.f32 %v662, %v726
  %v793 = vmax.f32 %v663, %v725
  %v794 = vmax.f32 %v664, %v729
  %v795 = vmax.f32 %v665, %v728
  %v796 = vmax.f32 %v666, %v732
  %v797 = vmax.f32 %v667, %v731
  %v798 = vmax.f32 %v668, %v735
  %v799 = vmax.f32 %v669, %v734
  %v800 = vmax.f32 %v670, %v738
  %v801 = vmax.f32 %v671, %v737
  %v802 = vmax.f32 %v674, %v741
  %v803 = vmax.f32 %v675, %v740
  %v804 = vmax.f32 %v676, %v744
  %v805 = vmax.f32 %v677, %v743
  %v806 = vmax.f32 %v678, %v747
  %v807 = vmax.f32 %v679, %v746
  %v808 = vmax.f32 %v680, %v750
  %v809 = vmax.f32 %v681, %v749
  %v810 = vmax.f32 %v682, %v753
  %v811 = vmax.f32 %v683, %v752
  %v812 = vmax.f32 %v684, %v756
  %v813 = vmax.f32 %v685, %v755
  %v814 = vmax.f32 %v686, %v759
  %v815 = vmax.f32 %v687, %v758
  %v820 = vrot.slane %v672, 1
  %v821 = vrot.slane %v673, 1
  %v822 = vsel %vm77, %v820, %v821
  %v823 = vrot.slane %v688, 1
  %v824 = vrot.slane %v689, 1
  %v825 = vsel %vm77, %v823, %v824
  %v830 = vmax.f32 %v672, %v822
  %v831 = vmax.f32 %v673, %v821
  %v832 = vmax.f32 %v688, %v825
  %v833 = vmax.f32 %v689, %v824
  %v834 = vmax.f32 %v788, %v790
  %v835 = vmax.f32 %v789, %v791
  %v836 = vmax.f32 %v790, %v792
  %v837 = vmax.f32 %v791, %v793
  %v838 = vmax.f32 %v792, %v794
  %v839 = vmax.f32 %v793, %v795
  %v840 = vmax.f32 %v794, %v796
  %v841 = vmax.f32 %v795, %v797
  %v842 = vmax.f32 %v796, %v798
  %v843 = vmax.f32 %v797, %v799
  %v844 = vmax.f32 %v798, %v800
  %v845 = vmax.f32 %v799, %v801
  %v846 = vmax.f32 %v800, %v830
  %v847 = vmax.f32 %v801, %v831
  %v848 = vmax.f32 %v802, %v804
  %v849 = vmax.f32 %v803, %v805
  %v850 = vmax.f32 %v804, %v806
  %v851 = vmax.f32 %v805, %v807
  %v852 = vmax.f32 %v806, %v808
  %v853 = vmax.f32 %v807, %v809
  %v854 = vmax.f32 %v808, %v810
  %v855 = vmax.f32 %v809, %v811
  %v856 = vmax.f32 %v810, %v812
  %v857 = vmax.f32 %v811, %v813
  %v858 = vmax.f32 %v812, %v814
  %v859 = vmax.f32 %v813, %v815
  %v860 = vmax.f32 %v814, %v832
  %v861 = vmax.f32 %v815, %v833
  %v862 = vmax.f32 %v630, %v834
  %v863 = vmax.f32 %v631, %v835
  %v864 = vmax.f32 %v632, %v836
  %v865 = vmax.f32 %v633, %v837
  %v866 = vmax.f32 %v634, %v838
  %v867 = vmax.f32 %v635, %v839
  %v868 = vmax.f32 %v636, %v840
  %v869 = vmax.f32 %v637, %v841
  %v870 = vmax.f32 %v638, %v842
  %v871 = vmax.f32 %v639, %v843
  %v872 = vmax.f32 %v640, %v844
  %v873 = vmax.f32 %v641, %v845
  %v874 = vmax.f32 %v642, %v846
  %v875 = vmax.f32 %v643, %v847
  %v876 = vmax.f32 %v644, %v848
  %v877 = vmax.f32 %v645, %v849
  %v878 = vmax.f32 %v646, %v850
  %v879 = vmax.f32 %v647, %v851
  %v880 = vmax.f32 %v648, %v852
  %v881 = vmax.f32 %v649, %v853
  %v882 = vmax.f32 %v650, %v854
  %v883 = vmax.f32 %v651, %v855
  %v884 = vmax.f32 %v652, %v856
  %v885 = vmax.f32 %v653, %v857
  %v886 = vmax.f32 %v654, %v858
  %v887 = vmax.f32 %v655, %v859
  %v888 = vmax.f32 %v656, %v860
  %v889 = vmax.f32 %v657, %v861
  %v890 = vmax.f32 %v426, %v862
  %v891 = vmax.f32 %v427, %v863
  %v892 = vmax.f32 %v428, %v864
  %v893 = vmax.f32 %v429, %v865
  %v894 = vmax.f32 %v430, %v866
  %v895 = vmax.f32 %v431, %v867
  %v896 = vmax.f32 %v432, %v868
  %v897 = vmax.f32 %v433, %v869
  %v898 = vmax.f32 %v434, %v870
  %v899 = vmax.f32 %v435, %v871
  %v900 = vmax.f32 %v436, %v872
  %v901 = vmax.f32 %v437, %v873
  %v902 = vmax.f32 %v438, %v874
  %v903 = vmax.f32 %v439, %v875
  %v904 = vmax.f32 %v440, %v876
  %v905 = vmax.f32 %v441, %v877
  %v906 = vmax.f32 %v442, %v878
  %v907 = vmax.f32 %v443, %v879
  %v908 = vmax.f32 %v444, %v880
  %v909 = vmax.f32 %v445, %v881
  %v910 = vmax.f32 %v446, %v882
  %v911 = vmax.f32 %v447, %v883
  %v912 = vmax.f32 %v448, %v884
  %v913 = vmax.f32 %v449, %v885
  %v914 = vmax.f32 %v450, %v886
  %v915 = vmax.f32 %v451, %v887
  %v916 = vmax.f32 %v452, %v888
  %v917 = vmax.f32 %v453, %v889
  %918 = vst [vmem:[%s4] sm:$0xff] %v890
  %919 = vst [vmem:[%s4 + $0x8] sm:$0x7] %v891
  %920 = vst [vmem:[%s4 + $0x10] sm:$0xff] %v892
  %921 = vst [vmem:[%s4 + $0x18] sm:$0x7] %v893
  %922 = vst [vmem:[%s4 + $0x20] sm:$0xff] %v894
  %923 = vst [vmem:[%s4 + $0x28] sm:$0x7] %v895
  %924 = vst [vmem:[%s4 + $0x30] sm:$0xff] %v896
  %925 = vst [vmem:[%s4 + $0x38] sm:$0x7] %v897
  %926 = vst [vmem:[%s4 + $0x40] sm:$0xff] %v898
  %927 = vst [vmem:[%s4 + $0x48] sm:$0x7] %v899
  %928 = vst [vmem:[%s4 + $0x50] sm:$0xff] %v900
  %929 = vst [vmem:[%s4 + $0x58] sm:$0x7] %v901
  %930 = vst [vmem:[%s4 + $0x60] sm:$0xff] %v902
  %931 = vst [vmem:[%s4 + $0x68] sm:$0x7] %v903
  %932 = vst [vmem:[%s4 + $0x70] sm:$0xff] %v904
  %933 = vst [vmem:[%s4 + $0x78] sm:$0x7] %v905
  %934 = vst [vmem:[%s4 + $0x80] sm:$0xff] %v906
  %935 = vst [vmem:[%s4 + $0x88] sm:$0x7] %v907
  %936 = vst [vmem:[%s4 + $0x90] sm:$0xff] %v908
  %937 = vst [vmem:[%s4 + $0x98] sm:$0x7] %v909
  %938 = vst [vmem:[%s4 + $0xa0] sm:$0xff] %v910
  %939 = vst [vmem:[%s4 + $0xa8] sm:$0x7] %v911
  %940 = vst [vmem:[%s4 + $0xb0] sm:$0xff] %v912
  %941 = vst [vmem:[%s4 + $0xb8] sm:$0x7] %v913
  %942 = vst [vmem:[%s4 + $0xc0] sm:$0xff] %v914
  %943 = vst [vmem:[%s4 + $0xc8] sm:$0x7] %v915
  %944 = vst [vmem:[%s4 + $0xd0] sm:$0xff] %v916
  %945 = vst [vmem:[%s4 + $0xd8] sm:$0x7] %v917
  // Predicated region
  $region18: #{_lambda_.7} parent=0 // pred_check
    _
  $region19: #{_lambda_.7} parent=0 // pred_check_branch
    %947 = sbr.rel (0) target = $region21
  $region20: #{_lambda_.7} parent=0 // pred_region
    _
  $region21: #{_lambda_.7} parent=0 // pred_fallthru
    _
  // Predicated region
  $region22: #{_lambda_.7} parent=0 // pred_check
    _
  $region23: #{_lambda_.7} parent=0 // pred_check_branch
    %949 = sbr.rel (0) target = $region25
  $region24: #{_lambda_.7} parent=0 // pred_region
    _
  $region25: #{_lambda_.7} parent=0 // pred_fallthru
    _

// kernel: _lambda_.8
$region0: #{_lambda_.8}
  #allocation0 [shape = 'u32[]', space=smem, size = 0x4, offset = 0x4, fixed_abs, tag = 'smem constant byte address 0x4 - core index']
  #allocation1 [shape = 'u32[144,128]{1,0:T(1,128)}', space=vmem, size = 0x12000, scoped, tag = 'internal scratch']
  %s0 = inlined_call_operand.vmem [shape: bf16[56,1152], index: 0, kind: input, shape index: {}]
  %s1 = inlined_call_operand.vmem [shape: bf16[1152,256], index: 1, kind: input, shape index: {}]
  %s2 = inlined_call_operand.vmem [shape: f32[1,256], index: 2, kind: input, shape index: {}]
  %s3 = inlined_call_operand.vmem [shape: f32[56,256], index: 3, kind: output, shape index: {}]
  %s4 = sld [smem:[#allocation0]]
  $region120: #{_lambda_.8} parent=0
    _
  %s6 = ssub.s32 1, %s4
  %s7 = scalar_select 0, %s6, %s4
  $region1: #{_lambda_.8} parent=0
    #allocation2 [shape = 'u8[589824]{0}', space=vmem, size = 0x90000, scoped, tag = 'input window, operand 1']
    #allocation3 [shape = 'u8[57344]{0}', space=vmem, size = 0xe000, scoped, tag = 'output window, operand 0']
    loop: start=0, step=1, limit=4
    $region2: #{_lambda_.8} parent=1 // loop_pre_header
      _
    $region3: #{_lambda_.8} parent=1 // loop_header
      %s9 = sphi 0, %s13
      %p10 = scmp.ge.s32.totalorder %s9, 4
      %s16 = sphi 0, %s28
      %s17 = sphi 0, %s24
      %s18 = sphi 0, %s16
      %s19 = sphi 0, %s17
      %s20 = sphi 0, %s18
      %s21 = sphi 0, %s19
      %s31 = sphi 0, %s33
      %s34 = sphi 0, %s31
      %s35 = sphi 0, %s34
      %s51 = sphi 0, %s35
      %s57 = sphi 0, %s59
      %s60 = sphi 0, %s57
      %s61 = sphi 0, %s60
      %s77 = sphi 0, %s61
      %s83 = sphi 0, %s85
      %s86 = sphi 0, %s83
      %s87 = sphi 0, %s86
      %s103 = sphi 0, %s87
      %s111 = sphi 0, %s113
      %s114 = sphi 0, %s111
      %s115 = sphi 0, %s114
      %s131 = sphi 0, %s115
    $region4: #{_lambda_.8} parent=1 // loop_header_branch
      %12 = sbr.rel (%p10) target = $region8
    $region5: #{_lambda_.8} parent=1 // loop_body
      %s14 = ssub.s32 %s9, 1
      %s15 = ssub.s32 %s9, 2
      %s22 = sadd.s32 1, %s17
      %p23 = scmp.ge.s32.totalorder %s22, 2
      %s24 = scalar_select %p23, 0, %s22
      %s25 = sadd.s32 1, %s16
      %s26 = scalar_select %p23, %s25, %s16
      %p27 = scmp.ge.s32.totalorder %s26, 1
      %s28 = scalar_select %p27, 0, %s26
      %s29 = ssub.s32 %s16, %s28
      %p30 = scmp.eq.s32.totalorder %s29, 0
      %s32 = sadd.s32 %s31, 1
      %s33 = scalar_select %p30, %s31, %s32
      %p36 = pneg %p30
      %p37 = scmp.eq.s32.totalorder %s9, 1
      %p38 = por %p36, %p37
      %p39 = scmp.ne.s32.totalorder %s31, %s34
      %p40 = scmp.eq.s32.totalorder %s9, 0
      %p41 = por %p39, %p40
      %p42 = scmp.ne.s32.totalorder %s31, %s34
      %p43 = scmp.eq.s32.totalorder %s14, 1
      %p44 = por %p42, %p43
      %p45 = scmp.ne.s32.totalorder %s34, %s35
      %p46 = scmp.eq.s32.totalorder %s14, 0
      %p47 = por %p45, %p46
      %p48 = scmp.ne.s32.totalorder %s34, %s35
      %p49 = scmp.eq.s32.totalorder %s15, 1
      %p50 = por %p48, %p49
      %p52 = scmp.ne.s32.totalorder %s35, %s51
      %p53 = scmp.eq.s32.totalorder %s15, 0
      %p54 = por %p52, %p53
      %s55 = ssub.s32 %s17, %s24
      %p56 = scmp.eq.s32.totalorder %s55, 0
      %s58 = sadd.s32 %s57, 1
      %s59 = scalar_select %p56, %s57, %s58
      %p62 = pneg %p56
      %p63 = scmp.eq.s32.totalorder %s9, 1
      %p64 = por %p62, %p63
      %p65 = scmp.ne.s32.totalorder %s57, %s60
      %p66 = scmp.eq.s32.totalorder %s9, 0
      %p67 = por %p65, %p66
      %p68 = scmp.ne.s32.totalorder %s57, %s60
      %p69 = scmp.eq.s32.totalorder %s14, 1
      %p70 = por %p68, %p69
      %p71 = scmp.ne.s32.totalorder %s60, %s61
      %p72 = scmp.eq.s32.totalorder %s14, 0
      %p73 = por %p71, %p72
      %p74 = scmp.ne.s32.totalorder %s60, %s61
      %p75 = scmp.eq.s32.totalorder %s15, 1
      %p76 = por %p74, %p75
      %p78 = scmp.ne.s32.totalorder %s61, %s77
      %p79 = scmp.eq.s32.totalorder %s15, 0
      %p80 = por %p78, %p79
      %s81 = ssub.s32 %s17, %s24
      %p82 = scmp.eq.s32.totalorder %s81, 0
      %s84 = sadd.s32 %s83, 1
      %s85 = scalar_select %p82, %s83, %s84
      %p88 = pneg %p82
      %p89 = scmp.eq.s32.totalorder %s9, 1
      %p90 = por %p88, %p89
      %p91 = scmp.ne.s32.totalorder %s83, %s86
      %p92 = scmp.eq.s32.totalorder %s9, 0
      %p93 = por %p91, %p92
      %p94 = scmp.ne.s32.totalorder %s83, %s86
      %p95 = scmp.eq.s32.totalorder %s14, 1
      %p96 = por %p94, %p95
      %p97 = scmp.ne.s32.totalorder %s86, %s87
      %p98 = scmp.eq.s32.totalorder %s14, 0
      %p99 = por %p97, %p98
      %p100 = scmp.ne.s32.totalorder %s86, %s87
      %p101 = scmp.eq.s32.totalorder %s15, 1
      %p102 = por %p100, %p101
      %p104 = scmp.ne.s32.totalorder %s87, %s103
      %p105 = scmp.eq.s32.totalorder %s15, 0
      %p106 = por %p104, %p105
      %s107 = ssub.s32 %s16, %s28
      %s108 = ssub.s32 %s17, %s24
      %s109 = sor.u32 %s107, %s108
      %p110 = scmp.eq.s32.totalorder %s109, 0
      %s112 = sadd.s32 %s111, 1
      %s113 = scalar_select %p110, %s111, %s112
      %p116 = pneg %p110
      %p117 = scmp.eq.s32.totalorder %s9, 1
      %p118 = por %p116, %p117
      %p119 = scmp.ne.s32.totalorder %s111, %s114
      %p120 = scmp.eq.s32.totalorder %s9, 0
      %p121 = por %p119, %p120
      %p122 = scmp.ne.s32.totalorder %s111, %s114
      %p123 = scmp.eq.s32.totalorder %s14, 1
      %p124 = por %p122, %p123
      %p125 = scmp.ne.s32.totalorder %s114, %s115
      %p126 = scmp.eq.s32.totalorder %s14, 0
      %p127 = por %p125, %p126
      %p128 = scmp.ne.s32.totalorder %s114, %s115
      %p129 = scmp.eq.s32.totalorder %s15, 1
      %p130 = por %p128, %p129
      %p132 = scmp.ne.s32.totalorder %s115, %s131
      %p133 = scmp.eq.s32.totalorder %s15, 0
      %p134 = por %p132, %p133
      %p135 = scmp.le.s32.totalorder 1, %s9
      %p136 = scmp.lt.s32.totalorder %s9, 3
      %p137 = pnand %p135, %p136
      %p138 = pneg %p137
      // Predicated region
      $region9: #{_lambda_.8} parent=5 // pred_check
        _
      $region10: #{_lambda_.8} parent=5 // pred_check_branch
        %140 = sbr.rel (%p137) target = $region12
      $region11: #{_lambda_.8} parent=5 // pred_region
        %s141 = ssub.s32 %s9, 1
        // Predicated region
        $region13: #{_lambda_.8} parent=11 // pred_check
          %p142 = pneg %p47
        $region14: #{_lambda_.8} parent=11 // pred_check_branch
          %144 = sbr.rel (%p142) target = $region16
        $region15: #{_lambda_.8} parent=11 // pred_region
          %s145 = smul.u32 7, %s18
          %p146 = scmp.lt.s32.totalorder %s145, 6
          %s147 = scalar_select %p146, %s145, 6
          %s148 = smul.addr %s147, 9
          %s149 = smul.addr %s148, 4
          %s150 = scalar_lea.vmem %s0, %s149
          %s151 = smul.u32 7, %s18
        $region16: #{_lambda_.8} parent=11 // pred_fallthru
          _
      $region12: #{_lambda_.8} parent=5 // pred_fallthru
        _
      %p152 = scmp.lt.s32.totalorder %s9, 2
      // Predicated region
      $region17: #{_lambda_.8} parent=5 // pred_check
        %p153 = pneg %p152
      $region18: #{_lambda_.8} parent=5 // pred_check_branch
        %155 = sbr.rel (%p153) target = $region20
      $region19: #{_lambda_.8} parent=5 // pred_region
        // Predicated region
        $region21: #{_lambda_.8} parent=19 // pred_check
          %p156 = pneg %p67
        $region22: #{_lambda_.8} parent=19 // pred_check_branch
          %158 = sbr.rel (%p156) target = $region24
        $region23: #{_lambda_.8} parent=19 // pred_region
          %s159 = sand.u32 %s57, 1
          %s160 = sand.u32 %s57, 1
          %s161 = smul.addr %s160, 576
          %s162 = scalar_lea.vmem [#allocation2], %s161
          %s163 = smul.addr %s17, 4
          %s164 = scalar_lea.vmem %s1, %s163
          // Predicated region
          $region25: #{_lambda_.8} parent=23 // pred_check
            _
          $region26: #{_lambda_.8} parent=23 // pred_check_branch
            %166 = sbr.rel (0) target = $region28
          $region27: #{_lambda_.8} parent=23 // pred_region
            // Predicated region
            $region29: #{_lambda_.8} parent=27 // pred_check
              _
            $region30: #{_lambda_.8} parent=27 // pred_check_branch
              %168 = sbr.rel target = $region32
            $region31: #{_lambda_.8} parent=27 // pred_region
              // Predicated region
              $region44: #{_lambda_.8} parent=31 // pred_check
                _
              $region45: #{_lambda_.8} parent=31 // pred_check_branch
                %470 = sbr.rel (0) target = $region47
              $region46: #{_lambda_.8} parent=31 // pred_region
                loop: start=0, step=1, limit=1
                $region48: #{_lambda_.8} parent=46 // loop_pre_header
                  _
                $region49: #{_lambda_.8} parent=46 // loop_header
                  %s472 = sphi 0, %s476
                  %p473 = scmp.ge.s32.totalorder %s472, 1
                  %s477 = sphi %s164, %s164
                  %s478 = sphi %s162, %s162
                $region50: #{_lambda_.8} parent=46 // loop_header_branch
                  %475 = sbr.rel (%p473) target = $region54
                $region51: #{_lambda_.8} parent=46 // loop_body
                  _
                $region52: #{_lambda_.8} parent=46 // loop_footer
                  %s476 = sadd.s32 1, %s472
                $region53: #{_lambda_.8} parent=46 // loop_footer_branch
                  %471 = sbr.rel target = $region49
                $region54: #{_lambda_.8} parent=46 // loop_exit
                  _
                %s480 = ssub.s32 16, 1
                loop: start=0, step=1, limit=1
                $region55: #{_lambda_.8} parent=46 // loop_pre_header
                  _
                $region56: #{_lambda_.8} parent=46 // loop_header
                  %s482 = sphi 0, %s486
                  %p483 = scmp.ge.s32.totalorder %s482, 1
                  %s487 = sphi %s164, %s164
                  %s488 = sphi %s162, %s162
                $region57: #{_lambda_.8} parent=46 // loop_header_branch
                  %485 = sbr.rel (%p483) target = $region61
                $region58: #{_lambda_.8} parent=46 // loop_body
                  %v489 = vld [vmem:[%s487] sm:%s480]
                  %490 = vst [vmem:[%s488] sm:%s480] %v489
                  %v491 = vld [vmem:[%s487 + $0x8] sm:%s480]
                  %492 = vst [vmem:[%s488 + $0x4] sm:%s480] %v491
                  %v493 = vld [vmem:[%s487 + $0x10] sm:%s480]
                  %494 = vst [vmem:[%s488 + $0x8] sm:%s480] %v493
                  %v495 = vld [vmem:[%s487 + $0x18] sm:%s480]
                  %496 = vst [vmem:[%s488 + $0xc] sm:%s480] %v495
                  %v497 = vld [vmem:[%s487 + $0x20] sm:%s480]
                  %498 = vst [vmem:[%s488 + $0x10] sm:%s480] %v497
                  %v499 = vld [vmem:[%s487 + $0x28] sm:%s480]
                  %500 = vst [vmem:[%s488 + $0x14] sm:%s480] %v499
                  %v501 = vld [vmem:[%s487 + $0x30] sm:%s480]
                  %502 = vst [vmem:[%s488 + $0x18] sm:%s480] %v501
                  %v503 = vld [vmem:[%s487 + $0x38] sm:%s480]
                  %504 = vst [vmem:[%s488 + $0x1c] sm:%s480] %v503
                  %v505 = vld [vmem:[%s487 + $0x40] sm:%s480]
                  %506 = vst [vmem:[%s488 + $0x20] sm:%s480] %v505
                  %v507 = vld [vmem:[%s487 + $0x48] sm:%s480]
                  %508 = vst [vmem:[%s488 + $0x24] sm:%s480] %v507
                  %v509 = vld [vmem:[%s487 + $0x50] sm:%s480]
                  %510 = vst [vmem:[%s488 + $0x28] sm:%s480] %v509
                  %v511 = vld [vmem:[%s487 + $0x58] sm:%s480]
                  %512 = vst [vmem:[%s488 + $0x2c] sm:%s480] %v511
                  %v513 = vld [vmem:[%s487 + $0x60] sm:%s480]
                  %514 = vst [vmem:[%s488 + $0x30] sm:%s480] %v513
                  %v515 = vld [vmem:[%s487 + $0x68] sm:%s480]
                  %516 = vst [vmem:[%s488 + $0x34] sm:%s480] %v515
                  %v517 = vld [vmem:[%s487 + $0x70] sm:%s480]
                  %518 = vst [vmem:[%s488 + $0x38] sm:%s480] %v517
                  %v519 = vld [vmem:[%s487 + $0x78] sm:%s480]
                  %520 = vst [vmem:[%s488 + $0x3c] sm:%s480] %v519
                  %v521 = vld [vmem:[%s487 + $0x80] sm:%s480]
                  %522 = vst [vmem:[%s488 + $0x40] sm:%s480] %v521
                  %v523 = vld [vmem:[%s487 + $0x88] sm:%s480]
                  %524 = vst [vmem:[%s488 + $0x44] sm:%s480] %v523
                  %v525 = vld [vmem:[%s487 + $0x90] sm:%s480]
                  %526 = vst [vmem:[%s488 + $0x48] sm:%s480] %v525
                  %v527 = vld [vmem:[%s487 + $0x98] sm:%s480]
                  %528 = vst [vmem:[%s488 + $0x4c] sm:%s480] %v527
                  %v529 = vld [vmem:[%s487 + $0xa0] sm:%s480]
                  %530 = vst [vmem:[%s488 + $0x50] sm:%s480] %v529
                  %v531 = vld [vmem:[%s487 + $0xa8] sm:%s480]
                  %532 = vst [vmem:[%s488 + $0x54] sm:%s480] %v531
                  %v533 = vld [vmem:[%s487 + $0xb0] sm:%s480]
                  %534 = vst [vmem:[%s488 + $0x58] sm:%s480] %v533
                  %v535 = vld [vmem:[%s487 + $0xb8] sm:%s480]
                  %536 = vst [vmem:[%s488 + $0x5c] sm:%s480] %v535
                  %v537 = vld [vmem:[%s487 + $0xc0] sm:%s480]
                  %538 = vst [vmem:[%s488 + $0x60] sm:%s480] %v537
                  %v539 = vld [vmem:[%s487 + $0xc8] sm:%s480]
                  %540 = vst [vmem:[%s488 + $0x64] sm:%s480] %v539
                  %v541 = vld [vmem:[%s487 + $0xd0] sm:%s480]
                  %542 = vst [vmem:[%s488 + $0x68] sm:%s480] %v541
                  %v543 = vld [vmem:[%s487 + $0xd8] sm:%s480]
                  %544 = vst [vmem:[%s488 + $0x6c] sm:%s480] %v543
                  %v545 = vld [vmem:[%s487 + $0xe0] sm:%s480]
                  %546 = vst [vmem:[%s488 + $0x70] sm:%s480] %v545
                  %v547 = vld [vmem:[%s487 + $0xe8] sm:%s480]
                  %548 = vst [vmem:[%s488 + $0x74] sm:%s480] %v547
                  %v549 = vld [vmem:[%s487 + $0xf0] sm:%s480]
                  %550 = vst [vmem:[%s488 + $0x78] sm:%s480] %v549
                  %v551 = vld [vmem:[%s487 + $0xf8] sm:%s480]
                  %552 = vst [vmem:[%s488 + $0x7c] sm:%s480] %v551
                  %v553 = vld [vmem:[%s487 + $0x100] sm:%s480]
                  %554 = vst [vmem:[%s488 + $0x80] sm:%s480] %v553
                  %v555 = vld [vmem:[%s487 + $0x108] sm:%s480]
                  %556 = vst [vmem:[%s488 + $0x84] sm:%s480] %v555
                  %v557 = vld [vmem:[%s487 + $0x110] sm:%s480]
                  %558 = vst [vmem:[%s488 + $0x88] sm:%s480] %v557
                  %v559 = vld [vmem:[%s487 + $0x118] sm:%s480]
                  %560 = vst [vmem:[%s488 + $0x8c] sm:%s480] %v559
                  %v561 = vld [vmem:[%s487 + $0x120] sm:%s480]
                  %562 = vst [vmem:[%s488 + $0x90] sm:%s480] %v561
                  %v563 = vld [vmem:[%s487 + $0x128] sm:%s480]
                  %564 = vst [vmem:[%s488 + $0x94] sm:%s480] %v563
                  %v565 = vld [vmem:[%s487 + $0x130] sm:%s480]
                  %566 = vst [vmem:[%s488 + $0x98] sm:%s480] %v565
                  %v567 = vld [vmem:[%s487 + $0x138] sm:%s480]
                  %568 = vst [vmem:[%s488 + $0x9c] sm:%s480] %v567
                  %v569 = vld [vmem:[%s487 + $0x140] sm:%s480]
                  %570 = vst [vmem:[%s488 + $0xa0] sm:%s480] %v569
                  %v571 = vld [vmem:[%s487 + $0x148] sm:%s480]
                  %572 = vst [vmem:[%s488 + $0xa4] sm:%s480] %v571
                  %v573 = vld [vmem:[%s487 + $0x150] sm:%s480]
                  %574 = vst [vmem:[%s488 + $0xa8] sm:%s480] %v573
                  %v575 = vld [vmem:[%s487 + $0x158] sm:%s480]
                  %576 = vst [vmem:[%s488 + $0xac] sm:%s480] %v575
                  %v577 = vld [vmem:[%s487 + $0x160] sm:%s480]
                  %578 = vst [vmem:[%s488 + $0xb0] sm:%s480] %v577
                  %v579 = vld [vmem:[%s487 + $0x168] sm:%s480]
                  %580 = vst [vmem:[%s488 + $0xb4] sm:%s480] %v579
                  %v581 = vld [vmem:[%s487 + $0x170] sm:%s480]
                  %582 = vst [vmem:[%s488 + $0xb8] sm:%s480] %v581
                  %v583 = vld [vmem:[%s487 + $0x178] sm:%s480]
                  %584 = vst [vmem:[%s488 + $0xbc] sm:%s480] %v583
                  %v585 = vld [vmem:[%s487 + $0x180] sm:%s480]
                  %586 = vst [vmem:[%s488 + $0xc0] sm:%s480] %v585
                  %v587 = vld [vmem:[%s487 + $0x188] sm:%s480]
                  %588 = vst [vmem:[%s488 + $0xc4] sm:%s480] %v587
                  %v589 = vld [vmem:[%s487 + $0x190] sm:%s480]
                  %590 = vst [vmem:[%s488 + $0xc8] sm:%s480] %v589
                  %v591 = vld [vmem:[%s487 + $0x198] sm:%s480]
                  %592 = vst [vmem:[%s488 + $0xcc] sm:%s480] %v591
                  %v593 = vld [vmem:[%s487 + $0x1a0] sm:%s480]
                  %594 = vst [vmem:[%s488 + $0xd0] sm:%s480] %v593
                  %v595 = vld [vmem:[%s487 + $0x1a8] sm:%s480]
                  %596 = vst [vmem:[%s488 + $0xd4] sm:%s480] %v595
                  %v597 = vld [vmem:[%s487 + $0x1b0] sm:%s480]
                  %598 = vst [vmem:[%s488 + $0xd8] sm:%s480] %v597
                  %v599 = vld [vmem:[%s487 + $0x1b8] sm:%s480]
                  %600 = vst [vmem:[%s488 + $0xdc] sm:%s480] %v599
                  %v601 = vld [vmem:[%s487 + $0x1c0] sm:%s480]
                  %602 = vst [vmem:[%s488 + $0xe0] sm:%s480] %v601
                  %v603 = vld [vmem:[%s487 + $0x1c8] sm:%s480]
                  %604 = vst [vmem:[%s488 + $0xe4] sm:%s480] %v603
                  %v605 = vld [vmem:[%s487 + $0x1d0] sm:%s480]
                  %606 = vst [vmem:[%s488 + $0xe8] sm:%s480] %v605
                  %v607 = vld [vmem:[%s487 + $0x1d8] sm:%s480]
                  %608 = vst [vmem:[%s488 + $0xec] sm:%s480] %v607
                  %v609 = vld [vmem:[%s487 + $0x1e0] sm:%s480]
                  %610 = vst [vmem:[%s488 + $0xf0] sm:%s480] %v609
                  %v611 = vld [vmem:[%s487 + $0x1e8] sm:%s480]
                  %612 = vst [vmem:[%s488 + $0xf4] sm:%s480] %v611
                  %v613 = vld [vmem:[%s487 + $0x1f0] sm:%s480]
                  %614 = vst [vmem:[%s488 + $0xf8] sm:%s480] %v613
                  %v615 = vld [vmem:[%s487 + $0x1f8] sm:%s480]
                  %616 = vst [vmem:[%s488 + $0xfc] sm:%s480] %v615
                  %v617 = vld [vmem:[%s487 + $0x200] sm:%s480]
                  %618 = vst [vmem:[%s488 + $0x100] sm:%s480] %v617
                  %v619 = vld [vmem:[%s487 + $0x208] sm:%s480]
                  %620 = vst [vmem:[%s488 + $0x104] sm:%s480] %v619
                  %v621 = vld [vmem:[%s487 + $0x210] sm:%s480]
                  %622 = vst [vmem:[%s488 + $0x108] sm:%s480] %v621
                  %v623 = vld [vmem:[%s487 + $0x218] sm:%s480]
                  %624 = vst [vmem:[%s488 + $0x10c] sm:%s480] %v623
                  %v625 = vld [vmem:[%s487 + $0x220] sm:%s480]
                  %626 = vst [vmem:[%s488 + $0x110] sm:%s480] %v625
                  %v627 = vld [vmem:[%s487 + $0x228] sm:%s480]
                  %628 = vst [vmem:[%s488 + $0x114] sm:%s480] %v627
                  %v629 = vld [vmem:[%s487 + $0x230] sm:%s480]
                  %630 = vst [vmem:[%s488 + $0x118] sm:%s480] %v629
                  %v631 = vld [vmem:[%s487 + $0x238] sm:%s480]
                  %632 = vst [vmem:[%s488 + $0x11c] sm:%s480] %v631
                  %v633 = vld [vmem:[%s487 + $0x240] sm:%s480]
                  %634 = vst [vmem:[%s488 + $0x120] sm:%s480] %v633
                  %v635 = vld [vmem:[%s487 + $0x248] sm:%s480]
                  %636 = vst [vmem:[%s488 + $0x124] sm:%s480] %v635
                  %v637 = vld [vmem:[%s487 + $0x250] sm:%s480]
                  %638 = vst [vmem:[%s488 + $0x128] sm:%s480] %v637
                  %v639 = vld [vmem:[%s487 + $0x258] sm:%s480]
                  %640 = vst [vmem:[%s488 + $0x12c] sm:%s480] %v639
                  %v641 = vld [vmem:[%s487 + $0x260] sm:%s480]
                  %642 = vst [vmem:[%s488 + $0x130] sm:%s480] %v641
                  %v643 = vld [vmem:[%s487 + $0x268] sm:%s480]
                  %644 = vst [vmem:[%s488 + $0x134] sm:%s480] %v643
                  %v645 = vld [vmem:[%s487 + $0x270] sm:%s480]
                  %646 = vst [vmem:[%s488 + $0x138] sm:%s480] %v645
                  %v647 = vld [vmem:[%s487 + $0x278] sm:%s480]
                  %648 = vst [vmem:[%s488 + $0x13c] sm:%s480] %v647
                  %v649 = vld [vmem:[%s487 + $0x280] sm:%s480]
                  %650 = vst [vmem:[%s488 + $0x140] sm:%s480] %v649
                  %v651 = vld [vmem:[%s487 + $0x288] sm:%s480]
                  %652 = vst [vmem:[%s488 + $0x144] sm:%s480] %v651
                  %v653 = vld [vmem:[%s487 + $0x290] sm:%s480]
                  %654 = vst [vmem:[%s488 + $0x148] sm:%s480] %v653
                  %v655 = vld [vmem:[%s487 + $0x298] sm:%s480]
                  %656 = vst [vmem:[%s488 + $0x14c] sm:%s480] %v655
                  %v657 = vld [vmem:[%s487 + $0x2a0] sm:%s480]
                  %658 = vst [vmem:[%s488 + $0x150] sm:%s480] %v657
                  %v659 = vld [vmem:[%s487 + $0x2a8] sm:%s480]
                  %660 = vst [vmem:[%s488 + $0x154] sm:%s480] %v659
                  %v661 = vld [vmem:[%s487 + $0x2b0] sm:%s480]
                  %662 = vst [vmem:[%s488 + $0x158] sm:%s480] %v661
                  %v663 = vld [vmem:[%s487 + $0x2b8] sm:%s480]
                  %664 = vst [vmem:[%s488 + $0x15c] sm:%s480] %v663
                  %v665 = vld [vmem:[%s487 + $0x2c0] sm:%s480]
                  %666 = vst [vmem:[%s488 + $0x160] sm:%s480] %v665
                  %v667 = vld [vmem:[%s487 + $0x2c8] sm:%s480]
                  %668 = vst [vmem:[%s488 + $0x164] sm:%s480] %v667
                  %v669 = vld [vmem:[%s487 + $0x2d0] sm:%s480]
                  %670 = vst [vmem:[%s488 + $0x168] sm:%s480] %v669
                  %v671 = vld [vmem:[%s487 + $0x2d8] sm:%s480]
                  %672 = vst [vmem:[%s488 + $0x16c] sm:%s480] %v671
                  %v673 = vld [vmem:[%s487 + $0x2e0] sm:%s480]
                  %674 = vst [vmem:[%s488 + $0x170] sm:%s480] %v673
                  %v675 = vld [vmem:[%s487 + $0x2e8] sm:%s480]
                  %676 = vst [vmem:[%s488 + $0x174] sm:%s480] %v675
                  %v677 = vld [vmem:[%s487 + $0x2f0] sm:%s480]
                  %678 = vst [vmem:[%s488 + $0x178] sm:%s480] %v677
                  %v679 = vld [vmem:[%s487 + $0x2f8] sm:%s480]
                  %680 = vst [vmem:[%s488 + $0x17c] sm:%s480] %v679
                  %v681 = vld [vmem:[%s487 + $0x300] sm:%s480]
                  %682 = vst [vmem:[%s488 + $0x180] sm:%s480] %v681
                  %v683 = vld [vmem:[%s487 + $0x308] sm:%s480]
                  %684 = vst [vmem:[%s488 + $0x184] sm:%s480] %v683
                  %v685 = vld [vmem:[%s487 + $0x310] sm:%s480]
                  %686 = vst [vmem:[%s488 + $0x188] sm:%s480] %v685
                  %v687 = vld [vmem:[%s487 + $0x318] sm:%s480]
                  %688 = vst [vmem:[%s488 + $0x18c] sm:%s480] %v687
                  %v689 = vld [vmem:[%s487 + $0x320] sm:%s480]
                  %690 = vst [vmem:[%s488 + $0x190] sm:%s480] %v689
                  %v691 = vld [vmem:[%s487 + $0x328] sm:%s480]
                  %692 = vst [vmem:[%s488 + $0x194] sm:%s480] %v691
                  %v693 = vld [vmem:[%s487 + $0x330] sm:%s480]
                  %694 = vst [vmem:[%s488 + $0x198] sm:%s480] %v693
                  %v695 = vld [vmem:[%s487 + $0x338] sm:%s480]
                  %696 = vst [vmem:[%s488 + $0x19c] sm:%s480] %v695
                  %v697 = vld [vmem:[%s487 + $0x340] sm:%s480]
                  %698 = vst [vmem:[%s488 + $0x1a0] sm:%s480] %v697
                  %v699 = vld [vmem:[%s487 + $0x348] sm:%s480]
                  %700 = vst [vmem:[%s488 + $0x1a4] sm:%s480] %v699
                  %v701 = vld [vmem:[%s487 + $0x350] sm:%s480]
                  %702 = vst [vmem:[%s488 + $0x1a8] sm:%s480] %v701
                  %v703 = vld [vmem:[%s487 + $0x358] sm:%s480]
                  %704 = vst [vmem:[%s488 + $0x1ac] sm:%s480] %v703
                  %v705 = vld [vmem:[%s487 + $0x360] sm:%s480]
                  %706 = vst [vmem:[%s488 + $0x1b0] sm:%s480] %v705
                  %v707 = vld [vmem:[%s487 + $0x368] sm:%s480]
                  %708 = vst [vmem:[%s488 + $0x1b4] sm:%s480] %v707
                  %v709 = vld [vmem:[%s487 + $0x370] sm:%s480]
                  %710 = vst [vmem:[%s488 + $0x1b8] sm:%s480] %v709
                  %v711 = vld [vmem:[%s487 + $0x378] sm:%s480]
                  %712 = vst [vmem:[%s488 + $0x1bc] sm:%s480] %v711
                  %v713 = vld [vmem:[%s487 + $0x380] sm:%s480]
                  %714 = vst [vmem:[%s488 + $0x1c0] sm:%s480] %v713
                  %v715 = vld [vmem:[%s487 + $0x388] sm:%s480]
                  %716 = vst [vmem:[%s488 + $0x1c4] sm:%s480] %v715
                  %v717 = vld [vmem:[%s487 + $0x390] sm:%s480]
                  %718 = vst [vmem:[%s488 + $0x1c8] sm:%s480] %v717
                  %v719 = vld [vmem:[%s487 + $0x398] sm:%s480]
                  %720 = vst [vmem:[%s488 + $0x1cc] sm:%s480] %v719
                  %v721 = vld [vmem:[%s487 + $0x3a0] sm:%s480]
                  %722 = vst [vmem:[%s488 + $0x1d0] sm:%s480] %v721
                  %v723 = vld [vmem:[%s487 + $0x3a8] sm:%s480]
                  %724 = vst [vmem:[%s488 + $0x1d4] sm:%s480] %v723
                  %v725 = vld [vmem:[%s487 + $0x3b0] sm:%s480]
                  %726 = vst [vmem:[%s488 + $0x1d8] sm:%s480] %v725
                  %v727 = vld [vmem:[%s487 + $0x3b8] sm:%s480]
                  %728 = vst [vmem:[%s488 + $0x1dc] sm:%s480] %v727
                  %v729 = vld [vmem:[%s487 + $0x3c0] sm:%s480]
                  %730 = vst [vmem:[%s488 + $0x1e0] sm:%s480] %v729
                  %v731 = vld [vmem:[%s487 + $0x3c8] sm:%s480]
                  %732 = vst [vmem:[%s488 + $0x1e4] sm:%s480] %v731
                  %v733 = vld [vmem:[%s487 + $0x3d0] sm:%s480]
                  %734 = vst [vmem:[%s488 + $0x1e8] sm:%s480] %v733
                  %v735 = vld [vmem:[%s487 + $0x3d8] sm:%s480]
                  %736 = vst [vmem:[%s488 + $0x1ec] sm:%s480] %v735
                  %v737 = vld [vmem:[%s487 + $0x3e0] sm:%s480]
                  %738 = vst [vmem:[%s488 + $0x1f0] sm:%s480] %v737
                  %v739 = vld [vmem:[%s487 + $0x3e8] sm:%s480]
                  %740 = vst [vmem:[%s488 + $0x1f4] sm:%s480] %v739
                  %v741 = vld [vmem:[%s487 + $0x3f0] sm:%s480]
                  %742 = vst [vmem:[%s488 + $0x1f8] sm:%s480] %v741
                  %v743 = vld [vmem:[%s487 + $0x3f8] sm:%s480]
                  %744 = vst [vmem:[%s488 + $0x1fc] sm:%s480] %v743
                  %v745 = vld [vmem:[%s487 + $0x400] sm:%s480]
                  %746 = vst [vmem:[%s488 + $0x200] sm:%s480] %v745
                  %v747 = vld [vmem:[%s487 + $0x408] sm:%s480]
                  %748 = vst [vmem:[%s488 + $0x204] sm:%s480] %v747
                  %v749 = vld [vmem:[%s487 + $0x410] sm:%s480]
                  %750 = vst [vmem:[%s488 + $0x208] sm:%s480] %v749
                  %v751 = vld [vmem:[%s487 + $0x418] sm:%s480]
                  %752 = vst [vmem:[%s488 + $0x20c] sm:%s480] %v751
                  %v753 = vld [vmem:[%s487 + $0x420] sm:%s480]
                  %754 = vst [vmem:[%s488 + $0x210] sm:%s480] %v753
                  %v755 = vld [vmem:[%s487 + $0x428] sm:%s480]
                  %756 = vst [vmem:[%s488 + $0x214] sm:%s480] %v755
                  %v757 = vld [vmem:[%s487 + $0x430] sm:%s480]
                  %758 = vst [vmem:[%s488 + $0x218] sm:%s480] %v757
                  %v759 = vld [vmem:[%s487 + $0x438] sm:%s480]
                  %760 = vst [vmem:[%s488 + $0x21c] sm:%s480] %v759
                  %v761 = vld [vmem:[%s487 + $0x440] sm:%s480]
                  %762 = vst [vmem:[%s488 + $0x220] sm:%s480] %v761
                  %v763 = vld [vmem:[%s487 + $0x448] sm:%s480]
                  %764 = vst [vmem:[%s488 + $0x224] sm:%s480] %v763
                  %v765 = vld [vmem:[%s487 + $0x450] sm:%s480]
                  %766 = vst [vmem:[%s488 + $0x228] sm:%s480] %v765
                  %v767 = vld [vmem:[%s487 + $0x458] sm:%s480]
                  %768 = vst [vmem:[%s488 + $0x22c] sm:%s480] %v767
                  %v769 = vld [vmem:[%s487 + $0x460] sm:%s480]
                  %770 = vst [vmem:[%s488 + $0x230] sm:%s480] %v769
                  %v771 = vld [vmem:[%s487 + $0x468] sm:%s480]
                  %772 = vst [vmem:[%s488 + $0x234] sm:%s480] %v771
                  %v773 = vld [vmem:[%s487 + $0x470] sm:%s480]
                  %774 = vst [vmem:[%s488 + $0x238] sm:%s480] %v773
                  %v775 = vld [vmem:[%s487 + $0x478] sm:%s480]
                  %776 = vst [vmem:[%s488 + $0x23c] sm:%s480] %v775
                $region59: #{_lambda_.8} parent=46 // loop_footer
                  %s486 = sadd.s32 1, %s482
                $region60: #{_lambda_.8} parent=46 // loop_footer_branch
                  %481 = sbr.rel target = $region56
                $region61: #{_lambda_.8} parent=46 // loop_exit
                  _
              $region47: #{_lambda_.8} parent=31 // pred_fallthru
                _
            $region32: #{_lambda_.8} parent=27 // pred_fallthru
              _
            // Predicated region
            $region33: #{_lambda_.8} parent=27 // pred_check
              _
            $region34: #{_lambda_.8} parent=27 // pred_check_branch
              %170 = sbr.rel (0) target = $region36
            $region35: #{_lambda_.8} parent=27 // pred_region
              %s172 = ssub.s32 16, 1
              loop: start=0, step=1, limit=1
              $region37: #{_lambda_.8} parent=35 // loop_pre_header
                _
              $region38: #{_lambda_.8} parent=35 // loop_header
                %s174 = sphi 0, %s178
                %p175 = scmp.ge.s32.totalorder %s174, 1
                %s179 = sphi %s164, %s164
                %s180 = sphi %s162, %s162
              $region39: #{_lambda_.8} parent=35 // loop_header_branch
                %177 = sbr.rel (%p175) target = $region43
              $region40: #{_lambda_.8} parent=35 // loop_body
                %v181 = vld [vmem:[%s179] sm:%s172]
                %182 = vst [vmem:[%s180] sm:%s172] %v181
                %v183 = vld [vmem:[%s179 + $0x8] sm:%s172]
                %184 = vst [vmem:[%s180 + $0x4] sm:%s172] %v183
                %v185 = vld [vmem:[%s179 + $0x10] sm:%s172]
                %186 = vst [vmem:[%s180 + $0x8] sm:%s172] %v185
                %v187 = vld [vmem:[%s179 + $0x18] sm:%s172]
                %188 = vst [vmem:[%s180 + $0xc] sm:%s172] %v187
                %v189 = vld [vmem:[%s179 + $0x20] sm:%s172]
                %190 = vst [vmem:[%s180 + $0x10] sm:%s172] %v189
                %v191 = vld [vmem:[%s179 + $0x28] sm:%s172]
                %192 = vst [vmem:[%s180 + $0x14] sm:%s172] %v191
                %v193 = vld [vmem:[%s179 + $0x30] sm:%s172]
                %194 = vst [vmem:[%s180 + $0x18] sm:%s172] %v193
                %v195 = vld [vmem:[%s179 + $0x38] sm:%s172]
                %196 = vst [vmem:[%s180 + $0x1c] sm:%s172] %v195
                %v197 = vld [vmem:[%s179 + $0x40] sm:%s172]
                %198 = vst [vmem:[%s180 + $0x20] sm:%s172] %v197
                %v199 = vld [vmem:[%s179 + $0x48] sm:%s172]
                %200 = vst [vmem:[%s180 + $0x24] sm:%s172] %v199
                %v201 = vld [vmem:[%s179 + $0x50] sm:%s172]
                %202 = vst [vmem:[%s180 + $0x28] sm:%s172] %v201
                %v203 = vld [vmem:[%s179 + $0x58] sm:%s172]
                %204 = vst [vmem:[%s180 + $0x2c] sm:%s172] %v203
                %v205 = vld [vmem:[%s179 + $0x60] sm:%s172]
                %206 = vst [vmem:[%s180 + $0x30] sm:%s172] %v205
                %v207 = vld [vmem:[%s179 + $0x68] sm:%s172]
                %208 = vst [vmem:[%s180 + $0x34] sm:%s172] %v207
                %v209 = vld [vmem:[%s179 + $0x70] sm:%s172]
                %210 = vst [vmem:[%s180 + $0x38] sm:%s172] %v209
                %v211 = vld [vmem:[%s179 + $0x78] sm:%s172]
                %212 = vst [vmem:[%s180 + $0x3c] sm:%s172] %v211
                %v213 = vld [vmem:[%s179 + $0x80] sm:%s172]
                %214 = vst [vmem:[%s180 + $0x40] sm:%s172] %v213
                %v215 = vld [vmem:[%s179 + $0x88] sm:%s172]
                %216 = vst [vmem:[%s180 + $0x44] sm:%s172] %v215
                %v217 = vld [vmem:[%s179 + $0x90] sm:%s172]
                %218 = vst [vmem:[%s180 + $0x48] sm:%s172] %v217
                %v219 = vld [vmem:[%s179 + $0x98] sm:%s172]
                %220 = vst [vmem:[%s180 + $0x4c] sm:%s172] %v219
                %v221 = vld [vmem:[%s179 + $0xa0] sm:%s172]
                %222 = vst [vmem:[%s180 + $0x50] sm:%s172] %v221
                %v223 = vld [vmem:[%s179 + $0xa8] sm:%s172]
                %224 = vst [vmem:[%s180 + $0x54] sm:%s172] %v223
                %v225 = vld [vmem:[%s179 + $0xb0] sm:%s172]
                %226 = vst [vmem:[%s180 + $0x58] sm:%s172] %v225
                %v227 = vld [vmem:[%s179 + $0xb8] sm:%s172]
                %228 = vst [vmem:[%s180 + $0x5c] sm:%s172] %v227
                %v229 = vld [vmem:[%s179 + $0xc0] sm:%s172]
                %230 = vst [vmem:[%s180 + $0x60] sm:%s172] %v229
                %v231 = vld [vmem:[%s179 + $0xc8] sm:%s172]
                %232 = vst [vmem:[%s180 + $0x64] sm:%s172] %v231
                %v233 = vld [vmem:[%s179 + $0xd0] sm:%s172]
                %234 = vst [vmem:[%s180 + $0x68] sm:%s172] %v233
                %v235 = vld [vmem:[%s179 + $0xd8] sm:%s172]
                %236 = vst [vmem:[%s180 + $0x6c] sm:%s172] %v235
                %v237 = vld [vmem:[%s179 + $0xe0] sm:%s172]
                %238 = vst [vmem:[%s180 + $0x70] sm:%s172] %v237
                %v239 = vld [vmem:[%s179 + $0xe8] sm:%s172]
                %240 = vst [vmem:[%s180 + $0x74] sm:%s172] %v239
                %v241 = vld [vmem:[%s179 + $0xf0] sm:%s172]
                %242 = vst [vmem:[%s180 + $0x78] sm:%s172] %v241
                %v243 = vld [vmem:[%s179 + $0xf8] sm:%s172]
                %244 = vst [vmem:[%s180 + $0x7c] sm:%s172] %v243
                %v245 = vld [vmem:[%s179 + $0x100] sm:%s172]
                %246 = vst [vmem:[%s180 + $0x80] sm:%s172] %v245
                %v247 = vld [vmem:[%s179 + $0x108] sm:%s172]
                %248 = vst [vmem:[%s180 + $0x84] sm:%s172] %v247
                %v249 = vld [vmem:[%s179 + $0x110] sm:%s172]
                %250 = vst [vmem:[%s180 + $0x88] sm:%s172] %v249
                %v251 = vld [vmem:[%s179 + $0x118] sm:%s172]
                %252 = vst [vmem:[%s180 + $0x8c] sm:%s172] %v251
                %v253 = vld [vmem:[%s179 + $0x120] sm:%s172]
                %254 = vst [vmem:[%s180 + $0x90] sm:%s172] %v253
                %v255 = vld [vmem:[%s179 + $0x128] sm:%s172]
                %256 = vst [vmem:[%s180 + $0x94] sm:%s172] %v255
                %v257 = vld [vmem:[%s179 + $0x130] sm:%s172]
                %258 = vst [vmem:[%s180 + $0x98] sm:%s172] %v257
                %v259 = vld [vmem:[%s179 + $0x138] sm:%s172]
                %260 = vst [vmem:[%s180 + $0x9c] sm:%s172] %v259
                %v261 = vld [vmem:[%s179 + $0x140] sm:%s172]
                %262 = vst [vmem:[%s180 + $0xa0] sm:%s172] %v261
                %v263 = vld [vmem:[%s179 + $0x148] sm:%s172]
                %264 = vst [vmem:[%s180 + $0xa4] sm:%s172] %v263
                %v265 = vld [vmem:[%s179 + $0x150] sm:%s172]
                %266 = vst [vmem:[%s180 + $0xa8] sm:%s172] %v265
                %v267 = vld [vmem:[%s179 + $0x158] sm:%s172]
                %268 = vst [vmem:[%s180 + $0xac] sm:%s172] %v267
                %v269 = vld [vmem:[%s179 + $0x160] sm:%s172]
                %270 = vst [vmem:[%s180 + $0xb0] sm:%s172] %v269
                %v271 = vld [vmem:[%s179 + $0x168] sm:%s172]
                %272 = vst [vmem:[%s180 + $0xb4] sm:%s172] %v271
                %v273 = vld [vmem:[%s179 + $0x170] sm:%s172]
                %274 = vst [vmem:[%s180 + $0xb8] sm:%s172] %v273
                %v275 = vld [vmem:[%s179 + $0x178] sm:%s172]
                %276 = vst [vmem:[%s180 + $0xbc] sm:%s172] %v275
                %v277 = vld [vmem:[%s179 + $0x180] sm:%s172]
                %278 = vst [vmem:[%s180 + $0xc0] sm:%s172] %v277
                %v279 = vld [vmem:[%s179 + $0x188] sm:%s172]
                %280 = vst [vmem:[%s180 + $0xc4] sm:%s172] %v279
                %v281 = vld [vmem:[%s179 + $0x190] sm:%s172]
                %282 = vst [vmem:[%s180 + $0xc8] sm:%s172] %v281
                %v283 = vld [vmem:[%s179 + $0x198] sm:%s172]
                %284 = vst [vmem:[%s180 + $0xcc] sm:%s172] %v283
                %v285 = vld [vmem:[%s179 + $0x1a0] sm:%s172]
                %286 = vst [vmem:[%s180 + $0xd0] sm:%s172] %v285
                %v287 = vld [vmem:[%s179 + $0x1a8] sm:%s172]
                %288 = vst [vmem:[%s180 + $0xd4] sm:%s172] %v287
                %v289 = vld [vmem:[%s179 + $0x1b0] sm:%s172]
                %290 = vst [vmem:[%s180 + $0xd8] sm:%s172] %v289
                %v291 = vld [vmem:[%s179 + $0x1b8] sm:%s172]
                %292 = vst [vmem:[%s180 + $0xdc] sm:%s172] %v291
                %v293 = vld [vmem:[%s179 + $0x1c0] sm:%s172]
                %294 = vst [vmem:[%s180 + $0xe0] sm:%s172] %v293
                %v295 = vld [vmem:[%s179 + $0x1c8] sm:%s172]
                %296 = vst [vmem:[%s180 + $0xe4] sm:%s172] %v295
                %v297 = vld [vmem:[%s179 + $0x1d0] sm:%s172]
                %298 = vst [vmem:[%s180 + $0xe8] sm:%s172] %v297
                %v299 = vld [vmem:[%s179 + $0x1d8] sm:%s172]
                %300 = vst [vmem:[%s180 + $0xec] sm:%s172] %v299
                %v301 = vld [vmem:[%s179 + $0x1e0] sm:%s172]
                %302 = vst [vmem:[%s180 + $0xf0] sm:%s172] %v301
                %v303 = vld [vmem:[%s179 + $0x1e8] sm:%s172]
                %304 = vst [vmem:[%s180 + $0xf4] sm:%s172] %v303
                %v305 = vld [vmem:[%s179 + $0x1f0] sm:%s172]
                %306 = vst [vmem:[%s180 + $0xf8] sm:%s172] %v305
                %v307 = vld [vmem:[%s179 + $0x1f8] sm:%s172]
                %308 = vst [vmem:[%s180 + $0xfc] sm:%s172] %v307
                %v309 = vld [vmem:[%s179 + $0x200] sm:%s172]
                %310 = vst [vmem:[%s180 + $0x100] sm:%s172] %v309
                %v311 = vld [vmem:[%s179 + $0x208] sm:%s172]
                %312 = vst [vmem:[%s180 + $0x104] sm:%s172] %v311
                %v313 = vld [vmem:[%s179 + $0x210] sm:%s172]
                %314 = vst [vmem:[%s180 + $0x108] sm:%s172] %v313
                %v315 = vld [vmem:[%s179 + $0x218] sm:%s172]
                %316 = vst [vmem:[%s180 + $0x10c] sm:%s172] %v315
                %v317 = vld [vmem:[%s179 + $0x220] sm:%s172]
                %318 = vst [vmem:[%s180 + $0x110] sm:%s172] %v317
                %v319 = vld [vmem:[%s179 + $0x228] sm:%s172]
                %320 = vst [vmem:[%s180 + $0x114] sm:%s172] %v319
                %v321 = vld [vmem:[%s179 + $0x230] sm:%s172]
                %322 = vst [vmem:[%s180 + $0x118] sm:%s172] %v321
                %v323 = vld [vmem:[%s179 + $0x238] sm:%s172]
                %324 = vst [vmem:[%s180 + $0x11c] sm:%s172] %v323
                %v325 = vld [vmem:[%s179 + $0x240] sm:%s172]
                %326 = vst [vmem:[%s180 + $0x120] sm:%s172] %v325
                %v327 = vld [vmem:[%s179 + $0x248] sm:%s172]
                %328 = vst [vmem:[%s180 + $0x124] sm:%s172] %v327
                %v329 = vld [vmem:[%s179 + $0x250] sm:%s172]
                %330 = vst [vmem:[%s180 + $0x128] sm:%s172] %v329
                %v331 = vld [vmem:[%s179 + $0x258] sm:%s172]
                %332 = vst [vmem:[%s180 + $0x12c] sm:%s172] %v331
                %v333 = vld [vmem:[%s179 + $0x260] sm:%s172]
                %334 = vst [vmem:[%s180 + $0x130] sm:%s172] %v333
                %v335 = vld [vmem:[%s179 + $0x268] sm:%s172]
                %336 = vst [vmem:[%s180 + $0x134] sm:%s172] %v335
                %v337 = vld [vmem:[%s179 + $0x270] sm:%s172]
                %338 = vst [vmem:[%s180 + $0x138] sm:%s172] %v337
                %v339 = vld [vmem:[%s179 + $0x278] sm:%s172]
                %340 = vst [vmem:[%s180 + $0x13c] sm:%s172] %v339
                %v341 = vld [vmem:[%s179 + $0x280] sm:%s172]
                %342 = vst [vmem:[%s180 + $0x140] sm:%s172] %v341
                %v343 = vld [vmem:[%s179 + $0x288] sm:%s172]
                %344 = vst [vmem:[%s180 + $0x144] sm:%s172] %v343
                %v345 = vld [vmem:[%s179 + $0x290] sm:%s172]
                %346 = vst [vmem:[%s180 + $0x148] sm:%s172] %v345
                %v347 = vld [vmem:[%s179 + $0x298] sm:%s172]
                %348 = vst [vmem:[%s180 + $0x14c] sm:%s172] %v347
                %v349 = vld [vmem:[%s179 + $0x2a0] sm:%s172]
                %350 = vst [vmem:[%s180 + $0x150] sm:%s172] %v349
                %v351 = vld [vmem:[%s179 + $0x2a8] sm:%s172]
                %352 = vst [vmem:[%s180 + $0x154] sm:%s172] %v351
                %v353 = vld [vmem:[%s179 + $0x2b0] sm:%s172]
                %354 = vst [vmem:[%s180 + $0x158] sm:%s172] %v353
                %v355 = vld [vmem:[%s179 + $0x2b8] sm:%s172]
                %356 = vst [vmem:[%s180 + $0x15c] sm:%s172] %v355
                %v357 = vld [vmem:[%s179 + $0x2c0] sm:%s172]
                %358 = vst [vmem:[%s180 + $0x160] sm:%s172] %v357
                %v359 = vld [vmem:[%s179 + $0x2c8] sm:%s172]
                %360 = vst [vmem:[%s180 + $0x164] sm:%s172] %v359
                %v361 = vld [vmem:[%s179 + $0x2d0] sm:%s172]
                %362 = vst [vmem:[%s180 + $0x168] sm:%s172] %v361
                %v363 = vld [vmem:[%s179 + $0x2d8] sm:%s172]
                %364 = vst [vmem:[%s180 + $0x16c] sm:%s172] %v363
                %v365 = vld [vmem:[%s179 + $0x2e0] sm:%s172]
                %366 = vst [vmem:[%s180 + $0x170] sm:%s172] %v365
                %v367 = vld [vmem:[%s179 + $0x2e8] sm:%s172]
                %368 = vst [vmem:[%s180 + $0x174] sm:%s172] %v367
                %v369 = vld [vmem:[%s179 + $0x2f0] sm:%s172]
                %370 = vst [vmem:[%s180 + $0x178] sm:%s172] %v369
                %v371 = vld [vmem:[%s179 + $0x2f8] sm:%s172]
                %372 = vst [vmem:[%s180 + $0x17c] sm:%s172] %v371
                %v373 = vld [vmem:[%s179 + $0x300] sm:%s172]
                %374 = vst [vmem:[%s180 + $0x180] sm:%s172] %v373
                %v375 = vld [vmem:[%s179 + $0x308] sm:%s172]
                %376 = vst [vmem:[%s180 + $0x184] sm:%s172] %v375
                %v377 = vld [vmem:[%s179 + $0x310] sm:%s172]
                %378 = vst [vmem:[%s180 + $0x188] sm:%s172] %v377
                %v379 = vld [vmem:[%s179 + $0x318] sm:%s172]
                %380 = vst [vmem:[%s180 + $0x18c] sm:%s172] %v379
                %v381 = vld [vmem:[%s179 + $0x320] sm:%s172]
                %382 = vst [vmem:[%s180 + $0x190] sm:%s172] %v381
                %v383 = vld [vmem:[%s179 + $0x328] sm:%s172]
                %384 = vst [vmem:[%s180 + $0x194] sm:%s172] %v383
                %v385 = vld [vmem:[%s179 + $0x330] sm:%s172]
                %386 = vst [vmem:[%s180 + $0x198] sm:%s172] %v385
                %v387 = vld [vmem:[%s179 + $0x338] sm:%s172]
                %388 = vst [vmem:[%s180 + $0x19c] sm:%s172] %v387
                %v389 = vld [vmem:[%s179 + $0x340] sm:%s172]
                %390 = vst [vmem:[%s180 + $0x1a0] sm:%s172] %v389
                %v391 = vld [vmem:[%s179 + $0x348] sm:%s172]
                %392 = vst [vmem:[%s180 + $0x1a4] sm:%s172] %v391
                %v393 = vld [vmem:[%s179 + $0x350] sm:%s172]
                %394 = vst [vmem:[%s180 + $0x1a8] sm:%s172] %v393
                %v395 = vld [vmem:[%s179 + $0x358] sm:%s172]
                %396 = vst [vmem:[%s180 + $0x1ac] sm:%s172] %v395
                %v397 = vld [vmem:[%s179 + $0x360] sm:%s172]
                %398 = vst [vmem:[%s180 + $0x1b0] sm:%s172] %v397
                %v399 = vld [vmem:[%s179 + $0x368] sm:%s172]
                %400 = vst [vmem:[%s180 + $0x1b4] sm:%s172] %v399
                %v401 = vld [vmem:[%s179 + $0x370] sm:%s172]
                %402 = vst [vmem:[%s180 + $0x1b8] sm:%s172] %v401
                %v403 = vld [vmem:[%s179 + $0x378] sm:%s172]
                %404 = vst [vmem:[%s180 + $0x1bc] sm:%s172] %v403
                %v405 = vld [vmem:[%s179 + $0x380] sm:%s172]
                %406 = vst [vmem:[%s180 + $0x1c0] sm:%s172] %v405
                %v407 = vld [vmem:[%s179 + $0x388] sm:%s172]
                %408 = vst [vmem:[%s180 + $0x1c4] sm:%s172] %v407
                %v409 = vld [vmem:[%s179 + $0x390] sm:%s172]
                %410 = vst [vmem:[%s180 + $0x1c8] sm:%s172] %v409
                %v411 = vld [vmem:[%s179 + $0x398] sm:%s172]
                %412 = vst [vmem:[%s180 + $0x1cc] sm:%s172] %v411
                %v413 = vld [vmem:[%s179 + $0x3a0] sm:%s172]
                %414 = vst [vmem:[%s180 + $0x1d0] sm:%s172] %v413
                %v415 = vld [vmem:[%s179 + $0x3a8] sm:%s172]
                %416 = vst [vmem:[%s180 + $0x1d4] sm:%s172] %v415
                %v417 = vld [vmem:[%s179 + $0x3b0] sm:%s172]
                %418 = vst [vmem:[%s180 + $0x1d8] sm:%s172] %v417
                %v419 = vld [vmem:[%s179 + $0x3b8] sm:%s172]
                %420 = vst [vmem:[%s180 + $0x1dc] sm:%s172] %v419
                %v421 = vld [vmem:[%s179 + $0x3c0] sm:%s172]
                %422 = vst [vmem:[%s180 + $0x1e0] sm:%s172] %v421
                %v423 = vld [vmem:[%s179 + $0x3c8] sm:%s172]
                %424 = vst [vmem:[%s180 + $0x1e4] sm:%s172] %v423
                %v425 = vld [vmem:[%s179 + $0x3d0] sm:%s172]
                %426 = vst [vmem:[%s180 + $0x1e8] sm:%s172] %v425
                %v427 = vld [vmem:[%s179 + $0x3d8] sm:%s172]
                %428 = vst [vmem:[%s180 + $0x1ec] sm:%s172] %v427
                %v429 = vld [vmem:[%s179 + $0x3e0] sm:%s172]
                %430 = vst [vmem:[%s180 + $0x1f0] sm:%s172] %v429
                %v431 = vld [vmem:[%s179 + $0x3e8] sm:%s172]
                %432 = vst [vmem:[%s180 + $0x1f4] sm:%s172] %v431
                %v433 = vld [vmem:[%s179 + $0x3f0] sm:%s172]
                %434 = vst [vmem:[%s180 + $0x1f8] sm:%s172] %v433
                %v435 = vld [vmem:[%s179 + $0x3f8] sm:%s172]
                %436 = vst [vmem:[%s180 + $0x1fc] sm:%s172] %v435
                %v437 = vld [vmem:[%s179 + $0x400] sm:%s172]
                %438 = vst [vmem:[%s180 + $0x200] sm:%s172] %v437
                %v439 = vld [vmem:[%s179 + $0x408] sm:%s172]
                %440 = vst [vmem:[%s180 + $0x204] sm:%s172] %v439
                %v441 = vld [vmem:[%s179 + $0x410] sm:%s172]
                %442 = vst [vmem:[%s180 + $0x208] sm:%s172] %v441
                %v443 = vld [vmem:[%s179 + $0x418] sm:%s172]
                %444 = vst [vmem:[%s180 + $0x20c] sm:%s172] %v443
                %v445 = vld [vmem:[%s179 + $0x420] sm:%s172]
                %446 = vst [vmem:[%s180 + $0x210] sm:%s172] %v445
                %v447 = vld [vmem:[%s179 + $0x428] sm:%s172]
                %448 = vst [vmem:[%s180 + $0x214] sm:%s172] %v447
                %v449 = vld [vmem:[%s179 + $0x430] sm:%s172]
                %450 = vst [vmem:[%s180 + $0x218] sm:%s172] %v449
                %v451 = vld [vmem:[%s179 + $0x438] sm:%s172]
                %452 = vst [vmem:[%s180 + $0x21c] sm:%s172] %v451
                %v453 = vld [vmem:[%s179 + $0x440] sm:%s172]
                %454 = vst [vmem:[%s180 + $0x220] sm:%s172] %v453
                %v455 = vld [vmem:[%s179 + $0x448] sm:%s172]
                %456 = vst [vmem:[%s180 + $0x224] sm:%s172] %v455
                %v457 = vld [vmem:[%s179 + $0x450] sm:%s172]
                %458 = vst [vmem:[%s180 + $0x228] sm:%s172] %v457
                %v459 = vld [vmem:[%s179 + $0x458] sm:%s172]
                %460 = vst [vmem:[%s180 + $0x22c] sm:%s172] %v459
                %v461 = vld [vmem:[%s179 + $0x460] sm:%s172]
                %462 = vst [vmem:[%s180 + $0x230] sm:%s172] %v461
                %v463 = vld [vmem:[%s179 + $0x468] sm:%s172]
                %464 = vst [vmem:[%s180 + $0x234] sm:%s172] %v463
                %v465 = vld [vmem:[%s179 + $0x470] sm:%s172]
                %466 = vst [vmem:[%s180 + $0x238] sm:%s172] %v465
                %v467 = vld [vmem:[%s179 + $0x478] sm:%s172]
                %468 = vst [vmem:[%s180 + $0x23c] sm:%s172] %v467
              $region41: #{_lambda_.8} parent=35 // loop_footer
                %s178 = sadd.s32 1, %s174
              $region42: #{_lambda_.8} parent=35 // loop_footer_branch
                %173 = sbr.rel target = $region38
              $region43: #{_lambda_.8} parent=35 // loop_exit
                _
            $region36: #{_lambda_.8} parent=27 // pred_fallthru
              _
          $region28: #{_lambda_.8} parent=23 // pred_fallthru
            _
          %777 = vnop
        $region24: #{_lambda_.8} parent=19 // pred_fallthru
          _
        // Predicated region
        $region62: #{_lambda_.8} parent=19 // pred_check
          %p778 = pneg %p93
        $region63: #{_lambda_.8} parent=19 // pred_check_branch
          %780 = sbr.rel (%p778) target = $region65
        $region64: #{_lambda_.8} parent=19 // pred_region
          %p781 = scmp.lt.s32.totalorder %s17, 1
          %s782 = scalar_select %p781, %s17, 1
          %s783 = scalar_lea.vmem %s2, %s782
        $region65: #{_lambda_.8} parent=19 // pred_fallthru
          _
      $region20: #{_lambda_.8} parent=5 // pred_fallthru
        _
      %p784 = scmp.le.s32.totalorder 1, %s9
      %p785 = scmp.lt.s32.totalorder %s9, 3
      %p786 = pnand %p784, %p785
      %p787 = pneg %p786
      // Predicated region
      $region66: #{_lambda_.8} parent=5 // pred_check
        _
      $region67: #{_lambda_.8} parent=5 // pred_check_branch
        %789 = sbr.rel (%p786) target = $region69
      $region68: #{_lambda_.8} parent=5 // pred_region
        %s790 = ssub.s32 %s9, 1
        %s791 = sand.u32 %s60, 1
        %s792 = sand.u32 %s60, 1
        %s793 = smul.addr %s792, 576
        %s794 = scalar_lea.vmem [#allocation2], %s793
        // Predicated region
        $region70: #{_lambda_.8} parent=68 // pred_check
          %p795 = pneg %p73
        $region71: #{_lambda_.8} parent=68 // pred_check_branch
          %797 = sbr.rel (%p795) target = $region73
        $region72: #{_lambda_.8} parent=68 // pred_region
          _
        $region73: #{_lambda_.8} parent=68 // pred_fallthru
          _
        %s798 = smul.u32 7, %s18
        %p799 = scmp.lt.s32.totalorder %s798, 6
        %s800 = scalar_select %p799, %s798, 6
        %s801 = smul.addr %s800, 9
        %s802 = smul.addr %s801, 4
        %s803 = scalar_lea.vmem %s0, %s802
        %p804 = pneg %p47
        %p805 = pneg %p44
        %s806 = sand.u32 %s60, 1
        %s807 = sand.u32 %s60, 1
        %s808 = smul.addr %s807, 576
        %s809 = scalar_lea.vmem [#allocation2], %s808
        %p810 = pneg %p73
        %p811 = pneg %p70
        %p812 = scmp.lt.s32.totalorder %s19, 1
        %s813 = scalar_select %p812, %s19, 1
        %s814 = scalar_lea.vmem %s2, %s813
        %p815 = pneg %p99
        %p816 = pneg %p96
        %p817 = pneg %p127
        %p818 = pneg %p124
        %s819 = sand.u32 %s114, 1
        %s820 = sand.u32 %s114, 1
        %s821 = smul.addr %s820, 56
        %s822 = scalar_lea.vmem [#allocation3], %s821
        %s823 = smul.u32 7, %s18
        %p824 = scmp.lt.s32.totalorder %s823, 6
        %s825 = scalar_select %p824, %s823, 6
        %s826 = smul.addr %s825, 9
        %s827 = smul.addr %s826, 4
        %s828 = scalar_lea.vmem %s0, %s827
        %s829 = smul.u32 7, %s18
        %p830 = scmp.lt.s32.totalorder %s19, 1
        %s831 = scalar_select %p830, %s19, 1
        %s832 = scalar_lea.vmem %s2, %s831
        %s833 = smul.u32 7, %s18
        %v835 = vld [vmem:[%s828] sm:$0xff]
        %v836 = vld [vmem:[%s828 + $0x8] sm:$0xff]
        %v837 = vld [vmem:[%s828 + $0x10] sm:$0xff]
        %v838 = vld [vmem:[%s828 + $0x18] sm:$0xff]
        %v839 = vld [vmem:[%s828 + $0x20] sm:$0xf]
        %v840 = vld [vmem:[%s828 + $0x24] sm:$0xff]
        %v841 = vld [vmem:[%s828 + $0x2c] sm:$0xff]
        %v842 = vld [vmem:[%s828 + $0x34] sm:$0xff]
        %v843 = vld [vmem:[%s828 + $0x3c] sm:$0xff]
        %v844 = vld [vmem:[%s828 + $0x44] sm:$0xf]
        %v845 = vld [vmem:[%s828 + $0x48] sm:$0xff]
        %v846 = vld [vmem:[%s828 + $0x50] sm:$0xff]
        %v847 = vld [vmem:[%s828 + $0x58] sm:$0xff]
        %v848 = vld [vmem:[%s828 + $0x60] sm:$0xff]
        %v849 = vld [vmem:[%s828 + $0x68] sm:$0xf]
        %v850 = vld [vmem:[%s828 + $0x6c] sm:$0xff]
        %v851 = vld [vmem:[%s828 + $0x74] sm:$0xff]
        %v852 = vld [vmem:[%s828 + $0x7c] sm:$0xff]
        %v853 = vld [vmem:[%s828 + $0x84] sm:$0xff]
        %v854 = vld [vmem:[%s828 + $0x8c] sm:$0xf]
        %v855 = vld [vmem:[%s828 + $0x90] sm:$0xff]
        %v856 = vld [vmem:[%s828 + $0x98] sm:$0xff]
        %v857 = vld [vmem:[%s828 + $0xa0] sm:$0xff]
        %v858 = vld [vmem:[%s828 + $0xa8] sm:$0xff]
        %v859 = vld [vmem:[%s828 + $0xb0] sm:$0xf]
        %v860 = vld [vmem:[%s828 + $0xb4] sm:$0xff]
        %v861 = vld [vmem:[%s828 + $0xbc] sm:$0xff]
        %v862 = vld [vmem:[%s828 + $0xc4] sm:$0xff]
        %v863 = vld [vmem:[%s828 + $0xcc] sm:$0xff]
        %v864 = vld [vmem:[%s828 + $0xd4] sm:$0xf]
        %v865 = vld [vmem:[%s828 + $0xd8] sm:$0xff]
        %v866 = vld [vmem:[%s828 + $0xe0] sm:$0xff]
        %v867 = vld [vmem:[%s828 + $0xe8] sm:$0xff]
        %v868 = vld [vmem:[%s828 + $0xf0] sm:$0xff]
        %v869 = vld [vmem:[%s828 + $0xf8] sm:$0xf]
        %v870 = vld [vmem:[%s794] sm:$0xf]
        %v871 = vld [vmem:[%s794 + $0x4] sm:$0xf]
        %v872 = vld [vmem:[%s794 + $0x8] sm:$0xf]
        %v873 = vld [vmem:[%s794 + $0xc] sm:$0xf]
        %v874 = vld [vmem:[%s794 + $0x10] sm:$0xf]
        %v875 = vld [vmem:[%s794 + $0x14] sm:$0xf]
        %v876 = vld [vmem:[%s794 + $0x18] sm:$0xf]
        %v877 = vld [vmem:[%s794 + $0x1c] sm:$0xf]
        %v878 = vld [vmem:[%s794 + $0x20] sm:$0xf]
        %v879 = vld [vmem:[%s794 + $0x24] sm:$0xf]
        %v880 = vld [vmem:[%s794 + $0x28] sm:$0xf]
        %v881 = vld [vmem:[%s794 + $0x2c] sm:$0xf]
        %v882 = vld [vmem:[%s794 + $0x30] sm:$0xf]
        %v883 = vld [vmem:[%s794 + $0x34] sm:$0xf]
        %v884 = vld [vmem:[%s794 + $0x38] sm:$0xf]
        %v885 = vld [vmem:[%s794 + $0x3c] sm:$0xf]
        %v886 = vld [vmem:[%s794 + $0x40] sm:$0xf]
        %v887 = vld [vmem:[%s794 + $0x44] sm:$0xf]
        %v888 = vld [vmem:[%s794 + $0x48] sm:$0xf]
        %v889 = vld [vmem:[%s794 + $0x4c] sm:$0xf]
        %v890 = vld [vmem:[%s794 + $0x50] sm:$0xf]
        %v891 = vld [vmem:[%s794 + $0x54] sm:$0xf]
        %v892 = vld [vmem:[%s794 + $0x58] sm:$0xf]
        %v893 = vld [vmem:[%s794 + $0x5c] sm:$0xf]
        %v894 = vld [vmem:[%s794 + $0x60] sm:$0xf]
        %v895 = vld [vmem:[%s794 + $0x64] sm:$0xf]
        %v896 = vld [vmem:[%s794 + $0x68] sm:$0xf]
        %v897 = vld [vmem:[%s794 + $0x6c] sm:$0xf]
        %v898 = vld [vmem:[%s794 + $0x70] sm:$0xf]
        %v899 = vld [vmem:[%s794 + $0x74] sm:$0xf]
        %v900 = vld [vmem:[%s794 + $0x78] sm:$0xf]
        %v901 = vld [vmem:[%s794 + $0x7c] sm:$0xf]
        %v902 = vld [vmem:[%s794 + $0x80] sm:$0xf]
        %v903 = vld [vmem:[%s794 + $0x84] sm:$0xf]
        %v904 = vld [vmem:[%s794 + $0x88] sm:$0xf]
        %v905 = vld [vmem:[%s794 + $0x8c] sm:$0xf]
        %v906 = vld [vmem:[%s794 + $0x90] sm:$0xf]
        %v907 = vld [vmem:[%s794 + $0x94] sm:$0xf]
        %v908 = vld [vmem:[%s794 + $0x98] sm:$0xf]
        %v909 = vld [vmem:[%s794 + $0x9c] sm:$0xf]
        %v910 = vld [vmem:[%s794 + $0xa0] sm:$0xf]
        %v911 = vld [vmem:[%s794 + $0xa4] sm:$0xf]
        %v912 = vld [vmem:[%s794 + $0xa8] sm:$0xf]
        %v913 = vld [vmem:[%s794 + $0xac] sm:$0xf]
        %v914 = vld [vmem:[%s794 + $0xb0] sm:$0xf]
        %v915 = vld [vmem:[%s794 + $0xb4] sm:$0xf]
        %v916 = vld [vmem:[%s794 + $0xb8] sm:$0xf]
        %v917 = vld [vmem:[%s794 + $0xbc] sm:$0xf]
        %v918 = vld [vmem:[%s794 + $0xc0] sm:$0xf]
        %v919 = vld [vmem:[%s794 + $0xc4] sm:$0xf]
        %v920 = vld [vmem:[%s794 + $0xc8] sm:$0xf]
        %v921 = vld [vmem:[%s794 + $0xcc] sm:$0xf]
        %v922 = vld [vmem:[%s794 + $0xd0] sm:$0xf]
        %v923 = vld [vmem:[%s794 + $0xd4] sm:$0xf]
        %v924 = vld [vmem:[%s794 + $0xd8] sm:$0xf]
        %v925 = vld [vmem:[%s794 + $0xdc] sm:$0xf]
        %v926 = vld [vmem:[%s794 + $0xe0] sm:$0xf]
        %v927 = vld [vmem:[%s794 + $0xe4] sm:$0xf]
        %v928 = vld [vmem:[%s794 + $0xe8] sm:$0xf]
        %v929 = vld [vmem:[%s794 + $0xec] sm:$0xf]
        %v930 = vld [vmem:[%s794 + $0xf0] sm:$0xf]
        %v931 = vld [vmem:[%s794 + $0xf4] sm:$0xf]
        %v932 = vld [vmem:[%s794 + $0xf8] sm:$0xf]
        %v933 = vld [vmem:[%s794 + $0xfc] sm:$0xf]
        %v934 = vld [vmem:[%s794 + $0x100] sm:$0xf]
        %v935 = vld [vmem:[%s794 + $0x104] sm:$0xf]
        %v936 = vld [vmem:[%s794 + $0x108] sm:$0xf]
        %v937 = vld [vmem:[%s794 + $0x10c] sm:$0xf]
        %v938 = vld [vmem:[%s794 + $0x110] sm:$0xf]
        %v939 = vld [vmem:[%s794 + $0x114] sm:$0xf]
        %v940 = vld [vmem:[%s794 + $0x118] sm:$0xf]
        %v941 = vld [vmem:[%s794 + $0x11c] sm:$0xf]
        %v942 = vld [vmem:[%s794 + $0x120] sm:$0xf]
        %v943 = vld [vmem:[%s794 + $0x124] sm:$0xf]
        %v944 = vld [vmem:[%s794 + $0x128] sm:$0xf]
        %v945 = vld [vmem:[%s794 + $0x12c] sm:$0xf]
        %v946 = vld [vmem:[%s794 + $0x130] sm:$0xf]
        %v947 = vld [vmem:[%s794 + $0x134] sm:$0xf]
        %v948 = vld [vmem:[%s794 + $0x138] sm:$0xf]
        %v949 = vld [vmem:[%s794 + $0x13c] sm:$0xf]
        %v950 = vld [vmem:[%s794 + $0x140] sm:$0xf]
        %v951 = vld [vmem:[%s794 + $0x144] sm:$0xf]
        %v952 = vld [vmem:[%s794 + $0x148] sm:$0xf]
        %v953 = vld [vmem:[%s794 + $0x14c] sm:$0xf]
        %v954 = vld [vmem:[%s794 + $0x150] sm:$0xf]
        %v955 = vld [vmem:[%s794 + $0x154] sm:$0xf]
        %v956 = vld [vmem:[%s794 + $0x158] sm:$0xf]
        %v957 = vld [vmem:[%s794 + $0x15c] sm:$0xf]
        %v958 = vld [vmem:[%s794 + $0x160] sm:$0xf]
        %v959 = vld [vmem:[%s794 + $0x164] sm:$0xf]
        %v960 = vld [vmem:[%s794 + $0x168] sm:$0xf]
        %v961 = vld [vmem:[%s794 + $0x16c] sm:$0xf]
        %v962 = vld [vmem:[%s794 + $0x170] sm:$0xf]
        %v963 = vld [vmem:[%s794 + $0x174] sm:$0xf]
        %v964 = vld [vmem:[%s794 + $0x178] sm:$0xf]
        %v965 = vld [vmem:[%s794 + $0x17c] sm:$0xf]
        %v966 = vld [vmem:[%s794 + $0x180] sm:$0xf]
        %v967 = vld [vmem:[%s794 + $0x184] sm:$0xf]
        %v968 = vld [vmem:[%s794 + $0x188] sm:$0xf]
        %v969 = vld [vmem:[%s794 + $0x18c] sm:$0xf]
        %v970 = vld [vmem:[%s794 + $0x190] sm:$0xf]
        %v971 = vld [vmem:[%s794 + $0x194] sm:$0xf]
        %v972 = vld [vmem:[%s794 + $0x198] sm:$0xf]
        %v973 = vld [vmem:[%s794 + $0x19c] sm:$0xf]
        %v974 = vld [vmem:[%s794 + $0x1a0] sm:$0xf]
        %v975 = vld [vmem:[%s794 + $0x1a4] sm:$0xf]
        %v976 = vld [vmem:[%s794 + $0x1a8] sm:$0xf]
        %v977 = vld [vmem:[%s794 + $0x1ac] sm:$0xf]
        %v978 = vld [vmem:[%s794 + $0x1b0] sm:$0xf]
        %v979 = vld [vmem:[%s794 + $0x1b4] sm:$0xf]
        %v980 = vld [vmem:[%s794 + $0x1b8] sm:$0xf]
        %v981 = vld [vmem:[%s794 + $0x1bc] sm:$0xf]
        %v982 = vld [vmem:[%s794 + $0x1c0] sm:$0xf]
        %v983 = vld [vmem:[%s794 + $0x1c4] sm:$0xf]
        %v984 = vld [vmem:[%s794 + $0x1c8] sm:$0xf]
        %v985 = vld [vmem:[%s794 + $0x1cc] sm:$0xf]
        %v986 = vld [vmem:[%s794 + $0x1d0] sm:$0xf]
        %v987 = vld [vmem:[%s794 + $0x1d4] sm:$0xf]
        %v988 = vld [vmem:[%s794 + $0x1d8] sm:$0xf]
        %v989 = vld [vmem:[%s794 + $0x1dc] sm:$0xf]
        %v990 = vld [vmem:[%s794 + $0x1e0] sm:$0xf]
        %v991 = vld [vmem:[%s794 + $0x1e4] sm:$0xf]
        %v992 = vld [vmem:[%s794 + $0x1e8] sm:$0xf]
        %v993 = vld [vmem:[%s794 + $0x1ec] sm:$0xf]
        %v994 = vld [vmem:[%s794 + $0x1f0] sm:$0xf]
        %v995 = vld [vmem:[%s794 + $0x1f4] sm:$0xf]
        %v996 = vld [vmem:[%s794 + $0x1f8] sm:$0xf]
        %v997 = vld [vmem:[%s794 + $0x1fc] sm:$0xf]
        %v998 = vld [vmem:[%s794 + $0x200] sm:$0xf]
        %v999 = vld [vmem:[%s794 + $0x204] sm:$0xf]
        %v1000 = vld [vmem:[%s794 + $0x208] sm:$0xf]
        %v1001 = vld [vmem:[%s794 + $0x20c] sm:$0xf]
        %v1002 = vld [vmem:[%s794 + $0x210] sm:$0xf]
        %v1003 = vld [vmem:[%s794 + $0x214] sm:$0xf]
        %v1004 = vld [vmem:[%s794 + $0x218] sm:$0xf]
        %v1005 = vld [vmem:[%s794 + $0x21c] sm:$0xf]
        %v1006 = vld [vmem:[%s794 + $0x220] sm:$0xf]
        %v1007 = vld [vmem:[%s794 + $0x224] sm:$0xf]
        %v1008 = vld [vmem:[%s794 + $0x228] sm:$0xf]
        %v1009 = vld [vmem:[%s794 + $0x22c] sm:$0xf]
        %v1010 = vld [vmem:[%s794 + $0x230] sm:$0xf]
        %v1011 = vld [vmem:[%s794 + $0x234] sm:$0xf]
        %v1012 = vld [vmem:[%s794 + $0x238] sm:$0xf]
        %v1013 = vld [vmem:[%s794 + $0x23c] sm:$0xf]
        %v1014 = vld [vmem:[%s832] sm:$0x1]
        %v1016 = vlaneseq
        %v1017 = vshrl.u32 %v1016, 7
        %v1018 = vsub.s32 0, %v1017
        %v1019 = vrot.slane %v1014, %v1018
        %v1056 = vunpack.c.l.b16 %v835
        %v1057 = vunpack.c.h.b16 %v835
        %v1058 = vunpack.c.l.b16 %v836
        %v1059 = vunpack.c.h.b16 %v836
        %v1060 = vunpack.c.l.b16 %v837
        %v1061 = vunpack.c.h.b16 %v837
        %v1062 = vunpack.c.l.b16 %v838
        %v1063 = vunpack.c.h.b16 %v838
        %v1064 = vunpack.c.l.b16 %v839
        %v1065 = vunpack.c.l.b16 %v840
        %v1066 = vunpack.c.h.b16 %v840
        %v1067 = vunpack.c.l.b16 %v841
        %v1068 = vunpack.c.h.b16 %v841
        %v1069 = vunpack.c.l.b16 %v842
        %v1070 = vunpack.c.h.b16 %v842
        %v1071 = vunpack.c.l.b16 %v843
        %v1072 = vunpack.c.h.b16 %v843
        %v1073 = vunpack.c.l.b16 %v844
        %v1074 = vunpack.c.l.b16 %v845
        %v1075 = vunpack.c.h.b16 %v845
        %v1076 = vunpack.c.l.b16 %v846
        %v1077 = vunpack.c.h.b16 %v846
        %v1078 = vunpack.c.l.b16 %v847
        %v1079 = vunpack.c.h.b16 %v847
        %v1080 = vunpack.c.l.b16 %v848
        %v1081 = vunpack.c.h.b16 %v848
        %v1082 = vunpack.c.l.b16 %v849
        %v1083 = vunpack.c.l.b16 %v850
        %v1084 = vunpack.c.h.b16 %v850
        %v1085 = vunpack.c.l.b16 %v851
        %v1086 = vunpack.c.h.b16 %v851
        %v1087 = vunpack.c.l.b16 %v852
        %v1088 = vunpack.c.h.b16 %v852
        %v1089 = vunpack.c.l.b16 %v853
        %v1090 = vunpack.c.h.b16 %v853
        %v1091 = vunpack.c.l.b16 %v854
        %v1092 = vunpack.c.l.b16 %v855
        %v1093 = vunpack.c.h.b16 %v855
        %v1094 = vunpack.c.l.b16 %v856
        %v1095 = vunpack.c.h.b16 %v856
        %v1096 = vunpack.c.l.b16 %v857
        %v1097 = vunpack.c.h.b16 %v857
        %v1098 = vunpack.c.l.b16 %v858
        %v1099 = vunpack.c.h.b16 %v858
        %v1100 = vunpack.c.l.b16 %v859
        %v1101 = vunpack.c.l.b16 %v860
        %v1102 = vunpack.c.h.b16 %v860
        %v1103 = vunpack.c.l.b16 %v861
        %v1104 = vunpack.c.h.b16 %v861
        %v1105 = vunpack.c.l.b16 %v862
        %v1106 = vunpack.c.h.b16 %v862
        %v1107 = vunpack.c.l.b16 %v863
        %v1108 = vunpack.c.h.b16 %v863
        %v1109 = vunpack.c.l.b16 %v864
        %v1110 = vunpack.c.l.b16 %v865
        %v1111 = vunpack.c.h.b16 %v865
        %v1112 = vunpack.c.l.b16 %v866
        %v1113 = vunpack.c.h.b16 %v866
        %v1114 = vunpack.c.l.b16 %v867
        %v1115 = vunpack.c.h.b16 %v867
        %v1116 = vunpack.c.l.b16 %v868
        %v1117 = vunpack.c.h.b16 %v868
        %v1118 = vunpack.c.l.b16 %v869
        %v1119 = vpack.c.b16 %v1065, %v1056
        %v1120 = vpack.c.b16 %v1066, %v1057
        %v1121 = vpack.c.b16 %v1067, %v1058
        %v1122 = vpack.c.b16 %v1068, %v1059
        %v1123 = vpack.c.b16 %v1069, %v1060
        %v1124 = vpack.c.b16 %v1070, %v1061
        %v1125 = vpack.c.b16 %v1071, %v1062
        %v1126 = vpack.c.b16 %v1072, %v1063
        %v1127 = vpack.c.b16 %v1073, %v1064
        %v1128 = vpack.c.b16 %v1083, %v1074
        %v1129 = vpack.c.b16 %v1084, %v1075
        %v1130 = vpack.c.b16 %v1085, %v1076
        %v1131 = vpack.c.b16 %v1086, %v1077
        %v1132 = vpack.c.b16 %v1087, %v1078
        %v1133 = vpack.c.b16 %v1088, %v1079
        %v1134 = vpack.c.b16 %v1089, %v1080
        %v1135 = vpack.c.b16 %v1090, %v1081
        %v1136 = vpack.c.b16 %v1091, %v1082
        %v1137 = vpack.c.b16 %v1101, %v1092
        %v1138 = vpack.c.b16 %v1102, %v1093
        %v1139 = vpack.c.b16 %v1103, %v1094
        %v1140 = vpack.c.b16 %v1104, %v1095
        %v1141 = vpack.c.b16 %v1105, %v1096
        %v1142 = vpack.c.b16 %v1106, %v1097
        %v1143 = vpack.c.b16 %v1107, %v1098
        %v1144 = vpack.c.b16 %v1108, %v1099
        %v1145 = vpack.c.b16 %v1109, %v1100
        %v1146 = vpack.c.b16 %v1110, %v1110
        %v1147 = vpack.c.b16 %v1111, %v1111
        %v1148 = vpack.c.b16 %v1112, %v1112
        %v1149 = vpack.c.b16 %v1113, %v1113
        %v1150 = vpack.c.b16 %v1114, %v1114
        %v1151 = vpack.c.b16 %v1115, %v1115
        %v1152 = vpack.c.b16 %v1116, %v1116
        %v1153 = vpack.c.b16 %v1117, %v1117
        %v1154 = vpack.c.b16 %v1118, %v1118
        %v1335 = vunpack.c.l.b16 %v870
        %v1336 = vunpack.c.l.b16 %v871
        %v1337 = vunpack.c.l.b16 %v872
        %v1338 = vunpack.c.l.b16 %v873
        %v1339 = vunpack.c.l.b16 %v874
        %v1340 = vunpack.c.l.b16 %v875
        %v1341 = vunpack.c.l.b16 %v876
        %v1342 = vunpack.c.l.b16 %v877
        %v1343 = vunpack.c.l.b16 %v878
        %v1344 = vunpack.c.l.b16 %v879
        %v1345 = vunpack.c.l.b16 %v880
        %v1346 = vunpack.c.l.b16 %v881
        %v1347 = vunpack.c.l.b16 %v882
        %v1348 = vunpack.c.l.b16 %v883
        %v1349 = vunpack.c.l.b16 %v884
        %v1350 = vunpack.c.l.b16 %v885
        %v1351 = vunpack.c.l.b16 %v886
        %v1352 = vunpack.c.l.b16 %v887
        %v1353 = vunpack.c.l.b16 %v888
        %v1354 = vunpack.c.l.b16 %v889
        %v1355 = vunpack.c.l.b16 %v890
        %v1356 = vunpack.c.l.b16 %v891
        %v1357 = vunpack.c.l.b16 %v892
        %v1358 = vunpack.c.l.b16 %v893
        %v1359 = vunpack.c.l.b16 %v894
        %v1360 = vunpack.c.l.b16 %v895
        %v1361 = vunpack.c.l.b16 %v896
        %v1362 = vunpack.c.l.b16 %v897
        %v1363 = vunpack.c.l.b16 %v898
        %v1364 = vunpack.c.l.b16 %v899
        %v1365 = vunpack.c.l.b16 %v900
        %v1366 = vunpack.c.l.b16 %v901
        %v1367 = vunpack.c.l.b16 %v902
        %v1368 = vunpack.c.l.b16 %v903
        %v1369 = vunpack.c.l.b16 %v904
        %v1370 = vunpack.c.l.b16 %v905
        %v1371 = vunpack.c.l.b16 %v906
        %v1372 = vunpack.c.l.b16 %v907
        %v1373 = vunpack.c.l.b16 %v908
        %v1374 = vunpack.c.l.b16 %v909
        %v1375 = vunpack.c.l.b16 %v910
        %v1376 = vunpack.c.l.b16 %v911
        %v1377 = vunpack.c.l.b16 %v912
        %v1378 = vunpack.c.l.b16 %v913
        %v1379 = vunpack.c.l.b16 %v914
        %v1380 = vunpack.c.l.b16 %v915
        %v1381 = vunpack.c.l.b16 %v916
        %v1382 = vunpack.c.l.b16 %v917
        %v1383 = vunpack.c.l.b16 %v918
        %v1384 = vunpack.c.l.b16 %v919
        %v1385 = vunpack.c.l.b16 %v920
        %v1386 = vunpack.c.l.b16 %v921
        %v1387 = vunpack.c.l.b16 %v922
        %v1388 = vunpack.c.l.b16 %v923
        %v1389 = vunpack.c.l.b16 %v924
        %v1390 = vunpack.c.l.b16 %v925
        %v1391 = vunpack.c.l.b16 %v926
        %v1392 = vunpack.c.l.b16 %v927
        %v1393 = vunpack.c.l.b16 %v928
        %v1394 = vunpack.c.l.b16 %v929
        %v1395 = vunpack.c.l.b16 %v930
        %v1396 = vunpack.c.l.b16 %v931
        %v1397 = vunpack.c.l.b16 %v932
        %v1398 = vunpack.c.l.b16 %v933
        %v1399 = vunpack.c.l.b16 %v934
        %v1400 = vunpack.c.l.b16 %v935
        %v1401 = vunpack.c.l.b16 %v936
        %v1402 = vunpack.c.l.b16 %v937
        %v1403 = vunpack.c.l.b16 %v938
        %v1404 = vunpack.c.l.b16 %v939
        %v1405 = vunpack.c.l.b16 %v940
        %v1406 = vunpack.c.l.b16 %v941
        %v1407 = vunpack.c.l.b16 %v942
        %v1408 = vunpack.c.l.b16 %v943
        %v1409 = vunpack.c.l.b16 %v944
        %v1410 = vunpack.c.l.b16 %v945
        %v1411 = vunpack.c.l.b16 %v946
        %v1412 = vunpack.c.l.b16 %v947
        %v1413 = vunpack.c.l.b16 %v948
        %v1414 = vunpack.c.l.b16 %v949
        %v1415 = vunpack.c.l.b16 %v950
        %v1416 = vunpack.c.l.b16 %v951
        %v1417 = vunpack.c.l.b16 %v952
        %v1418 = vunpack.c.l.b16 %v953
        %v1419 = vunpack.c.l.b16 %v954
        %v1420 = vunpack.c.l.b16 %v955
        %v1421 = vunpack.c.l.b16 %v956
        %v1422 = vunpack.c.l.b16 %v957
        %v1423 = vunpack.c.l.b16 %v958
        %v1424 = vunpack.c.l.b16 %v959
        %v1425 = vunpack.c.l.b16 %v960
        %v1426 = vunpack.c.l.b16 %v961
        %v1427 = vunpack.c.l.b16 %v962
        %v1428 = vunpack.c.l.b16 %v963
        %v1429 = vunpack.c.l.b16 %v964
        %v1430 = vunpack.c.l.b16 %v965
        %v1431 = vunpack.c.l.b16 %v966
        %v1432 = vunpack.c.l.b16 %v967
        %v1433 = vunpack.c.l.b16 %v968
        %v1434 = vunpack.c.l.b16 %v969
        %v1435 = vunpack.c.l.b16 %v970
        %v1436 = vunpack.c.l.b16 %v971
        %v1437 = vunpack.c.l.b16 %v972
        %v1438 = vunpack.c.l.b16 %v973
        %v1439 = vunpack.c.l.b16 %v974
        %v1440 = vunpack.c.l.b16 %v975
        %v1441 = vunpack.c.l.b16 %v976
        %v1442 = vunpack.c.l.b16 %v977
        %v1443 = vunpack.c.l.b16 %v978
        %v1444 = vunpack.c.l.b16 %v979
        %v1445 = vunpack.c.l.b16 %v980
        %v1446 = vunpack.c.l.b16 %v981
        %v1447 = vunpack.c.l.b16 %v982
        %v1448 = vunpack.c.l.b16 %v983
        %v1449 = vunpack.c.l.b16 %v984
        %v1450 = vunpack.c.l.b16 %v985
        %v1451 = vunpack.c.l.b16 %v986
        %v1452 = vunpack.c.l.b16 %v987
        %v1453 = vunpack.c.l.b16 %v988
        %v1454 = vunpack.c.l.b16 %v989
        %v1455 = vunpack.c.l.b16 %v990
        %v1456 = vunpack.c.l.b16 %v991
        %v1457 = vunpack.c.l.b16 %v992
        %v1458 = vunpack.c.l.b16 %v993
        %v1459 = vunpack.c.l.b16 %v994
        %v1460 = vunpack.c.l.b16 %v995
        %v1461 = vunpack.c.l.b16 %v996
        %v1462 = vunpack.c.l.b16 %v997
        %v1463 = vunpack.c.l.b16 %v998
        %v1464 = vunpack.c.l.b16 %v999
        %v1465 = vunpack.c.l.b16 %v1000
        %v1466 = vunpack.c.l.b16 %v1001
        %v1467 = vunpack.c.l.b16 %v1002
        %v1468 = vunpack.c.l.b16 %v1003
        %v1469 = vunpack.c.l.b16 %v1004
        %v1470 = vunpack.c.l.b16 %v1005
        %v1471 = vunpack.c.l.b16 %v1006
        %v1472 = vunpack.c.l.b16 %v1007
        %v1473 = vunpack.c.l.b16 %v1008
        %v1474 = vunpack.c.l.b16 %v1009
        %v1475 = vunpack.c.l.b16 %v1010
        %v1476 = vunpack.c.l.b16 %v1011
        %v1477 = vunpack.c.l.b16 %v1012
        %v1478 = vunpack.c.l.b16 %v1013
        %v1479 = vpack.c.b16 %v1336, %v1335
        %v1480 = vpack.c.b16 %v1338, %v1337
        %v1481 = vpack.c.b16 %v1340, %v1339
        %v1482 = vpack.c.b16 %v1342, %v1341
        %v1483 = vpack.c.b16 %v1344, %v1343
        %v1484 = vpack.c.b16 %v1346, %v1345
        %v1485 = vpack.c.b16 %v1348, %v1347
        %v1486 = vpack.c.b16 %v1350, %v1349
        %v1487 = vpack.c.b16 %v1352, %v1351
        %v1488 = vpack.c.b16 %v1354, %v1353
        %v1489 = vpack.c.b16 %v1356, %v1355
        %v1490 = vpack.c.b16 %v1358, %v1357
        %v1491 = vpack.c.b16 %v1360, %v1359
        %v1492 = vpack.c.b16 %v1362, %v1361
        %v1493 = vpack.c.b16 %v1364, %v1363
        %v1494 = vpack.c.b16 %v1366, %v1365
        %v1495 = vpack.c.b16 %v1368, %v1367
        %v1496 = vpack.c.b16 %v1370, %v1369
        %v1497 = vpack.c.b16 %v1372, %v1371
        %v1498 = vpack.c.b16 %v1374, %v1373
        %v1499 = vpack.c.b16 %v1376, %v1375
        %v1500 = vpack.c.b16 %v1378, %v1377
        %v1501 = vpack.c.b16 %v1380, %v1379
        %v1502 = vpack.c.b16 %v1382, %v1381
        %v1503 = vpack.c.b16 %v1384, %v1383
        %v1504 = vpack.c.b16 %v1386, %v1385
        %v1505 = vpack.c.b16 %v1388, %v1387
        %v1506 = vpack.c.b16 %v1390, %v1389
        %v1507 = vpack.c.b16 %v1392, %v1391
        %v1508 = vpack.c.b16 %v1394, %v1393
        %v1509 = vpack.c.b16 %v1396, %v1395
        %v1510 = vpack.c.b16 %v1398, %v1397
        %v1511 = vpack.c.b16 %v1400, %v1399
        %v1512 = vpack.c.b16 %v1402, %v1401
        %v1513 = vpack.c.b16 %v1404, %v1403
        %v1514 = vpack.c.b16 %v1406, %v1405
        %v1515 = vpack.c.b16 %v1408, %v1407
        %v1516 = vpack.c.b16 %v1410, %v1409
        %v1517 = vpack.c.b16 %v1412, %v1411
        %v1518 = vpack.c.b16 %v1414, %v1413
        %v1519 = vpack.c.b16 %v1416, %v1415
        %v1520 = vpack.c.b16 %v1418, %v1417
        %v1521 = vpack.c.b16 %v1420, %v1419
        %v1522 = vpack.c.b16 %v1422, %v1421
        %v1523 = vpack.c.b16 %v1424, %v1423
        %v1524 = vpack.c.b16 %v1426, %v1425
        %v1525 = vpack.c.b16 %v1428, %v1427
        %v1526 = vpack.c.b16 %v1430, %v1429
        %v1527 = vpack.c.b16 %v1432, %v1431
        %v1528 = vpack.c.b16 %v1434, %v1433
        %v1529 = vpack.c.b16 %v1436, %v1435
        %v1530 = vpack.c.b16 %v1438, %v1437
        %v1531 = vpack.c.b16 %v1440, %v1439
        %v1532 = vpack.c.b16 %v1442, %v1441
        %v1533 = vpack.c.b16 %v1444, %v1443
        %v1534 = vpack.c.b16 %v1446, %v1445
        %v1535 = vpack.c.b16 %v1448, %v1447
        %v1536 = vpack.c.b16 %v1450, %v1449
        %v1537 = vpack.c.b16 %v1452, %v1451
        %v1538 = vpack.c.b16 %v1454, %v1453
        %v1539 = vpack.c.b16 %v1456, %v1455
        %v1540 = vpack.c.b16 %v1458, %v1457
        %v1541 = vpack.c.b16 %v1460, %v1459
        %v1542 = vpack.c.b16 %v1462, %v1461
        %v1543 = vpack.c.b16 %v1464, %v1463
        %v1544 = vpack.c.b16 %v1466, %v1465
        %v1545 = vpack.c.b16 %v1468, %v1467
        %v1546 = vpack.c.b16 %v1470, %v1469
        %v1547 = vpack.c.b16 %v1472, %v1471
        %v1548 = vpack.c.b16 %v1474, %v1473
        %v1549 = vpack.c.b16 %v1476, %v1475
        %v1550 = vpack.c.b16 %v1478, %v1477
        %1623 = vmatprep.subr.bf16.mxu0 0
        %1624 = vmatpush1.bf16.msra.mxu0 %v1486
        %1625 = vmatprep.subr.bf16.mxu0 0
        %1626 = vmatpush1.bf16.msra.mxu0 %v1485
        %1627 = vmatprep.subr.bf16.mxu0 0
        %1628 = vmatpush1.bf16.msra.mxu0 %v1484
        %1629 = vmatprep.subr.bf16.mxu0 0
        %1630 = vmatpush1.bf16.msra.mxu0 %v1483
        %1631 = vmatprep.subr.bf16.mxu0 0
        %1632 = vmatpush1.bf16.msra.mxu0 %v1482
        %1633 = vmatprep.subr.bf16.mxu0 0
        %1634 = vmatpush1.bf16.msra.mxu0 %v1481
        %1635 = vmatprep.subr.bf16.mxu0 0
        %1636 = vmatpush1.bf16.msra.mxu0 %v1480
        %1637 = vmatprep.subr.bf16.mxu0 0
        %1638 = vmatpush1.bf16.msra.mxu0 %v1479
        %1639 = vmatprep.subr.bf16.mxu0 0
        %1640 = vmatpush2.bf16.msra.mxu0 %v1494
        %1641 = vmatprep.subr.bf16.mxu0 0
        %1642 = vmatpush2.bf16.msra.mxu0 %v1493
        %1643 = vmatprep.subr.bf16.mxu0 0
        %1644 = vmatpush2.bf16.msra.mxu0 %v1492
        %1645 = vmatprep.subr.bf16.mxu0 0
        %1646 = vmatpush2.bf16.msra.mxu0 %v1491
        %1647 = vmatprep.subr.bf16.mxu0 0
        %1648 = vmatpush2.bf16.msra.mxu0 %v1490
        %1649 = vmatprep.subr.bf16.mxu0 0
        %1650 = vmatpush2.bf16.msra.mxu0 %v1489
        %1651 = vmatprep.subr.bf16.mxu0 0
        %1652 = vmatpush2.bf16.msra.mxu0 %v1488
        %1653 = vmatprep.subr.bf16.mxu0 0
        %1654 = vmatpush2.bf16.msra.mxu0 %v1487
        %1655 = vmatprep.mubr.bf16.mxu0 %v1120
        %1656 = vmatmul.mubr.bf16.gmra.mxu0 %v1119
        %v1657 = vpop.f32.mrf.mxu0
        %v1658 = vadd.f32 %v1019, %v1657
        %v1659 = vpop.f32.mrf.mxu0
        %v1660 = vpop.f32.mrf.mxu0
        %v1661 = vadd.f32 %v1019, %v1660
        %v1662 = vpop.f32.mrf.mxu0
        %1663 = vmatprep.mubr.bf16.mxu0 %v1129
        %1664 = vmatmul.mubr.bf16.gmra.mxu0 %v1128
        %v1665 = vpop.f32.mrf.mxu0
        %v1666 = vadd.f32 %v1019, %v1665
        %v1667 = vpop.f32.mrf.mxu0
        %v1668 = vpop.f32.mrf.mxu0
        %v1669 = vadd.f32 %v1019, %v1668
        %v1670 = vpop.f32.mrf.mxu0
        %1671 = vmatprep.mubr.bf16.mxu0 %v1138
        %1672 = vmatmul.mubr.bf16.gmra.mxu0 %v1137
        %v1673 = vpop.f32.mrf.mxu0
        %v1674 = vadd.f32 %v1019, %v1673
        %v1675 = vpop.f32.mrf.mxu0
        %v1676 = vpop.f32.mrf.mxu0
        %v1677 = vadd.f32 %v1019, %v1676
        %v1678 = vpop.f32.mrf.mxu0
        %1679 = vmatprep.mubr.bf16.mxu0 %v1147
        %1680 = vmatmul.mubr.bf16.gmra.mxu0 %v1146
        %v1681 = vpop.f32.mrf.mxu0
        %v1682 = vadd.f32 %v1019, %v1681
        %v1683 = vpop.f32.mrf.mxu0
        %v1684 = vpop.f32.mrf.mxu0
        %v1685 = vpop.f32.mrf.mxu0
        %1686 = vdwg.mxu0
        %1687 = vmatprep.subr.bf16.mxu0 0
        %1688 = vmatpush1.bf16.msra.mxu0 %v1502
        %1689 = vmatprep.subr.bf16.mxu0 0
        %1690 = vmatpush1.bf16.msra.mxu0 %v1501
        %1691 = vmatprep.subr.bf16.mxu0 0
        %1692 = vmatpush1.bf16.msra.mxu0 %v1500
        %1693 = vmatprep.subr.bf16.mxu0 0
        %1694 = vmatpush1.bf16.msra.mxu0 %v1499
        %1695 = vmatprep.subr.bf16.mxu0 0
        %1696 = vmatpush1.bf16.msra.mxu0 %v1498
        %1697 = vmatprep.subr.bf16.mxu0 0
        %1698 = vmatpush1.bf16.msra.mxu0 %v1497
        %1699 = vmatprep.subr.bf16.mxu0 0
        %1700 = vmatpush1.bf16.msra.mxu0 %v1496
        %1701 = vmatprep.subr.bf16.mxu0 0
        %1702 = vmatpush1.bf16.msra.mxu0 %v1495
        %1703 = vmatprep.subr.bf16.mxu0 0
        %1704 = vmatpush2.bf16.msra.mxu0 %v1510
        %1705 = vmatprep.subr.bf16.mxu0 0
        %1706 = vmatpush2.bf16.msra.mxu0 %v1509
        %1707 = vmatprep.subr.bf16.mxu0 0
        %1708 = vmatpush2.bf16.msra.mxu0 %v1508
        %1709 = vmatprep.subr.bf16.mxu0 0
        %1710 = vmatpush2.bf16.msra.mxu0 %v1507
        %1711 = vmatprep.subr.bf16.mxu0 0
        %1712 = vmatpush2.bf16.msra.mxu0 %v1506
        %1713 = vmatprep.subr.bf16.mxu0 0
        %1714 = vmatpush2.bf16.msra.mxu0 %v1505
        %1715 = vmatprep.subr.bf16.mxu0 0
        %1716 = vmatpush2.bf16.msra.mxu0 %v1504
        %1717 = vmatprep.subr.bf16.mxu0 0
        %1718 = vmatpush2.bf16.msra.mxu0 %v1503
        %1719 = vmatprep.mubr.bf16.mxu0 %v1122
        %1720 = vmatmul.mubr.bf16.gmra.mxu0 %v1121
        %v1721 = vpop.f32.mrf.mxu0
        %v1722 = vadd.f32 %v1658, %v1721
        %v1723 = vpop.f32.mrf.mxu0
        %v1724 = vpop.f32.mrf.mxu0
        %v1725 = vadd.f32 %v1661, %v1724
        %v1726 = vpop.f32.mrf.mxu0
        %1727 = vmatprep.mubr.bf16.mxu0 %v1131
        %1728 = vmatmul.mubr.bf16.gmra.mxu0 %v1130
        %v1729 = vpop.f32.mrf.mxu0
        %v1730 = vadd.f32 %v1666, %v1729
        %v1731 = vpop.f32.mrf.mxu0
        %v1732 = vpop.f32.mrf.mxu0
        %v1733 = vadd.f32 %v1669, %v1732
        %v1734 = vpop.f32.mrf.mxu0
        %1735 = vmatprep.mubr.bf16.mxu0 %v1140
        %1736 = vmatmul.mubr.bf16.gmra.mxu0 %v1139
        %v1737 = vpop.f32.mrf.mxu0
        %v1738 = vadd.f32 %v1674, %v1737
        %v1739 = vpop.f32.mrf.mxu0
        %v1740 = vpop.f32.mrf.mxu0
        %v1741 = vadd.f32 %v1677, %v1740
        %v1742 = vpop.f32.mrf.mxu0
        %1743 = vmatprep.mubr.bf16.mxu0 %v1149
        %1744 = vmatmul.mubr.bf16.gmra.mxu0 %v1148
        %v1745 = vpop.f32.mrf.mxu0
        %v1746 = vadd.f32 %v1682, %v1745
        %v1747 = vpop.f32.mrf.mxu0
        %v1748 = vpop.f32.mrf.mxu0
        %v1749 = vpop.f32.mrf.mxu0
        %1750 = vdwg.mxu0
        %1751 = vmatprep.subr.bf16.mxu0 0
        %1752 = vmatpush1.bf16.msra.mxu0 %v1518
        %1753 = vmatprep.subr.bf16.mxu0 0
        %1754 = vmatpush1.bf16.msra.mxu0 %v1517
        %1755 = vmatprep.subr.bf16.mxu0 0
        %1756 = vmatpush1.bf16.msra.mxu0 %v1516
        %1757 = vmatprep.subr.bf16.mxu0 0
        %1758 = vmatpush1.bf16.msra.mxu0 %v1515
        %1759 = vmatprep.subr.bf16.mxu0 0
        %1760 = vmatpush1.bf16.msra.mxu0 %v1514
        %1761 = vmatprep.subr.bf16.mxu0 0
        %1762 = vmatpush1.bf16.msra.mxu0 %v1513
        %1763 = vmatprep.subr.bf16.mxu0 0
        %1764 = vmatpush1.bf16.msra.mxu0 %v1512
        %1765 = vmatprep.subr.bf16.mxu0 0
        %1766 = vmatpush1.bf16.msra.mxu0 %v1511
        %1767 = vmatprep.subr.bf16.mxu0 0
        %1768 = vmatpush2.bf16.msra.mxu0 %v1526
        %1769 = vmatprep.subr.bf16.mxu0 0
        %1770 = vmatpush2.bf16.msra.mxu0 %v1525
        %1771 = vmatprep.subr.bf16.mxu0 0
        %1772 = vmatpush2.bf16.msra.mxu0 %v1524
        %1773 = vmatprep.subr.bf16.mxu0 0
        %1774 = vmatpush2.bf16.msra.mxu0 %v1523
        %1775 = vmatprep.subr.bf16.mxu0 0
        %1776 = vmatpush2.bf16.msra.mxu0 %v1522
        %1777 = vmatprep.subr.bf16.mxu0 0
        %1778 = vmatpush2.bf16.msra.mxu0 %v1521
        %1779 = vmatprep.subr.bf16.mxu0 0
        %1780 = vmatpush2.bf16.msra.mxu0 %v1520
        %1781 = vmatprep.subr.bf16.mxu0 0
        %1782 = vmatpush2.bf16.msra.mxu0 %v1519
        %1783 = vmatprep.mubr.bf16.mxu0 %v1124
        %1784 = vmatmul.mubr.bf16.gmra.mxu0 %v1123
        %v1785 = vpop.f32.mrf.mxu0
        %v1786 = vadd.f32 %v1722, %v1785
        %v1787 = vpop.f32.mrf.mxu0
        %v1788 = vpop.f32.mrf.mxu0
        %v1789 = vadd.f32 %v1725, %v1788
        %v1790 = vpop.f32.mrf.mxu0
        %1791 = vmatprep.mubr.bf16.mxu0 %v1133
        %1792 = vmatmul.mubr.bf16.gmra.mxu0 %v1132
        %v1793 = vpop.f32.mrf.mxu0
        %v1794 = vadd.f32 %v1730, %v1793
        %v1795 = vpop.f32.mrf.mxu0
        %v1796 = vpop.f32.mrf.mxu0
        %v1797 = vadd.f32 %v1733, %v1796
        %v1798 = vpop.f32.mrf.mxu0
        %1799 = vmatprep.mubr.bf16.mxu0 %v1142
        %1800 = vmatmul.mubr.bf16.gmra.mxu0 %v1141
        %v1801 = vpop.f32.mrf.mxu0
        %v1802 = vadd.f32 %v1738, %v1801
        %v1803 = vpop.f32.mrf.mxu0
        %v1804 = vpop.f32.mrf.mxu0
        %v1805 = vadd.f32 %v1741, %v1804
        %v1806 = vpop.f32.mrf.mxu0
        %1807 = vmatprep.mubr.bf16.mxu0 %v1151
        %1808 = vmatmul.mubr.bf16.gmra.mxu0 %v1150
        %v1809 = vpop.f32.mrf.mxu0
        %v1810 = vadd.f32 %v1746, %v1809
        %v1811 = vpop.f32.mrf.mxu0
        %v1812 = vpop.f32.mrf.mxu0
        %v1813 = vpop.f32.mrf.mxu0
        %1814 = vdwg.mxu0
        %1815 = vmatprep.subr.bf16.mxu0 0
        %1816 = vmatpush1.bf16.msra.mxu0 %v1534
        %1817 = vmatprep.subr.bf16.mxu0 0
        %1818 = vmatpush1.bf16.msra.mxu0 %v1533
        %1819 = vmatprep.subr.bf16.mxu0 0
        %1820 = vmatpush1.bf16.msra.mxu0 %v1532
        %1821 = vmatprep.subr.bf16.mxu0 0
        %1822 = vmatpush1.bf16.msra.mxu0 %v1531
        %1823 = vmatprep.subr.bf16.mxu0 0
        %1824 = vmatpush1.bf16.msra.mxu0 %v1530
        %1825 = vmatprep.subr.bf16.mxu0 0
        %1826 = vmatpush1.bf16.msra.mxu0 %v1529
        %1827 = vmatprep.subr.bf16.mxu0 0
        %1828 = vmatpush1.bf16.msra.mxu0 %v1528
        %1829 = vmatprep.subr.bf16.mxu0 0
        %1830 = vmatpush1.bf16.msra.mxu0 %v1527
        %1831 = vmatprep.subr.bf16.mxu0 0
        %1832 = vmatpush2.bf16.msra.mxu0 %v1542
        %1833 = vmatprep.subr.bf16.mxu0 0
        %1834 = vmatpush2.bf16.msra.mxu0 %v1541
        %1835 = vmatprep.subr.bf16.mxu0 0
        %1836 = vmatpush2.bf16.msra.mxu0 %v1540
        %1837 = vmatprep.subr.bf16.mxu0 0
        %1838 = vmatpush2.bf16.msra.mxu0 %v1539
        %1839 = vmatprep.subr.bf16.mxu0 0
        %1840 = vmatpush2.bf16.msra.mxu0 %v1538
        %1841 = vmatprep.subr.bf16.mxu0 0
        %1842 = vmatpush2.bf16.msra.mxu0 %v1537
        %1843 = vmatprep.subr.bf16.mxu0 0
        %1844 = vmatpush2.bf16.msra.mxu0 %v1536
        %1845 = vmatprep.subr.bf16.mxu0 0
        %1846 = vmatpush2.bf16.msra.mxu0 %v1535
        %1847 = vmatprep.mubr.bf16.mxu0 %v1126
        %1848 = vmatmul.mubr.bf16.gmra.mxu0 %v1125
        %v1849 = vpop.f32.mrf.mxu0
        %v1850 = vadd.f32 %v1786, %v1849
        %v1851 = vpop.f32.mrf.mxu0
        %v1852 = vpop.f32.mrf.mxu0
        %v1853 = vadd.f32 %v1789, %v1852
        %v1854 = vpop.f32.mrf.mxu0
        %1855 = vmatprep.mubr.bf16.mxu0 %v1135
        %1856 = vmatmul.mubr.bf16.gmra.mxu0 %v1134
        %v1857 = vpop.f32.mrf.mxu0
        %v1858 = vadd.f32 %v1794, %v1857
        %v1859 = vpop.f32.mrf.mxu0
        %v1860 = vpop.f32.mrf.mxu0
        %v1861 = vadd.f32 %v1797, %v1860
        %v1862 = vpop.f32.mrf.mxu0
        %1863 = vmatprep.mubr.bf16.mxu0 %v1144
        %1864 = vmatmul.mubr.bf16.gmra.mxu0 %v1143
        %v1865 = vpop.f32.mrf.mxu0
        %v1866 = vadd.f32 %v1802, %v1865
        %v1867 = vpop.f32.mrf.mxu0
        %v1868 = vpop.f32.mrf.mxu0
        %v1869 = vadd.f32 %v1805, %v1868
        %v1870 = vpop.f32.mrf.mxu0
        %1871 = vmatprep.mubr.bf16.mxu0 %v1153
        %1872 = vmatmul.mubr.bf16.gmra.mxu0 %v1152
        %v1873 = vpop.f32.mrf.mxu0
        %v1874 = vadd.f32 %v1810, %v1873
        %v1875 = vpop.f32.mrf.mxu0
        %v1876 = vpop.f32.mrf.mxu0
        %v1877 = vpop.f32.mrf.mxu0
        %1878 = vdwg.mxu0
        %1879 = vmatprep.subr.bf16.mxu0 0
        %1880 = vmatpush1.bf16.msra.mxu0 %v1550
        %1881 = vmatprep.subr.bf16.mxu0 0
        %1882 = vmatpush1.bf16.msra.mxu0 %v1549
        %1883 = vmatprep.subr.bf16.mxu0 0
        %1884 = vmatpush1.bf16.msra.mxu0 %v1548
        %1885 = vmatprep.subr.bf16.mxu0 0
        %1886 = vmatpush1.bf16.msra.mxu0 %v1547
        %1887 = vmatprep.subr.bf16.mxu0 0
        %1888 = vmatpush1.bf16.msra.mxu0 %v1546
        %1889 = vmatprep.subr.bf16.mxu0 0
        %1890 = vmatpush1.bf16.msra.mxu0 %v1545
        %1891 = vmatprep.subr.bf16.mxu0 0
        %1892 = vmatpush1.bf16.msra.mxu0 %v1544
        %1893 = vmatprep.subr.bf16.mxu0 0
        %1894 = vmatpush1.bf16.msra.mxu0 %v1543
        %1895 = vmatprep.subr.bf16.mxu0 0
        %1896 = vmatpush2.bf16.msra.mxu0 0
        %1897 = vmatprep.subr.bf16.mxu0 0
        %1898 = vmatpush2.bf16.msra.mxu0 0
        %1899 = vmatprep.subr.bf16.mxu0 0
        %1900 = vmatpush2.bf16.msra.mxu0 0
        %1901 = vmatprep.subr.bf16.mxu0 0
        %1902 = vmatpush2.bf16.msra.mxu0 0
        %1903 = vmatprep.subr.bf16.mxu0 0
        %1904 = vmatpush2.bf16.msra.mxu0 0
        %1905 = vmatprep.subr.bf16.mxu0 0
        %1906 = vmatpush2.bf16.msra.mxu0 0
        %1907 = vmatprep.subr.bf16.mxu0 0
        %1908 = vmatpush2.bf16.msra.mxu0 0
        %1909 = vmatprep.subr.bf16.mxu0 0
        %1910 = vmatpush2.bf16.msra.mxu0 0
        %1911 = vmatprep.mubr.bf16.mxu0 0
        %1912 = vmatmul.mubr.bf16.gmra.mxu0 %v1127
        %v1913 = vpop.f32.mrf.mxu0
        %v1914 = vadd.f32 %v1850, %v1913
        %v1915 = vpop.f32.mrf.mxu0
        %v1916 = vpop.f32.mrf.mxu0
        %v1917 = vadd.f32 %v1853, %v1916
        %v1918 = vpop.f32.mrf.mxu0
        %1919 = vmatprep.mubr.bf16.mxu0 0
        %1920 = vmatmul.mubr.bf16.gmra.mxu0 %v1136
        %v1921 = vpop.f32.mrf.mxu0
        %v1922 = vadd.f32 %v1858, %v1921
        %v1923 = vpop.f32.mrf.mxu0
        %v1924 = vpop.f32.mrf.mxu0
        %v1925 = vadd.f32 %v1861, %v1924
        %v1926 = vpop.f32.mrf.mxu0
        %1927 = vmatprep.mubr.bf16.mxu0 0
        %1928 = vmatmul.mubr.bf16.gmra.mxu0 %v1145
        %v1929 = vpop.f32.mrf.mxu0
        %v1930 = vadd.f32 %v1866, %v1929
        %v1931 = vpop.f32.mrf.mxu0
        %v1932 = vpop.f32.mrf.mxu0
        %v1933 = vadd.f32 %v1869, %v1932
        %v1934 = vpop.f32.mrf.mxu0
        %1935 = vmatprep.mubr.bf16.mxu0 0
        %1936 = vmatmul.mubr.bf16.gmra.mxu0 %v1154
        %v1937 = vpop.f32.mrf.mxu0
        %v1938 = vadd.f32 %v1874, %v1937
        %v1939 = vpop.f32.mrf.mxu0
        %v1940 = vpop.f32.mrf.mxu0
        %v1941 = vpop.f32.mrf.mxu0
        %1942 = vdwg.mxu0
        %v1943 = vmax.f32 %v1914, 0.0
        %v1944 = vmax.f32 %v1917, 0.0
        %v1945 = vmax.f32 %v1922, 0.0
        %v1946 = vmax.f32 %v1925, 0.0
        %v1947 = vmax.f32 %v1930, 0.0
        %v1948 = vmax.f32 %v1933, 0.0
        %v1949 = vmax.f32 %v1938, 0.0
        %1950 = vst [vmem:[%s822] sm:$0xff] %v1943
        %1951 = vst [vmem:[%s822 + $0x8] sm:$0xff] %v1944
        %1952 = vst [vmem:[%s822 + $0x10] sm:$0xff] %v1945
        %1953 = vst [vmem:[%s822 + $0x18] sm:$0xff] %v1946
        %1954 = vst [vmem:[%s822 + $0x20] sm:$0xff] %v1947
        %1955 = vst [vmem:[%s822 + $0x28] sm:$0xff] %v1948
        %1956 = vst [vmem:[%s822 + $0x30] sm:$0xff] %v1949
        %s1957 = sand.u32 %s114, 1
        %s1958 = sand.u32 %s114, 1
        %s1959 = smul.addr %s1958, 56
        %s1960 = scalar_lea.vmem [#allocation3], %s1959
        // Predicated region
        $region74: #{_lambda_.8} parent=68 // pred_check
          %p1961 = pneg %p124
        $region75: #{_lambda_.8} parent=68 // pred_check_branch
          %1963 = sbr.rel (%p1961) target = $region77
        $region76: #{_lambda_.8} parent=68 // pred_region
          %s1964 = smul.u32 7, %s18
          %s1965 = smul.addr %s1964, 2
          %s1966 = sadd.s32 %s19, %s1965
          %s1967 = smul.addr %s1966, 8
          %s1968 = scalar_lea.vmem %s3, %s1967
          // Predicated region
          $region78: #{_lambda_.8} parent=76 // pred_check
            _
          $region79: #{_lambda_.8} parent=76 // pred_check_branch
            %1970 = sbr.rel (0) target = $region81
          $region80: #{_lambda_.8} parent=76 // pred_region
            // Predicated region
            $region82: #{_lambda_.8} parent=80 // pred_check
              _
            $region83: #{_lambda_.8} parent=80 // pred_check_branch
              %1972 = sbr.rel (0) target = $region85
            $region84: #{_lambda_.8} parent=80 // pred_region
              // Predicated region
              $region97: #{_lambda_.8} parent=84 // pred_check
                _
              $region98: #{_lambda_.8} parent=84 // pred_check_branch
                %2000 = sbr.rel (0) target = $region100
              $region99: #{_lambda_.8} parent=84 // pred_region
                loop: start=0, step=1, limit=1
                $region101: #{_lambda_.8} parent=99 // loop_pre_header
                  _
                $region102: #{_lambda_.8} parent=99 // loop_header
                  %s2002 = sphi 0, %s2006
                  %p2003 = scmp.ge.s32.totalorder %s2002, 1
                  %s2007 = sphi %s1960, %s1960
                  %s2008 = sphi %s1968, %s1968
                $region103: #{_lambda_.8} parent=99 // loop_header_branch
                  %2005 = sbr.rel (%p2003) target = $region107
                $region104: #{_lambda_.8} parent=99 // loop_body
                  %v2009 = vld [vmem:[%s2007] sm:$0xff]
                  %2010 = vst [vmem:[%s2008] sm:$0xff] %v2009
                  %v2011 = vld [vmem:[%s2007 + $0x8] sm:$0xff]
                  %2012 = vst [vmem:[%s2008 + $0x10] sm:$0xff] %v2011
                  %v2013 = vld [vmem:[%s2007 + $0x10] sm:$0xff]
                  %2014 = vst [vmem:[%s2008 + $0x20] sm:$0xff] %v2013
                  %v2015 = vld [vmem:[%s2007 + $0x18] sm:$0xff]
                  %2016 = vst [vmem:[%s2008 + $0x30] sm:$0xff] %v2015
                  %v2017 = vld [vmem:[%s2007 + $0x20] sm:$0xff]
                  %2018 = vst [vmem:[%s2008 + $0x40] sm:$0xff] %v2017
                  %v2019 = vld [vmem:[%s2007 + $0x28] sm:$0xff]
                  %2020 = vst [vmem:[%s2008 + $0x50] sm:$0xff] %v2019
                  %v2021 = vld [vmem:[%s2007 + $0x30] sm:$0xff]
                  %2022 = vst [vmem:[%s2008 + $0x60] sm:$0xff] %v2021
                $region105: #{_lambda_.8} parent=99 // loop_footer
                  %s2006 = sadd.s32 1, %s2002
                $region106: #{_lambda_.8} parent=99 // loop_footer_branch
                  %2001 = sbr.rel target = $region102
                $region107: #{_lambda_.8} parent=99 // loop_exit
                  _
              $region100: #{_lambda_.8} parent=84 // pred_fallthru
                _
              // Predicated region
              $region108: #{_lambda_.8} parent=84 // pred_check
                _
              $region109: #{_lambda_.8} parent=84 // pred_check_branch
                %2024 = sbr.rel target = $region111
              $region110: #{_lambda_.8} parent=84 // pred_region
                _
              $region111: #{_lambda_.8} parent=84 // pred_fallthru
                _
            $region85: #{_lambda_.8} parent=80 // pred_fallthru
              _
            // Predicated region
            $region86: #{_lambda_.8} parent=80 // pred_check
              _
            $region87: #{_lambda_.8} parent=80 // pred_check_branch
              %1974 = sbr.rel target = $region89
            $region88: #{_lambda_.8} parent=80 // pred_region
              %s1976 = ssub.s32 256, 1
              loop: start=0, step=1, limit=1
              $region90: #{_lambda_.8} parent=88 // loop_pre_header
                _
              $region91: #{_lambda_.8} parent=88 // loop_header
                %s1978 = sphi 0, %s1982
                %p1979 = scmp.ge.s32.totalorder %s1978, 1
                %s1983 = sphi %s1960, %s1960
                %s1984 = sphi %s1968, %s1968
              $region92: #{_lambda_.8} parent=88 // loop_header_branch
                %1981 = sbr.rel (%p1979) target = $region96
              $region93: #{_lambda_.8} parent=88 // loop_body
                %v1985 = vld [vmem:[%s1983] sm:%s1976]
                %1986 = vst [vmem:[%s1984] sm:%s1976] %v1985
                %v1987 = vld [vmem:[%s1983 + $0x8] sm:%s1976]
                %1988 = vst [vmem:[%s1984 + $0x10] sm:%s1976] %v1987
                %v1989 = vld [vmem:[%s1983 + $0x10] sm:%s1976]
                %1990 = vst [vmem:[%s1984 + $0x20] sm:%s1976] %v1989
                %v1991 = vld [vmem:[%s1983 + $0x18] sm:%s1976]
                %1992 = vst [vmem:[%s1984 + $0x30] sm:%s1976] %v1991
                %v1993 = vld [vmem:[%s1983 + $0x20] sm:%s1976]
                %1994 = vst [vmem:[%s1984 + $0x40] sm:%s1976] %v1993
                %v1995 = vld [vmem:[%s1983 + $0x28] sm:%s1976]
                %1996 = vst [vmem:[%s1984 + $0x50] sm:%s1976] %v1995
                %v1997 = vld [vmem:[%s1983 + $0x30] sm:%s1976]
                %1998 = vst [vmem:[%s1984 + $0x60] sm:%s1976] %v1997
              $region94: #{_lambda_.8} parent=88 // loop_footer
                %s1982 = sadd.s32 1, %s1978
              $region95: #{_lambda_.8} parent=88 // loop_footer_branch
                %1977 = sbr.rel target = $region91
              $region96: #{_lambda_.8} parent=88 // loop_exit
                _
            $region89: #{_lambda_.8} parent=80 // pred_fallthru
              _
          $region81: #{_lambda_.8} parent=76 // pred_fallthru
            _
          %2025 = vnop
        $region77: #{_lambda_.8} parent=68 // pred_fallthru
          _
      $region69: #{_lambda_.8} parent=5 // pred_fallthru
        _
      %p2026 = scmp.le.s32.totalorder 2, %s9
      // Predicated region
      $region112: #{_lambda_.8} parent=5 // pred_check
        %p2027 = pneg %p2026
      $region113: #{_lambda_.8} parent=5 // pred_check_branch
        %2029 = sbr.rel (%p2027) target = $region115
      $region114: #{_lambda_.8} parent=5 // pred_region
        %s2030 = ssub.s32 %s9, 2
        // Predicated region
        $region116: #{_lambda_.8} parent=114 // pred_check
          %p2031 = pneg %p130
        $region117: #{_lambda_.8} parent=114 // pred_check_branch
          %2033 = sbr.rel (%p2031) target = $region119
        $region118: #{_lambda_.8} parent=114 // pred_region
          %s2034 = sand.u32 %s115, 1
          %s2035 = sand.u32 %s115, 1
          %s2036 = smul.addr %s2035, 56
          %s2037 = scalar_lea.vmem [#allocation3], %s2036
        $region119: #{_lambda_.8} parent=114 // pred_fallthru
          _
      $region115: #{_lambda_.8} parent=5 // pred_fallthru
        _
    $region6: #{_lambda_.8} parent=1 // loop_footer
      %s13 = sadd.s32 1, %s9
    $region7: #{_lambda_.8} parent=1 // loop_footer_branch
      %8 = sbr.rel target = $region3
    $region8: #{_lambda_.8} parent=1 // loop_exit
      _

// kernel: _lambda_.9
$region0: #{_lambda_.9}
  #allocation0 [shape = 'u32[]', space=smem, size = 0x4, offset = 0x4, fixed_abs, tag = 'smem constant byte address 0x4 - core index']
  #allocation1 [shape = 'u32[144,128]{1,0:T(1,128)}', space=vmem, size = 0x12000, scoped, tag = 'internal scratch']
  %s0 = inlined_call_operand.vmem [shape: bf16[16,2304], index: 0, kind: input, shape index: {}]
  %s1 = inlined_call_operand.vmem [shape: bf16[2304,128], index: 1, kind: input, shape index: {}]
  %s2 = inlined_call_operand.vmem [shape: f32[1,128], index: 2, kind: input, shape index: {}]
  %s3 = inlined_call_operand.vmem [shape: f32[16,128], index: 3, kind: output, shape index: {}]
  %s4 = sld [smem:[#allocation0]]
  $region22: #{_lambda_.9} parent=0
    _
  %s6 = ssub.s32 1, %s4
  %s7 = scalar_select 0, %s6, %s4
  // Predicated region
  $region2: #{_lambda_.9} parent=0 // pred_check
    _
  $region3: #{_lambda_.9} parent=0 // pred_check_branch
    %9 = sbr.rel (0) target = $region5
  $region4: #{_lambda_.9} parent=0 // pred_region
    _
  $region5: #{_lambda_.9} parent=0 // pred_fallthru
    _
  // Predicated region
  $region6: #{_lambda_.9} parent=0 // pred_check
    _
  $region7: #{_lambda_.9} parent=0 // pred_check_branch
    %11 = sbr.rel (0) target = $region9
  $region8: #{_lambda_.9} parent=0 // pred_region
    _
  $region9: #{_lambda_.9} parent=0 // pred_fallthru
    _
  // Predicated region
  $region10: #{_lambda_.9} parent=0 // pred_check
    _
  $region11: #{_lambda_.9} parent=0 // pred_check_branch
    %13 = sbr.rel (0) target = $region13
  $region12: #{_lambda_.9} parent=0 // pred_region
    _
  $region13: #{_lambda_.9} parent=0 // pred_fallthru
    _
  %v15 = vld [vmem:[%s0] sm:$0xff]
  %v16 = vld [vmem:[%s0 + $0x8] sm:$0xff]
  %v17 = vld [vmem:[%s0 + $0x10] sm:$0xff]
  %v18 = vld [vmem:[%s0 + $0x18] sm:$0xff]
  %v19 = vld [vmem:[%s0 + $0x20] sm:$0xff]
  %v20 = vld [vmem:[%s0 + $0x28] sm:$0xff]
  %v21 = vld [vmem:[%s0 + $0x30] sm:$0xff]
  %v22 = vld [vmem:[%s0 + $0x38] sm:$0xff]
  %v23 = vld [vmem:[%s0 + $0x40] sm:$0xff]
  %v24 = vld [vmem:[%s0 + $0x48] sm:$0xff]
  %v25 = vld [vmem:[%s0 + $0x50] sm:$0xff]
  %v26 = vld [vmem:[%s0 + $0x58] sm:$0xff]
  %v27 = vld [vmem:[%s0 + $0x60] sm:$0xff]
  %v28 = vld [vmem:[%s0 + $0x68] sm:$0xff]
  %v29 = vld [vmem:[%s0 + $0x70] sm:$0xff]
  %v30 = vld [vmem:[%s0 + $0x78] sm:$0xff]
  %v31 = vld [vmem:[%s0 + $0x80] sm:$0xff]
  %v32 = vld [vmem:[%s0 + $0x88] sm:$0xff]
  %v33 = vld [vmem:[%s1] sm:$0xf]
  %v34 = vld [vmem:[%s1 + $0x4] sm:$0xf]
  %v35 = vld [vmem:[%s1 + $0x8] sm:$0xf]
  %v36 = vld [vmem:[%s1 + $0xc] sm:$0xf]
  %v37 = vld [vmem:[%s1 + $0x10] sm:$0xf]
  %v38 = vld [vmem:[%s1 + $0x14] sm:$0xf]
  %v39 = vld [vmem:[%s1 + $0x18] sm:$0xf]
  %v40 = vld [vmem:[%s1 + $0x1c] sm:$0xf]
  %v41 = vld [vmem:[%s1 + $0x20] sm:$0xf]
  %v42 = vld [vmem:[%s1 + $0x24] sm:$0xf]
  %v43 = vld [vmem:[%s1 + $0x28] sm:$0xf]
  %v44 = vld [vmem:[%s1 + $0x2c] sm:$0xf]
  %v45 = vld [vmem:[%s1 + $0x30] sm:$0xf]
  %v46 = vld [vmem:[%s1 + $0x34] sm:$0xf]
  %v47 = vld [vmem:[%s1 + $0x38] sm:$0xf]
  %v48 = vld [vmem:[%s1 + $0x3c] sm:$0xf]
  %v49 = vld [vmem:[%s1 + $0x40] sm:$0xf]
  %v50 = vld [vmem:[%s1 + $0x44] sm:$0xf]
  %v51 = vld [vmem:[%s1 + $0x48] sm:$0xf]
  %v52 = vld [vmem:[%s1 + $0x4c] sm:$0xf]
  %v53 = vld [vmem:[%s1 + $0x50] sm:$0xf]
  %v54 = vld [vmem:[%s1 + $0x54] sm:$0xf]
  %v55 = vld [vmem:[%s1 + $0x58] sm:$0xf]
  %v56 = vld [vmem:[%s1 + $0x5c] sm:$0xf]
  %v57 = vld [vmem:[%s1 + $0x60] sm:$0xf]
  %v58 = vld [vmem:[%s1 + $0x64] sm:$0xf]
  %v59 = vld [vmem:[%s1 + $0x68] sm:$0xf]
  %v60 = vld [vmem:[%s1 + $0x6c] sm:$0xf]
  %v61 = vld [vmem:[%s1 + $0x70] sm:$0xf]
  %v62 = vld [vmem:[%s1 + $0x74] sm:$0xf]
  %v63 = vld [vmem:[%s1 + $0x78] sm:$0xf]
  %v64 = vld [vmem:[%s1 + $0x7c] sm:$0xf]
  %v65 = vld [vmem:[%s1 + $0x80] sm:$0xf]
  %v66 = vld [vmem:[%s1 + $0x84] sm:$0xf]
  %v67 = vld [vmem:[%s1 + $0x88] sm:$0xf]
  %v68 = vld [vmem:[%s1 + $0x8c] sm:$0xf]
  %v69 = vld [vmem:[%s1 + $0x90] sm:$0xf]
  %v70 = vld [vmem:[%s1 + $0x94] sm:$0xf]
  %v71 = vld [vmem:[%s1 + $0x98] sm:$0xf]
  %v72 = vld [vmem:[%s1 + $0x9c] sm:$0xf]
  %v73 = vld [vmem:[%s1 + $0xa0] sm:$0xf]
  %v74 = vld [vmem:[%s1 + $0xa4] sm:$0xf]
  %v75 = vld [vmem:[%s1 + $0xa8] sm:$0xf]
  %v76 = vld [vmem:[%s1 + $0xac] sm:$0xf]
  %v77 = vld [vmem:[%s1 + $0xb0] sm:$0xf]
  %v78 = vld [vmem:[%s1 + $0xb4] sm:$0xf]
  %v79 = vld [vmem:[%s1 + $0xb8] sm:$0xf]
  %v80 = vld [vmem:[%s1 + $0xbc] sm:$0xf]
  %v81 = vld [vmem:[%s1 + $0xc0] sm:$0xf]
  %v82 = vld [vmem:[%s1 + $0xc4] sm:$0xf]
  %v83 = vld [vmem:[%s1 + $0xc8] sm:$0xf]
  %v84 = vld [vmem:[%s1 + $0xcc] sm:$0xf]
  %v85 = vld [vmem:[%s1 + $0xd0] sm:$0xf]
  %v86 = vld [vmem:[%s1 + $0xd4] sm:$0xf]
  %v87 = vld [vmem:[%s1 + $0xd8] sm:$0xf]
  %v88 = vld [vmem:[%s1 + $0xdc] sm:$0xf]
  %v89 = vld [vmem:[%s1 + $0xe0] sm:$0xf]
  %v90 = vld [vmem:[%s1 + $0xe4] sm:$0xf]
  %v91 = vld [vmem:[%s1 + $0xe8] sm:$0xf]
  %v92 = vld [vmem:[%s1 + $0xec] sm:$0xf]
  %v93 = vld [vmem:[%s1 + $0xf0] sm:$0xf]
  %v94 = vld [vmem:[%s1 + $0xf4] sm:$0xf]
  %v95 = vld [vmem:[%s1 + $0xf8] sm:$0xf]
  %v96 = vld [vmem:[%s1 + $0xfc] sm:$0xf]
  %v97 = vld [vmem:[%s1 + $0x100] sm:$0xf]
  %v98 = vld [vmem:[%s1 + $0x104] sm:$0xf]
  %v99 = vld [vmem:[%s1 + $0x108] sm:$0xf]
  %v100 = vld [vmem:[%s1 + $0x10c] sm:$0xf]
  %v101 = vld [vmem:[%s1 + $0x110] sm:$0xf]
  %v102 = vld [vmem:[%s1 + $0x114] sm:$0xf]
  %v103 = vld [vmem:[%s1 + $0x118] sm:$0xf]
  %v104 = vld [vmem:[%s1 + $0x11c] sm:$0xf]
  %v105 = vld [vmem:[%s1 + $0x120] sm:$0xf]
  %v106 = vld [vmem:[%s1 + $0x124] sm:$0xf]
  %v107 = vld [vmem:[%s1 + $0x128] sm:$0xf]
  %v108 = vld [vmem:[%s1 + $0x12c] sm:$0xf]
  %v109 = vld [vmem:[%s1 + $0x130] sm:$0xf]
  %v110 = vld [vmem:[%s1 + $0x134] sm:$0xf]
  %v111 = vld [vmem:[%s1 + $0x138] sm:$0xf]
  %v112 = vld [vmem:[%s1 + $0x13c] sm:$0xf]
  %v113 = vld [vmem:[%s1 + $0x140] sm:$0xf]
  %v114 = vld [vmem:[%s1 + $0x144] sm:$0xf]
  %v115 = vld [vmem:[%s1 + $0x148] sm:$0xf]
  %v116 = vld [vmem:[%s1 + $0x14c] sm:$0xf]
  %v117 = vld [vmem:[%s1 + $0x150] sm:$0xf]
  %v118 = vld [vmem:[%s1 + $0x154] sm:$0xf]
  %v119 = vld [vmem:[%s1 + $0x158] sm:$0xf]
  %v120 = vld [vmem:[%s1 + $0x15c] sm:$0xf]
  %v121 = vld [vmem:[%s1 + $0x160] sm:$0xf]
  %v122 = vld [vmem:[%s1 + $0x164] sm:$0xf]
  %v123 = vld [vmem:[%s1 + $0x168] sm:$0xf]
  %v124 = vld [vmem:[%s1 + $0x16c] sm:$0xf]
  %v125 = vld [vmem:[%s1 + $0x170] sm:$0xf]
  %v126 = vld [vmem:[%s1 + $0x174] sm:$0xf]
  %v127 = vld [vmem:[%s1 + $0x178] sm:$0xf]
  %v128 = vld [vmem:[%s1 + $0x17c] sm:$0xf]
  %v129 = vld [vmem:[%s1 + $0x180] sm:$0xf]
  %v130 = vld [vmem:[%s1 + $0x184] sm:$0xf]
  %v131 = vld [vmem:[%s1 + $0x188] sm:$0xf]
  %v132 = vld [vmem:[%s1 + $0x18c] sm:$0xf]
  %v133 = vld [vmem:[%s1 + $0x190] sm:$0xf]
  %v134 = vld [vmem:[%s1 + $0x194] sm:$0xf]
  %v135 = vld [vmem:[%s1 + $0x198] sm:$0xf]
  %v136 = vld [vmem:[%s1 + $0x19c] sm:$0xf]
  %v137 = vld [vmem:[%s1 + $0x1a0] sm:$0xf]
  %v138 = vld [vmem:[%s1 + $0x1a4] sm:$0xf]
  %v139 = vld [vmem:[%s1 + $0x1a8] sm:$0xf]
  %v140 = vld [vmem:[%s1 + $0x1ac] sm:$0xf]
  %v141 = vld [vmem:[%s1 + $0x1b0] sm:$0xf]
  %v142 = vld [vmem:[%s1 + $0x1b4] sm:$0xf]
  %v143 = vld [vmem:[%s1 + $0x1b8] sm:$0xf]
  %v144 = vld [vmem:[%s1 + $0x1bc] sm:$0xf]
  %v145 = vld [vmem:[%s1 + $0x1c0] sm:$0xf]
  %v146 = vld [vmem:[%s1 + $0x1c4] sm:$0xf]
  %v147 = vld [vmem:[%s1 + $0x1c8] sm:$0xf]
  %v148 = vld [vmem:[%s1 + $0x1cc] sm:$0xf]
  %v149 = vld [vmem:[%s1 + $0x1d0] sm:$0xf]
  %v150 = vld [vmem:[%s1 + $0x1d4] sm:$0xf]
  %v151 = vld [vmem:[%s1 + $0x1d8] sm:$0xf]
  %v152 = vld [vmem:[%s1 + $0x1dc] sm:$0xf]
  %v153 = vld [vmem:[%s1 + $0x1e0] sm:$0xf]
  %v154 = vld [vmem:[%s1 + $0x1e4] sm:$0xf]
  %v155 = vld [vmem:[%s1 + $0x1e8] sm:$0xf]
  %v156 = vld [vmem:[%s1 + $0x1ec] sm:$0xf]
  %v157 = vld [vmem:[%s1 + $0x1f0] sm:$0xf]
  %v158 = vld [vmem:[%s1 + $0x1f4] sm:$0xf]
  %v159 = vld [vmem:[%s1 + $0x1f8] sm:$0xf]
  %v160 = vld [vmem:[%s1 + $0x1fc] sm:$0xf]
  %v161 = vld [vmem:[%s1 + $0x200] sm:$0xf]
  %v162 = vld [vmem:[%s1 + $0x204] sm:$0xf]
  %v163 = vld [vmem:[%s1 + $0x208] sm:$0xf]
  %v164 = vld [vmem:[%s1 + $0x20c] sm:$0xf]
  %v165 = vld [vmem:[%s1 + $0x210] sm:$0xf]
  %v166 = vld [vmem:[%s1 + $0x214] sm:$0xf]
  %v167 = vld [vmem:[%s1 + $0x218] sm:$0xf]
  %v168 = vld [vmem:[%s1 + $0x21c] sm:$0xf]
  %v169 = vld [vmem:[%s1 + $0x220] sm:$0xf]
  %v170 = vld [vmem:[%s1 + $0x224] sm:$0xf]
  %v171 = vld [vmem:[%s1 + $0x228] sm:$0xf]
  %v172 = vld [vmem:[%s1 + $0x22c] sm:$0xf]
  %v173 = vld [vmem:[%s1 + $0x230] sm:$0xf]
  %v174 = vld [vmem:[%s1 + $0x234] sm:$0xf]
  %v175 = vld [vmem:[%s1 + $0x238] sm:$0xf]
  %v176 = vld [vmem:[%s1 + $0x23c] sm:$0xf]
  %v177 = vld [vmem:[%s1 + $0x240] sm:$0xf]
  %v178 = vld [vmem:[%s1 + $0x244] sm:$0xf]
  %v179 = vld [vmem:[%s1 + $0x248] sm:$0xf]
  %v180 = vld [vmem:[%s1 + $0x24c] sm:$0xf]
  %v181 = vld [vmem:[%s1 + $0x250] sm:$0xf]
  %v182 = vld [vmem:[%s1 + $0x254] sm:$0xf]
  %v183 = vld [vmem:[%s1 + $0x258] sm:$0xf]
  %v184 = vld [vmem:[%s1 + $0x25c] sm:$0xf]
  %v185 = vld [vmem:[%s1 + $0x260] sm:$0xf]
  %v186 = vld [vmem:[%s1 + $0x264] sm:$0xf]
  %v187 = vld [vmem:[%s1 + $0x268] sm:$0xf]
  %v188 = vld [vmem:[%s1 + $0x26c] sm:$0xf]
  %v189 = vld [vmem:[%s1 + $0x270] sm:$0xf]
  %v190 = vld [vmem:[%s1 + $0x274] sm:$0xf]
  %v191 = vld [vmem:[%s1 + $0x278] sm:$0xf]
  %v192 = vld [vmem:[%s1 + $0x27c] sm:$0xf]
  %v193 = vld [vmem:[%s1 + $0x280] sm:$0xf]
  %v194 = vld [vmem:[%s1 + $0x284] sm:$0xf]
  %v195 = vld [vmem:[%s1 + $0x288] sm:$0xf]
  %v196 = vld [vmem:[%s1 + $0x28c] sm:$0xf]
  %v197 = vld [vmem:[%s1 + $0x290] sm:$0xf]
  %v198 = vld [vmem:[%s1 + $0x294] sm:$0xf]
  %v199 = vld [vmem:[%s1 + $0x298] sm:$0xf]
  %v200 = vld [vmem:[%s1 + $0x29c] sm:$0xf]
  %v201 = vld [vmem:[%s1 + $0x2a0] sm:$0xf]
  %v202 = vld [vmem:[%s1 + $0x2a4] sm:$0xf]
  %v203 = vld [vmem:[%s1 + $0x2a8] sm:$0xf]
  %v204 = vld [vmem:[%s1 + $0x2ac] sm:$0xf]
  %v205 = vld [vmem:[%s1 + $0x2b0] sm:$0xf]
  %v206 = vld [vmem:[%s1 + $0x2b4] sm:$0xf]
  %v207 = vld [vmem:[%s1 + $0x2b8] sm:$0xf]
  %v208 = vld [vmem:[%s1 + $0x2bc] sm:$0xf]
  %v209 = vld [vmem:[%s1 + $0x2c0] sm:$0xf]
  %v210 = vld [vmem:[%s1 + $0x2c4] sm:$0xf]
  %v211 = vld [vmem:[%s1 + $0x2c8] sm:$0xf]
  %v212 = vld [vmem:[%s1 + $0x2cc] sm:$0xf]
  %v213 = vld [vmem:[%s1 + $0x2d0] sm:$0xf]
  %v214 = vld [vmem:[%s1 + $0x2d4] sm:$0xf]
  %v215 = vld [vmem:[%s1 + $0x2d8] sm:$0xf]
  %v216 = vld [vmem:[%s1 + $0x2dc] sm:$0xf]
  %v217 = vld [vmem:[%s1 + $0x2e0] sm:$0xf]
  %v218 = vld [vmem:[%s1 + $0x2e4] sm:$0xf]
  %v219 = vld [vmem:[%s1 + $0x2e8] sm:$0xf]
  %v220 = vld [vmem:[%s1 + $0x2ec] sm:$0xf]
  %v221 = vld [vmem:[%s1 + $0x2f0] sm:$0xf]
  %v222 = vld [vmem:[%s1 + $0x2f4] sm:$0xf]
  %v223 = vld [vmem:[%s1 + $0x2f8] sm:$0xf]
  %v224 = vld [vmem:[%s1 + $0x2fc] sm:$0xf]
  %v225 = vld [vmem:[%s1 + $0x300] sm:$0xf]
  %v226 = vld [vmem:[%s1 + $0x304] sm:$0xf]
  %v227 = vld [vmem:[%s1 + $0x308] sm:$0xf]
  %v228 = vld [vmem:[%s1 + $0x30c] sm:$0xf]
  %v229 = vld [vmem:[%s1 + $0x310] sm:$0xf]
  %v230 = vld [vmem:[%s1 + $0x314] sm:$0xf]
  %v231 = vld [vmem:[%s1 + $0x318] sm:$0xf]
  %v232 = vld [vmem:[%s1 + $0x31c] sm:$0xf]
  %v233 = vld [vmem:[%s1 + $0x320] sm:$0xf]
  %v234 = vld [vmem:[%s1 + $0x324] sm:$0xf]
  %v235 = vld [vmem:[%s1 + $0x328] sm:$0xf]
  %v236 = vld [vmem:[%s1 + $0x32c] sm:$0xf]
  %v237 = vld [vmem:[%s1 + $0x330] sm:$0xf]
  %v238 = vld [vmem:[%s1 + $0x334] sm:$0xf]
  %v239 = vld [vmem:[%s1 + $0x338] sm:$0xf]
  %v240 = vld [vmem:[%s1 + $0x33c] sm:$0xf]
  %v241 = vld [vmem:[%s1 + $0x340] sm:$0xf]
  %v242 = vld [vmem:[%s1 + $0x344] sm:$0xf]
  %v243 = vld [vmem:[%s1 + $0x348] sm:$0xf]
  %v244 = vld [vmem:[%s1 + $0x34c] sm:$0xf]
  %v245 = vld [vmem:[%s1 + $0x350] sm:$0xf]
  %v246 = vld [vmem:[%s1 + $0x354] sm:$0xf]
  %v247 = vld [vmem:[%s1 + $0x358] sm:$0xf]
  %v248 = vld [vmem:[%s1 + $0x35c] sm:$0xf]
  %v249 = vld [vmem:[%s1 + $0x360] sm:$0xf]
  %v250 = vld [vmem:[%s1 + $0x364] sm:$0xf]
  %v251 = vld [vmem:[%s1 + $0x368] sm:$0xf]
  %v252 = vld [vmem:[%s1 + $0x36c] sm:$0xf]
  %v253 = vld [vmem:[%s1 + $0x370] sm:$0xf]
  %v254 = vld [vmem:[%s1 + $0x374] sm:$0xf]
  %v255 = vld [vmem:[%s1 + $0x378] sm:$0xf]
  %v256 = vld [vmem:[%s1 + $0x37c] sm:$0xf]
  %v257 = vld [vmem:[%s1 + $0x380] sm:$0xf]
  %v258 = vld [vmem:[%s1 + $0x384] sm:$0xf]
  %v259 = vld [vmem:[%s1 + $0x388] sm:$0xf]
  %v260 = vld [vmem:[%s1 + $0x38c] sm:$0xf]
  %v261 = vld [vmem:[%s1 + $0x390] sm:$0xf]
  %v262 = vld [vmem:[%s1 + $0x394] sm:$0xf]
  %v263 = vld [vmem:[%s1 + $0x398] sm:$0xf]
  %v264 = vld [vmem:[%s1 + $0x39c] sm:$0xf]
  %v265 = vld [vmem:[%s1 + $0x3a0] sm:$0xf]
  %v266 = vld [vmem:[%s1 + $0x3a4] sm:$0xf]
  %v267 = vld [vmem:[%s1 + $0x3a8] sm:$0xf]
  %v268 = vld [vmem:[%s1 + $0x3ac] sm:$0xf]
  %v269 = vld [vmem:[%s1 + $0x3b0] sm:$0xf]
  %v270 = vld [vmem:[%s1 + $0x3b4] sm:$0xf]
  %v271 = vld [vmem:[%s1 + $0x3b8] sm:$0xf]
  %v272 = vld [vmem:[%s1 + $0x3bc] sm:$0xf]
  %v273 = vld [vmem:[%s1 + $0x3c0] sm:$0xf]
  %v274 = vld [vmem:[%s1 + $0x3c4] sm:$0xf]
  %v275 = vld [vmem:[%s1 + $0x3c8] sm:$0xf]
  %v276 = vld [vmem:[%s1 + $0x3cc] sm:$0xf]
  %v277 = vld [vmem:[%s1 + $0x3d0] sm:$0xf]
  %v278 = vld [vmem:[%s1 + $0x3d4] sm:$0xf]
  %v279 = vld [vmem:[%s1 + $0x3d8] sm:$0xf]
  %v280 = vld [vmem:[%s1 + $0x3dc] sm:$0xf]
  %v281 = vld [vmem:[%s1 + $0x3e0] sm:$0xf]
  %v282 = vld [vmem:[%s1 + $0x3e4] sm:$0xf]
  %v283 = vld [vmem:[%s1 + $0x3e8] sm:$0xf]
  %v284 = vld [vmem:[%s1 + $0x3ec] sm:$0xf]
  %v285 = vld [vmem:[%s1 + $0x3f0] sm:$0xf]
  %v286 = vld [vmem:[%s1 + $0x3f4] sm:$0xf]
  %v287 = vld [vmem:[%s1 + $0x3f8] sm:$0xf]
  %v288 = vld [vmem:[%s1 + $0x3fc] sm:$0xf]
  %v289 = vld [vmem:[%s1 + $0x400] sm:$0xf]
  %v290 = vld [vmem:[%s1 + $0x404] sm:$0xf]
  %v291 = vld [vmem:[%s1 + $0x408] sm:$0xf]
  %v292 = vld [vmem:[%s1 + $0x40c] sm:$0xf]
  %v293 = vld [vmem:[%s1 + $0x410] sm:$0xf]
  %v294 = vld [vmem:[%s1 + $0x414] sm:$0xf]
  %v295 = vld [vmem:[%s1 + $0x418] sm:$0xf]
  %v296 = vld [vmem:[%s1 + $0x41c] sm:$0xf]
  %v297 = vld [vmem:[%s1 + $0x420] sm:$0xf]
  %v298 = vld [vmem:[%s1 + $0x424] sm:$0xf]
  %v299 = vld [vmem:[%s1 + $0x428] sm:$0xf]
  %v300 = vld [vmem:[%s1 + $0x42c] sm:$0xf]
  %v301 = vld [vmem:[%s1 + $0x430] sm:$0xf]
  %v302 = vld [vmem:[%s1 + $0x434] sm:$0xf]
  %v303 = vld [vmem:[%s1 + $0x438] sm:$0xf]
  %v304 = vld [vmem:[%s1 + $0x43c] sm:$0xf]
  %v305 = vld [vmem:[%s1 + $0x440] sm:$0xf]
  %v306 = vld [vmem:[%s1 + $0x444] sm:$0xf]
  %v307 = vld [vmem:[%s1 + $0x448] sm:$0xf]
  %v308 = vld [vmem:[%s1 + $0x44c] sm:$0xf]
  %v309 = vld [vmem:[%s1 + $0x450] sm:$0xf]
  %v310 = vld [vmem:[%s1 + $0x454] sm:$0xf]
  %v311 = vld [vmem:[%s1 + $0x458] sm:$0xf]
  %v312 = vld [vmem:[%s1 + $0x45c] sm:$0xf]
  %v313 = vld [vmem:[%s1 + $0x460] sm:$0xf]
  %v314 = vld [vmem:[%s1 + $0x464] sm:$0xf]
  %v315 = vld [vmem:[%s1 + $0x468] sm:$0xf]
  %v316 = vld [vmem:[%s1 + $0x46c] sm:$0xf]
  %v317 = vld [vmem:[%s1 + $0x470] sm:$0xf]
  %v318 = vld [vmem:[%s1 + $0x474] sm:$0xf]
  %v319 = vld [vmem:[%s1 + $0x478] sm:$0xf]
  %v320 = vld [vmem:[%s1 + $0x47c] sm:$0xf]
  %v321 = vld [vmem:[%s2] sm:$0x1]
  %v323 = vlaneseq
  %v324 = vshrl.u32 %v323, 7
  %v325 = vsub.s32 0, %v324
  %v326 = vrot.slane %v321, %v325
  %v346 = vunpack.c.l.b16 %v15
  %v347 = vunpack.c.h.b16 %v15
  %v348 = vunpack.c.l.b16 %v16
  %v349 = vunpack.c.h.b16 %v16
  %v350 = vunpack.c.l.b16 %v17
  %v351 = vunpack.c.h.b16 %v17
  %v352 = vunpack.c.l.b16 %v18
  %v353 = vunpack.c.h.b16 %v18
  %v354 = vunpack.c.l.b16 %v19
  %v355 = vunpack.c.h.b16 %v19
  %v356 = vunpack.c.l.b16 %v20
  %v357 = vunpack.c.h.b16 %v20
  %v358 = vunpack.c.l.b16 %v21
  %v359 = vunpack.c.h.b16 %v21
  %v360 = vunpack.c.l.b16 %v22
  %v361 = vunpack.c.h.b16 %v22
  %v362 = vunpack.c.l.b16 %v23
  %v363 = vunpack.c.h.b16 %v23
  %v364 = vunpack.c.l.b16 %v24
  %v365 = vunpack.c.h.b16 %v24
  %v366 = vunpack.c.l.b16 %v25
  %v367 = vunpack.c.h.b16 %v25
  %v368 = vunpack.c.l.b16 %v26
  %v369 = vunpack.c.h.b16 %v26
  %v370 = vunpack.c.l.b16 %v27
  %v371 = vunpack.c.h.b16 %v27
  %v372 = vunpack.c.l.b16 %v28
  %v373 = vunpack.c.h.b16 %v28
  %v374 = vunpack.c.l.b16 %v29
  %v375 = vunpack.c.h.b16 %v29
  %v376 = vunpack.c.l.b16 %v30
  %v377 = vunpack.c.h.b16 %v30
  %v378 = vunpack.c.l.b16 %v31
  %v379 = vunpack.c.h.b16 %v31
  %v380 = vunpack.c.l.b16 %v32
  %v381 = vunpack.c.h.b16 %v32
  %v382 = vpack.c.b16 %v364, %v346
  %v383 = vpack.c.b16 %v365, %v347
  %v384 = vpack.c.b16 %v366, %v348
  %v385 = vpack.c.b16 %v367, %v349
  %v386 = vpack.c.b16 %v368, %v350
  %v387 = vpack.c.b16 %v369, %v351
  %v388 = vpack.c.b16 %v370, %v352
  %v389 = vpack.c.b16 %v371, %v353
  %v390 = vpack.c.b16 %v372, %v354
  %v391 = vpack.c.b16 %v373, %v355
  %v392 = vpack.c.b16 %v374, %v356
  %v393 = vpack.c.b16 %v375, %v357
  %v394 = vpack.c.b16 %v376, %v358
  %v395 = vpack.c.b16 %v377, %v359
  %v396 = vpack.c.b16 %v378, %v360
  %v397 = vpack.c.b16 %v379, %v361
  %v398 = vpack.c.b16 %v380, %v362
  %v399 = vpack.c.b16 %v381, %v363
  %v706 = vunpack.c.l.b16 %v33
  %v707 = vunpack.c.l.b16 %v34
  %v708 = vunpack.c.l.b16 %v35
  %v709 = vunpack.c.l.b16 %v36
  %v710 = vunpack.c.l.b16 %v37
  %v711 = vunpack.c.l.b16 %v38
  %v712 = vunpack.c.l.b16 %v39
  %v713 = vunpack.c.l.b16 %v40
  %v714 = vunpack.c.l.b16 %v41
  %v715 = vunpack.c.l.b16 %v42
  %v716 = vunpack.c.l.b16 %v43
  %v717 = vunpack.c.l.b16 %v44
  %v718 = vunpack.c.l.b16 %v45
  %v719 = vunpack.c.l.b16 %v46
  %v720 = vunpack.c.l.b16 %v47
  %v721 = vunpack.c.l.b16 %v48
  %v722 = vunpack.c.l.b16 %v49
  %v723 = vunpack.c.l.b16 %v50
  %v724 = vunpack.c.l.b16 %v51
  %v725 = vunpack.c.l.b16 %v52
  %v726 = vunpack.c.l.b16 %v53
  %v727 = vunpack.c.l.b16 %v54
  %v728 = vunpack.c.l.b16 %v55
  %v729 = vunpack.c.l.b16 %v56
  %v730 = vunpack.c.l.b16 %v57
  %v731 = vunpack.c.l.b16 %v58
  %v732 = vunpack.c.l.b16 %v59
  %v733 = vunpack.c.l.b16 %v60
  %v734 = vunpack.c.l.b16 %v61
  %v735 = vunpack.c.l.b16 %v62
  %v736 = vunpack.c.l.b16 %v63
  %v737 = vunpack.c.l.b16 %v64
  %v738 = vunpack.c.l.b16 %v65
  %v739 = vunpack.c.l.b16 %v66
  %v740 = vunpack.c.l.b16 %v67
  %v741 = vunpack.c.l.b16 %v68
  %v742 = vunpack.c.l.b16 %v69
  %v743 = vunpack.c.l.b16 %v70
  %v744 = vunpack.c.l.b16 %v71
  %v745 = vunpack.c.l.b16 %v72
  %v746 = vunpack.c.l.b16 %v73
  %v747 = vunpack.c.l.b16 %v74
  %v748 = vunpack.c.l.b16 %v75
  %v749 = vunpack.c.l.b16 %v76
  %v750 = vunpack.c.l.b16 %v77
  %v751 = vunpack.c.l.b16 %v78
  %v752 = vunpack.c.l.b16 %v79
  %v753 = vunpack.c.l.b16 %v80
  %v754 = vunpack.c.l.b16 %v81
  %v755 = vunpack.c.l.b16 %v82
  %v756 = vunpack.c.l.b16 %v83
  %v757 = vunpack.c.l.b16 %v84
  %v758 = vunpack.c.l.b16 %v85
  %v759 = vunpack.c.l.b16 %v86
  %v760 = vunpack.c.l.b16 %v87
  %v761 = vunpack.c.l.b16 %v88
  %v762 = vunpack.c.l.b16 %v89
  %v763 = vunpack.c.l.b16 %v90
  %v764 = vunpack.c.l.b16 %v91
  %v765 = vunpack.c.l.b16 %v92
  %v766 = vunpack.c.l.b16 %v93
  %v767 = vunpack.c.l.b16 %v94
  %v768 = vunpack.c.l.b16 %v95
  %v769 = vunpack.c.l.b16 %v96
  %v770 = vunpack.c.l.b16 %v97
  %v771 = vunpack.c.l.b16 %v98
  %v772 = vunpack.c.l.b16 %v99
  %v773 = vunpack.c.l.b16 %v100
  %v774 = vunpack.c.l.b16 %v101
  %v775 = vunpack.c.l.b16 %v102
  %v776 = vunpack.c.l.b16 %v103
  %v777 = vunpack.c.l.b16 %v104
  %v778 = vunpack.c.l.b16 %v105
  %v779 = vunpack.c.l.b16 %v106
  %v780 = vunpack.c.l.b16 %v107
  %v781 = vunpack.c.l.b16 %v108
  %v782 = vunpack.c.l.b16 %v109
  %v783 = vunpack.c.l.b16 %v110
  %v784 = vunpack.c.l.b16 %v111
  %v785 = vunpack.c.l.b16 %v112
  %v786 = vunpack.c.l.b16 %v113
  %v787 = vunpack.c.l.b16 %v114
  %v788 = vunpack.c.l.b16 %v115
  %v789 = vunpack.c.l.b16 %v116
  %v790 = vunpack.c.l.b16 %v117
  %v791 = vunpack.c.l.b16 %v118
  %v792 = vunpack.c.l.b16 %v119
  %v793 = vunpack.c.l.b16 %v120
  %v794 = vunpack.c.l.b16 %v121
  %v795 = vunpack.c.l.b16 %v122
  %v796 = vunpack.c.l.b16 %v123
  %v797 = vunpack.c.l.b16 %v124
  %v798 = vunpack.c.l.b16 %v125
  %v799 = vunpack.c.l.b16 %v126
  %v800 = vunpack.c.l.b16 %v127
  %v801 = vunpack.c.l.b16 %v128
  %v802 = vunpack.c.l.b16 %v129
  %v803 = vunpack.c.l.b16 %v130
  %v804 = vunpack.c.l.b16 %v131
  %v805 = vunpack.c.l.b16 %v132
  %v806 = vunpack.c.l.b16 %v133
  %v807 = vunpack.c.l.b16 %v134
  %v808 = vunpack.c.l.b16 %v135
  %v809 = vunpack.c.l.b16 %v136
  %v810 = vunpack.c.l.b16 %v137
  %v811 = vunpack.c.l.b16 %v138
  %v812 = vunpack.c.l.b16 %v139
  %v813 = vunpack.c.l.b16 %v140
  %v814 = vunpack.c.l.b16 %v141
  %v815 = vunpack.c.l.b16 %v142
  %v816 = vunpack.c.l.b16 %v143
  %v817 = vunpack.c.l.b16 %v144
  %v818 = vunpack.c.l.b16 %v145
  %v819 = vunpack.c.l.b16 %v146
  %v820 = vunpack.c.l.b16 %v147
  %v821 = vunpack.c.l.b16 %v148
  %v822 = vunpack.c.l.b16 %v149
  %v823 = vunpack.c.l.b16 %v150
  %v824 = vunpack.c.l.b16 %v151
  %v825 = vunpack.c.l.b16 %v152
  %v826 = vunpack.c.l.b16 %v153
  %v827 = vunpack.c.l.b16 %v154
  %v828 = vunpack.c.l.b16 %v155
  %v829 = vunpack.c.l.b16 %v156
  %v830 = vunpack.c.l.b16 %v157
  %v831 = vunpack.c.l.b16 %v158
  %v832 = vunpack.c.l.b16 %v159
  %v833 = vunpack.c.l.b16 %v160
  %v834 = vunpack.c.l.b16 %v161
  %v835 = vunpack.c.l.b16 %v162
  %v836 = vunpack.c.l.b16 %v163
  %v837 = vunpack.c.l.b16 %v164
  %v838 = vunpack.c.l.b16 %v165
  %v839 = vunpack.c.l.b16 %v166
  %v840 = vunpack.c.l.b16 %v167
  %v841 = vunpack.c.l.b16 %v168
  %v842 = vunpack.c.l.b16 %v169
  %v843 = vunpack.c.l.b16 %v170
  %v844 = vunpack.c.l.b16 %v171
  %v845 = vunpack.c.l.b16 %v172
  %v846 = vunpack.c.l.b16 %v173
  %v847 = vunpack.c.l.b16 %v174
  %v848 = vunpack.c.l.b16 %v175
  %v849 = vunpack.c.l.b16 %v176
  %v850 = vunpack.c.l.b16 %v177
  %v851 = vunpack.c.l.b16 %v178
  %v852 = vunpack.c.l.b16 %v179
  %v853 = vunpack.c.l.b16 %v180
  %v854 = vunpack.c.l.b16 %v181
  %v855 = vunpack.c.l.b16 %v182
  %v856 = vunpack.c.l.b16 %v183
  %v857 = vunpack.c.l.b16 %v184
  %v858 = vunpack.c.l.b16 %v185
  %v859 = vunpack.c.l.b16 %v186
  %v860 = vunpack.c.l.b16 %v187
  %v861 = vunpack.c.l.b16 %v188
  %v862 = vunpack.c.l.b16 %v189
  %v863 = vunpack.c.l.b16 %v190
  %v864 = vunpack.c.l.b16 %v191
  %v865 = vunpack.c.l.b16 %v192
  %v866 = vunpack.c.l.b16 %v193
  %v867 = vunpack.c.l.b16 %v194
  %v868 = vunpack.c.l.b16 %v195
  %v869 = vunpack.c.l.b16 %v196
  %v870 = vunpack.c.l.b16 %v197
  %v871 = vunpack.c.l.b16 %v198
  %v872 = vunpack.c.l.b16 %v199
  %v873 = vunpack.c.l.b16 %v200
  %v874 = vunpack.c.l.b16 %v201
  %v875 = vunpack.c.l.b16 %v202
  %v876 = vunpack.c.l.b16 %v203
  %v877 = vunpack.c.l.b16 %v204
  %v878 = vunpack.c.l.b16 %v205
  %v879 = vunpack.c.l.b16 %v206
  %v880 = vunpack.c.l.b16 %v207
  %v881 = vunpack.c.l.b16 %v208
  %v882 = vunpack.c.l.b16 %v209
  %v883 = vunpack.c.l.b16 %v210
  %v884 = vunpack.c.l.b16 %v211
  %v885 = vunpack.c.l.b16 %v212
  %v886 = vunpack.c.l.b16 %v213
  %v887 = vunpack.c.l.b16 %v214
  %v888 = vunpack.c.l.b16 %v215
  %v889 = vunpack.c.l.b16 %v216
  %v890 = vunpack.c.l.b16 %v217
  %v891 = vunpack.c.l.b16 %v218
  %v892 = vunpack.c.l.b16 %v219
  %v893 = vunpack.c.l.b16 %v220
  %v894 = vunpack.c.l.b16 %v221
  %v895 = vunpack.c.l.b16 %v222
  %v896 = vunpack.c.l.b16 %v223
  %v897 = vunpack.c.l.b16 %v224
  %v898 = vunpack.c.l.b16 %v225
  %v899 = vunpack.c.l.b16 %v226
  %v900 = vunpack.c.l.b16 %v227
  %v901 = vunpack.c.l.b16 %v228
  %v902 = vunpack.c.l.b16 %v229
  %v903 = vunpack.c.l.b16 %v230
  %v904 = vunpack.c.l.b16 %v231
  %v905 = vunpack.c.l.b16 %v232
  %v906 = vunpack.c.l.b16 %v233
  %v907 = vunpack.c.l.b16 %v234
  %v908 = vunpack.c.l.b16 %v235
  %v909 = vunpack.c.l.b16 %v236
  %v910 = vunpack.c.l.b16 %v237
  %v911 = vunpack.c.l.b16 %v238
  %v912 = vunpack.c.l.b16 %v239
  %v913 = vunpack.c.l.b16 %v240
  %v914 = vunpack.c.l.b16 %v241
  %v915 = vunpack.c.l.b16 %v242
  %v916 = vunpack.c.l.b16 %v243
  %v917 = vunpack.c.l.b16 %v244
  %v918 = vunpack.c.l.b16 %v245
  %v919 = vunpack.c.l.b16 %v246
  %v920 = vunpack.c.l.b16 %v247
  %v921 = vunpack.c.l.b16 %v248
  %v922 = vunpack.c.l.b16 %v249
  %v923 = vunpack.c.l.b16 %v250
  %v924 = vunpack.c.l.b16 %v251
  %v925 = vunpack.c.l.b16 %v252
  %v926 = vunpack.c.l.b16 %v253
  %v927 = vunpack.c.l.b16 %v254
  %v928 = vunpack.c.l.b16 %v255
  %v929 = vunpack.c.l.b16 %v256
  %v930 = vunpack.c.l.b16 %v257
  %v931 = vunpack.c.l.b16 %v258
  %v932 = vunpack.c.l.b16 %v259
  %v933 = vunpack.c.l.b16 %v260
  %v934 = vunpack.c.l.b16 %v261
  %v935 = vunpack.c.l.b16 %v262
  %v936 = vunpack.c.l.b16 %v263
  %v937 = vunpack.c.l.b16 %v264
  %v938 = vunpack.c.l.b16 %v265
  %v939 = vunpack.c.l.b16 %v266
  %v940 = vunpack.c.l.b16 %v267
  %v941 = vunpack.c.l.b16 %v268
  %v942 = vunpack.c.l.b16 %v269
  %v943 = vunpack.c.l.b16 %v270
  %v944 = vunpack.c.l.b16 %v271
  %v945 = vunpack.c.l.b16 %v272
  %v946 = vunpack.c.l.b16 %v273
  %v947 = vunpack.c.l.b16 %v274
  %v948 = vunpack.c.l.b16 %v275
  %v949 = vunpack.c.l.b16 %v276
  %v950 = vunpack.c.l.b16 %v277
  %v951 = vunpack.c.l.b16 %v278
  %v952 = vunpack.c.l.b16 %v279
  %v953 = vunpack.c.l.b16 %v280
  %v954 = vunpack.c.l.b16 %v281
  %v955 = vunpack.c.l.b16 %v282
  %v956 = vunpack.c.l.b16 %v283
  %v957 = vunpack.c.l.b16 %v284
  %v958 = vunpack.c.l.b16 %v285
  %v959 = vunpack.c.l.b16 %v286
  %v960 = vunpack.c.l.b16 %v287
  %v961 = vunpack.c.l.b16 %v288
  %v962 = vunpack.c.l.b16 %v289
  %v963 = vunpack.c.l.b16 %v290
  %v964 = vunpack.c.l.b16 %v291
  %v965 = vunpack.c.l.b16 %v292
  %v966 = vunpack.c.l.b16 %v293
  %v967 = vunpack.c.l.b16 %v294
  %v968 = vunpack.c.l.b16 %v295
  %v969 = vunpack.c.l.b16 %v296
  %v970 = vunpack.c.l.b16 %v297
  %v971 = vunpack.c.l.b16 %v298
  %v972 = vunpack.c.l.b16 %v299
  %v973 = vunpack.c.l.b16 %v300
  %v974 = vunpack.c.l.b16 %v301
  %v975 = vunpack.c.l.b16 %v302
  %v976 = vunpack.c.l.b16 %v303
  %v977 = vunpack.c.l.b16 %v304
  %v978 = vunpack.c.l.b16 %v305
  %v979 = vunpack.c.l.b16 %v306
  %v980 = vunpack.c.l.b16 %v307
  %v981 = vunpack.c.l.b16 %v308
  %v982 = vunpack.c.l.b16 %v309
  %v983 = vunpack.c.l.b16 %v310
  %v984 = vunpack.c.l.b16 %v311
  %v985 = vunpack.c.l.b16 %v312
  %v986 = vunpack.c.l.b16 %v313
  %v987 = vunpack.c.l.b16 %v314
  %v988 = vunpack.c.l.b16 %v315
  %v989 = vunpack.c.l.b16 %v316
  %v990 = vunpack.c.l.b16 %v317
  %v991 = vunpack.c.l.b16 %v318
  %v992 = vunpack.c.l.b16 %v319
  %v993 = vunpack.c.l.b16 %v320
  %v994 = vpack.c.b16 %v707, %v706
  %v995 = vpack.c.b16 %v709, %v708
  %v996 = vpack.c.b16 %v711, %v710
  %v997 = vpack.c.b16 %v713, %v712
  %v998 = vpack.c.b16 %v715, %v714
  %v999 = vpack.c.b16 %v717, %v716
  %v1000 = vpack.c.b16 %v719, %v718
  %v1001 = vpack.c.b16 %v721, %v720
  %v1002 = vpack.c.b16 %v723, %v722
  %v1003 = vpack.c.b16 %v725, %v724
  %v1004 = vpack.c.b16 %v727, %v726
  %v1005 = vpack.c.b16 %v729, %v728
  %v1006 = vpack.c.b16 %v731, %v730
  %v1007 = vpack.c.b16 %v733, %v732
  %v1008 = vpack.c.b16 %v735, %v734
  %v1009 = vpack.c.b16 %v737, %v736
  %v1010 = vpack.c.b16 %v739, %v738
  %v1011 = vpack.c.b16 %v741, %v740
  %v1012 = vpack.c.b16 %v743, %v742
  %v1013 = vpack.c.b16 %v745, %v744
  %v1014 = vpack.c.b16 %v747, %v746
  %v1015 = vpack.c.b16 %v749, %v748
  %v1016 = vpack.c.b16 %v751, %v750
  %v1017 = vpack.c.b16 %v753, %v752
  %v1018 = vpack.c.b16 %v755, %v754
  %v1019 = vpack.c.b16 %v757, %v756
  %v1020 = vpack.c.b16 %v759, %v758
  %v1021 = vpack.c.b16 %v761, %v760
  %v1022 = vpack.c.b16 %v763, %v762
  %v1023 = vpack.c.b16 %v765, %v764
  %v1024 = vpack.c.b16 %v767, %v766
  %v1025 = vpack.c.b16 %v769, %v768
  %v1026 = vpack.c.b16 %v771, %v770
  %v1027 = vpack.c.b16 %v773, %v772
  %v1028 = vpack.c.b16 %v775, %v774
  %v1029 = vpack.c.b16 %v777, %v776
  %v1030 = vpack.c.b16 %v779, %v778
  %v1031 = vpack.c.b16 %v781, %v780
  %v1032 = vpack.c.b16 %v783, %v782
  %v1033 = vpack.c.b16 %v785, %v784
  %v1034 = vpack.c.b16 %v787, %v786
  %v1035 = vpack.c.b16 %v789, %v788
  %v1036 = vpack.c.b16 %v791, %v790
  %v1037 = vpack.c.b16 %v793, %v792
  %v1038 = vpack.c.b16 %v795, %v794
  %v1039 = vpack.c.b16 %v797, %v796
  %v1040 = vpack.c.b16 %v799, %v798
  %v1041 = vpack.c.b16 %v801, %v800
  %v1042 = vpack.c.b16 %v803, %v802
  %v1043 = vpack.c.b16 %v805, %v804
  %v1044 = vpack.c.b16 %v807, %v806
  %v1045 = vpack.c.b16 %v809, %v808
  %v1046 = vpack.c.b16 %v811, %v810
  %v1047 = vpack.c.b16 %v813, %v812
  %v1048 = vpack.c.b16 %v815, %v814
  %v1049 = vpack.c.b16 %v817, %v816
  %v1050 = vpack.c.b16 %v819, %v818
  %v1051 = vpack.c.b16 %v821, %v820
  %v1052 = vpack.c.b16 %v823, %v822
  %v1053 = vpack.c.b16 %v825, %v824
  %v1054 = vpack.c.b16 %v827, %v826
  %v1055 = vpack.c.b16 %v829, %v828
  %v1056 = vpack.c.b16 %v831, %v830
  %v1057 = vpack.c.b16 %v833, %v832
  %v1058 = vpack.c.b16 %v835, %v834
  %v1059 = vpack.c.b16 %v837, %v836
  %v1060 = vpack.c.b16 %v839, %v838
  %v1061 = vpack.c.b16 %v841, %v840
  %v1062 = vpack.c.b16 %v843, %v842
  %v1063 = vpack.c.b16 %v845, %v844
  %v1064 = vpack.c.b16 %v847, %v846
  %v1065 = vpack.c.b16 %v849, %v848
  %v1066 = vpack.c.b16 %v851, %v850
  %v1067 = vpack.c.b16 %v853, %v852
  %v1068 = vpack.c.b16 %v855, %v854
  %v1069 = vpack.c.b16 %v857, %v856
  %v1070 = vpack.c.b16 %v859, %v858
  %v1071 = vpack.c.b16 %v861, %v860
  %v1072 = vpack.c.b16 %v863, %v862
  %v1073 = vpack.c.b16 %v865, %v864
  %v1074 = vpack.c.b16 %v867, %v866
  %v1075 = vpack.c.b16 %v869, %v868
  %v1076 = vpack.c.b16 %v871, %v870
  %v1077 = vpack.c.b16 %v873, %v872
  %v1078 = vpack.c.b16 %v875, %v874
  %v1079 = vpack.c.b16 %v877, %v876
  %v1080 = vpack.c.b16 %v879, %v878
  %v1081 = vpack.c.b16 %v881, %v880
  %v1082 = vpack.c.b16 %v883, %v882
  %v1083 = vpack.c.b16 %v885, %v884
  %v1084 = vpack.c.b16 %v887, %v886
  %v1085 = vpack.c.b16 %v889, %v888
  %v1086 = vpack.c.b16 %v891, %v890
  %v1087 = vpack.c.b16 %v893, %v892
  %v1088 = vpack.c.b16 %v895, %v894
  %v1089 = vpack.c.b16 %v897, %v896
  %v1090 = vpack.c.b16 %v899, %v898
  %v1091 = vpack.c.b16 %v901, %v900
  %v1092 = vpack.c.b16 %v903, %v902
  %v1093 = vpack.c.b16 %v905, %v904
  %v1094 = vpack.c.b16 %v907, %v906
  %v1095 = vpack.c.b16 %v909, %v908
  %v1096 = vpack.c.b16 %v911, %v910
  %v1097 = vpack.c.b16 %v913, %v912
  %v1098 = vpack.c.b16 %v915, %v914
  %v1099 = vpack.c.b16 %v917, %v916
  %v1100 = vpack.c.b16 %v919, %v918
  %v1101 = vpack.c.b16 %v921, %v920
  %v1102 = vpack.c.b16 %v923, %v922
  %v1103 = vpack.c.b16 %v925, %v924
  %v1104 = vpack.c.b16 %v927, %v926
  %v1105 = vpack.c.b16 %v929, %v928
  %v1106 = vpack.c.b16 %v931, %v930
  %v1107 = vpack.c.b16 %v933, %v932
  %v1108 = vpack.c.b16 %v935, %v934
  %v1109 = vpack.c.b16 %v937, %v936
  %v1110 = vpack.c.b16 %v939, %v938
  %v1111 = vpack.c.b16 %v941, %v940
  %v1112 = vpack.c.b16 %v943, %v942
  %v1113 = vpack.c.b16 %v945, %v944
  %v1114 = vpack.c.b16 %v947, %v946
  %v1115 = vpack.c.b16 %v949, %v948
  %v1116 = vpack.c.b16 %v951, %v950
  %v1117 = vpack.c.b16 %v953, %v952
  %v1118 = vpack.c.b16 %v955, %v954
  %v1119 = vpack.c.b16 %v957, %v956
  %v1120 = vpack.c.b16 %v959, %v958
  %v1121 = vpack.c.b16 %v961, %v960
  %v1122 = vpack.c.b16 %v963, %v962
  %v1123 = vpack.c.b16 %v965, %v964
  %v1124 = vpack.c.b16 %v967, %v966
  %v1125 = vpack.c.b16 %v969, %v968
  %v1126 = vpack.c.b16 %v971, %v970
  %v1127 = vpack.c.b16 %v973, %v972
  %v1128 = vpack.c.b16 %v975, %v974
  %v1129 = vpack.c.b16 %v977, %v976
  %v1130 = vpack.c.b16 %v979, %v978
  %v1131 = vpack.c.b16 %v981, %v980
  %v1132 = vpack.c.b16 %v983, %v982
  %v1133 = vpack.c.b16 %v985, %v984
  %v1134 = vpack.c.b16 %v987, %v986
  %v1135 = vpack.c.b16 %v989, %v988
  %v1136 = vpack.c.b16 %v991, %v990
  %v1137 = vpack.c.b16 %v993, %v992
  %1282 = vmatprep.subr.bf16.mxu0 0
  %1283 = vmatpush1.bf16.msra.mxu0 %v1001
  %1284 = vmatprep.subr.bf16.mxu0 0
  %1285 = vmatpush1.bf16.msra.mxu0 %v1000
  %1286 = vmatprep.subr.bf16.mxu0 0
  %1287 = vmatpush1.bf16.msra.mxu0 %v999
  %1288 = vmatprep.subr.bf16.mxu0 0
  %1289 = vmatpush1.bf16.msra.mxu0 %v998
  %1290 = vmatprep.subr.bf16.mxu0 0
  %1291 = vmatpush1.bf16.msra.mxu0 %v997
  %1292 = vmatprep.subr.bf16.mxu0 0
  %1293 = vmatpush1.bf16.msra.mxu0 %v996
  %1294 = vmatprep.subr.bf16.mxu0 0
  %1295 = vmatpush1.bf16.msra.mxu0 %v995
  %1296 = vmatprep.subr.bf16.mxu0 0
  %1297 = vmatpush1.bf16.msra.mxu0 %v994
  %1298 = vmatprep.subr.bf16.mxu0 0
  %1299 = vmatpush2.bf16.msra.mxu0 %v1009
  %1300 = vmatprep.subr.bf16.mxu0 0
  %1301 = vmatpush2.bf16.msra.mxu0 %v1008
  %1302 = vmatprep.subr.bf16.mxu0 0
  %1303 = vmatpush2.bf16.msra.mxu0 %v1007
  %1304 = vmatprep.subr.bf16.mxu0 0
  %1305 = vmatpush2.bf16.msra.mxu0 %v1006
  %1306 = vmatprep.subr.bf16.mxu0 0
  %1307 = vmatpush2.bf16.msra.mxu0 %v1005
  %1308 = vmatprep.subr.bf16.mxu0 0
  %1309 = vmatpush2.bf16.msra.mxu0 %v1004
  %1310 = vmatprep.subr.bf16.mxu0 0
  %1311 = vmatpush2.bf16.msra.mxu0 %v1003
  %1312 = vmatprep.subr.bf16.mxu0 0
  %1313 = vmatpush2.bf16.msra.mxu0 %v1002
  %1314 = vmatprep.mubr.bf16.mxu0 %v383
  %1315 = vmatmul.mubr.bf16.gmra.mxu0 %v382
  %v1316 = vpop.f32.mrf.mxu0
  %v1317 = vadd.f32 %v326, %v1316
  %v1318 = vpop.f32.mrf.mxu0
  %v1319 = vpop.f32.mrf.mxu0
  %v1320 = vadd.f32 %v326, %v1319
  %v1321 = vpop.f32.mrf.mxu0
  %1322 = vdwg.mxu0
  %1323 = vmatprep.subr.bf16.mxu0 0
  %1324 = vmatpush1.bf16.msra.mxu0 %v1017
  %1325 = vmatprep.subr.bf16.mxu0 0
  %1326 = vmatpush1.bf16.msra.mxu0 %v1016
  %1327 = vmatprep.subr.bf16.mxu0 0
  %1328 = vmatpush1.bf16.msra.mxu0 %v1015
  %1329 = vmatprep.subr.bf16.mxu0 0
  %1330 = vmatpush1.bf16.msra.mxu0 %v1014
  %1331 = vmatprep.subr.bf16.mxu0 0
  %1332 = vmatpush1.bf16.msra.mxu0 %v1013
  %1333 = vmatprep.subr.bf16.mxu0 0
  %1334 = vmatpush1.bf16.msra.mxu0 %v1012
  %1335 = vmatprep.subr.bf16.mxu0 0
  %1336 = vmatpush1.bf16.msra.mxu0 %v1011
  %1337 = vmatprep.subr.bf16.mxu0 0
  %1338 = vmatpush1.bf16.msra.mxu0 %v1010
  %1339 = vmatprep.subr.bf16.mxu0 0
  %1340 = vmatpush2.bf16.msra.mxu0 %v1025
  %1341 = vmatprep.subr.bf16.mxu0 0
  %1342 = vmatpush2.bf16.msra.mxu0 %v1024
  %1343 = vmatprep.subr.bf16.mxu0 0
  %1344 = vmatpush2.bf16.msra.mxu0 %v1023
  %1345 = vmatprep.subr.bf16.mxu0 0
  %1346 = vmatpush2.bf16.msra.mxu0 %v1022
  %1347 = vmatprep.subr.bf16.mxu0 0
  %1348 = vmatpush2.bf16.msra.mxu0 %v1021
  %1349 = vmatprep.subr.bf16.mxu0 0
  %1350 = vmatpush2.bf16.msra.mxu0 %v1020
  %1351 = vmatprep.subr.bf16.mxu0 0
  %1352 = vmatpush2.bf16.msra.mxu0 %v1019
  %1353 = vmatprep.subr.bf16.mxu0 0
  %1354 = vmatpush2.bf16.msra.mxu0 %v1018
  %1355 = vmatprep.mubr.bf16.mxu0 %v385
  %1356 = vmatmul.mubr.bf16.gmra.mxu0 %v384
  %v1357 = vpop.f32.mrf.mxu0
  %v1358 = vadd.f32 %v1317, %v1357
  %v1359 = vpop.f32.mrf.mxu0
  %v1360 = vpop.f32.mrf.mxu0
  %v1361 = vadd.f32 %v1320, %v1360
  %v1362 = vpop.f32.mrf.mxu0
  %1363 = vdwg.mxu0
  %1364 = vmatprep.subr.bf16.mxu0 0
  %1365 = vmatpush1.bf16.msra.mxu0 %v1033
  %1366 = vmatprep.subr.bf16.mxu0 0
  %1367 = vmatpush1.bf16.msra.mxu0 %v1032
  %1368 = vmatprep.subr.bf16.mxu0 0
  %1369 = vmatpush1.bf16.msra.mxu0 %v1031
  %1370 = vmatprep.subr.bf16.mxu0 0
  %1371 = vmatpush1.bf16.msra.mxu0 %v1030
  %1372 = vmatprep.subr.bf16.mxu0 0
  %1373 = vmatpush1.bf16.msra.mxu0 %v1029
  %1374 = vmatprep.subr.bf16.mxu0 0
  %1375 = vmatpush1.bf16.msra.mxu0 %v1028
  %1376 = vmatprep.subr.bf16.mxu0 0
  %1377 = vmatpush1.bf16.msra.mxu0 %v1027
  %1378 = vmatprep.subr.bf16.mxu0 0
  %1379 = vmatpush1.bf16.msra.mxu0 %v1026
  %1380 = vmatprep.subr.bf16.mxu0 0
  %1381 = vmatpush2.bf16.msra.mxu0 %v1041
  %1382 = vmatprep.subr.bf16.mxu0 0
  %1383 = vmatpush2.bf16.msra.mxu0 %v1040
  %1384 = vmatprep.subr.bf16.mxu0 0
  %1385 = vmatpush2.bf16.msra.mxu0 %v1039
  %1386 = vmatprep.subr.bf16.mxu0 0
  %1387 = vmatpush2.bf16.msra.mxu0 %v1038
  %1388 = vmatprep.subr.bf16.mxu0 0
  %1389 = vmatpush2.bf16.msra.mxu0 %v1037
  %1390 = vmatprep.subr.bf16.mxu0 0
  %1391 = vmatpush2.bf16.msra.mxu0 %v1036
  %1392 = vmatprep.subr.bf16.mxu0 0
  %1393 = vmatpush2.bf16.msra.mxu0 %v1035
  %1394 = vmatprep.subr.bf16.mxu0 0
  %1395 = vmatpush2.bf16.msra.mxu0 %v1034
  %1396 = vmatprep.mubr.bf16.mxu0 %v387
  %1397 = vmatmul.mubr.bf16.gmra.mxu0 %v386
  %v1398 = vpop.f32.mrf.mxu0
  %v1399 = vadd.f32 %v1358, %v1398
  %v1400 = vpop.f32.mrf.mxu0
  %v1401 = vpop.f32.mrf.mxu0
  %v1402 = vadd.f32 %v1361, %v1401
  %v1403 = vpop.f32.mrf.mxu0
  %1404 = vdwg.mxu0
  %1405 = vmatprep.subr.bf16.mxu0 0
  %1406 = vmatpush1.bf16.msra.mxu0 %v1049
  %1407 = vmatprep.subr.bf16.mxu0 0
  %1408 = vmatpush1.bf16.msra.mxu0 %v1048
  %1409 = vmatprep.subr.bf16.mxu0 0
  %1410 = vmatpush1.bf16.msra.mxu0 %v1047
  %1411 = vmatprep.subr.bf16.mxu0 0
  %1412 = vmatpush1.bf16.msra.mxu0 %v1046
  %1413 = vmatprep.subr.bf16.mxu0 0
  %1414 = vmatpush1.bf16.msra.mxu0 %v1045
  %1415 = vmatprep.subr.bf16.mxu0 0
  %1416 = vmatpush1.bf16.msra.mxu0 %v1044
  %1417 = vmatprep.subr.bf16.mxu0 0
  %1418 = vmatpush1.bf16.msra.mxu0 %v1043
  %1419 = vmatprep.subr.bf16.mxu0 0
  %1420 = vmatpush1.bf16.msra.mxu0 %v1042
  %1421 = vmatprep.subr.bf16.mxu0 0
  %1422 = vmatpush2.bf16.msra.mxu0 %v1057
  %1423 = vmatprep.subr.bf16.mxu0 0
  %1424 = vmatpush2.bf16.msra.mxu0 %v1056
  %1425 = vmatprep.subr.bf16.mxu0 0
  %1426 = vmatpush2.bf16.msra.mxu0 %v1055
  %1427 = vmatprep.subr.bf16.mxu0 0
  %1428 = vmatpush2.bf16.msra.mxu0 %v1054
  %1429 = vmatprep.subr.bf16.mxu0 0
  %1430 = vmatpush2.bf16.msra.mxu0 %v1053
  %1431 = vmatprep.subr.bf16.mxu0 0
  %1432 = vmatpush2.bf16.msra.mxu0 %v1052
  %1433 = vmatprep.subr.bf16.mxu0 0
  %1434 = vmatpush2.bf16.msra.mxu0 %v1051
  %1435 = vmatprep.subr.bf16.mxu0 0
  %1436 = vmatpush2.bf16.msra.mxu0 %v1050
  %1437 = vmatprep.mubr.bf16.mxu0 %v389
  %1438 = vmatmul.mubr.bf16.gmra.mxu0 %v388
  %v1439 = vpop.f32.mrf.mxu0
  %v1440 = vadd.f32 %v1399, %v1439
  %v1441 = vpop.f32.mrf.mxu0
  %v1442 = vpop.f32.mrf.mxu0
  %v1443 = vadd.f32 %v1402, %v1442
  %v1444 = vpop.f32.mrf.mxu0
  %1445 = vdwg.mxu0
  %1446 = vmatprep.subr.bf16.mxu0 0
  %1447 = vmatpush1.bf16.msra.mxu0 %v1065
  %1448 = vmatprep.subr.bf16.mxu0 0
  %1449 = vmatpush1.bf16.msra.mxu0 %v1064
  %1450 = vmatprep.subr.bf16.mxu0 0
  %1451 = vmatpush1.bf16.msra.mxu0 %v1063
  %1452 = vmatprep.subr.bf16.mxu0 0
  %1453 = vmatpush1.bf16.msra.mxu0 %v1062
  %1454 = vmatprep.subr.bf16.mxu0 0
  %1455 = vmatpush1.bf16.msra.mxu0 %v1061
  %1456 = vmatprep.subr.bf16.mxu0 0
  %1457 = vmatpush1.bf16.msra.mxu0 %v1060
  %1458 = vmatprep.subr.bf16.mxu0 0
  %1459 = vmatpush1.bf16.msra.mxu0 %v1059
  %1460 = vmatprep.subr.bf16.mxu0 0
  %1461 = vmatpush1.bf16.msra.mxu0 %v1058
  %1462 = vmatprep.subr.bf16.mxu0 0
  %1463 = vmatpush2.bf16.msra.mxu0 %v1073
  %1464 = vmatprep.subr.bf16.mxu0 0
  %1465 = vmatpush2.bf16.msra.mxu0 %v1072
  %1466 = vmatprep.subr.bf16.mxu0 0
  %1467 = vmatpush2.bf16.msra.mxu0 %v1071
  %1468 = vmatprep.subr.bf16.mxu0 0
  %1469 = vmatpush2.bf16.msra.mxu0 %v1070
  %1470 = vmatprep.subr.bf16.mxu0 0
  %1471 = vmatpush2.bf16.msra.mxu0 %v1069
  %1472 = vmatprep.subr.bf16.mxu0 0
  %1473 = vmatpush2.bf16.msra.mxu0 %v1068
  %1474 = vmatprep.subr.bf16.mxu0 0
  %1475 = vmatpush2.bf16.msra.mxu0 %v1067
  %1476 = vmatprep.subr.bf16.mxu0 0
  %1477 = vmatpush2.bf16.msra.mxu0 %v1066
  %1478 = vmatprep.mubr.bf16.mxu0 %v391
  %1479 = vmatmul.mubr.bf16.gmra.mxu0 %v390
  %v1480 = vpop.f32.mrf.mxu0
  %v1481 = vadd.f32 %v1440, %v1480
  %v1482 = vpop.f32.mrf.mxu0
  %v1483 = vpop.f32.mrf.mxu0
  %v1484 = vadd.f32 %v1443, %v1483
  %v1485 = vpop.f32.mrf.mxu0
  %1486 = vdwg.mxu0
  %1487 = vmatprep.subr.bf16.mxu0 0
  %1488 = vmatpush1.bf16.msra.mxu0 %v1081
  %1489 = vmatprep.subr.bf16.mxu0 0
  %1490 = vmatpush1.bf16.msra.mxu0 %v1080
  %1491 = vmatprep.subr.bf16.mxu0 0
  %1492 = vmatpush1.bf16.msra.mxu0 %v1079
  %1493 = vmatprep.subr.bf16.mxu0 0
  %1494 = vmatpush1.bf16.msra.mxu0 %v1078
  %1495 = vmatprep.subr.bf16.mxu0 0
  %1496 = vmatpush1.bf16.msra.mxu0 %v1077
  %1497 = vmatprep.subr.bf16.mxu0 0
  %1498 = vmatpush1.bf16.msra.mxu0 %v1076
  %1499 = vmatprep.subr.bf16.mxu0 0
  %1500 = vmatpush1.bf16.msra.mxu0 %v1075
  %1501 = vmatprep.subr.bf16.mxu0 0
  %1502 = vmatpush1.bf16.msra.mxu0 %v1074
  %1503 = vmatprep.subr.bf16.mxu0 0
  %1504 = vmatpush2.bf16.msra.mxu0 %v1089
  %1505 = vmatprep.subr.bf16.mxu0 0
  %1506 = vmatpush2.bf16.msra.mxu0 %v1088
  %1507 = vmatprep.subr.bf16.mxu0 0
  %1508 = vmatpush2.bf16.msra.mxu0 %v1087
  %1509 = vmatprep.subr.bf16.mxu0 0
  %1510 = vmatpush2.bf16.msra.mxu0 %v1086
  %1511 = vmatprep.subr.bf16.mxu0 0
  %1512 = vmatpush2.bf16.msra.mxu0 %v1085
  %1513 = vmatprep.subr.bf16.mxu0 0
  %1514 = vmatpush2.bf16.msra.mxu0 %v1084
  %1515 = vmatprep.subr.bf16.mxu0 0
  %1516 = vmatpush2.bf16.msra.mxu0 %v1083
  %1517 = vmatprep.subr.bf16.mxu0 0
  %1518 = vmatpush2.bf16.msra.mxu0 %v1082
  %1519 = vmatprep.mubr.bf16.mxu0 %v393
  %1520 = vmatmul.mubr.bf16.gmra.mxu0 %v392
  %v1521 = vpop.f32.mrf.mxu0
  %v1522 = vadd.f32 %v1481, %v1521
  %v1523 = vpop.f32.mrf.mxu0
  %v1524 = vpop.f32.mrf.mxu0
  %v1525 = vadd.f32 %v1484, %v1524
  %v1526 = vpop.f32.mrf.mxu0
  %1527 = vdwg.mxu0
  %1528 = vmatprep.subr.bf16.mxu0 0
  %1529 = vmatpush1.bf16.msra.mxu0 %v1097
  %1530 = vmatprep.subr.bf16.mxu0 0
  %1531 = vmatpush1.bf16.msra.mxu0 %v1096
  %1532 = vmatprep.subr.bf16.mxu0 0
  %1533 = vmatpush1.bf16.msra.mxu0 %v1095
  %1534 = vmatprep.subr.bf16.mxu0 0
  %1535 = vmatpush1.bf16.msra.mxu0 %v1094
  %1536 = vmatprep.subr.bf16.mxu0 0
  %1537 = vmatpush1.bf16.msra.mxu0 %v1093
  %1538 = vmatprep.subr.bf16.mxu0 0
  %1539 = vmatpush1.bf16.msra.mxu0 %v1092
  %1540 = vmatprep.subr.bf16.mxu0 0
  %1541 = vmatpush1.bf16.msra.mxu0 %v1091
  %1542 = vmatprep.subr.bf16.mxu0 0
  %1543 = vmatpush1.bf16.msra.mxu0 %v1090
  %1544 = vmatprep.subr.bf16.mxu0 0
  %1545 = vmatpush2.bf16.msra.mxu0 %v1105
  %1546 = vmatprep.subr.bf16.mxu0 0
  %1547 = vmatpush2.bf16.msra.mxu0 %v1104
  %1548 = vmatprep.subr.bf16.mxu0 0
  %1549 = vmatpush2.bf16.msra.mxu0 %v1103
  %1550 = vmatprep.subr.bf16.mxu0 0
  %1551 = vmatpush2.bf16.msra.mxu0 %v1102
  %1552 = vmatprep.subr.bf16.mxu0 0
  %1553 = vmatpush2.bf16.msra.mxu0 %v1101
  %1554 = vmatprep.subr.bf16.mxu0 0
  %1555 = vmatpush2.bf16.msra.mxu0 %v1100
  %1556 = vmatprep.subr.bf16.mxu0 0
  %1557 = vmatpush2.bf16.msra.mxu0 %v1099
  %1558 = vmatprep.subr.bf16.mxu0 0
  %1559 = vmatpush2.bf16.msra.mxu0 %v1098
  %1560 = vmatprep.mubr.bf16.mxu0 %v395
  %1561 = vmatmul.mubr.bf16.gmra.mxu0 %v394
  %v1562 = vpop.f32.mrf.mxu0
  %v1563 = vadd.f32 %v1522, %v1562
  %v1564 = vpop.f32.mrf.mxu0
  %v1565 = vpop.f32.mrf.mxu0
  %v1566 = vadd.f32 %v1525, %v1565
  %v1567 = vpop.f32.mrf.mxu0
  %1568 = vdwg.mxu0
  %1569 = vmatprep.subr.bf16.mxu0 0
  %1570 = vmatpush1.bf16.msra.mxu0 %v1113
  %1571 = vmatprep.subr.bf16.mxu0 0
  %1572 = vmatpush1.bf16.msra.mxu0 %v1112
  %1573 = vmatprep.subr.bf16.mxu0 0
  %1574 = vmatpush1.bf16.msra.mxu0 %v1111
  %1575 = vmatprep.subr.bf16.mxu0 0
  %1576 = vmatpush1.bf16.msra.mxu0 %v1110
  %1577 = vmatprep.subr.bf16.mxu0 0
  %1578 = vmatpush1.bf16.msra.mxu0 %v1109
  %1579 = vmatprep.subr.bf16.mxu0 0
  %1580 = vmatpush1.bf16.msra.mxu0 %v1108
  %1581 = vmatprep.subr.bf16.mxu0 0
  %1582 = vmatpush1.bf16.msra.mxu0 %v1107
  %1583 = vmatprep.subr.bf16.mxu0 0
  %1584 = vmatpush1.bf16.msra.mxu0 %v1106
  %1585 = vmatprep.subr.bf16.mxu0 0
  %1586 = vmatpush2.bf16.msra.mxu0 %v1121
  %1587 = vmatprep.subr.bf16.mxu0 0
  %1588 = vmatpush2.bf16.msra.mxu0 %v1120
  %1589 = vmatprep.subr.bf16.mxu0 0
  %1590 = vmatpush2.bf16.msra.mxu0 %v1119
  %1591 = vmatprep.subr.bf16.mxu0 0
  %1592 = vmatpush2.bf16.msra.mxu0 %v1118
  %1593 = vmatprep.subr.bf16.mxu0 0
  %1594 = vmatpush2.bf16.msra.mxu0 %v1117
  %1595 = vmatprep.subr.bf16.mxu0 0
  %1596 = vmatpush2.bf16.msra.mxu0 %v1116
  %1597 = vmatprep.subr.bf16.mxu0 0
  %1598 = vmatpush2.bf16.msra.mxu0 %v1115
  %1599 = vmatprep.subr.bf16.mxu0 0
  %1600 = vmatpush2.bf16.msra.mxu0 %v1114
  %1601 = vmatprep.mubr.bf16.mxu0 %v397
  %1602 = vmatmul.mubr.bf16.gmra.mxu0 %v396
  %v1603 = vpop.f32.mrf.mxu0
  %v1604 = vadd.f32 %v1563, %v1603
  %v1605 = vpop.f32.mrf.mxu0
  %v1606 = vpop.f32.mrf.mxu0
  %v1607 = vadd.f32 %v1566, %v1606
  %v1608 = vpop.f32.mrf.mxu0
  %1609 = vdwg.mxu0
  %1610 = vmatprep.subr.bf16.mxu0 0
  %1611 = vmatpush1.bf16.msra.mxu0 %v1129
  %1612 = vmatprep.subr.bf16.mxu0 0
  %1613 = vmatpush1.bf16.msra.mxu0 %v1128
  %1614 = vmatprep.subr.bf16.mxu0 0
  %1615 = vmatpush1.bf16.msra.mxu0 %v1127
  %1616 = vmatprep.subr.bf16.mxu0 0
  %1617 = vmatpush1.bf16.msra.mxu0 %v1126
  %1618 = vmatprep.subr.bf16.mxu0 0
  %1619 = vmatpush1.bf16.msra.mxu0 %v1125
  %1620 = vmatprep.subr.bf16.mxu0 0
  %1621 = vmatpush1.bf16.msra.mxu0 %v1124
  %1622 = vmatprep.subr.bf16.mxu0 0
  %1623 = vmatpush1.bf16.msra.mxu0 %v1123
  %1624 = vmatprep.subr.bf16.mxu0 0
  %1625 = vmatpush1.bf16.msra.mxu0 %v1122
  %1626 = vmatprep.subr.bf16.mxu0 0
  %1627 = vmatpush2.bf16.msra.mxu0 %v1137
  %1628 = vmatprep.subr.bf16.mxu0 0
  %1629 = vmatpush2.bf16.msra.mxu0 %v1136
  %1630 = vmatprep.subr.bf16.mxu0 0
  %1631 = vmatpush2.bf16.msra.mxu0 %v1135
  %1632 = vmatprep.subr.bf16.mxu0 0
  %1633 = vmatpush2.bf16.msra.mxu0 %v1134
  %1634 = vmatprep.subr.bf16.mxu0 0
  %1635 = vmatpush2.bf16.msra.mxu0 %v1133
  %1636 = vmatprep.subr.bf16.mxu0 0
  %1637 = vmatpush2.bf16.msra.mxu0 %v1132
  %1638 = vmatprep.subr.bf16.mxu0 0
  %1639 = vmatpush2.bf16.msra.mxu0 %v1131
  %1640 = vmatprep.subr.bf16.mxu0 0
  %1641 = vmatpush2.bf16.msra.mxu0 %v1130
  %1642 = vmatprep.mubr.bf16.mxu0 %v399
  %1643 = vmatmul.mubr.bf16.gmra.mxu0 %v398
  %v1644 = vpop.f32.mrf.mxu0
  %v1645 = vadd.f32 %v1604, %v1644
  %v1646 = vpop.f32.mrf.mxu0
  %v1647 = vpop.f32.mrf.mxu0
  %v1648 = vadd.f32 %v1607, %v1647
  %v1649 = vpop.f32.mrf.mxu0
  %1650 = vdwg.mxu0
  %v1651 = vmax.f32 %v1645, 0.0
  %v1652 = vmax.f32 %v1648, 0.0
  %1653 = vst [vmem:[%s3] sm:$0xff] %v1651
  %1654 = vst [vmem:[%s3 + $0x8] sm:$0xff] %v1652
  // Predicated region
  $region14: #{_lambda_.9} parent=0 // pred_check
    _
  $region15: #{_lambda_.9} parent=0 // pred_check_branch
    %1656 = sbr.rel (0) target = $region17
  $region16: #{_lambda_.9} parent=0 // pred_region
    _
  $region17: #{_lambda_.9} parent=0 // pred_fallthru
    _
  // Predicated region
  $region18: #{_lambda_.9} parent=0 // pred_check
    _
  $region19: #{_lambda_.9} parent=0 // pred_check_branch
    %1658 = sbr.rel (0) target = $region21
  $region20: #{_lambda_.9} parent=0 // pred_region
    _
  $region21: #{_lambda_.9} parent=0 // pred_fallthru
    _

</llo_original>
